<compile_context>
chip_gen: v6e
topology: v6e:2x2x1
jax: 0.10.0
libtpu: 0.0.40
codegen_flags: <defaults>
</compile_context>

<pallas_src>
import jax
import jax.numpy as jnp
from jax.experimental import pallas as pl
from jax.experimental.pallas import tpu as pltpu


# ----------------------------------------------------------------------------
# Pallas kernel: whole MFA3 forward.
# ----------------------------------------------------------------------------
def mfa3_kernel(xpad_ref,                            # (B, H+2, W+2, Cin) bf16, halo=1
                ws1x_ref, ws1m_ref, bs1_ref,         # fused stage-1 1x1 convs
                g1_ref, be1_ref,                     # fused stage-1 BN
                w2_ref, b2_ref, g2_ref, be2_ref,     # fused (1,3)+(1,7) conv + BN
                w3_ref, b3_ref, g3_ref, be3_ref,     # fused (3,1)+(7,1) conv + BN
                out_ref,                             # (N, 64) f32
                pw_ref):                             # bf16 VMEM scratch for W-taps
    f32 = jnp.float32
    bf16 = jnp.bfloat16

    B, Hp, Wp, Cin = xpad_ref.shape
    H, W = Hp - 2, Wp - 2
    N = B * H * W
    PAD = (pw_ref.shape[1] - W) // 2     # halo width in the W-tap scratch (>= 3)
    trunkC = pw_ref.shape[2]             # block3a + block4a channels (64)
    n1 = g1_ref.shape[-1]                # 32 + 32 + 8 + 16
    head = n1 - trunkC                   # block1 + block2 channels (24)

    def bn_relu(t, g, be):
        # One-pass batch stats (sum / sum-of-squares), precomputed per-channel
        # scale/shift, then y = max(t*a + b, 0).  All f32.
        inv_n = 1.0 / t.shape[0]
        mu = jnp.sum(t, axis=0, keepdims=True) * inv_n
        ex2 = jnp.sum(t * t, axis=0, keepdims=True) * inv_n
        var = jnp.maximum(ex2 - mu * mu, 0.0)       # guard E[x^2]-E[x]^2 cancellation
        a = g * jax.lax.rsqrt(var + 1e-5)
        b = be - mu * a
        return jnp.maximum(t * a + b, 0.0)

    # ---------------- stage 1: separable 3x3 max-pool + four fused 1x1 convs --
    xpad = xpad_ref[...]                                         # bf16, halo = -1e30
    mpw = jnp.maximum(jnp.maximum(xpad[:, :, 0:W, :], xpad[:, :, 1:W + 1, :]),
                      xpad[:, :, 2:W + 2, :])                    # (B, Hp, W, Cin)
    mp = jnp.maximum(jnp.maximum(mpw[:, 0:H], mpw[:, 1:H + 1]), mpw[:, 2:H + 2])
    x = xpad[:, 1:1 + H, 1:1 + W, :]                             # centre view

    # two accumulated matmuls instead of lane-concatenating [x | maxpool(x)]
    s1 = (jnp.dot(x.reshape(N, Cin), ws1x_ref[...], preferred_element_type=f32)
          + jnp.dot(mp.reshape(N, Cin), ws1m_ref[...], preferred_element_type=f32)
          + bs1_ref[...])
    a1 = bn_relu(s1, g1_ref[...], be1_ref[...])                  # (N, 88) f32
    trunk = a1[:, :trunkC].astype(bf16)                          # [b3a | b4a], (N, 64)

    # ---------------- stage 2: joint (1,3)+(1,7) block-diagonal matmul --------
    # Joint bf16 W-halo scratch: one store, zero only the two halo strips.
    pw_ref[:, :PAD, :] = jnp.zeros((B * H, PAD, trunkC), bf16)
    pw_ref[:, PAD + W:, :] = jnp.zeros((B * H, PAD, trunkC), bf16)
    pw_ref[:, PAD:PAD + W, :] = trunk.reshape(B * H, W, trunkC)
    taps2 = jnp.concatenate(
        [pw_ref[:, PAD + j - 3:PAD + j - 3 + W, :] for j in range(7)],
        axis=-1).reshape(N, 7 * trunkC)                          # (N, 448) bf16
    y2 = jnp.dot(taps2, w2_ref[...], preferred_element_type=f32) + b2_ref[...]
    a2 = bn_relu(y2, g2_ref[...], be2_ref[...])                  # (N, 48) f32
    n2 = a2.shape[-1]

    # ---------------- stage 3: joint (3,1)+(7,1) block-diagonal matmul --------
    # H is a leading dim: padding and shifted views are plain tile selection.
    c = a2.astype(bf16).reshape(B, H, W, n2)
    zr = jnp.zeros((B, 3, W, n2), bf16)
    cp = jnp.concatenate([zr, c, zr], axis=1)                    # (B, H+6, W, n2)
    taps3 = jnp.concatenate([cp[:, i:i + H] for i in range(7)],
                            axis=-1).reshape(N, 7 * n2)          # (N, 336) bf16
    z = jnp.dot(taps3, w3_ref[...], preferred_element_type=f32) + b3_ref[...]
    a3 = bn_relu(z, g3_ref[...], be3_ref[...])                   # (N, 40) f32

    # torch.cat([x1, x2, x3, x4], dim=1) -> lanes [b1 | b2 | b3 | b4]
    out_ref[:, :head] = a1[:, trunkC:].astype(out_ref.dtype)     # [x1 | x2]
    out_ref[:, head:] = a3.astype(out_ref.dtype)                 # [x3 | x4]


# ----------------------------------------------------------------------------
# JAX glue
# ----------------------------------------------------------------------------
@jax.jit
def mfa3_forward(x_nhwc, p):
    """x_nhwc: (B, H, W, Cin) f32.  Returns (B, H, W, 64) f32."""
    B, H, W, Cin = x_nhwc.shape
    N = B * H * W
    bf16 = jnp.bfloat16
    f32 = jnp.float32

    C1, C2 = p["w_b1"].shape[1], p["w_b2"].shape[1]
    C3a, C4a = p["w_b3a"].shape[1], p["w_b4a"].shape[1]
    C3b, C4b = p["w13"].shape[2], p["w17"].shape[2]
    C3c, C4c = p["w31"].shape[2], p["w71"].shape[2]
    trunkC = C3a + C4a                 # 64
    head = C1 + C2                     # 24
    n1 = trunkC + head                 # 88
    n2 = C3b + C4b                     # 48
    n3 = C3c + C4c                     # 40
    Cout = head + n3                   # 64
    PAD = 8

    # ---- generation-aware VMEM sizing (v5e/v6e: 128 MiB, v7x: 64 MiB) -------
    try:
        vmem_cap = int(pltpu.get_tpu_info().vmem_capacity_bytes)
    except Exception:
        vmem_cap = 64 * 1024 * 1024    # conservative fallback (v7x per-core)
    vmem_limit = min(int(0.75 * vmem_cap), 100 * 1024 * 1024)

    # crude resident-footprint estimate (x1.5 headroom for compiler temps)
    est = (B * (H + 2) * (W + 2) * Cin * 2            # xpad bf16
           + 2 * N * n1 * 4                           # s1 + a1
           + (B * H) * (W + 2 * PAD) * trunkC * 2     # W-tap halo scratch bf16
           + N * 7 * trunkC * 2                       # stage-2 tap slab bf16
           + 2 * N * n2 * 4                           # y2 + a2
           + B * (H + 6) * W * n2 * 2                 # H-padded activation bf16
           + N * 7 * n2 * 2                           # stage-3 tap slab bf16
           + 2 * N * n3 * 4                           # z + a3
           + N * Cout * 4)                            # output
    est = int(est * 1.5)
    if est > vmem_limit:
        # TODO(synk): N-tiled two-pass-BN variant (grid over row blocks with an
        # H halo, per-channel sum/sumsq accumulators, dimension_semantics=
        # ("parallel",...)) for shapes that do not fit VMEM-resident; that is
        # also the prerequisite for v7x megacore sharding.
        raise ValueError(
            "MFA3 single-block kernel needs ~%.1f MiB VMEM (> %.0f MiB limit); "
            "tile the N=B*H*W axis for shapes this large."
            % (est / 2 ** 20, vmem_limit / 2 ** 20))

    # input padded once with halo=1; -1e30 acts as the max-pool -inf padding and
    # is never read by any conv (the 1x1 convs use only the centre slice).
    xpad = jnp.pad(x_nhwc, ((0, 0), (1, 1), (1, 1), (0, 0)),
                   constant_values=-1e30).astype(bf16)

    # ---- stage-1 weights: columns reordered to [b3a | b4a | b1 | b2] so the
    # separable-conv trunk is the leading 64-lane slice; the maxpool branch has
    # its own zero-padded weight (no lane concat of x with maxpool(x)).
    ws1x = jnp.zeros((Cin, n1), f32)
    ws1x = ws1x.at[:, :C3a].set(p["w_b3a"])
    ws1x = ws1x.at[:, C3a:trunkC].set(p["w_b4a"])
    ws1x = ws1x.at[:, trunkC:trunkC + C1].set(p["w_b1"])
    ws1m = jnp.zeros((Cin, n1), f32)
    ws1m = ws1m.at[:, trunkC + C1:].set(p["w_b2"])
    bs1 = jnp.concatenate([p["b_b3a"], p["b_b4a"], p["b_b1"], p["b_b2"]])
    g1 = jnp.concatenate([p["g1"][head:], p["g1"][:head]])
    be1 = jnp.concatenate([p["be1"][head:], p["be1"][:head]])

    # ---- stage-2 block-diagonal weight over the joint 7-tap x 64-ch slab ----
    # (1,3) conv occupies the 3 centre taps of channels 0..C3a-1,
    # (1,7) conv occupies all 7 taps of channels C3a..trunkC-1.
    w2 = jnp.zeros((7 * trunkC, n2), f32)
    for k in range(3):
        j = k + 2
        w2 = w2.at[j * trunkC:j * trunkC + C3a, :C3b].set(p["w13"][k])
    for j in range(7):
        w2 = w2.at[j * trunkC + C3a:(j + 1) * trunkC, C3b:].set(p["w17"][j])
    b2 = jnp.concatenate([p["b13"], p["b17"]])

    # ---- stage-3 block-diagonal weight over the joint 7-tap x 48-ch slab ----
    w3 = jnp.zeros((7 * n2, n3), f32)
    for k in range(3):
        i = k + 2
        w3 = w3.at[i * n2:i * n2 + C3b, :C3c].set(p["w31"][k])
    for i in range(7):
        w3 = w3.at[i * n2 + C3b:(i + 1) * n2, C3c:].set(p["w71"][i])
    b3 = jnp.concatenate([p["b31"], p["b71"]])

    row = lambda v: jnp.asarray(v, jnp.float32).reshape(1, -1)
    args = (
        xpad,
        ws1x.astype(bf16), ws1m.astype(bf16), row(bs1), row(g1), row(be1),
        w2.astype(bf16), row(b2), row(p["g2"]), row(p["be2"]),
        w3.astype(bf16), row(b3), row(p["g3"]), row(p["be3"]),
    )

    vmem = pl.BlockSpec(memory_space=pltpu.MemorySpace.VMEM)
    out_flat = pl.pallas_call(
        mfa3_kernel,
        out_shape=jax.ShapeDtypeStruct((N, Cout), jnp.float32),
        in_specs=[vmem] * len(args),
        out_specs=vmem,
        scratch_shapes=[
            pltpu.VMEM((B * H, W + 2 * PAD, trunkC), bf16),
        ],
        compiler_params=pltpu.CompilerParams(vmem_limit_bytes=vmem_limit),
    )(*args)
    return out_flat.reshape(B, H, W, Cout)


# ----------------------------------------------------------------------------
# Pure-JAX reference (NHWC, f32 highest precision) for correctness checking
# ----------------------------------------------------------------------------
def reference(x, p):
    hi = jax.lax.Precision.HIGHEST

    def conv(t, w_hwio, b):
        kh, kw = w_hwio.shape[0], w_hwio.shape[1]
        y = jax.lax.conv_general_dilated(
            t, w_hwio, (1, 1), [(kh // 2, kh // 2), (kw // 2, kw // 2)],
            dimension_numbers=("NHWC", "HWIO", "NHWC"), precision=hi)
        return y + b.reshape(1, 1, 1, -1)

    def bn_relu(t, g, be):
        mu = jnp.mean(t, axis=(0, 1, 2), keepdims=True)
        var = jnp.mean((t - mu) ** 2, axis=(0, 1, 2), keepdims=True)
        y = (g.reshape(1, 1, 1, -1) * (t - mu) * jax.lax.rsqrt(var + 1e-5)
             + be.reshape(1, 1, 1, -1))
        return jnp.maximum(y, 0.0)

    C1, C2 = p["w_b1"].shape[1], p["w_b2"].shape[1]
    C3a, C4a = p["w_b3a"].shape[1], p["w_b4a"].shape[1]
    C3b = p["w13"].shape[2]
    C3c = p["w31"].shape[2]
    g1, be1 = p["g1"], p["be1"]
    g2, be2 = p["g2"], p["be2"]
    g3, be3 = p["g3"], p["be3"]
    o1, o2, o3 = C1, C1 + C2, C1 + C2 + C3a

    # block1
    x1 = bn_relu(conv(x, p["w_b1"][None, None], p["b_b1"]), g1[:o1], be1[:o1])
    # block2
    mp = jax.lax.reduce_window(x, -jnp.inf, jax.lax.max,
                               (1, 3, 3, 1), (1, 1, 1, 1),
                               [(0, 0), (1, 1), (1, 1), (0, 0)])
    x2 = bn_relu(conv(mp, p["w_b2"][None, None], p["b_b2"]), g1[o1:o2], be1[o1:o2])
    # block3
    t = bn_relu(conv(x, p["w_b3a"][None, None], p["b_b3a"]), g1[o2:o3], be1[o2:o3])
    t = bn_relu(conv(t, p["w13"][None], p["b13"]), g2[:C3b], be2[:C3b])
    x3 = bn_relu(conv(t, p["w31"][:, None], p["b31"]), g3[:C3c], be3[:C3c])
    # block4
    u = bn_relu(conv(x, p["w_b4a"][None, None], p["b_b4a"]), g1[o3:], be1[o3:])
    u = bn_relu(conv(u, p["w17"][None], p["b17"]), g2[C3b:], be2[C3b:])
    x4 = bn_relu(conv(u, p["w71"][:, None], p["b71"]), g3[C3c:], be3[C3c:])

    return jnp.concatenate([x1, x2, x3, x4], axis=-1)


# ----------------------------------------------------------------------------
# Main
# ----------------------------------------------------------------------------
if __name__ == "__main__":
    B, Cin, H, W = 2, 32, 16, 16
    C1, C2 = 8, 16
    C3a, C3b, C3c = 32, 24, 16
    C4a, C4b, C4c = 32, 24, 24
    n1, n2, n3 = C1 + C2 + C3a + C4a, C3b + C4b, C3c + C4c

    key = jax.random.PRNGKey(0)
    keys = iter(jax.random.split(key, 32))
    nrm = lambda shape, s=0.1: s * jax.random.normal(next(keys), shape, jnp.float32)

    # Deterministic synthetic parameters (shapes follow MFA3.__init__).  Weights
    # are stored (in, out); tap axis first for the separable convs.  The g*/be*
    # vectors use the canonical [block1 | block2 | block3 | block4] ordering.
    params = dict(
        w_b1=nrm((Cin, C1)), b_b1=nrm((C1,)),
        w_b2=nrm((Cin, C2)), b_b2=nrm((C2,)),
        w_b3a=nrm((Cin, C3a)), b_b3a=nrm((C3a,)),
        w_b4a=nrm((Cin, C4a)), b_b4a=nrm((C4a,)),
        w13=nrm((3, C3a, C3b)), b13=nrm((C3b,)),
        w17=nrm((7, C4a, C4b)), b17=nrm((C4b,)),
        w31=nrm((3, C3b, C3c)), b31=nrm((C3c,)),
        w71=nrm((7, C4b, C4c)), b71=nrm((C4c,)),
        g1=1.0 + nrm((n1,)), be1=nrm((n1,)),
        g2=1.0 + nrm((n2,)), be2=nrm((n2,)),
        g3=1.0 + nrm((n3,)), be3=nrm((n3,)),
    )
    # TODO(synk): BatchNorm running-stat (momentum buffer) updates are stateful
    # training bookkeeping with no effect on the forward output; not modeled.

    # The PyTorch module is NCHW; build NCHW inputs and convert to NHWC.
    x_nchw = jax.random.normal(next(keys), (B, Cin, H, W), jnp.float32)
    x = jnp.transpose(x_nchw, (0, 2, 3, 1))

    out = jax.block_until_ready(mfa3_forward(x, params))
    ref = reference(x, params)

    assert out.shape == (B, H, W, C1 + C2 + C3c + C4c)
    err = float(jnp.max(jnp.abs(out - ref)))
    # tolerance sized for bf16 MXU operands across a 3-deep conv/BN chain
    assert bool(jnp.allclose(out, ref, atol=5e-2, rtol=5e-2)), (
        "max abs err = %e" % err)

    print("KERNEL_OK")
</pallas_src>

<mosaic_0001>
module attributes {stable_mosaic.version = 11 : i64} {
  func.func @mfa3_kernel(%arg0: memref<2x18x18x32xbf16, #tpu.memory_space<vmem>>, %arg1: memref<32x88xbf16, #tpu.memory_space<vmem>>, %arg2: memref<32x88xbf16, #tpu.memory_space<vmem>>, %arg3: memref<1x88xf32, #tpu.memory_space<vmem>>, %arg4: memref<1x88xf32, #tpu.memory_space<vmem>>, %arg5: memref<1x88xf32, #tpu.memory_space<vmem>>, %arg6: memref<448x48xbf16, #tpu.memory_space<vmem>>, %arg7: memref<1x48xf32, #tpu.memory_space<vmem>>, %arg8: memref<1x48xf32, #tpu.memory_space<vmem>>, %arg9: memref<1x48xf32, #tpu.memory_space<vmem>>, %arg10: memref<336x40xbf16, #tpu.memory_space<vmem>>, %arg11: memref<1x40xf32, #tpu.memory_space<vmem>>, %arg12: memref<1x40xf32, #tpu.memory_space<vmem>>, %arg13: memref<1x40xf32, #tpu.memory_space<vmem>>, %arg14: memref<512x64xf32, #tpu.memory_space<vmem>>, %arg15: memref<32x32x64xbf16, #tpu.memory_space<vmem>>) attributes {dimension_semantics = [], scalar_prefetch = 0 : i64, scratch_operands = 1 : i64, tpu.core_type = #tpu.core_type<tc>} {
    %c0 = arith.constant 0 : index
    %c0_0 = arith.constant 0 : index
    %c0_1 = arith.constant 0 : index
    %c0_2 = arith.constant 0 : index
    %0 = vector.load %arg0[%c0, %c0_0, %c0_1, %c0_2] : memref<2x18x18x32xbf16, #tpu.memory_space<vmem>>, vector<2x18x18x32xbf16>
    %1 = vector.extract_strided_slice %0 {offsets = [0, 0, 0, 0], sizes = [2, 18, 16, 32], strides = [1, 1, 1, 1]} : vector<2x18x18x32xbf16> to vector<2x18x16x32xbf16>
    %2 = vector.extract_strided_slice %0 {offsets = [0, 0, 1, 0], sizes = [2, 18, 16, 32], strides = [1, 1, 1, 1]} : vector<2x18x18x32xbf16> to vector<2x18x16x32xbf16>
    %3 = arith.maximumf %1, %2 : vector<2x18x16x32xbf16>
    %4 = vector.extract_strided_slice %0 {offsets = [0, 0, 2, 0], sizes = [2, 18, 16, 32], strides = [1, 1, 1, 1]} : vector<2x18x18x32xbf16> to vector<2x18x16x32xbf16>
    %5 = arith.maximumf %3, %4 : vector<2x18x16x32xbf16>
    %6 = vector.extract_strided_slice %5 {offsets = [0, 0, 0, 0], sizes = [2, 16, 16, 32], strides = [1, 1, 1, 1]} : vector<2x18x16x32xbf16> to vector<2x16x16x32xbf16>
    %7 = vector.extract_strided_slice %5 {offsets = [0, 1, 0, 0], sizes = [2, 16, 16, 32], strides = [1, 1, 1, 1]} : vector<2x18x16x32xbf16> to vector<2x16x16x32xbf16>
    %8 = arith.maximumf %6, %7 : vector<2x16x16x32xbf16>
    %9 = vector.extract_strided_slice %5 {offsets = [0, 2, 0, 0], sizes = [2, 16, 16, 32], strides = [1, 1, 1, 1]} : vector<2x18x16x32xbf16> to vector<2x16x16x32xbf16>
    %10 = arith.maximumf %8, %9 : vector<2x16x16x32xbf16>
    %11 = vector.extract_strided_slice %0 {offsets = [0, 1, 1, 0], sizes = [2, 16, 16, 32], strides = [1, 1, 1, 1]} : vector<2x18x18x32xbf16> to vector<2x16x16x32xbf16>
    %12 = vector.shape_cast %11 : vector<2x16x16x32xbf16> to vector<512x32xbf16>
    %c0_3 = arith.constant 0 : index
    %c0_4 = arith.constant 0 : index
    %13 = vector.load %arg1[%c0_3, %c0_4] : memref<32x88xbf16, #tpu.memory_space<vmem>>, vector<32x88xbf16>
    %cst = arith.constant dense<0.000000e+00> : vector<512x88xf32>
    %14 = tpu.matmul %12, %13, %cst {dimension_numbers = #tpu.dot_dimension_numbers<[1], [0], [0], [1], [0, 0, 1, 1], [], []>} : vector<512x32xbf16>, vector<32x88xbf16>, vector<512x88xf32> -> vector<512x88xf32>
    %15 = vector.shape_cast %10 : vector<2x16x16x32xbf16> to vector<512x32xbf16>
    %c0_5 = arith.constant 0 : index
    %c0_6 = arith.constant 0 : index
    %16 = vector.load %arg2[%c0_5, %c0_6] : memref<32x88xbf16, #tpu.memory_space<vmem>>, vector<32x88xbf16>
    %cst_7 = arith.constant dense<0.000000e+00> : vector<512x88xf32>
    %17 = tpu.matmul %15, %16, %cst_7 {dimension_numbers = #tpu.dot_dimension_numbers<[1], [0], [0], [1], [0, 0, 1, 1], [], []>} : vector<512x32xbf16>, vector<32x88xbf16>, vector<512x88xf32> -> vector<512x88xf32>
    %18 = arith.addf %14, %17 : vector<512x88xf32>
    %c0_8 = arith.constant 0 : index
    %c0_9 = arith.constant 0 : index
    %19 = vector.load %arg3[%c0_8, %c0_9] : memref<1x88xf32, #tpu.memory_space<vmem>>, vector<1x88xf32>
    %20 = vector.broadcast %19 : vector<1x88xf32> to vector<512x88xf32>
    %21 = arith.addf %18, %20 : vector<512x88xf32>
    %c0_10 = arith.constant 0 : index
    %c0_11 = arith.constant 0 : index
    %22 = vector.load %arg4[%c0_10, %c0_11] : memref<1x88xf32, #tpu.memory_space<vmem>>, vector<1x88xf32>
    %c0_12 = arith.constant 0 : index
    %c0_13 = arith.constant 0 : index
    %23 = vector.load %arg5[%c0_12, %c0_13] : memref<1x88xf32, #tpu.memory_space<vmem>>, vector<1x88xf32>
    %cst_14 = arith.constant dense<0.000000e+00> : vector<88xf32>
    %24 = vector.multi_reduction <add>, %21, %cst_14 [0] : vector<512x88xf32> to vector<88xf32>
    %25 = vector.shape_cast %24 : vector<88xf32> to vector<1x88xf32>
    %cst_15 = arith.constant 0.001953125 : f32
    %26 = vector.broadcast %cst_15 : f32 to vector<1x88xf32>
    %27 = arith.mulf %25, %26 : vector<1x88xf32>
    %28 = arith.mulf %21, %21 : vector<512x88xf32>
    %cst_16 = arith.constant dense<0.000000e+00> : vector<88xf32>
    %29 = vector.multi_reduction <add>, %28, %cst_16 [0] : vector<512x88xf32> to vector<88xf32>
    %30 = vector.shape_cast %29 : vector<88xf32> to vector<1x88xf32>
    %cst_17 = arith.constant 0.001953125 : f32
    %31 = vector.broadcast %cst_17 : f32 to vector<1x88xf32>
    %32 = arith.mulf %30, %31 : vector<1x88xf32>
    %33 = arith.mulf %27, %27 : vector<1x88xf32>
    %34 = arith.subf %32, %33 : vector<1x88xf32>
    %cst_18 = arith.constant 0.000000e+00 : f32
    %35 = vector.broadcast %cst_18 : f32 to vector<1x88xf32>
    %36 = arith.maximumf %34, %35 : vector<1x88xf32>
    %cst_19 = arith.constant 9.99999974E-6 : f32
    %37 = vector.broadcast %cst_19 : f32 to vector<1x88xf32>
    %38 = arith.addf %36, %37 : vector<1x88xf32>
    %39 = math.rsqrt %38 : vector<1x88xf32>
    %40 = arith.mulf %22, %39 : vector<1x88xf32>
    %41 = arith.mulf %27, %40 : vector<1x88xf32>
    %42 = arith.subf %23, %41 : vector<1x88xf32>
    %43 = vector.broadcast %40 : vector<1x88xf32> to vector<512x88xf32>
    %44 = arith.mulf %21, %43 : vector<512x88xf32>
    %45 = vector.broadcast %42 : vector<1x88xf32> to vector<512x88xf32>
    %46 = arith.addf %44, %45 : vector<512x88xf32>
    %cst_20 = arith.constant 0.000000e+00 : f32
    %47 = vector.broadcast %cst_20 : f32 to vector<512x88xf32>
    %48 = arith.maximumf %46, %47 : vector<512x88xf32>
    %49 = vector.extract_strided_slice %48 {offsets = [0, 0], sizes = [512, 64], strides = [1, 1]} : vector<512x88xf32> to vector<512x64xf32>
    %50 = arith.truncf %49 : vector<512x64xf32> to vector<512x64xbf16>
    %cst_21 = arith.constant 0.000000e+00 : bf16
    %51 = vector.broadcast %cst_21 : bf16 to vector<32x8x64xbf16>
    %c0_22 = arith.constant 0 : index
    %c0_23 = arith.constant 0 : index
    %c0_24 = arith.constant 0 : index
    %52 = vector.load %arg15[%c0_22, %c0_23, %c0_24] : memref<32x32x64xbf16, #tpu.memory_space<vmem>>, vector<32x8x64xbf16>
    tpu.vector_store %arg15[%c0_22, %c0_23, %c0_24], %51 {strides = array<i32>} : memref<32x32x64xbf16, #tpu.memory_space<vmem>>, vector<32x8x64xbf16>,
    %cst_25 = arith.constant 0.000000e+00 : bf16
    %53 = vector.broadcast %cst_25 : bf16 to vector<32x8x64xbf16>
    %c0_26 = arith.constant 0 : index
    %c24 = arith.constant 24 : index
    %c0_27 = arith.constant 0 : index
    %54 = vector.load %arg15[%c0_26, %c24, %c0_27] : memref<32x32x64xbf16, #tpu.memory_space<vmem>>, vector<32x8x64xbf16>
    tpu.vector_store %arg15[%c0_26, %c24, %c0_27], %53 {strides = array<i32>} : memref<32x32x64xbf16, #tpu.memory_space<vmem>>, vector<32x8x64xbf16>,
    %55 = vector.shape_cast %50 : vector<512x64xbf16> to vector<32x16x64xbf16>
    %c0_28 = arith.constant 0 : index
    %c8 = arith.constant 8 : index
    %c0_29 = arith.constant 0 : index
    %56 = vector.load %arg15[%c0_28, %c8, %c0_29] : memref<32x32x64xbf16, #tpu.memory_space<vmem>>, vector<32x16x64xbf16>
    tpu.vector_store %arg15[%c0_28, %c8, %c0_29], %55 {strides = array<i32>} : memref<32x32x64xbf16, #tpu.memory_space<vmem>>, vector<32x16x64xbf16>,
    %c0_30 = arith.constant 0 : index
    %c5 = arith.constant 5 : index
    %c0_31 = arith.constant 0 : index
    %57 = vector.load %arg15[%c0_30, %c5, %c0_31] : memref<32x32x64xbf16, #tpu.memory_space<vmem>>, vector<32x16x64xbf16>
    %c0_32 = arith.constant 0 : index
    %c6 = arith.constant 6 : index
    %c0_33 = arith.constant 0 : index
    %58 = vector.load %arg15[%c0_32, %c6, %c0_33] : memref<32x32x64xbf16, #tpu.memory_space<vmem>>, vector<32x16x64xbf16>
    %c0_34 = arith.constant 0 : index
    %c7 = arith.constant 7 : index
    %c0_35 = arith.constant 0 : index
    %59 = vector.load %arg15[%c0_34, %c7, %c0_35] : memref<32x32x64xbf16, #tpu.memory_space<vmem>>, vector<32x16x64xbf16>
    %c0_36 = arith.constant 0 : index
    %c8_37 = arith.constant 8 : index
    %c0_38 = arith.constant 0 : index
    %60 = vector.load %arg15[%c0_36, %c8_37, %c0_38] : memref<32x32x64xbf16, #tpu.memory_space<vmem>>, vector<32x16x64xbf16>
    %c0_39 = arith.constant 0 : index
    %c9 = arith.constant 9 : index
    %c0_40 = arith.constant 0 : index
    %61 = vector.load %arg15[%c0_39, %c9, %c0_40] : memref<32x32x64xbf16, #tpu.memory_space<vmem>>, vector<32x16x64xbf16>
    %c0_41 = arith.constant 0 : index
    %c10 = arith.constant 10 : index
    %c0_42 = arith.constant 0 : index
    %62 = vector.load %arg15[%c0_41, %c10, %c0_42] : memref<32x32x64xbf16, #tpu.memory_space<vmem>>, vector<32x16x64xbf16>
    %c0_43 = arith.constant 0 : index
    %c11 = arith.constant 11 : index
    %c0_44 = arith.constant 0 : index
    %63 = vector.load %arg15[%c0_43, %c11, %c0_44] : memref<32x32x64xbf16, #tpu.memory_space<vmem>>, vector<32x16x64xbf16>
    %64 = tpu.concatenate %57, %58, %59, %60, %61, %62, %63 in 2 : vector<32x16x64xbf16>, vector<32x16x64xbf16>, vector<32x16x64xbf16>, vector<32x16x64xbf16>, vector<32x16x64xbf16>, vector<32x16x64xbf16>, vector<32x16x64xbf16> -> vector<32x16x448xbf16>
    %65 = vector.shape_cast %64 : vector<32x16x448xbf16> to vector<512x448xbf16>
    %c0_45 = arith.constant 0 : index
    %c0_46 = arith.constant 0 : index
    %66 = vector.load %arg6[%c0_45, %c0_46] : memref<448x48xbf16, #tpu.memory_space<vmem>>, vector<448x48xbf16>
    %cst_47 = arith.constant dense<0.000000e+00> : vector<512x48xf32>
    %67 = tpu.matmul %65, %66, %cst_47 {dimension_numbers = #tpu.dot_dimension_numbers<[1], [0], [0], [1], [0, 0, 1, 1], [], []>} : vector<512x448xbf16>, vector<448x48xbf16>, vector<512x48xf32> -> vector<512x48xf32>
    %c0_48 = arith.constant 0 : index
    %c0_49 = arith.constant 0 : index
    %68 = vector.load %arg7[%c0_48, %c0_49] : memref<1x48xf32, #tpu.memory_space<vmem>>, vector<1x48xf32>
    %69 = vector.broadcast %68 : vector<1x48xf32> to vector<512x48xf32>
    %70 = arith.addf %67, %69 : vector<512x48xf32>
    %c0_50 = arith.constant 0 : index
    %c0_51 = arith.constant 0 : index
    %71 = vector.load %arg8[%c0_50, %c0_51] : memref<1x48xf32, #tpu.memory_space<vmem>>, vector<1x48xf32>
    %c0_52 = arith.constant 0 : index
    %c0_53 = arith.constant 0 : index
    %72 = vector.load %arg9[%c0_52, %c0_53] : memref<1x48xf32, #tpu.memory_space<vmem>>, vector<1x48xf32>
    %cst_54 = arith.constant dense<0.000000e+00> : vector<48xf32>
    %73 = vector.multi_reduction <add>, %70, %cst_54 [0] : vector<512x48xf32> to vector<48xf32>
    %74 = vector.shape_cast %73 : vector<48xf32> to vector<1x48xf32>
    %cst_55 = arith.constant 0.001953125 : f32
    %75 = vector.broadcast %cst_55 : f32 to vector<1x48xf32>
    %76 = arith.mulf %74, %75 : vector<1x48xf32>
    %77 = arith.mulf %70, %70 : vector<512x48xf32>
    %cst_56 = arith.constant dense<0.000000e+00> : vector<48xf32>
    %78 = vector.multi_reduction <add>, %77, %cst_56 [0] : vector<512x48xf32> to vector<48xf32>
    %79 = vector.shape_cast %78 : vector<48xf32> to vector<1x48xf32>
    %cst_57 = arith.constant 0.001953125 : f32
    %80 = vector.broadcast %cst_57 : f32 to vector<1x48xf32>
    %81 = arith.mulf %79, %80 : vector<1x48xf32>
    %82 = arith.mulf %76, %76 : vector<1x48xf32>
    %83 = arith.subf %81, %82 : vector<1x48xf32>
    %cst_58 = arith.constant 0.000000e+00 : f32
    %84 = vector.broadcast %cst_58 : f32 to vector<1x48xf32>
    %85 = arith.maximumf %83, %84 : vector<1x48xf32>
    %cst_59 = arith.constant 9.99999974E-6 : f32
    %86 = vector.broadcast %cst_59 : f32 to vector<1x48xf32>
    %87 = arith.addf %85, %86 : vector<1x48xf32>
    %88 = math.rsqrt %87 : vector<1x48xf32>
    %89 = arith.mulf %71, %88 : vector<1x48xf32>
    %90 = arith.mulf %76, %89 : vector<1x48xf32>
    %91 = arith.subf %72, %90 : vector<1x48xf32>
    %92 = vector.broadcast %89 : vector<1x48xf32> to vector<512x48xf32>
    %93 = arith.mulf %70, %92 : vector<512x48xf32>
    %94 = vector.broadcast %91 : vector<1x48xf32> to vector<512x48xf32>
    %95 = arith.addf %93, %94 : vector<512x48xf32>
    %cst_60 = arith.constant 0.000000e+00 : f32
    %96 = vector.broadcast %cst_60 : f32 to vector<512x48xf32>
    %97 = arith.maximumf %95, %96 : vector<512x48xf32>
    %98 = arith.truncf %97 : vector<512x48xf32> to vector<512x48xbf16>
    %99 = vector.shape_cast %98 : vector<512x48xbf16> to vector<2x16x16x48xbf16>
    %cst_61 = arith.constant 0.000000e+00 : bf16
    %100 = vector.broadcast %cst_61 : bf16 to vector<2x3x16x48xbf16>
    %101 = tpu.concatenate %100, %99, %100 in 1 : vector<2x3x16x48xbf16>, vector<2x16x16x48xbf16>, vector<2x3x16x48xbf16> -> vector<2x22x16x48xbf16>
    %102 = vector.extract_strided_slice %101 {offsets = [0, 0, 0, 0], sizes = [2, 16, 16, 48], strides = [1, 1, 1, 1]} : vector<2x22x16x48xbf16> to vector<2x16x16x48xbf16>
    %103 = vector.extract_strided_slice %101 {offsets = [0, 1, 0, 0], sizes = [2, 16, 16, 48], strides = [1, 1, 1, 1]} : vector<2x22x16x48xbf16> to vector<2x16x16x48xbf16>
    %104 = vector.extract_strided_slice %101 {offsets = [0, 2, 0, 0], sizes = [2, 16, 16, 48], strides = [1, 1, 1, 1]} : vector<2x22x16x48xbf16> to vector<2x16x16x48xbf16>
    %105 = vector.extract_strided_slice %101 {offsets = [0, 3, 0, 0], sizes = [2, 16, 16, 48], strides = [1, 1, 1, 1]} : vector<2x22x16x48xbf16> to vector<2x16x16x48xbf16>
    %106 = vector.extract_strided_slice %101 {offsets = [0, 4, 0, 0], sizes = [2, 16, 16, 48], strides = [1, 1, 1, 1]} : vector<2x22x16x48xbf16> to vector<2x16x16x48xbf16>
    %107 = vector.extract_strided_slice %101 {offsets = [0, 5, 0, 0], sizes = [2, 16, 16, 48], strides = [1, 1, 1, 1]} : vector<2x22x16x48xbf16> to vector<2x16x16x48xbf16>
    %108 = vector.extract_strided_slice %101 {offsets = [0, 6, 0, 0], sizes = [2, 16, 16, 48], strides = [1, 1, 1, 1]} : vector<2x22x16x48xbf16> to vector<2x16x16x48xbf16>
    %109 = tpu.concatenate %102, %103, %104, %105, %106, %107, %108 in 3 : vector<2x16x16x48xbf16>, vector<2x16x16x48xbf16>, vector<2x16x16x48xbf16>, vector<2x16x16x48xbf16>, vector<2x16x16x48xbf16>, vector<2x16x16x48xbf16>, vector<2x16x16x48xbf16> -> vector<2x16x16x336xbf16>
    %110 = vector.shape_cast %109 : vector<2x16x16x336xbf16> to vector<512x336xbf16>
    %c0_62 = arith.constant 0 : index
    %c0_63 = arith.constant 0 : index
    %111 = vector.load %arg10[%c0_62, %c0_63] : memref<336x40xbf16, #tpu.memory_space<vmem>>, vector<336x40xbf16>
    %cst_64 = arith.constant dense<0.000000e+00> : vector<512x40xf32>
    %112 = tpu.matmul %110, %111, %cst_64 {dimension_numbers = #tpu.dot_dimension_numbers<[1], [0], [0], [1], [0, 0, 1, 1], [], []>} : vector<512x336xbf16>, vector<336x40xbf16>, vector<512x40xf32> -> vector<512x40xf32>
    %c0_65 = arith.constant 0 : index
    %c0_66 = arith.constant 0 : index
    %113 = vector.load %arg11[%c0_65, %c0_66] : memref<1x40xf32, #tpu.memory_space<vmem>>, vector<1x40xf32>
    %114 = vector.broadcast %113 : vector<1x40xf32> to vector<512x40xf32>
    %115 = arith.addf %112, %114 : vector<512x40xf32>
    %c0_67 = arith.constant 0 : index
    %c0_68 = arith.constant 0 : index
    %116 = vector.load %arg12[%c0_67, %c0_68] : memref<1x40xf32, #tpu.memory_space<vmem>>, vector<1x40xf32>
    %c0_69 = arith.constant 0 : index
    %c0_70 = arith.constant 0 : index
    %117 = vector.load %arg13[%c0_69, %c0_70] : memref<1x40xf32, #tpu.memory_space<vmem>>, vector<1x40xf32>
    %cst_71 = arith.constant dense<0.000000e+00> : vector<40xf32>
    %118 = vector.multi_reduction <add>, %115, %cst_71 [0] : vector<512x40xf32> to vector<40xf32>
    %119 = vector.shape_cast %118 : vector<40xf32> to vector<1x40xf32>
    %cst_72 = arith.constant 0.001953125 : f32
    %120 = vector.broadcast %cst_72 : f32 to vector<1x40xf32>
    %121 = arith.mulf %119, %120 : vector<1x40xf32>
    %122 = arith.mulf %115, %115 : vector<512x40xf32>
    %cst_73 = arith.constant dense<0.000000e+00> : vector<40xf32>
    %123 = vector.multi_reduction <add>, %122, %cst_73 [0] : vector<512x40xf32> to vector<40xf32>
    %124 = vector.shape_cast %123 : vector<40xf32> to vector<1x40xf32>
    %cst_74 = arith.constant 0.001953125 : f32
    %125 = vector.broadcast %cst_74 : f32 to vector<1x40xf32>
    %126 = arith.mulf %124, %125 : vector<1x40xf32>
    %127 = arith.mulf %121, %121 : vector<1x40xf32>
    %128 = arith.subf %126, %127 : vector<1x40xf32>
    %cst_75 = arith.constant 0.000000e+00 : f32
    %129 = vector.broadcast %cst_75 : f32 to vector<1x40xf32>
    %130 = arith.maximumf %128, %129 : vector<1x40xf32>
    %cst_76 = arith.constant 9.99999974E-6 : f32
    %131 = vector.broadcast %cst_76 : f32 to vector<1x40xf32>
    %132 = arith.addf %130, %131 : vector<1x40xf32>
    %133 = math.rsqrt %132 : vector<1x40xf32>
    %134 = arith.mulf %116, %133 : vector<1x40xf32>
    %135 = arith.mulf %121, %134 : vector<1x40xf32>
    %136 = arith.subf %117, %135 : vector<1x40xf32>
    %137 = vector.broadcast %134 : vector<1x40xf32> to vector<512x40xf32>
    %138 = arith.mulf %115, %137 : vector<512x40xf32>
    %139 = vector.broadcast %136 : vector<1x40xf32> to vector<512x40xf32>
    %140 = arith.addf %138, %139 : vector<512x40xf32>
    %cst_77 = arith.constant 0.000000e+00 : f32
    %141 = vector.broadcast %cst_77 : f32 to vector<512x40xf32>
    %142 = arith.maximumf %140, %141 : vector<512x40xf32>
    %143 = vector.extract_strided_slice %48 {offsets = [0, 64], sizes = [512, 24], strides = [1, 1]} : vector<512x88xf32> to vector<512x24xf32>
    %c0_78 = arith.constant 0 : index
    %c0_79 = arith.constant 0 : index
    %144 = vector.load %arg14[%c0_78, %c0_79] : memref<512x64xf32, #tpu.memory_space<vmem>>, vector<512x24xf32>
    tpu.vector_store %arg14[%c0_78, %c0_79], %143 {strides = array<i32>} : memref<512x64xf32, #tpu.memory_space<vmem>>, vector<512x24xf32>,
    %c0_80 = arith.constant 0 : index
    %c24_81 = arith.constant 24 : index
    %145 = vector.load %arg14[%c0_80, %c24_81] : memref<512x64xf32, #tpu.memory_space<vmem>>, vector<512x40xf32>
    tpu.vector_store %arg14[%c0_80, %c24_81], %142 {strides = array<i32>} : memref<512x64xf32, #tpu.memory_space<vmem>>, vector<512x40xf32>,
    return
  }
}

</mosaic_0001>

<llo_original>
// kernel: mfa3_forward.1
$region0: #{mfa3_forward.1}
  #allocation0 [shape = 'u32[]', space=smem, size = 0x4, offset = 0x4, fixed_abs, tag = 'smem constant byte address 0x4 - core index']
  #allocation1 [shape = 'u32[144,128]{1,0:T(1,128)}', space=vmem, size = 0x12000, scoped, tag = 'internal scratch']
  #allocation2 [shape = 'bf16[32,32,64]{2,1,0:T(8,128)(2,1)}', space=vmem, size = 0x40000, scoped, tag = 'scratch operand']
  %s0 = inlined_call_operand.vmem [shape: bf16[2,18,18,32], index: 0, kind: input, shape index: {}]
  %s1 = inlined_call_operand.vmem [shape: bf16[32,88], index: 1, kind: input, shape index: {}]
  %s2 = inlined_call_operand.vmem [shape: bf16[32,88], index: 2, kind: input, shape index: {}]
  %s3 = inlined_call_operand.vmem [shape: f32[1,88], index: 3, kind: input, shape index: {}]
  %s4 = inlined_call_operand.vmem [shape: f32[1,88], index: 4, kind: input, shape index: {}]
  %s5 = inlined_call_operand.vmem [shape: f32[1,88], index: 5, kind: input, shape index: {}]
  %s6 = inlined_call_operand.vmem [shape: bf16[448,48], index: 6, kind: input, shape index: {}]
  %s7 = inlined_call_operand.vmem [shape: f32[1,48], index: 7, kind: input, shape index: {}]
  %s8 = inlined_call_operand.vmem [shape: f32[1,48], index: 8, kind: input, shape index: {}]
  %s9 = inlined_call_operand.vmem [shape: f32[1,48], index: 9, kind: input, shape index: {}]
  %s10 = inlined_call_operand.vmem [shape: bf16[336,40], index: 10, kind: input, shape index: {}]
  %s11 = inlined_call_operand.vmem [shape: f32[1,40], index: 11, kind: input, shape index: {}]
  %s12 = inlined_call_operand.vmem [shape: f32[1,40], index: 12, kind: input, shape index: {}]
  %s13 = inlined_call_operand.vmem [shape: f32[1,40], index: 13, kind: input, shape index: {}]
  %s14 = inlined_call_operand.hbm [shape: f32[512,64], index: 14, kind: output, shape index: {}]
  %s15 = sld [smem:[#allocation0]]
  $region66: #{mfa3_forward.1} parent=0
    _
  %s17 = ssub.s32 1, %s15
  %s18 = scalar_select 0, %s17, %s15
  $region1: #{mfa3_forward.1} parent=0
    #allocation3 [shape = 'u8[262144]{0}', space=vmem, size = 0x40000, scoped, tag = 'output window, operand 0, single buffered']
    #allocation4 [shape = 's32[1]{0}', space=sflag, size = 0x4, scoped, tag = 'scoped memory for mfa3_forward.1']
    %19 = vsyncpa [#allocation4], 0
    // Predicated region
    $region2: #{mfa3_forward.1} parent=1 // pred_check
      _
    $region3: #{mfa3_forward.1} parent=1 // pred_check_branch
      %21 = sbr.rel (0) target = $region5
    $region4: #{mfa3_forward.1} parent=1 // pred_region
      _
    $region5: #{mfa3_forward.1} parent=1 // pred_fallthru
      _
    // Predicated region
    $region6: #{mfa3_forward.1} parent=1 // pred_check
      _
    $region7: #{mfa3_forward.1} parent=1 // pred_check_branch
      %23 = sbr.rel (0) target = $region9
    $region8: #{mfa3_forward.1} parent=1 // pred_region
      _
    $region9: #{mfa3_forward.1} parent=1 // pred_fallthru
      _
    // Predicated region
    $region10: #{mfa3_forward.1} parent=1 // pred_check
      _
    $region11: #{mfa3_forward.1} parent=1 // pred_check_branch
      %25 = sbr.rel (0) target = $region13
    $region12: #{mfa3_forward.1} parent=1 // pred_region
      _
    $region13: #{mfa3_forward.1} parent=1 // pred_fallthru
      _
    // Predicated region
    $region14: #{mfa3_forward.1} parent=1 // pred_check
      _
    $region15: #{mfa3_forward.1} parent=1 // pred_check_branch
      %27 = sbr.rel (0) target = $region17
    $region16: #{mfa3_forward.1} parent=1 // pred_region
      _
    $region17: #{mfa3_forward.1} parent=1 // pred_fallthru
      _
    // Predicated region
    $region18: #{mfa3_forward.1} parent=1 // pred_check
      _
    $region19: #{mfa3_forward.1} parent=1 // pred_check_branch
      %29 = sbr.rel (0) target = $region21
    $region20: #{mfa3_forward.1} parent=1 // pred_region
      _
    $region21: #{mfa3_forward.1} parent=1 // pred_fallthru
      _
    // Predicated region
    $region22: #{mfa3_forward.1} parent=1 // pred_check
      _
    $region23: #{mfa3_forward.1} parent=1 // pred_check_branch
      %31 = sbr.rel (0) target = $region25
    $region24: #{mfa3_forward.1} parent=1 // pred_region
      _
    $region25: #{mfa3_forward.1} parent=1 // pred_fallthru
      _
    // Predicated region
    $region26: #{mfa3_forward.1} parent=1 // pred_check
      _
    $region27: #{mfa3_forward.1} parent=1 // pred_check_branch
      %33 = sbr.rel (0) target = $region29
    $region28: #{mfa3_forward.1} parent=1 // pred_region
      _
    $region29: #{mfa3_forward.1} parent=1 // pred_fallthru
      _
    // Predicated region
    $region30: #{mfa3_forward.1} parent=1 // pred_check
      _
    $region31: #{mfa3_forward.1} parent=1 // pred_check_branch
      %35 = sbr.rel (0) target = $region33
    $region32: #{mfa3_forward.1} parent=1 // pred_region
      _
    $region33: #{mfa3_forward.1} parent=1 // pred_fallthru
      _
    // Predicated region
    $region34: #{mfa3_forward.1} parent=1 // pred_check
      _
    $region35: #{mfa3_forward.1} parent=1 // pred_check_branch
      %37 = sbr.rel (0) target = $region37
    $region36: #{mfa3_forward.1} parent=1 // pred_region
      _
    $region37: #{mfa3_forward.1} parent=1 // pred_fallthru
      _
    // Predicated region
    $region38: #{mfa3_forward.1} parent=1 // pred_check
      _
    $region39: #{mfa3_forward.1} parent=1 // pred_check_branch
      %39 = sbr.rel (0) target = $region41
    $region40: #{mfa3_forward.1} parent=1 // pred_region
      _
    $region41: #{mfa3_forward.1} parent=1 // pred_fallthru
      _
    // Predicated region
    $region42: #{mfa3_forward.1} parent=1 // pred_check
      _
    $region43: #{mfa3_forward.1} parent=1 // pred_check_branch
      %41 = sbr.rel (0) target = $region45
    $region44: #{mfa3_forward.1} parent=1 // pred_region
      _
    $region45: #{mfa3_forward.1} parent=1 // pred_fallthru
      _
    // Predicated region
    $region46: #{mfa3_forward.1} parent=1 // pred_check
      _
    $region47: #{mfa3_forward.1} parent=1 // pred_check_branch
      %43 = sbr.rel (0) target = $region49
    $region48: #{mfa3_forward.1} parent=1 // pred_region
      _
    $region49: #{mfa3_forward.1} parent=1 // pred_fallthru
      _
    // Predicated region
    $region50: #{mfa3_forward.1} parent=1 // pred_check
      _
    $region51: #{mfa3_forward.1} parent=1 // pred_check_branch
      %45 = sbr.rel (0) target = $region53
    $region52: #{mfa3_forward.1} parent=1 // pred_region
      _
    $region53: #{mfa3_forward.1} parent=1 // pred_fallthru
      _
    // Predicated region
    $region54: #{mfa3_forward.1} parent=1 // pred_check
      _
    $region55: #{mfa3_forward.1} parent=1 // pred_check_branch
      %47 = sbr.rel (0) target = $region57
    $region56: #{mfa3_forward.1} parent=1 // pred_region
      _
    $region57: #{mfa3_forward.1} parent=1 // pred_fallthru
      _
    %v49 = vld [vmem:[%s0] sm:$0xf]
    %v50 = vld [vmem:[%s0 + $0x4] sm:$0xf]
    %v51 = vld [vmem:[%s0 + $0x8] sm:$0x1]
    %v52 = vld [vmem:[%s0 + $0xc] sm:$0xf]
    %v53 = vld [vmem:[%s0 + $0x10] sm:$0xf]
    %v54 = vld [vmem:[%s0 + $0x14] sm:$0x1]
    %v55 = vld [vmem:[%s0 + $0x18] sm:$0xf]
    %v56 = vld [vmem:[%s0 + $0x1c] sm:$0xf]
    %v57 = vld [vmem:[%s0 + $0x20] sm:$0x1]
    %v58 = vld [vmem:[%s0 + $0x24] sm:$0xf]
    %v59 = vld [vmem:[%s0 + $0x28] sm:$0xf]
    %v60 = vld [vmem:[%s0 + $0x2c] sm:$0x1]
    %v61 = vld [vmem:[%s0 + $0x30] sm:$0xf]
    %v62 = vld [vmem:[%s0 + $0x34] sm:$0xf]
    %v63 = vld [vmem:[%s0 + $0x38] sm:$0x1]
    %v64 = vld [vmem:[%s0 + $0x3c] sm:$0xf]
    %v65 = vld [vmem:[%s0 + $0x40] sm:$0xf]
    %v66 = vld [vmem:[%s0 + $0x44] sm:$0x1]
    %v67 = vld [vmem:[%s0 + $0x48] sm:$0xf]
    %v68 = vld [vmem:[%s0 + $0x4c] sm:$0xf]
    %v69 = vld [vmem:[%s0 + $0x50] sm:$0x1]
    %v70 = vld [vmem:[%s0 + $0x54] sm:$0xf]
    %v71 = vld [vmem:[%s0 + $0x58] sm:$0xf]
    %v72 = vld [vmem:[%s0 + $0x5c] sm:$0x1]
    %v73 = vld [vmem:[%s0 + $0x60] sm:$0xf]
    %v74 = vld [vmem:[%s0 + $0x64] sm:$0xf]
    %v75 = vld [vmem:[%s0 + $0x68] sm:$0x1]
    %v76 = vld [vmem:[%s0 + $0x6c] sm:$0xf]
    %v77 = vld [vmem:[%s0 + $0x70] sm:$0xf]
    %v78 = vld [vmem:[%s0 + $0x74] sm:$0x1]
    %v79 = vld [vmem:[%s0 + $0x78] sm:$0xf]
    %v80 = vld [vmem:[%s0 + $0x7c] sm:$0xf]
    %v81 = vld [vmem:[%s0 + $0x80] sm:$0x1]
    %v82 = vld [vmem:[%s0 + $0x84] sm:$0xf]
    %v83 = vld [vmem:[%s0 + $0x88] sm:$0xf]
    %v84 = vld [vmem:[%s0 + $0x8c] sm:$0x1]
    %v85 = vld [vmem:[%s0 + $0x90] sm:$0xf]
    %v86 = vld [vmem:[%s0 + $0x94] sm:$0xf]
    %v87 = vld [vmem:[%s0 + $0x98] sm:$0x1]
    %v88 = vld [vmem:[%s0 + $0x9c] sm:$0xf]
    %v89 = vld [vmem:[%s0 + $0xa0] sm:$0xf]
    %v90 = vld [vmem:[%s0 + $0xa4] sm:$0x1]
    %v91 = vld [vmem:[%s0 + $0xa8] sm:$0xf]
    %v92 = vld [vmem:[%s0 + $0xac] sm:$0xf]
    %v93 = vld [vmem:[%s0 + $0xb0] sm:$0x1]
    %v94 = vld [vmem:[%s0 + $0xb4] sm:$0xf]
    %v95 = vld [vmem:[%s0 + $0xb8] sm:$0xf]
    %v96 = vld [vmem:[%s0 + $0xbc] sm:$0x1]
    %v97 = vld [vmem:[%s0 + $0xc0] sm:$0xf]
    %v98 = vld [vmem:[%s0 + $0xc4] sm:$0xf]
    %v99 = vld [vmem:[%s0 + $0xc8] sm:$0x1]
    %v100 = vld [vmem:[%s0 + $0xcc] sm:$0xf]
    %v101 = vld [vmem:[%s0 + $0xd0] sm:$0xf]
    %v102 = vld [vmem:[%s0 + $0xd4] sm:$0x1]
    %v103 = vld [vmem:[%s0 + $0xd8] sm:$0xf]
    %v104 = vld [vmem:[%s0 + $0xdc] sm:$0xf]
    %v105 = vld [vmem:[%s0 + $0xe0] sm:$0x1]
    %v106 = vld [vmem:[%s0 + $0xe4] sm:$0xf]
    %v107 = vld [vmem:[%s0 + $0xe8] sm:$0xf]
    %v108 = vld [vmem:[%s0 + $0xec] sm:$0x1]
    %v109 = vld [vmem:[%s0 + $0xf0] sm:$0xf]
    %v110 = vld [vmem:[%s0 + $0xf4] sm:$0xf]
    %v111 = vld [vmem:[%s0 + $0xf8] sm:$0x1]
    %v112 = vld [vmem:[%s0 + $0xfc] sm:$0xf]
    %v113 = vld [vmem:[%s0 + $0x100] sm:$0xf]
    %v114 = vld [vmem:[%s0 + $0x104] sm:$0x1]
    %v115 = vld [vmem:[%s0 + $0x108] sm:$0xf]
    %v116 = vld [vmem:[%s0 + $0x10c] sm:$0xf]
    %v117 = vld [vmem:[%s0 + $0x110] sm:$0x1]
    %v118 = vld [vmem:[%s0 + $0x114] sm:$0xf]
    %v119 = vld [vmem:[%s0 + $0x118] sm:$0xf]
    %v120 = vld [vmem:[%s0 + $0x11c] sm:$0x1]
    %v121 = vld [vmem:[%s0 + $0x120] sm:$0xf]
    %v122 = vld [vmem:[%s0 + $0x124] sm:$0xf]
    %v123 = vld [vmem:[%s0 + $0x128] sm:$0x1]
    %v124 = vld [vmem:[%s0 + $0x12c] sm:$0xf]
    %v125 = vld [vmem:[%s0 + $0x130] sm:$0xf]
    %v126 = vld [vmem:[%s0 + $0x134] sm:$0x1]
    %v127 = vld [vmem:[%s0 + $0x138] sm:$0xf]
    %v128 = vld [vmem:[%s0 + $0x13c] sm:$0xf]
    %v129 = vld [vmem:[%s0 + $0x140] sm:$0x1]
    %v130 = vld [vmem:[%s0 + $0x144] sm:$0xf]
    %v131 = vld [vmem:[%s0 + $0x148] sm:$0xf]
    %v132 = vld [vmem:[%s0 + $0x14c] sm:$0x1]
    %v133 = vld [vmem:[%s0 + $0x150] sm:$0xf]
    %v134 = vld [vmem:[%s0 + $0x154] sm:$0xf]
    %v135 = vld [vmem:[%s0 + $0x158] sm:$0x1]
    %v136 = vld [vmem:[%s0 + $0x15c] sm:$0xf]
    %v137 = vld [vmem:[%s0 + $0x160] sm:$0xf]
    %v138 = vld [vmem:[%s0 + $0x164] sm:$0x1]
    %v139 = vld [vmem:[%s0 + $0x168] sm:$0xf]
    %v140 = vld [vmem:[%s0 + $0x16c] sm:$0xf]
    %v141 = vld [vmem:[%s0 + $0x170] sm:$0x1]
    %v142 = vld [vmem:[%s0 + $0x174] sm:$0xf]
    %v143 = vld [vmem:[%s0 + $0x178] sm:$0xf]
    %v144 = vld [vmem:[%s0 + $0x17c] sm:$0x1]
    %v145 = vld [vmem:[%s0 + $0x180] sm:$0xf]
    %v146 = vld [vmem:[%s0 + $0x184] sm:$0xf]
    %v147 = vld [vmem:[%s0 + $0x188] sm:$0x1]
    %v148 = vld [vmem:[%s0 + $0x18c] sm:$0xf]
    %v149 = vld [vmem:[%s0 + $0x190] sm:$0xf]
    %v150 = vld [vmem:[%s0 + $0x194] sm:$0x1]
    %v151 = vld [vmem:[%s0 + $0x198] sm:$0xf]
    %v152 = vld [vmem:[%s0 + $0x19c] sm:$0xf]
    %v153 = vld [vmem:[%s0 + $0x1a0] sm:$0x1]
    %v154 = vld [vmem:[%s0 + $0x1a4] sm:$0xf]
    %v155 = vld [vmem:[%s0 + $0x1a8] sm:$0xf]
    %v156 = vld [vmem:[%s0 + $0x1ac] sm:$0x1]
    %vm157 = vsmask.f32 3328
    %vm158 = vsmask.f32 7440
    %vm159 = vmor %vm157, %vm158
    %v161 = vshrl.u32 %v49, 16
    %v163 = vrot.slane %v161, 4
    %v164 = vshll.u32 %v49, 16
    %v166 = vrot.slane %v164, 5
    %v167 = vor.u32 %v163, %v166
    %v168 = vrot.slane %v167, 4
    %v170 = vshll.u32 %v50, 16
    %v172 = vrot.slane %v170, 5
    %v173 = vsel %vm159, %v168, %v172
    %v174 = vshrl.u32 %v50, 16
    %v176 = vrot.slane %v174, 4
    %v177 = vor.u32 %v176, %v172
    %v178 = vrot.slane %v177, 4
    %v180 = vshll.u32 %v51, 16
    %v182 = vrot.slane %v180, 5
    %v183 = vsel %vm159, %v178, %v182
    %v185 = vshrl.u32 %v52, 16
    %v187 = vrot.slane %v185, 4
    %v188 = vshll.u32 %v52, 16
    %v190 = vrot.slane %v188, 5
    %v191 = vor.u32 %v187, %v190
    %v192 = vrot.slane %v191, 4
    %v194 = vshll.u32 %v53, 16
    %v196 = vrot.slane %v194, 5
    %v197 = vsel %vm159, %v192, %v196
    %v198 = vshrl.u32 %v53, 16
    %v200 = vrot.slane %v198, 4
    %v201 = vor.u32 %v200, %v196
    %v202 = vrot.slane %v201, 4
    %v204 = vshll.u32 %v54, 16
    %v206 = vrot.slane %v204, 5
    %v207 = vsel %vm159, %v202, %v206
    %v209 = vshrl.u32 %v55, 16
    %v211 = vrot.slane %v209, 4
    %v212 = vshll.u32 %v55, 16
    %v214 = vrot.slane %v212, 5
    %v215 = vor.u32 %v211, %v214
    %v216 = vrot.slane %v215, 4
    %v218 = vshll.u32 %v56, 16
    %v220 = vrot.slane %v218, 5
    %v221 = vsel %vm159, %v216, %v220
    %v222 = vshrl.u32 %v56, 16
    %v224 = vrot.slane %v222, 4
    %v225 = vor.u32 %v224, %v220
    %v226 = vrot.slane %v225, 4
    %v228 = vshll.u32 %v57, 16
    %v230 = vrot.slane %v228, 5
    %v231 = vsel %vm159, %v226, %v230
    %v233 = vshrl.u32 %v58, 16
    %v235 = vrot.slane %v233, 4
    %v236 = vshll.u32 %v58, 16
    %v238 = vrot.slane %v236, 5
    %v239 = vor.u32 %v235, %v238
    %v240 = vrot.slane %v239, 4
    %v242 = vshll.u32 %v59, 16
    %v244 = vrot.slane %v242, 5
    %v245 = vsel %vm159, %v240, %v244
    %v246 = vshrl.u32 %v59, 16
    %v248 = vrot.slane %v246, 4
    %v249 = vor.u32 %v248, %v244
    %v250 = vrot.slane %v249, 4
    %v252 = vshll.u32 %v60, 16
    %v254 = vrot.slane %v252, 5
    %v255 = vsel %vm159, %v250, %v254
    %v257 = vshrl.u32 %v61, 16
    %v259 = vrot.slane %v257, 4
    %v260 = vshll.u32 %v61, 16
    %v262 = vrot.slane %v260, 5
    %v263 = vor.u32 %v259, %v262
    %v264 = vrot.slane %v263, 4
    %v266 = vshll.u32 %v62, 16
    %v268 = vrot.slane %v266, 5
    %v269 = vsel %vm159, %v264, %v268
    %v270 = vshrl.u32 %v62, 16
    %v272 = vrot.slane %v270, 4
    %v273 = vor.u32 %v272, %v268
    %v274 = vrot.slane %v273, 4
    %v276 = vshll.u32 %v63, 16
    %v278 = vrot.slane %v276, 5
    %v279 = vsel %vm159, %v274, %v278
    %v281 = vshrl.u32 %v64, 16
    %v283 = vrot.slane %v281, 4
    %v284 = vshll.u32 %v64, 16
    %v286 = vrot.slane %v284, 5
    %v287 = vor.u32 %v283, %v286
    %v288 = vrot.slane %v287, 4
    %v290 = vshll.u32 %v65, 16
    %v292 = vrot.slane %v290, 5
    %v293 = vsel %vm159, %v288, %v292
    %v294 = vshrl.u32 %v65, 16
    %v296 = vrot.slane %v294, 4
    %v297 = vor.u32 %v296, %v292
    %v298 = vrot.slane %v297, 4
    %v300 = vshll.u32 %v66, 16
    %v302 = vrot.slane %v300, 5
    %v303 = vsel %vm159, %v298, %v302
    %v305 = vshrl.u32 %v67, 16
    %v307 = vrot.slane %v305, 4
    %v308 = vshll.u32 %v67, 16
    %v310 = vrot.slane %v308, 5
    %v311 = vor.u32 %v307, %v310
    %v312 = vrot.slane %v311, 4
    %v314 = vshll.u32 %v68, 16
    %v316 = vrot.slane %v314, 5
    %v317 = vsel %vm159, %v312, %v316
    %v318 = vshrl.u32 %v68, 16
    %v320 = vrot.slane %v318, 4
    %v321 = vor.u32 %v320, %v316
    %v322 = vrot.slane %v321, 4
    %v324 = vshll.u32 %v69, 16
    %v326 = vrot.slane %v324, 5
    %v327 = vsel %vm159, %v322, %v326
    %v329 = vshrl.u32 %v70, 16
    %v331 = vrot.slane %v329, 4
    %v332 = vshll.u32 %v70, 16
    %v334 = vrot.slane %v332, 5
    %v335 = vor.u32 %v331, %v334
    %v336 = vrot.slane %v335, 4
    %v338 = vshll.u32 %v71, 16
    %v340 = vrot.slane %v338, 5
    %v341 = vsel %vm159, %v336, %v340
    %v342 = vshrl.u32 %v71, 16
    %v344 = vrot.slane %v342, 4
    %v345 = vor.u32 %v344, %v340
    %v346 = vrot.slane %v345, 4
    %v348 = vshll.u32 %v72, 16
    %v350 = vrot.slane %v348, 5
    %v351 = vsel %vm159, %v346, %v350
    %v353 = vshrl.u32 %v73, 16
    %v355 = vrot.slane %v353, 4
    %v356 = vshll.u32 %v73, 16
    %v358 = vrot.slane %v356, 5
    %v359 = vor.u32 %v355, %v358
    %v360 = vrot.slane %v359, 4
    %v362 = vshll.u32 %v74, 16
    %v364 = vrot.slane %v362, 5
    %v365 = vsel %vm159, %v360, %v364
    %v366 = vshrl.u32 %v74, 16
    %v368 = vrot.slane %v366, 4
    %v369 = vor.u32 %v368, %v364
    %v370 = vrot.slane %v369, 4
    %v372 = vshll.u32 %v75, 16
    %v374 = vrot.slane %v372, 5
    %v375 = vsel %vm159, %v370, %v374
    %v377 = vshrl.u32 %v76, 16
    %v379 = vrot.slane %v377, 4
    %v380 = vshll.u32 %v76, 16
    %v382 = vrot.slane %v380, 5
    %v383 = vor.u32 %v379, %v382
    %v384 = vrot.slane %v383, 4
    %v386 = vshll.u32 %v77, 16
    %v388 = vrot.slane %v386, 5
    %v389 = vsel %vm159, %v384, %v388
    %v390 = vshrl.u32 %v77, 16
    %v392 = vrot.slane %v390, 4
    %v393 = vor.u32 %v392, %v388
    %v394 = vrot.slane %v393, 4
    %v396 = vshll.u32 %v78, 16
    %v398 = vrot.slane %v396, 5
    %v399 = vsel %vm159, %v394, %v398
    %v401 = vshrl.u32 %v79, 16
    %v403 = vrot.slane %v401, 4
    %v404 = vshll.u32 %v79, 16
    %v406 = vrot.slane %v404, 5
    %v407 = vor.u32 %v403, %v406
    %v408 = vrot.slane %v407, 4
    %v410 = vshll.u32 %v80, 16
    %v412 = vrot.slane %v410, 5
    %v413 = vsel %vm159, %v408, %v412
    %v414 = vshrl.u32 %v80, 16
    %v416 = vrot.slane %v414, 4
    %v417 = vor.u32 %v416, %v412
    %v418 = vrot.slane %v417, 4
    %v420 = vshll.u32 %v81, 16
    %v422 = vrot.slane %v420, 5
    %v423 = vsel %vm159, %v418, %v422
    %v425 = vshrl.u32 %v82, 16
    %v427 = vrot.slane %v425, 4
    %v428 = vshll.u32 %v82, 16
    %v430 = vrot.slane %v428, 5
    %v431 = vor.u32 %v427, %v430
    %v432 = vrot.slane %v431, 4
    %v434 = vshll.u32 %v83, 16
    %v436 = vrot.slane %v434, 5
    %v437 = vsel %vm159, %v432, %v436
    %v438 = vshrl.u32 %v83, 16
    %v440 = vrot.slane %v438, 4
    %v441 = vor.u32 %v440, %v436
    %v442 = vrot.slane %v441, 4
    %v444 = vshll.u32 %v84, 16
    %v446 = vrot.slane %v444, 5
    %v447 = vsel %vm159, %v442, %v446
    %v449 = vshrl.u32 %v85, 16
    %v451 = vrot.slane %v449, 4
    %v452 = vshll.u32 %v85, 16
    %v454 = vrot.slane %v452, 5
    %v455 = vor.u32 %v451, %v454
    %v456 = vrot.slane %v455, 4
    %v458 = vshll.u32 %v86, 16
    %v460 = vrot.slane %v458, 5
    %v461 = vsel %vm159, %v456, %v460
    %v462 = vshrl.u32 %v86, 16
    %v464 = vrot.slane %v462, 4
    %v465 = vor.u32 %v464, %v460
    %v466 = vrot.slane %v465, 4
    %v468 = vshll.u32 %v87, 16
    %v470 = vrot.slane %v468, 5
    %v471 = vsel %vm159, %v466, %v470
    %v473 = vshrl.u32 %v88, 16
    %v475 = vrot.slane %v473, 4
    %v476 = vshll.u32 %v88, 16
    %v478 = vrot.slane %v476, 5
    %v479 = vor.u32 %v475, %v478
    %v480 = vrot.slane %v479, 4
    %v482 = vshll.u32 %v89, 16
    %v484 = vrot.slane %v482, 5
    %v485 = vsel %vm159, %v480, %v484
    %v486 = vshrl.u32 %v89, 16
    %v488 = vrot.slane %v486, 4
    %v489 = vor.u32 %v488, %v484
    %v490 = vrot.slane %v489, 4
    %v492 = vshll.u32 %v90, 16
    %v494 = vrot.slane %v492, 5
    %v495 = vsel %vm159, %v490, %v494
    %v497 = vshrl.u32 %v91, 16
    %v499 = vrot.slane %v497, 4
    %v500 = vshll.u32 %v91, 16
    %v502 = vrot.slane %v500, 5
    %v503 = vor.u32 %v499, %v502
    %v504 = vrot.slane %v503, 4
    %v506 = vshll.u32 %v92, 16
    %v508 = vrot.slane %v506, 5
    %v509 = vsel %vm159, %v504, %v508
    %v510 = vshrl.u32 %v92, 16
    %v512 = vrot.slane %v510, 4
    %v513 = vor.u32 %v512, %v508
    %v514 = vrot.slane %v513, 4
    %v516 = vshll.u32 %v93, 16
    %v518 = vrot.slane %v516, 5
    %v519 = vsel %vm159, %v514, %v518
    %v521 = vshrl.u32 %v94, 16
    %v523 = vrot.slane %v521, 4
    %v524 = vshll.u32 %v94, 16
    %v526 = vrot.slane %v524, 5
    %v527 = vor.u32 %v523, %v526
    %v528 = vrot.slane %v527, 4
    %v530 = vshll.u32 %v95, 16
    %v532 = vrot.slane %v530, 5
    %v533 = vsel %vm159, %v528, %v532
    %v534 = vshrl.u32 %v95, 16
    %v536 = vrot.slane %v534, 4
    %v537 = vor.u32 %v536, %v532
    %v538 = vrot.slane %v537, 4
    %v540 = vshll.u32 %v96, 16
    %v542 = vrot.slane %v540, 5
    %v543 = vsel %vm159, %v538, %v542
    %v545 = vshrl.u32 %v97, 16
    %v547 = vrot.slane %v545, 4
    %v548 = vshll.u32 %v97, 16
    %v550 = vrot.slane %v548, 5
    %v551 = vor.u32 %v547, %v550
    %v552 = vrot.slane %v551, 4
    %v554 = vshll.u32 %v98, 16
    %v556 = vrot.slane %v554, 5
    %v557 = vsel %vm159, %v552, %v556
    %v558 = vshrl.u32 %v98, 16
    %v560 = vrot.slane %v558, 4
    %v561 = vor.u32 %v560, %v556
    %v562 = vrot.slane %v561, 4
    %v564 = vshll.u32 %v99, 16
    %v566 = vrot.slane %v564, 5
    %v567 = vsel %vm159, %v562, %v566
    %v569 = vshrl.u32 %v100, 16
    %v571 = vrot.slane %v569, 4
    %v572 = vshll.u32 %v100, 16
    %v574 = vrot.slane %v572, 5
    %v575 = vor.u32 %v571, %v574
    %v576 = vrot.slane %v575, 4
    %v578 = vshll.u32 %v101, 16
    %v580 = vrot.slane %v578, 5
    %v581 = vsel %vm159, %v576, %v580
    %v582 = vshrl.u32 %v101, 16
    %v584 = vrot.slane %v582, 4
    %v585 = vor.u32 %v584, %v580
    %v586 = vrot.slane %v585, 4
    %v588 = vshll.u32 %v102, 16
    %v590 = vrot.slane %v588, 5
    %v591 = vsel %vm159, %v586, %v590
    %v593 = vshrl.u32 %v103, 16
    %v595 = vrot.slane %v593, 4
    %v596 = vshll.u32 %v103, 16
    %v598 = vrot.slane %v596, 5
    %v599 = vor.u32 %v595, %v598
    %v600 = vrot.slane %v599, 4
    %v602 = vshll.u32 %v104, 16
    %v604 = vrot.slane %v602, 5
    %v605 = vsel %vm159, %v600, %v604
    %v606 = vshrl.u32 %v104, 16
    %v608 = vrot.slane %v606, 4
    %v609 = vor.u32 %v608, %v604
    %v610 = vrot.slane %v609, 4
    %v612 = vshll.u32 %v105, 16
    %v614 = vrot.slane %v612, 5
    %v615 = vsel %vm159, %v610, %v614
    %v617 = vshrl.u32 %v106, 16
    %v619 = vrot.slane %v617, 4
    %v620 = vshll.u32 %v106, 16
    %v622 = vrot.slane %v620, 5
    %v623 = vor.u32 %v619, %v622
    %v624 = vrot.slane %v623, 4
    %v626 = vshll.u32 %v107, 16
    %v628 = vrot.slane %v626, 5
    %v629 = vsel %vm159, %v624, %v628
    %v630 = vshrl.u32 %v107, 16
    %v632 = vrot.slane %v630, 4
    %v633 = vor.u32 %v632, %v628
    %v634 = vrot.slane %v633, 4
    %v636 = vshll.u32 %v108, 16
    %v638 = vrot.slane %v636, 5
    %v639 = vsel %vm159, %v634, %v638
    %v641 = vshrl.u32 %v109, 16
    %v643 = vrot.slane %v641, 4
    %v644 = vshll.u32 %v109, 16
    %v646 = vrot.slane %v644, 5
    %v647 = vor.u32 %v643, %v646
    %v648 = vrot.slane %v647, 4
    %v650 = vshll.u32 %v110, 16
    %v652 = vrot.slane %v650, 5
    %v653 = vsel %vm159, %v648, %v652
    %v654 = vshrl.u32 %v110, 16
    %v656 = vrot.slane %v654, 4
    %v657 = vor.u32 %v656, %v652
    %v658 = vrot.slane %v657, 4
    %v660 = vshll.u32 %v111, 16
    %v662 = vrot.slane %v660, 5
    %v663 = vsel %vm159, %v658, %v662
    %v665 = vshrl.u32 %v112, 16
    %v667 = vrot.slane %v665, 4
    %v668 = vshll.u32 %v112, 16
    %v670 = vrot.slane %v668, 5
    %v671 = vor.u32 %v667, %v670
    %v672 = vrot.slane %v671, 4
    %v674 = vshll.u32 %v113, 16
    %v676 = vrot.slane %v674, 5
    %v677 = vsel %vm159, %v672, %v676
    %v678 = vshrl.u32 %v113, 16
    %v680 = vrot.slane %v678, 4
    %v681 = vor.u32 %v680, %v676
    %v682 = vrot.slane %v681, 4
    %v684 = vshll.u32 %v114, 16
    %v686 = vrot.slane %v684, 5
    %v687 = vsel %vm159, %v682, %v686
    %v689 = vshrl.u32 %v115, 16
    %v691 = vrot.slane %v689, 4
    %v692 = vshll.u32 %v115, 16
    %v694 = vrot.slane %v692, 5
    %v695 = vor.u32 %v691, %v694
    %v696 = vrot.slane %v695, 4
    %v698 = vshll.u32 %v116, 16
    %v700 = vrot.slane %v698, 5
    %v701 = vsel %vm159, %v696, %v700
    %v702 = vshrl.u32 %v116, 16
    %v704 = vrot.slane %v702, 4
    %v705 = vor.u32 %v704, %v700
    %v706 = vrot.slane %v705, 4
    %v708 = vshll.u32 %v117, 16
    %v710 = vrot.slane %v708, 5
    %v711 = vsel %vm159, %v706, %v710
    %v713 = vshrl.u32 %v118, 16
    %v715 = vrot.slane %v713, 4
    %v716 = vshll.u32 %v118, 16
    %v718 = vrot.slane %v716, 5
    %v719 = vor.u32 %v715, %v718
    %v720 = vrot.slane %v719, 4
    %v722 = vshll.u32 %v119, 16
    %v724 = vrot.slane %v722, 5
    %v725 = vsel %vm159, %v720, %v724
    %v726 = vshrl.u32 %v119, 16
    %v728 = vrot.slane %v726, 4
    %v729 = vor.u32 %v728, %v724
    %v730 = vrot.slane %v729, 4
    %v732 = vshll.u32 %v120, 16
    %v734 = vrot.slane %v732, 5
    %v735 = vsel %vm159, %v730, %v734
    %v737 = vshrl.u32 %v121, 16
    %v739 = vrot.slane %v737, 4
    %v740 = vshll.u32 %v121, 16
    %v742 = vrot.slane %v740, 5
    %v743 = vor.u32 %v739, %v742
    %v744 = vrot.slane %v743, 4
    %v746 = vshll.u32 %v122, 16
    %v748 = vrot.slane %v746, 5
    %v749 = vsel %vm159, %v744, %v748
    %v750 = vshrl.u32 %v122, 16
    %v752 = vrot.slane %v750, 4
    %v753 = vor.u32 %v752, %v748
    %v754 = vrot.slane %v753, 4
    %v756 = vshll.u32 %v123, 16
    %v758 = vrot.slane %v756, 5
    %v759 = vsel %vm159, %v754, %v758
    %v761 = vshrl.u32 %v124, 16
    %v763 = vrot.slane %v761, 4
    %v764 = vshll.u32 %v124, 16
    %v766 = vrot.slane %v764, 5
    %v767 = vor.u32 %v763, %v766
    %v768 = vrot.slane %v767, 4
    %v770 = vshll.u32 %v125, 16
    %v772 = vrot.slane %v770, 5
    %v773 = vsel %vm159, %v768, %v772
    %v774 = vshrl.u32 %v125, 16
    %v776 = vrot.slane %v774, 4
    %v777 = vor.u32 %v776, %v772
    %v778 = vrot.slane %v777, 4
    %v780 = vshll.u32 %v126, 16
    %v782 = vrot.slane %v780, 5
    %v783 = vsel %vm159, %v778, %v782
    %v785 = vshrl.u32 %v127, 16
    %v787 = vrot.slane %v785, 4
    %v788 = vshll.u32 %v127, 16
    %v790 = vrot.slane %v788, 5
    %v791 = vor.u32 %v787, %v790
    %v792 = vrot.slane %v791, 4
    %v794 = vshll.u32 %v128, 16
    %v796 = vrot.slane %v794, 5
    %v797 = vsel %vm159, %v792, %v796
    %v798 = vshrl.u32 %v128, 16
    %v800 = vrot.slane %v798, 4
    %v801 = vor.u32 %v800, %v796
    %v802 = vrot.slane %v801, 4
    %v804 = vshll.u32 %v129, 16
    %v806 = vrot.slane %v804, 5
    %v807 = vsel %vm159, %v802, %v806
    %v809 = vshrl.u32 %v130, 16
    %v811 = vrot.slane %v809, 4
    %v812 = vshll.u32 %v130, 16
    %v814 = vrot.slane %v812, 5
    %v815 = vor.u32 %v811, %v814
    %v816 = vrot.slane %v815, 4
    %v818 = vshll.u32 %v131, 16
    %v820 = vrot.slane %v818, 5
    %v821 = vsel %vm159, %v816, %v820
    %v822 = vshrl.u32 %v131, 16
    %v824 = vrot.slane %v822, 4
    %v825 = vor.u32 %v824, %v820
    %v826 = vrot.slane %v825, 4
    %v828 = vshll.u32 %v132, 16
    %v830 = vrot.slane %v828, 5
    %v831 = vsel %vm159, %v826, %v830
    %v833 = vshrl.u32 %v133, 16
    %v835 = vrot.slane %v833, 4
    %v836 = vshll.u32 %v133, 16
    %v838 = vrot.slane %v836, 5
    %v839 = vor.u32 %v835, %v838
    %v840 = vrot.slane %v839, 4
    %v842 = vshll.u32 %v134, 16
    %v844 = vrot.slane %v842, 5
    %v845 = vsel %vm159, %v840, %v844
    %v846 = vshrl.u32 %v134, 16
    %v848 = vrot.slane %v846, 4
    %v849 = vor.u32 %v848, %v844
    %v850 = vrot.slane %v849, 4
    %v852 = vshll.u32 %v135, 16
    %v854 = vrot.slane %v852, 5
    %v855 = vsel %vm159, %v850, %v854
    %v857 = vshrl.u32 %v136, 16
    %v859 = vrot.slane %v857, 4
    %v860 = vshll.u32 %v136, 16
    %v862 = vrot.slane %v860, 5
    %v863 = vor.u32 %v859, %v862
    %v864 = vrot.slane %v863, 4
    %v866 = vshll.u32 %v137, 16
    %v868 = vrot.slane %v866, 5
    %v869 = vsel %vm159, %v864, %v868
    %v870 = vshrl.u32 %v137, 16
    %v872 = vrot.slane %v870, 4
    %v873 = vor.u32 %v872, %v868
    %v874 = vrot.slane %v873, 4
    %v876 = vshll.u32 %v138, 16
    %v878 = vrot.slane %v876, 5
    %v879 = vsel %vm159, %v874, %v878
    %v881 = vshrl.u32 %v139, 16
    %v883 = vrot.slane %v881, 4
    %v884 = vshll.u32 %v139, 16
    %v886 = vrot.slane %v884, 5
    %v887 = vor.u32 %v883, %v886
    %v888 = vrot.slane %v887, 4
    %v890 = vshll.u32 %v140, 16
    %v892 = vrot.slane %v890, 5
    %v893 = vsel %vm159, %v888, %v892
    %v894 = vshrl.u32 %v140, 16
    %v896 = vrot.slane %v894, 4
    %v897 = vor.u32 %v896, %v892
    %v898 = vrot.slane %v897, 4
    %v900 = vshll.u32 %v141, 16
    %v902 = vrot.slane %v900, 5
    %v903 = vsel %vm159, %v898, %v902
    %v905 = vshrl.u32 %v142, 16
    %v907 = vrot.slane %v905, 4
    %v908 = vshll.u32 %v142, 16
    %v910 = vrot.slane %v908, 5
    %v911 = vor.u32 %v907, %v910
    %v912 = vrot.slane %v911, 4
    %v914 = vshll.u32 %v143, 16
    %v916 = vrot.slane %v914, 5
    %v917 = vsel %vm159, %v912, %v916
    %v918 = vshrl.u32 %v143, 16
    %v920 = vrot.slane %v918, 4
    %v921 = vor.u32 %v920, %v916
    %v922 = vrot.slane %v921, 4
    %v924 = vshll.u32 %v144, 16
    %v926 = vrot.slane %v924, 5
    %v927 = vsel %vm159, %v922, %v926
    %v929 = vshrl.u32 %v145, 16
    %v931 = vrot.slane %v929, 4
    %v932 = vshll.u32 %v145, 16
    %v934 = vrot.slane %v932, 5
    %v935 = vor.u32 %v931, %v934
    %v936 = vrot.slane %v935, 4
    %v938 = vshll.u32 %v146, 16
    %v940 = vrot.slane %v938, 5
    %v941 = vsel %vm159, %v936, %v940
    %v942 = vshrl.u32 %v146, 16
    %v944 = vrot.slane %v942, 4
    %v945 = vor.u32 %v944, %v940
    %v946 = vrot.slane %v945, 4
    %v948 = vshll.u32 %v147, 16
    %v950 = vrot.slane %v948, 5
    %v951 = vsel %vm159, %v946, %v950
    %v953 = vshrl.u32 %v148, 16
    %v955 = vrot.slane %v953, 4
    %v956 = vshll.u32 %v148, 16
    %v958 = vrot.slane %v956, 5
    %v959 = vor.u32 %v955, %v958
    %v960 = vrot.slane %v959, 4
    %v962 = vshll.u32 %v149, 16
    %v964 = vrot.slane %v962, 5
    %v965 = vsel %vm159, %v960, %v964
    %v966 = vshrl.u32 %v149, 16
    %v968 = vrot.slane %v966, 4
    %v969 = vor.u32 %v968, %v964
    %v970 = vrot.slane %v969, 4
    %v972 = vshll.u32 %v150, 16
    %v974 = vrot.slane %v972, 5
    %v975 = vsel %vm159, %v970, %v974
    %v977 = vshrl.u32 %v151, 16
    %v979 = vrot.slane %v977, 4
    %v980 = vshll.u32 %v151, 16
    %v982 = vrot.slane %v980, 5
    %v983 = vor.u32 %v979, %v982
    %v984 = vrot.slane %v983, 4
    %v986 = vshll.u32 %v152, 16
    %v988 = vrot.slane %v986, 5
    %v989 = vsel %vm159, %v984, %v988
    %v990 = vshrl.u32 %v152, 16
    %v992 = vrot.slane %v990, 4
    %v993 = vor.u32 %v992, %v988
    %v994 = vrot.slane %v993, 4
    %v996 = vshll.u32 %v153, 16
    %v998 = vrot.slane %v996, 5
    %v999 = vsel %vm159, %v994, %v998
    %v1001 = vshrl.u32 %v154, 16
    %v1003 = vrot.slane %v1001, 4
    %v1004 = vshll.u32 %v154, 16
    %v1006 = vrot.slane %v1004, 5
    %v1007 = vor.u32 %v1003, %v1006
    %v1008 = vrot.slane %v1007, 4
    %v1010 = vshll.u32 %v155, 16
    %v1012 = vrot.slane %v1010, 5
    %v1013 = vsel %vm159, %v1008, %v1012
    %v1014 = vshrl.u32 %v155, 16
    %v1016 = vrot.slane %v1014, 4
    %v1017 = vor.u32 %v1016, %v1012
    %v1018 = vrot.slane %v1017, 4
    %v1020 = vshll.u32 %v156, 16
    %v1022 = vrot.slane %v1020, 5
    %v1023 = vsel %vm159, %v1018, %v1022
    %v1096 = vmax.bf16 %v49, %v173
    %v1097 = vmax.bf16 %v50, %v183
    %v1098 = vmax.bf16 %v52, %v197
    %v1099 = vmax.bf16 %v53, %v207
    %v1100 = vmax.bf16 %v55, %v221
    %v1101 = vmax.bf16 %v56, %v231
    %v1102 = vmax.bf16 %v58, %v245
    %v1103 = vmax.bf16 %v59, %v255
    %v1104 = vmax.bf16 %v61, %v269
    %v1105 = vmax.bf16 %v62, %v279
    %v1106 = vmax.bf16 %v64, %v293
    %v1107 = vmax.bf16 %v65, %v303
    %v1108 = vmax.bf16 %v67, %v317
    %v1109 = vmax.bf16 %v68, %v327
    %v1110 = vmax.bf16 %v70, %v341
    %v1111 = vmax.bf16 %v71, %v351
    %v1112 = vmax.bf16 %v73, %v365
    %v1113 = vmax.bf16 %v74, %v375
    %v1114 = vmax.bf16 %v76, %v389
    %v1115 = vmax.bf16 %v77, %v399
    %v1116 = vmax.bf16 %v79, %v413
    %v1117 = vmax.bf16 %v80, %v423
    %v1118 = vmax.bf16 %v82, %v437
    %v1119 = vmax.bf16 %v83, %v447
    %v1120 = vmax.bf16 %v85, %v461
    %v1121 = vmax.bf16 %v86, %v471
    %v1122 = vmax.bf16 %v88, %v485
    %v1123 = vmax.bf16 %v89, %v495
    %v1124 = vmax.bf16 %v91, %v509
    %v1125 = vmax.bf16 %v92, %v519
    %v1126 = vmax.bf16 %v94, %v533
    %v1127 = vmax.bf16 %v95, %v543
    %v1128 = vmax.bf16 %v97, %v557
    %v1129 = vmax.bf16 %v98, %v567
    %v1130 = vmax.bf16 %v100, %v581
    %v1131 = vmax.bf16 %v101, %v591
    %v1132 = vmax.bf16 %v103, %v605
    %v1133 = vmax.bf16 %v104, %v615
    %v1134 = vmax.bf16 %v106, %v629
    %v1135 = vmax.bf16 %v107, %v639
    %v1136 = vmax.bf16 %v109, %v653
    %v1137 = vmax.bf16 %v110, %v663
    %v1138 = vmax.bf16 %v112, %v677
    %v1139 = vmax.bf16 %v113, %v687
    %v1140 = vmax.bf16 %v115, %v701
    %v1141 = vmax.bf16 %v116, %v711
    %v1142 = vmax.bf16 %v118, %v725
    %v1143 = vmax.bf16 %v119, %v735
    %v1144 = vmax.bf16 %v121, %v749
    %v1145 = vmax.bf16 %v122, %v759
    %v1146 = vmax.bf16 %v124, %v773
    %v1147 = vmax.bf16 %v125, %v783
    %v1148 = vmax.bf16 %v127, %v797
    %v1149 = vmax.bf16 %v128, %v807
    %v1150 = vmax.bf16 %v130, %v821
    %v1151 = vmax.bf16 %v131, %v831
    %v1152 = vmax.bf16 %v133, %v845
    %v1153 = vmax.bf16 %v134, %v855
    %v1154 = vmax.bf16 %v136, %v869
    %v1155 = vmax.bf16 %v137, %v879
    %v1156 = vmax.bf16 %v139, %v893
    %v1157 = vmax.bf16 %v140, %v903
    %v1158 = vmax.bf16 %v142, %v917
    %v1159 = vmax.bf16 %v143, %v927
    %v1160 = vmax.bf16 %v145, %v941
    %v1161 = vmax.bf16 %v146, %v951
    %v1162 = vmax.bf16 %v148, %v965
    %v1163 = vmax.bf16 %v149, %v975
    %v1164 = vmax.bf16 %v151, %v989
    %v1165 = vmax.bf16 %v152, %v999
    %v1166 = vmax.bf16 %v154, %v1013
    %v1167 = vmax.bf16 %v155, %v1023
    %vm1276 = vcmask 1042432
    %vm1277 = vcmask 1046532
    %vm1278 = vmor %vm1276, %vm1277
    %v1279 = vrot.slane %v49, 5
    %v1280 = vrot.slane %v1279, 4
    %v1281 = vrot.slane %v50, 5
    %v1282 = vsel %vm1278, %v1280, %v1281
    %v1283 = vrot.slane %v1281, 4
    %v1284 = vrot.slane %v51, 5
    %v1285 = vsel %vm1278, %v1283, %v1284
    %v1286 = vrot.slane %v52, 5
    %v1287 = vrot.slane %v1286, 4
    %v1288 = vrot.slane %v53, 5
    %v1289 = vsel %vm1278, %v1287, %v1288
    %v1290 = vrot.slane %v1288, 4
    %v1291 = vrot.slane %v54, 5
    %v1292 = vsel %vm1278, %v1290, %v1291
    %v1293 = vrot.slane %v55, 5
    %v1294 = vrot.slane %v1293, 4
    %v1295 = vrot.slane %v56, 5
    %v1296 = vsel %vm1278, %v1294, %v1295
    %v1297 = vrot.slane %v1295, 4
    %v1298 = vrot.slane %v57, 5
    %v1299 = vsel %vm1278, %v1297, %v1298
    %v1300 = vrot.slane %v58, 5
    %v1301 = vrot.slane %v1300, 4
    %v1302 = vrot.slane %v59, 5
    %v1303 = vsel %vm1278, %v1301, %v1302
    %v1304 = vrot.slane %v1302, 4
    %v1305 = vrot.slane %v60, 5
    %v1306 = vsel %vm1278, %v1304, %v1305
    %v1307 = vrot.slane %v61, 5
    %v1308 = vrot.slane %v1307, 4
    %v1309 = vrot.slane %v62, 5
    %v1310 = vsel %vm1278, %v1308, %v1309
    %v1311 = vrot.slane %v1309, 4
    %v1312 = vrot.slane %v63, 5
    %v1313 = vsel %vm1278, %v1311, %v1312
    %v1314 = vrot.slane %v64, 5
    %v1315 = vrot.slane %v1314, 4
    %v1316 = vrot.slane %v65, 5
    %v1317 = vsel %vm1278, %v1315, %v1316
    %v1318 = vrot.slane %v1316, 4
    %v1319 = vrot.slane %v66, 5
    %v1320 = vsel %vm1278, %v1318, %v1319
    %v1321 = vrot.slane %v67, 5
    %v1322 = vrot.slane %v1321, 4
    %v1323 = vrot.slane %v68, 5
    %v1324 = vsel %vm1278, %v1322, %v1323
    %v1325 = vrot.slane %v1323, 4
    %v1326 = vrot.slane %v69, 5
    %v1327 = vsel %vm1278, %v1325, %v1326
    %v1328 = vrot.slane %v70, 5
    %v1329 = vrot.slane %v1328, 4
    %v1330 = vrot.slane %v71, 5
    %v1331 = vsel %vm1278, %v1329, %v1330
    %v1332 = vrot.slane %v1330, 4
    %v1333 = vrot.slane %v72, 5
    %v1334 = vsel %vm1278, %v1332, %v1333
    %v1335 = vrot.slane %v73, 5
    %v1336 = vrot.slane %v1335, 4
    %v1337 = vrot.slane %v74, 5
    %v1338 = vsel %vm1278, %v1336, %v1337
    %v1339 = vrot.slane %v1337, 4
    %v1340 = vrot.slane %v75, 5
    %v1341 = vsel %vm1278, %v1339, %v1340
    %v1342 = vrot.slane %v76, 5
    %v1343 = vrot.slane %v1342, 4
    %v1344 = vrot.slane %v77, 5
    %v1345 = vsel %vm1278, %v1343, %v1344
    %v1346 = vrot.slane %v1344, 4
    %v1347 = vrot.slane %v78, 5
    %v1348 = vsel %vm1278, %v1346, %v1347
    %v1349 = vrot.slane %v79, 5
    %v1350 = vrot.slane %v1349, 4
    %v1351 = vrot.slane %v80, 5
    %v1352 = vsel %vm1278, %v1350, %v1351
    %v1353 = vrot.slane %v1351, 4
    %v1354 = vrot.slane %v81, 5
    %v1355 = vsel %vm1278, %v1353, %v1354
    %v1356 = vrot.slane %v82, 5
    %v1357 = vrot.slane %v1356, 4
    %v1358 = vrot.slane %v83, 5
    %v1359 = vsel %vm1278, %v1357, %v1358
    %v1360 = vrot.slane %v1358, 4
    %v1361 = vrot.slane %v84, 5
    %v1362 = vsel %vm1278, %v1360, %v1361
    %v1363 = vrot.slane %v85, 5
    %v1364 = vrot.slane %v1363, 4
    %v1365 = vrot.slane %v86, 5
    %v1366 = vsel %vm1278, %v1364, %v1365
    %v1367 = vrot.slane %v1365, 4
    %v1368 = vrot.slane %v87, 5
    %v1369 = vsel %vm1278, %v1367, %v1368
    %v1370 = vrot.slane %v88, 5
    %v1371 = vrot.slane %v1370, 4
    %v1372 = vrot.slane %v89, 5
    %v1373 = vsel %vm1278, %v1371, %v1372
    %v1374 = vrot.slane %v1372, 4
    %v1375 = vrot.slane %v90, 5
    %v1376 = vsel %vm1278, %v1374, %v1375
    %v1377 = vrot.slane %v91, 5
    %v1378 = vrot.slane %v1377, 4
    %v1379 = vrot.slane %v92, 5
    %v1380 = vsel %vm1278, %v1378, %v1379
    %v1381 = vrot.slane %v1379, 4
    %v1382 = vrot.slane %v93, 5
    %v1383 = vsel %vm1278, %v1381, %v1382
    %v1384 = vrot.slane %v94, 5
    %v1385 = vrot.slane %v1384, 4
    %v1386 = vrot.slane %v95, 5
    %v1387 = vsel %vm1278, %v1385, %v1386
    %v1388 = vrot.slane %v1386, 4
    %v1389 = vrot.slane %v96, 5
    %v1390 = vsel %vm1278, %v1388, %v1389
    %v1391 = vrot.slane %v97, 5
    %v1392 = vrot.slane %v1391, 4
    %v1393 = vrot.slane %v98, 5
    %v1394 = vsel %vm1278, %v1392, %v1393
    %v1395 = vrot.slane %v1393, 4
    %v1396 = vrot.slane %v99, 5
    %v1397 = vsel %vm1278, %v1395, %v1396
    %v1398 = vrot.slane %v100, 5
    %v1399 = vrot.slane %v1398, 4
    %v1400 = vrot.slane %v101, 5
    %v1401 = vsel %vm1278, %v1399, %v1400
    %v1402 = vrot.slane %v1400, 4
    %v1403 = vrot.slane %v102, 5
    %v1404 = vsel %vm1278, %v1402, %v1403
    %v1405 = vrot.slane %v103, 5
    %v1406 = vrot.slane %v1405, 4
    %v1407 = vrot.slane %v104, 5
    %v1408 = vsel %vm1278, %v1406, %v1407
    %v1409 = vrot.slane %v1407, 4
    %v1410 = vrot.slane %v105, 5
    %v1411 = vsel %vm1278, %v1409, %v1410
    %v1412 = vrot.slane %v106, 5
    %v1413 = vrot.slane %v1412, 4
    %v1414 = vrot.slane %v107, 5
    %v1415 = vsel %vm1278, %v1413, %v1414
    %v1416 = vrot.slane %v1414, 4
    %v1417 = vrot.slane %v108, 5
    %v1418 = vsel %vm1278, %v1416, %v1417
    %v1419 = vrot.slane %v109, 5
    %v1420 = vrot.slane %v1419, 4
    %v1421 = vrot.slane %v110, 5
    %v1422 = vsel %vm1278, %v1420, %v1421
    %v1423 = vrot.slane %v1421, 4
    %v1424 = vrot.slane %v111, 5
    %v1425 = vsel %vm1278, %v1423, %v1424
    %v1426 = vrot.slane %v112, 5
    %v1427 = vrot.slane %v1426, 4
    %v1428 = vrot.slane %v113, 5
    %v1429 = vsel %vm1278, %v1427, %v1428
    %v1430 = vrot.slane %v1428, 4
    %v1431 = vrot.slane %v114, 5
    %v1432 = vsel %vm1278, %v1430, %v1431
    %v1433 = vrot.slane %v115, 5
    %v1434 = vrot.slane %v1433, 4
    %v1435 = vrot.slane %v116, 5
    %v1436 = vsel %vm1278, %v1434, %v1435
    %v1437 = vrot.slane %v1435, 4
    %v1438 = vrot.slane %v117, 5
    %v1439 = vsel %vm1278, %v1437, %v1438
    %v1440 = vrot.slane %v118, 5
    %v1441 = vrot.slane %v1440, 4
    %v1442 = vrot.slane %v119, 5
    %v1443 = vsel %vm1278, %v1441, %v1442
    %v1444 = vrot.slane %v1442, 4
    %v1445 = vrot.slane %v120, 5
    %v1446 = vsel %vm1278, %v1444, %v1445
    %v1447 = vrot.slane %v121, 5
    %v1448 = vrot.slane %v1447, 4
    %v1449 = vrot.slane %v122, 5
    %v1450 = vsel %vm1278, %v1448, %v1449
    %v1451 = vrot.slane %v1449, 4
    %v1452 = vrot.slane %v123, 5
    %v1453 = vsel %vm1278, %v1451, %v1452
    %v1454 = vrot.slane %v124, 5
    %v1455 = vrot.slane %v1454, 4
    %v1456 = vrot.slane %v125, 5
    %v1457 = vsel %vm1278, %v1455, %v1456
    %v1458 = vrot.slane %v1456, 4
    %v1459 = vrot.slane %v126, 5
    %v1460 = vsel %vm1278, %v1458, %v1459
    %v1461 = vrot.slane %v127, 5
    %v1462 = vrot.slane %v1461, 4
    %v1463 = vrot.slane %v128, 5
    %v1464 = vsel %vm1278, %v1462, %v1463
    %v1465 = vrot.slane %v1463, 4
    %v1466 = vrot.slane %v129, 5
    %v1467 = vsel %vm1278, %v1465, %v1466
    %v1468 = vrot.slane %v130, 5
    %v1469 = vrot.slane %v1468, 4
    %v1470 = vrot.slane %v131, 5
    %v1471 = vsel %vm1278, %v1469, %v1470
    %v1472 = vrot.slane %v1470, 4
    %v1473 = vrot.slane %v132, 5
    %v1474 = vsel %vm1278, %v1472, %v1473
    %v1475 = vrot.slane %v133, 5
    %v1476 = vrot.slane %v1475, 4
    %v1477 = vrot.slane %v134, 5
    %v1478 = vsel %vm1278, %v1476, %v1477
    %v1479 = vrot.slane %v1477, 4
    %v1480 = vrot.slane %v135, 5
    %v1481 = vsel %vm1278, %v1479, %v1480
    %v1482 = vrot.slane %v136, 5
    %v1483 = vrot.slane %v1482, 4
    %v1484 = vrot.slane %v137, 5
    %v1485 = vsel %vm1278, %v1483, %v1484
    %v1486 = vrot.slane %v1484, 4
    %v1487 = vrot.slane %v138, 5
    %v1488 = vsel %vm1278, %v1486, %v1487
    %v1489 = vrot.slane %v139, 5
    %v1490 = vrot.slane %v1489, 4
    %v1491 = vrot.slane %v140, 5
    %v1492 = vsel %vm1278, %v1490, %v1491
    %v1493 = vrot.slane %v1491, 4
    %v1494 = vrot.slane %v141, 5
    %v1495 = vsel %vm1278, %v1493, %v1494
    %v1496 = vrot.slane %v142, 5
    %v1497 = vrot.slane %v1496, 4
    %v1498 = vrot.slane %v143, 5
    %v1499 = vsel %vm1278, %v1497, %v1498
    %v1500 = vrot.slane %v1498, 4
    %v1501 = vrot.slane %v144, 5
    %v1502 = vsel %vm1278, %v1500, %v1501
    %v1503 = vrot.slane %v145, 5
    %v1504 = vrot.slane %v1503, 4
    %v1505 = vrot.slane %v146, 5
    %v1506 = vsel %vm1278, %v1504, %v1505
    %v1507 = vrot.slane %v1505, 4
    %v1508 = vrot.slane %v147, 5
    %v1509 = vsel %vm1278, %v1507, %v1508
    %v1510 = vrot.slane %v148, 5
    %v1511 = vrot.slane %v1510, 4
    %v1512 = vrot.slane %v149, 5
    %v1513 = vsel %vm1278, %v1511, %v1512
    %v1514 = vrot.slane %v1512, 4
    %v1515 = vrot.slane %v150, 5
    %v1516 = vsel %vm1278, %v1514, %v1515
    %v1517 = vrot.slane %v151, 5
    %v1518 = vrot.slane %v1517, 4
    %v1519 = vrot.slane %v152, 5
    %v1520 = vsel %vm1278, %v1518, %v1519
    %v1521 = vrot.slane %v1519, 4
    %v1522 = vrot.slane %v153, 5
    %v1523 = vsel %vm1278, %v1521, %v1522
    %v1524 = vrot.slane %v154, 5
    %v1525 = vrot.slane %v1524, 4
    %v1526 = vrot.slane %v155, 5
    %v1527 = vsel %vm1278, %v1525, %v1526
    %v1528 = vrot.slane %v1526, 4
    %v1529 = vrot.slane %v156, 5
    %v1530 = vsel %vm1278, %v1528, %v1529
    %v1603 = vmax.bf16 %v1096, %v1282
    %v1604 = vmax.bf16 %v1097, %v1285
    %v1605 = vmax.bf16 %v1098, %v1289
    %v1606 = vmax.bf16 %v1099, %v1292
    %v1607 = vmax.bf16 %v1100, %v1296
    %v1608 = vmax.bf16 %v1101, %v1299
    %v1609 = vmax.bf16 %v1102, %v1303
    %v1610 = vmax.bf16 %v1103, %v1306
    %v1611 = vmax.bf16 %v1104, %v1310
    %v1612 = vmax.bf16 %v1105, %v1313
    %v1613 = vmax.bf16 %v1106, %v1317
    %v1614 = vmax.bf16 %v1107, %v1320
    %v1615 = vmax.bf16 %v1108, %v1324
    %v1616 = vmax.bf16 %v1109, %v1327
    %v1617 = vmax.bf16 %v1110, %v1331
    %v1618 = vmax.bf16 %v1111, %v1334
    %v1619 = vmax.bf16 %v1112, %v1338
    %v1620 = vmax.bf16 %v1113, %v1341
    %v1621 = vmax.bf16 %v1114, %v1345
    %v1622 = vmax.bf16 %v1115, %v1348
    %v1623 = vmax.bf16 %v1116, %v1352
    %v1624 = vmax.bf16 %v1117, %v1355
    %v1625 = vmax.bf16 %v1118, %v1359
    %v1626 = vmax.bf16 %v1119, %v1362
    %v1627 = vmax.bf16 %v1120, %v1366
    %v1628 = vmax.bf16 %v1121, %v1369
    %v1629 = vmax.bf16 %v1122, %v1373
    %v1630 = vmax.bf16 %v1123, %v1376
    %v1631 = vmax.bf16 %v1124, %v1380
    %v1632 = vmax.bf16 %v1125, %v1383
    %v1633 = vmax.bf16 %v1126, %v1387
    %v1634 = vmax.bf16 %v1127, %v1390
    %v1635 = vmax.bf16 %v1128, %v1394
    %v1636 = vmax.bf16 %v1129, %v1397
    %v1637 = vmax.bf16 %v1130, %v1401
    %v1638 = vmax.bf16 %v1131, %v1404
    %v1639 = vmax.bf16 %v1132, %v1408
    %v1640 = vmax.bf16 %v1133, %v1411
    %v1641 = vmax.bf16 %v1134, %v1415
    %v1642 = vmax.bf16 %v1135, %v1418
    %v1643 = vmax.bf16 %v1136, %v1422
    %v1644 = vmax.bf16 %v1137, %v1425
    %v1645 = vmax.bf16 %v1138, %v1429
    %v1646 = vmax.bf16 %v1139, %v1432
    %v1647 = vmax.bf16 %v1140, %v1436
    %v1648 = vmax.bf16 %v1141, %v1439
    %v1649 = vmax.bf16 %v1142, %v1443
    %v1650 = vmax.bf16 %v1143, %v1446
    %v1651 = vmax.bf16 %v1144, %v1450
    %v1652 = vmax.bf16 %v1145, %v1453
    %v1653 = vmax.bf16 %v1146, %v1457
    %v1654 = vmax.bf16 %v1147, %v1460
    %v1655 = vmax.bf16 %v1148, %v1464
    %v1656 = vmax.bf16 %v1149, %v1467
    %v1657 = vmax.bf16 %v1150, %v1471
    %v1658 = vmax.bf16 %v1151, %v1474
    %v1659 = vmax.bf16 %v1152, %v1478
    %v1660 = vmax.bf16 %v1153, %v1481
    %v1661 = vmax.bf16 %v1154, %v1485
    %v1662 = vmax.bf16 %v1155, %v1488
    %v1663 = vmax.bf16 %v1156, %v1492
    %v1664 = vmax.bf16 %v1157, %v1495
    %v1665 = vmax.bf16 %v1158, %v1499
    %v1666 = vmax.bf16 %v1159, %v1502
    %v1667 = vmax.bf16 %v1160, %v1506
    %v1668 = vmax.bf16 %v1161, %v1509
    %v1669 = vmax.bf16 %v1162, %v1513
    %v1670 = vmax.bf16 %v1163, %v1516
    %v1671 = vmax.bf16 %v1164, %v1520
    %v1672 = vmax.bf16 %v1165, %v1523
    %v1673 = vmax.bf16 %v1166, %v1527
    %v1674 = vmax.bf16 %v1167, %v1530
    %v1675 = vmax.bf16 %v1603, %v1605
    %v1676 = vmax.bf16 %v1604, %v1606
    %v1677 = vmax.bf16 %v1605, %v1607
    %v1678 = vmax.bf16 %v1606, %v1608
    %v1679 = vmax.bf16 %v1607, %v1609
    %v1680 = vmax.bf16 %v1608, %v1610
    %v1681 = vmax.bf16 %v1609, %v1611
    %v1682 = vmax.bf16 %v1610, %v1612
    %v1683 = vmax.bf16 %v1611, %v1613
    %v1684 = vmax.bf16 %v1612, %v1614
    %v1685 = vmax.bf16 %v1613, %v1615
    %v1686 = vmax.bf16 %v1614, %v1616
    %v1687 = vmax.bf16 %v1615, %v1617
    %v1688 = vmax.bf16 %v1616, %v1618
    %v1689 = vmax.bf16 %v1617, %v1619
    %v1690 = vmax.bf16 %v1618, %v1620
    %v1691 = vmax.bf16 %v1619, %v1621
    %v1692 = vmax.bf16 %v1620, %v1622
    %v1693 = vmax.bf16 %v1621, %v1623
    %v1694 = vmax.bf16 %v1622, %v1624
    %v1695 = vmax.bf16 %v1623, %v1625
    %v1696 = vmax.bf16 %v1624, %v1626
    %v1697 = vmax.bf16 %v1625, %v1627
    %v1698 = vmax.bf16 %v1626, %v1628
    %v1699 = vmax.bf16 %v1627, %v1629
    %v1700 = vmax.bf16 %v1628, %v1630
    %v1701 = vmax.bf16 %v1629, %v1631
    %v1702 = vmax.bf16 %v1630, %v1632
    %v1703 = vmax.bf16 %v1631, %v1633
    %v1704 = vmax.bf16 %v1632, %v1634
    %v1705 = vmax.bf16 %v1633, %v1635
    %v1706 = vmax.bf16 %v1634, %v1636
    %v1707 = vmax.bf16 %v1639, %v1641
    %v1708 = vmax.bf16 %v1640, %v1642
    %v1709 = vmax.bf16 %v1641, %v1643
    %v1710 = vmax.bf16 %v1642, %v1644
    %v1711 = vmax.bf16 %v1643, %v1645
    %v1712 = vmax.bf16 %v1644, %v1646
    %v1713 = vmax.bf16 %v1645, %v1647
    %v1714 = vmax.bf16 %v1646, %v1648
    %v1715 = vmax.bf16 %v1647, %v1649
    %v1716 = vmax.bf16 %v1648, %v1650
    %v1717 = vmax.bf16 %v1649, %v1651
    %v1718 = vmax.bf16 %v1650, %v1652
    %v1719 = vmax.bf16 %v1651, %v1653
    %v1720 = vmax.bf16 %v1652, %v1654
    %v1721 = vmax.bf16 %v1653, %v1655
    %v1722 = vmax.bf16 %v1654, %v1656
    %v1723 = vmax.bf16 %v1655, %v1657
    %v1724 = vmax.bf16 %v1656, %v1658
    %v1725 = vmax.bf16 %v1657, %v1659
    %v1726 = vmax.bf16 %v1658, %v1660
    %v1727 = vmax.bf16 %v1659, %v1661
    %v1728 = vmax.bf16 %v1660, %v1662
    %v1729 = vmax.bf16 %v1661, %v1663
    %v1730 = vmax.bf16 %v1662, %v1664
    %v1731 = vmax.bf16 %v1663, %v1665
    %v1732 = vmax.bf16 %v1664, %v1666
    %v1733 = vmax.bf16 %v1665, %v1667
    %v1734 = vmax.bf16 %v1666, %v1668
    %v1735 = vmax.bf16 %v1667, %v1669
    %v1736 = vmax.bf16 %v1668, %v1670
    %v1737 = vmax.bf16 %v1669, %v1671
    %v1738 = vmax.bf16 %v1670, %v1672
    %v1739 = vmax.bf16 %v1675, %v1607
    %v1740 = vmax.bf16 %v1676, %v1608
    %v1741 = vmax.bf16 %v1677, %v1609
    %v1742 = vmax.bf16 %v1678, %v1610
    %v1743 = vmax.bf16 %v1679, %v1611
    %v1744 = vmax.bf16 %v1680, %v1612
    %v1745 = vmax.bf16 %v1681, %v1613
    %v1746 = vmax.bf16 %v1682, %v1614
    %v1747 = vmax.bf16 %v1683, %v1615
    %v1748 = vmax.bf16 %v1684, %v1616
    %v1749 = vmax.bf16 %v1685, %v1617
    %v1750 = vmax.bf16 %v1686, %v1618
    %v1751 = vmax.bf16 %v1687, %v1619
    %v1752 = vmax.bf16 %v1688, %v1620
    %v1753 = vmax.bf16 %v1689, %v1621
    %v1754 = vmax.bf16 %v1690, %v1622
    %v1755 = vmax.bf16 %v1691, %v1623
    %v1756 = vmax.bf16 %v1692, %v1624
    %v1757 = vmax.bf16 %v1693, %v1625
    %v1758 = vmax.bf16 %v1694, %v1626
    %v1759 = vmax.bf16 %v1695, %v1627
    %v1760 = vmax.bf16 %v1696, %v1628
    %v1761 = vmax.bf16 %v1697, %v1629
    %v1762 = vmax.bf16 %v1698, %v1630
    %v1763 = vmax.bf16 %v1699, %v1631
    %v1764 = vmax.bf16 %v1700, %v1632
    %v1765 = vmax.bf16 %v1701, %v1633
    %v1766 = vmax.bf16 %v1702, %v1634
    %v1767 = vmax.bf16 %v1703, %v1635
    %v1768 = vmax.bf16 %v1704, %v1636
    %v1769 = vmax.bf16 %v1705, %v1637
    %v1770 = vmax.bf16 %v1706, %v1638
    %v1771 = vmax.bf16 %v1707, %v1643
    %v1772 = vmax.bf16 %v1708, %v1644
    %v1773 = vmax.bf16 %v1709, %v1645
    %v1774 = vmax.bf16 %v1710, %v1646
    %v1775 = vmax.bf16 %v1711, %v1647
    %v1776 = vmax.bf16 %v1712, %v1648
    %v1777 = vmax.bf16 %v1713, %v1649
    %v1778 = vmax.bf16 %v1714, %v1650
    %v1779 = vmax.bf16 %v1715, %v1651
    %v1780 = vmax.bf16 %v1716, %v1652
    %v1781 = vmax.bf16 %v1717, %v1653
    %v1782 = vmax.bf16 %v1718, %v1654
    %v1783 = vmax.bf16 %v1719, %v1655
    %v1784 = vmax.bf16 %v1720, %v1656
    %v1785 = vmax.bf16 %v1721, %v1657
    %v1786 = vmax.bf16 %v1722, %v1658
    %v1787 = vmax.bf16 %v1723, %v1659
    %v1788 = vmax.bf16 %v1724, %v1660
    %v1789 = vmax.bf16 %v1725, %v1661
    %v1790 = vmax.bf16 %v1726, %v1662
    %v1791 = vmax.bf16 %v1727, %v1663
    %v1792 = vmax.bf16 %v1728, %v1664
    %v1793 = vmax.bf16 %v1729, %v1665
    %v1794 = vmax.bf16 %v1730, %v1666
    %v1795 = vmax.bf16 %v1731, %v1667
    %v1796 = vmax.bf16 %v1732, %v1668
    %v1797 = vmax.bf16 %v1733, %v1669
    %v1798 = vmax.bf16 %v1734, %v1670
    %v1799 = vmax.bf16 %v1735, %v1671
    %v1800 = vmax.bf16 %v1736, %v1672
    %v1801 = vmax.bf16 %v1737, %v1673
    %v1802 = vmax.bf16 %v1738, %v1674
    %v1803 = vld [vmem:[%s1] sm:$0xf]
    %v1804 = vld [vmem:[%s1 + $0x4] sm:$0xf]
    %v1805 = vld [vmem:[%s1 + $0x8] sm:$0xf]
    %v1806 = vld [vmem:[%s1 + $0xc] sm:$0xf]
    %v1807 = vld [vmem:[%s2] sm:$0xf]
    %v1808 = vld [vmem:[%s2 + $0x4] sm:$0xf]
    %v1809 = vld [vmem:[%s2 + $0x8] sm:$0xf]
    %v1810 = vld [vmem:[%s2 + $0xc] sm:$0xf]
    %v1875 = vunpack.c.l.b16 %v1739
    %v1876 = vunpack.c.l.b16 %v1740
    %v1877 = vunpack.c.l.b16 %v1741
    %v1878 = vunpack.c.l.b16 %v1742
    %v1879 = vunpack.c.l.b16 %v1743
    %v1880 = vunpack.c.l.b16 %v1744
    %v1881 = vunpack.c.l.b16 %v1745
    %v1882 = vunpack.c.l.b16 %v1746
    %v1883 = vunpack.c.l.b16 %v1747
    %v1884 = vunpack.c.l.b16 %v1748
    %v1885 = vunpack.c.l.b16 %v1749
    %v1886 = vunpack.c.l.b16 %v1750
    %v1887 = vunpack.c.l.b16 %v1751
    %v1888 = vunpack.c.l.b16 %v1752
    %v1889 = vunpack.c.l.b16 %v1753
    %v1890 = vunpack.c.l.b16 %v1754
    %v1891 = vunpack.c.l.b16 %v1755
    %v1892 = vunpack.c.l.b16 %v1756
    %v1893 = vunpack.c.l.b16 %v1757
    %v1894 = vunpack.c.l.b16 %v1758
    %v1895 = vunpack.c.l.b16 %v1759
    %v1896 = vunpack.c.l.b16 %v1760
    %v1897 = vunpack.c.l.b16 %v1761
    %v1898 = vunpack.c.l.b16 %v1762
    %v1899 = vunpack.c.l.b16 %v1763
    %v1900 = vunpack.c.l.b16 %v1764
    %v1901 = vunpack.c.l.b16 %v1765
    %v1902 = vunpack.c.l.b16 %v1766
    %v1903 = vunpack.c.l.b16 %v1767
    %v1904 = vunpack.c.l.b16 %v1768
    %v1905 = vunpack.c.l.b16 %v1769
    %v1906 = vunpack.c.l.b16 %v1770
    %v1907 = vunpack.c.l.b16 %v1771
    %v1908 = vunpack.c.l.b16 %v1772
    %v1909 = vunpack.c.l.b16 %v1773
    %v1910 = vunpack.c.l.b16 %v1774
    %v1911 = vunpack.c.l.b16 %v1775
    %v1912 = vunpack.c.l.b16 %v1776
    %v1913 = vunpack.c.l.b16 %v1777
    %v1914 = vunpack.c.l.b16 %v1778
    %v1915 = vunpack.c.l.b16 %v1779
    %v1916 = vunpack.c.l.b16 %v1780
    %v1917 = vunpack.c.l.b16 %v1781
    %v1918 = vunpack.c.l.b16 %v1782
    %v1919 = vunpack.c.l.b16 %v1783
    %v1920 = vunpack.c.l.b16 %v1784
    %v1921 = vunpack.c.l.b16 %v1785
    %v1922 = vunpack.c.l.b16 %v1786
    %v1923 = vunpack.c.l.b16 %v1787
    %v1924 = vunpack.c.l.b16 %v1788
    %v1925 = vunpack.c.l.b16 %v1789
    %v1926 = vunpack.c.l.b16 %v1790
    %v1927 = vunpack.c.l.b16 %v1791
    %v1928 = vunpack.c.l.b16 %v1792
    %v1929 = vunpack.c.l.b16 %v1793
    %v1930 = vunpack.c.l.b16 %v1794
    %v1931 = vunpack.c.l.b16 %v1795
    %v1932 = vunpack.c.l.b16 %v1796
    %v1933 = vunpack.c.l.b16 %v1797
    %v1934 = vunpack.c.l.b16 %v1798
    %v1935 = vunpack.c.l.b16 %v1799
    %v1936 = vunpack.c.l.b16 %v1800
    %v1937 = vunpack.c.l.b16 %v1801
    %v1938 = vunpack.c.l.b16 %v1802
    %v1939 = vpack.c.b16 %v1876, %v1875
    %v1940 = vpack.c.b16 %v1878, %v1877
    %v1941 = vpack.c.b16 %v1880, %v1879
    %v1942 = vpack.c.b16 %v1882, %v1881
    %v1943 = vpack.c.b16 %v1884, %v1883
    %v1944 = vpack.c.b16 %v1886, %v1885
    %v1945 = vpack.c.b16 %v1888, %v1887
    %v1946 = vpack.c.b16 %v1890, %v1889
    %v1947 = vpack.c.b16 %v1892, %v1891
    %v1948 = vpack.c.b16 %v1894, %v1893
    %v1949 = vpack.c.b16 %v1896, %v1895
    %v1950 = vpack.c.b16 %v1898, %v1897
    %v1951 = vpack.c.b16 %v1900, %v1899
    %v1952 = vpack.c.b16 %v1902, %v1901
    %v1953 = vpack.c.b16 %v1904, %v1903
    %v1954 = vpack.c.b16 %v1906, %v1905
    %v1955 = vpack.c.b16 %v1908, %v1907
    %v1956 = vpack.c.b16 %v1910, %v1909
    %v1957 = vpack.c.b16 %v1912, %v1911
    %v1958 = vpack.c.b16 %v1914, %v1913
    %v1959 = vpack.c.b16 %v1916, %v1915
    %v1960 = vpack.c.b16 %v1918, %v1917
    %v1961 = vpack.c.b16 %v1920, %v1919
    %v1962 = vpack.c.b16 %v1922, %v1921
    %v1963 = vpack.c.b16 %v1924, %v1923
    %v1964 = vpack.c.b16 %v1926, %v1925
    %v1965 = vpack.c.b16 %v1928, %v1927
    %v1966 = vpack.c.b16 %v1930, %v1929
    %v1967 = vpack.c.b16 %v1932, %v1931
    %v1968 = vpack.c.b16 %v1934, %v1933
    %v1969 = vpack.c.b16 %v1936, %v1935
    %v1970 = vpack.c.b16 %v1938, %v1937
    %v1975 = vunpack.c.l.b16 %v1807
    %v1976 = vunpack.c.l.b16 %v1808
    %v1977 = vunpack.c.l.b16 %v1809
    %v1978 = vunpack.c.l.b16 %v1810
    %v1979 = vpack.c.b16 %v1976, %v1975
    %v1980 = vpack.c.b16 %v1978, %v1977
    %vm1983 = vcmask 261120
    %v1985 = vsel %vm1983, %v1939, 0
    %v1988 = vsel %vm1983, %v1940, 0
    %v1991 = vsel %vm1983, %v1941, 0
    %v1994 = vsel %vm1983, %v1942, 0
    %v1997 = vsel %vm1983, %v1943, 0
    %v2000 = vsel %vm1983, %v1944, 0
    %v2003 = vsel %vm1983, %v1945, 0
    %v2006 = vsel %vm1983, %v1946, 0
    %v2009 = vsel %vm1983, %v1947, 0
    %v2012 = vsel %vm1983, %v1948, 0
    %v2015 = vsel %vm1983, %v1949, 0
    %v2018 = vsel %vm1983, %v1950, 0
    %v2021 = vsel %vm1983, %v1951, 0
    %v2024 = vsel %vm1983, %v1952, 0
    %v2027 = vsel %vm1983, %v1953, 0
    %v2030 = vsel %vm1983, %v1954, 0
    %v2033 = vsel %vm1983, %v1955, 0
    %v2036 = vsel %vm1983, %v1956, 0
    %v2039 = vsel %vm1983, %v1957, 0
    %v2042 = vsel %vm1983, %v1958, 0
    %v2045 = vsel %vm1983, %v1959, 0
    %v2048 = vsel %vm1983, %v1960, 0
    %v2051 = vsel %vm1983, %v1961, 0
    %v2054 = vsel %vm1983, %v1962, 0
    %v2057 = vsel %vm1983, %v1963, 0
    %v2060 = vsel %vm1983, %v1964, 0
    %v2063 = vsel %vm1983, %v1965, 0
    %v2066 = vsel %vm1983, %v1966, 0
    %v2069 = vsel %vm1983, %v1967, 0
    %v2072 = vsel %vm1983, %v1968, 0
    %v2075 = vsel %vm1983, %v1969, 0
    %v2078 = vsel %vm1983, %v1970, 0
    %2080 = vmatprep.subr.bf16.mxu0 0
    %2081 = vmatpush1.bf16.msra.mxu0 0
    %2082 = vmatprep.subr.bf16.mxu0 0
    %2083 = vmatpush1.bf16.msra.mxu0 0
    %2084 = vmatprep.subr.bf16.mxu0 0
    %2085 = vmatpush1.bf16.msra.mxu0 0
    %2086 = vmatprep.subr.bf16.mxu0 0
    %2087 = vmatpush1.bf16.msra.mxu0 0
    %2088 = vmatprep.subr.bf16.mxu0 0
    %2089 = vmatpush1.bf16.msra.mxu0 0
    %2090 = vmatprep.subr.bf16.mxu0 0
    %2091 = vmatpush1.bf16.msra.mxu0 0
    %2092 = vmatprep.subr.bf16.mxu0 0
    %2093 = vmatpush1.bf16.msra.mxu0 %v1980
    %2094 = vmatprep.subr.bf16.mxu0 0
    %2095 = vmatpush1.bf16.msra.mxu0 %v1979
    %2096 = vmatprep.subr.bf16.mxu0 0
    %2097 = vmatpush2.bf16.msra.mxu0 0
    %2098 = vmatprep.subr.bf16.mxu0 0
    %2099 = vmatpush2.bf16.msra.mxu0 0
    %2100 = vmatprep.subr.bf16.mxu0 0
    %2101 = vmatpush2.bf16.msra.mxu0 0
    %2102 = vmatprep.subr.bf16.mxu0 0
    %2103 = vmatpush2.bf16.msra.mxu0 0
    %2104 = vmatprep.subr.bf16.mxu0 0
    %2105 = vmatpush2.bf16.msra.mxu0 0
    %2106 = vmatprep.subr.bf16.mxu0 0
    %2107 = vmatpush2.bf16.msra.mxu0 0
    %2108 = vmatprep.subr.bf16.mxu0 0
    %2109 = vmatpush2.bf16.msra.mxu0 0
    %2110 = vmatprep.subr.bf16.mxu0 0
    %2111 = vmatpush2.bf16.msra.mxu0 0
    %2112 = vmatprep.mubr.bf16.mxu0 0
    %2113 = vmatmul.mubr.bf16.gmra.mxu0 %v1985
    %v2114 = vpop.f32.mrf.mxu0
    %v2115 = vadd.f32 0.0, %v2114
    %v2116 = vpop.f32.mrf.mxu0
    %v2117 = vpop.f32.mrf.mxu0
    %v2118 = vadd.f32 0.0, %v2117
    %v2119 = vpop.f32.mrf.mxu0
    %2120 = vmatprep.mubr.bf16.mxu0 0
    %2121 = vmatmul.mubr.bf16.gmra.mxu0 %v1988
    %v2122 = vpop.f32.mrf.mxu0
    %v2123 = vadd.f32 0.0, %v2122
    %v2124 = vpop.f32.mrf.mxu0
    %v2125 = vpop.f32.mrf.mxu0
    %v2126 = vadd.f32 0.0, %v2125
    %v2127 = vpop.f32.mrf.mxu0
    %2128 = vmatprep.mubr.bf16.mxu0 0
    %2129 = vmatmul.mubr.bf16.gmra.mxu0 %v1991
    %v2130 = vpop.f32.mrf.mxu0
    %v2131 = vadd.f32 0.0, %v2130
    %v2132 = vpop.f32.mrf.mxu0
    %v2133 = vpop.f32.mrf.mxu0
    %v2134 = vadd.f32 0.0, %v2133
    %v2135 = vpop.f32.mrf.mxu0
    %2136 = vmatprep.mubr.bf16.mxu0 0
    %2137 = vmatmul.mubr.bf16.gmra.mxu0 %v1994
    %v2138 = vpop.f32.mrf.mxu0
    %v2139 = vadd.f32 0.0, %v2138
    %v2140 = vpop.f32.mrf.mxu0
    %v2141 = vpop.f32.mrf.mxu0
    %v2142 = vadd.f32 0.0, %v2141
    %v2143 = vpop.f32.mrf.mxu0
    %2144 = vmatprep.mubr.bf16.mxu0 0
    %2145 = vmatmul.mubr.bf16.gmra.mxu0 %v1997
    %v2146 = vpop.f32.mrf.mxu0
    %v2147 = vadd.f32 0.0, %v2146
    %v2148 = vpop.f32.mrf.mxu0
    %v2149 = vpop.f32.mrf.mxu0
    %v2150 = vadd.f32 0.0, %v2149
    %v2151 = vpop.f32.mrf.mxu0
    %2152 = vmatprep.mubr.bf16.mxu0 0
    %2153 = vmatmul.mubr.bf16.gmra.mxu0 %v2000
    %v2154 = vpop.f32.mrf.mxu0
    %v2155 = vadd.f32 0.0, %v2154
    %v2156 = vpop.f32.mrf.mxu0
    %v2157 = vpop.f32.mrf.mxu0
    %v2158 = vadd.f32 0.0, %v2157
    %v2159 = vpop.f32.mrf.mxu0
    %2160 = vmatprep.mubr.bf16.mxu0 0
    %2161 = vmatmul.mubr.bf16.gmra.mxu0 %v2003
    %v2162 = vpop.f32.mrf.mxu0
    %v2163 = vadd.f32 0.0, %v2162
    %v2164 = vpop.f32.mrf.mxu0
    %v2165 = vpop.f32.mrf.mxu0
    %v2166 = vadd.f32 0.0, %v2165
    %v2167 = vpop.f32.mrf.mxu0
    %2168 = vmatprep.mubr.bf16.mxu0 0
    %2169 = vmatmul.mubr.bf16.gmra.mxu0 %v2006
    %v2170 = vpop.f32.mrf.mxu0
    %v2171 = vadd.f32 0.0, %v2170
    %v2172 = vpop.f32.mrf.mxu0
    %v2173 = vpop.f32.mrf.mxu0
    %v2174 = vadd.f32 0.0, %v2173
    %v2175 = vpop.f32.mrf.mxu0
    %2176 = vmatprep.mubr.bf16.mxu0 0
    %2177 = vmatmul.mubr.bf16.gmra.mxu0 %v2009
    %v2178 = vpop.f32.mrf.mxu0
    %v2179 = vadd.f32 0.0, %v2178
    %v2180 = vpop.f32.mrf.mxu0
    %v2181 = vpop.f32.mrf.mxu0
    %v2182 = vadd.f32 0.0, %v2181
    %v2183 = vpop.f32.mrf.mxu0
    %2184 = vmatprep.mubr.bf16.mxu0 0
    %2185 = vmatmul.mubr.bf16.gmra.mxu0 %v2012
    %v2186 = vpop.f32.mrf.mxu0
    %v2187 = vadd.f32 0.0, %v2186
    %v2188 = vpop.f32.mrf.mxu0
    %v2189 = vpop.f32.mrf.mxu0
    %v2190 = vadd.f32 0.0, %v2189
    %v2191 = vpop.f32.mrf.mxu0
    %2192 = vmatprep.mubr.bf16.mxu0 0
    %2193 = vmatmul.mubr.bf16.gmra.mxu0 %v2015
    %v2194 = vpop.f32.mrf.mxu0
    %v2195 = vadd.f32 0.0, %v2194
    %v2196 = vpop.f32.mrf.mxu0
    %v2197 = vpop.f32.mrf.mxu0
    %v2198 = vadd.f32 0.0, %v2197
    %v2199 = vpop.f32.mrf.mxu0
    %2200 = vmatprep.mubr.bf16.mxu0 0
    %2201 = vmatmul.mubr.bf16.gmra.mxu0 %v2018
    %v2202 = vpop.f32.mrf.mxu0
    %v2203 = vadd.f32 0.0, %v2202
    %v2204 = vpop.f32.mrf.mxu0
    %v2205 = vpop.f32.mrf.mxu0
    %v2206 = vadd.f32 0.0, %v2205
    %v2207 = vpop.f32.mrf.mxu0
    %2208 = vmatprep.mubr.bf16.mxu0 0
    %2209 = vmatmul.mubr.bf16.gmra.mxu0 %v2021
    %v2210 = vpop.f32.mrf.mxu0
    %v2211 = vadd.f32 0.0, %v2210
    %v2212 = vpop.f32.mrf.mxu0
    %v2213 = vpop.f32.mrf.mxu0
    %v2214 = vadd.f32 0.0, %v2213
    %v2215 = vpop.f32.mrf.mxu0
    %2216 = vmatprep.mubr.bf16.mxu0 0
    %2217 = vmatmul.mubr.bf16.gmra.mxu0 %v2024
    %v2218 = vpop.f32.mrf.mxu0
    %v2219 = vadd.f32 0.0, %v2218
    %v2220 = vpop.f32.mrf.mxu0
    %v2221 = vpop.f32.mrf.mxu0
    %v2222 = vadd.f32 0.0, %v2221
    %v2223 = vpop.f32.mrf.mxu0
    %2224 = vmatprep.mubr.bf16.mxu0 0
    %2225 = vmatmul.mubr.bf16.gmra.mxu0 %v2027
    %v2226 = vpop.f32.mrf.mxu0
    %v2227 = vadd.f32 0.0, %v2226
    %v2228 = vpop.f32.mrf.mxu0
    %v2229 = vpop.f32.mrf.mxu0
    %v2230 = vadd.f32 0.0, %v2229
    %v2231 = vpop.f32.mrf.mxu0
    %2232 = vmatprep.mubr.bf16.mxu0 0
    %2233 = vmatmul.mubr.bf16.gmra.mxu0 %v2030
    %v2234 = vpop.f32.mrf.mxu0
    %v2235 = vadd.f32 0.0, %v2234
    %v2236 = vpop.f32.mrf.mxu0
    %v2237 = vpop.f32.mrf.mxu0
    %v2238 = vadd.f32 0.0, %v2237
    %v2239 = vpop.f32.mrf.mxu0
    %2240 = vmatprep.mubr.bf16.mxu0 0
    %2241 = vmatmul.mubr.bf16.gmra.mxu0 %v2033
    %v2242 = vpop.f32.mrf.mxu0
    %v2243 = vadd.f32 0.0, %v2242
    %v2244 = vpop.f32.mrf.mxu0
    %v2245 = vpop.f32.mrf.mxu0
    %v2246 = vadd.f32 0.0, %v2245
    %v2247 = vpop.f32.mrf.mxu0
    %2248 = vmatprep.mubr.bf16.mxu0 0
    %2249 = vmatmul.mubr.bf16.gmra.mxu0 %v2036
    %v2250 = vpop.f32.mrf.mxu0
    %v2251 = vadd.f32 0.0, %v2250
    %v2252 = vpop.f32.mrf.mxu0
    %v2253 = vpop.f32.mrf.mxu0
    %v2254 = vadd.f32 0.0, %v2253
    %v2255 = vpop.f32.mrf.mxu0
    %2256 = vmatprep.mubr.bf16.mxu0 0
    %2257 = vmatmul.mubr.bf16.gmra.mxu0 %v2039
    %v2258 = vpop.f32.mrf.mxu0
    %v2259 = vadd.f32 0.0, %v2258
    %v2260 = vpop.f32.mrf.mxu0
    %v2261 = vpop.f32.mrf.mxu0
    %v2262 = vadd.f32 0.0, %v2261
    %v2263 = vpop.f32.mrf.mxu0
    %2264 = vmatprep.mubr.bf16.mxu0 0
    %2265 = vmatmul.mubr.bf16.gmra.mxu0 %v2042
    %v2266 = vpop.f32.mrf.mxu0
    %v2267 = vadd.f32 0.0, %v2266
    %v2268 = vpop.f32.mrf.mxu0
    %v2269 = vpop.f32.mrf.mxu0
    %v2270 = vadd.f32 0.0, %v2269
    %v2271 = vpop.f32.mrf.mxu0
    %2272 = vmatprep.mubr.bf16.mxu0 0
    %2273 = vmatmul.mubr.bf16.gmra.mxu0 %v2045
    %v2274 = vpop.f32.mrf.mxu0
    %v2275 = vadd.f32 0.0, %v2274
    %v2276 = vpop.f32.mrf.mxu0
    %v2277 = vpop.f32.mrf.mxu0
    %v2278 = vadd.f32 0.0, %v2277
    %v2279 = vpop.f32.mrf.mxu0
    %2280 = vmatprep.mubr.bf16.mxu0 0
    %2281 = vmatmul.mubr.bf16.gmra.mxu0 %v2048
    %v2282 = vpop.f32.mrf.mxu0
    %v2283 = vadd.f32 0.0, %v2282
    %v2284 = vpop.f32.mrf.mxu0
    %v2285 = vpop.f32.mrf.mxu0
    %v2286 = vadd.f32 0.0, %v2285
    %v2287 = vpop.f32.mrf.mxu0
    %2288 = vmatprep.mubr.bf16.mxu0 0
    %2289 = vmatmul.mubr.bf16.gmra.mxu0 %v2051
    %v2290 = vpop.f32.mrf.mxu0
    %v2291 = vadd.f32 0.0, %v2290
    %v2292 = vpop.f32.mrf.mxu0
    %v2293 = vpop.f32.mrf.mxu0
    %v2294 = vadd.f32 0.0, %v2293
    %v2295 = vpop.f32.mrf.mxu0
    %2296 = vmatprep.mubr.bf16.mxu0 0
    %2297 = vmatmul.mubr.bf16.gmra.mxu0 %v2054
    %v2298 = vpop.f32.mrf.mxu0
    %v2299 = vadd.f32 0.0, %v2298
    %v2300 = vpop.f32.mrf.mxu0
    %v2301 = vpop.f32.mrf.mxu0
    %v2302 = vadd.f32 0.0, %v2301
    %v2303 = vpop.f32.mrf.mxu0
    %2304 = vmatprep.mubr.bf16.mxu0 0
    %2305 = vmatmul.mubr.bf16.gmra.mxu0 %v2057
    %v2306 = vpop.f32.mrf.mxu0
    %v2307 = vadd.f32 0.0, %v2306
    %v2308 = vpop.f32.mrf.mxu0
    %v2309 = vpop.f32.mrf.mxu0
    %v2310 = vadd.f32 0.0, %v2309
    %v2311 = vpop.f32.mrf.mxu0
    %2312 = vmatprep.mubr.bf16.mxu0 0
    %2313 = vmatmul.mubr.bf16.gmra.mxu0 %v2060
    %v2314 = vpop.f32.mrf.mxu0
    %v2315 = vadd.f32 0.0, %v2314
    %v2316 = vpop.f32.mrf.mxu0
    %v2317 = vpop.f32.mrf.mxu0
    %v2318 = vadd.f32 0.0, %v2317
    %v2319 = vpop.f32.mrf.mxu0
    %2320 = vmatprep.mubr.bf16.mxu0 0
    %2321 = vmatmul.mubr.bf16.gmra.mxu0 %v2063
    %v2322 = vpop.f32.mrf.mxu0
    %v2323 = vadd.f32 0.0, %v2322
    %v2324 = vpop.f32.mrf.mxu0
    %v2325 = vpop.f32.mrf.mxu0
    %v2326 = vadd.f32 0.0, %v2325
    %v2327 = vpop.f32.mrf.mxu0
    %2328 = vmatprep.mubr.bf16.mxu0 0
    %2329 = vmatmul.mubr.bf16.gmra.mxu0 %v2066
    %v2330 = vpop.f32.mrf.mxu0
    %v2331 = vadd.f32 0.0, %v2330
    %v2332 = vpop.f32.mrf.mxu0
    %v2333 = vpop.f32.mrf.mxu0
    %v2334 = vadd.f32 0.0, %v2333
    %v2335 = vpop.f32.mrf.mxu0
    %2336 = vmatprep.mubr.bf16.mxu0 0
    %2337 = vmatmul.mubr.bf16.gmra.mxu0 %v2069
    %v2338 = vpop.f32.mrf.mxu0
    %v2339 = vadd.f32 0.0, %v2338
    %v2340 = vpop.f32.mrf.mxu0
    %v2341 = vpop.f32.mrf.mxu0
    %v2342 = vadd.f32 0.0, %v2341
    %v2343 = vpop.f32.mrf.mxu0
    %2344 = vmatprep.mubr.bf16.mxu0 0
    %2345 = vmatmul.mubr.bf16.gmra.mxu0 %v2072
    %v2346 = vpop.f32.mrf.mxu0
    %v2347 = vadd.f32 0.0, %v2346
    %v2348 = vpop.f32.mrf.mxu0
    %v2349 = vpop.f32.mrf.mxu0
    %v2350 = vadd.f32 0.0, %v2349
    %v2351 = vpop.f32.mrf.mxu0
    %2352 = vmatprep.mubr.bf16.mxu0 0
    %2353 = vmatmul.mubr.bf16.gmra.mxu0 %v2075
    %v2354 = vpop.f32.mrf.mxu0
    %v2355 = vadd.f32 0.0, %v2354
    %v2356 = vpop.f32.mrf.mxu0
    %v2357 = vpop.f32.mrf.mxu0
    %v2358 = vadd.f32 0.0, %v2357
    %v2359 = vpop.f32.mrf.mxu0
    %2360 = vmatprep.mubr.bf16.mxu0 0
    %2361 = vmatmul.mubr.bf16.gmra.mxu0 %v2078
    %v2362 = vpop.f32.mrf.mxu0
    %v2363 = vadd.f32 0.0, %v2362
    %v2364 = vpop.f32.mrf.mxu0
    %v2365 = vpop.f32.mrf.mxu0
    %v2366 = vadd.f32 0.0, %v2365
    %v2367 = vpop.f32.mrf.mxu0
    %2368 = vdwg.mxu0
    %v2369 = vunpack.c.l.b16 %v197
    %v2370 = vunpack.c.l.b16 %v207
    %v2371 = vunpack.c.l.b16 %v221
    %v2372 = vunpack.c.l.b16 %v231
    %v2373 = vunpack.c.l.b16 %v245
    %v2374 = vunpack.c.l.b16 %v255
    %v2375 = vunpack.c.l.b16 %v269
    %v2376 = vunpack.c.l.b16 %v279
    %v2377 = vunpack.c.l.b16 %v293
    %v2378 = vunpack.c.l.b16 %v303
    %v2379 = vunpack.c.l.b16 %v317
    %v2380 = vunpack.c.l.b16 %v327
    %v2381 = vunpack.c.l.b16 %v341
    %v2382 = vunpack.c.l.b16 %v351
    %v2383 = vunpack.c.l.b16 %v365
    %v2384 = vunpack.c.l.b16 %v375
    %v2385 = vunpack.c.l.b16 %v389
    %v2386 = vunpack.c.l.b16 %v399
    %v2387 = vunpack.c.l.b16 %v413
    %v2388 = vunpack.c.l.b16 %v423
    %v2389 = vunpack.c.l.b16 %v437
    %v2390 = vunpack.c.l.b16 %v447
    %v2391 = vunpack.c.l.b16 %v461
    %v2392 = vunpack.c.l.b16 %v471
    %v2393 = vunpack.c.l.b16 %v485
    %v2394 = vunpack.c.l.b16 %v495
    %v2395 = vunpack.c.l.b16 %v509
    %v2396 = vunpack.c.l.b16 %v519
    %v2397 = vunpack.c.l.b16 %v533
    %v2398 = vunpack.c.l.b16 %v543
    %v2399 = vunpack.c.l.b16 %v557
    %v2400 = vunpack.c.l.b16 %v567
    %v2401 = vunpack.c.l.b16 %v629
    %v2402 = vunpack.c.l.b16 %v639
    %v2403 = vunpack.c.l.b16 %v653
    %v2404 = vunpack.c.l.b16 %v663
    %v2405 = vunpack.c.l.b16 %v677
    %v2406 = vunpack.c.l.b16 %v687
    %v2407 = vunpack.c.l.b16 %v701
    %v2408 = vunpack.c.l.b16 %v711
    %v2409 = vunpack.c.l.b16 %v725
    %v2410 = vunpack.c.l.b16 %v735
    %v2411 = vunpack.c.l.b16 %v749
    %v2412 = vunpack.c.l.b16 %v759
    %v2413 = vunpack.c.l.b16 %v773
    %v2414 = vunpack.c.l.b16 %v783
    %v2415 = vunpack.c.l.b16 %v797
    %v2416 = vunpack.c.l.b16 %v807
    %v2417 = vunpack.c.l.b16 %v821
    %v2418 = vunpack.c.l.b16 %v831
    %v2419 = vunpack.c.l.b16 %v845
    %v2420 = vunpack.c.l.b16 %v855
    %v2421 = vunpack.c.l.b16 %v869
    %v2422 = vunpack.c.l.b16 %v879
    %v2423 = vunpack.c.l.b16 %v893
    %v2424 = vunpack.c.l.b16 %v903
    %v2425 = vunpack.c.l.b16 %v917
    %v2426 = vunpack.c.l.b16 %v927
    %v2427 = vunpack.c.l.b16 %v941
    %v2428 = vunpack.c.l.b16 %v951
    %v2429 = vunpack.c.l.b16 %v965
    %v2430 = vunpack.c.l.b16 %v975
    %v2431 = vunpack.c.l.b16 %v989
    %v2432 = vunpack.c.l.b16 %v999
    %v2433 = vpack.c.b16 %v2370, %v2369
    %v2434 = vpack.c.b16 %v2372, %v2371
    %v2435 = vpack.c.b16 %v2374, %v2373
    %v2436 = vpack.c.b16 %v2376, %v2375
    %v2437 = vpack.c.b16 %v2378, %v2377
    %v2438 = vpack.c.b16 %v2380, %v2379
    %v2439 = vpack.c.b16 %v2382, %v2381
    %v2440 = vpack.c.b16 %v2384, %v2383
    %v2441 = vpack.c.b16 %v2386, %v2385
    %v2442 = vpack.c.b16 %v2388, %v2387
    %v2443 = vpack.c.b16 %v2390, %v2389
    %v2444 = vpack.c.b16 %v2392, %v2391
    %v2445 = vpack.c.b16 %v2394, %v2393
    %v2446 = vpack.c.b16 %v2396, %v2395
    %v2447 = vpack.c.b16 %v2398, %v2397
    %v2448 = vpack.c.b16 %v2400, %v2399
    %v2449 = vpack.c.b16 %v2402, %v2401
    %v2450 = vpack.c.b16 %v2404, %v2403
    %v2451 = vpack.c.b16 %v2406, %v2405
    %v2452 = vpack.c.b16 %v2408, %v2407
    %v2453 = vpack.c.b16 %v2410, %v2409
    %v2454 = vpack.c.b16 %v2412, %v2411
    %v2455 = vpack.c.b16 %v2414, %v2413
    %v2456 = vpack.c.b16 %v2416, %v2415
    %v2457 = vpack.c.b16 %v2418, %v2417
    %v2458 = vpack.c.b16 %v2420, %v2419
    %v2459 = vpack.c.b16 %v2422, %v2421
    %v2460 = vpack.c.b16 %v2424, %v2423
    %v2461 = vpack.c.b16 %v2426, %v2425
    %v2462 = vpack.c.b16 %v2428, %v2427
    %v2463 = vpack.c.b16 %v2430, %v2429
    %v2464 = vpack.c.b16 %v2432, %v2431
    %v2469 = vunpack.c.l.b16 %v1803
    %v2470 = vunpack.c.l.b16 %v1804
    %v2471 = vunpack.c.l.b16 %v1805
    %v2472 = vunpack.c.l.b16 %v1806
    %v2473 = vpack.c.b16 %v2470, %v2469
    %v2474 = vpack.c.b16 %v2472, %v2471
    %v2478 = vsel %vm1983, %v2433, 0
    %v2481 = vsel %vm1983, %v2434, 0
    %v2484 = vsel %vm1983, %v2435, 0
    %v2487 = vsel %vm1983, %v2436, 0
    %v2490 = vsel %vm1983, %v2437, 0
    %v2493 = vsel %vm1983, %v2438, 0
    %v2496 = vsel %vm1983, %v2439, 0
    %v2499 = vsel %vm1983, %v2440, 0
    %v2502 = vsel %vm1983, %v2441, 0
    %v2505 = vsel %vm1983, %v2442, 0
    %v2508 = vsel %vm1983, %v2443, 0
    %v2511 = vsel %vm1983, %v2444, 0
    %v2514 = vsel %vm1983, %v2445, 0
    %v2517 = vsel %vm1983, %v2446, 0
    %v2520 = vsel %vm1983, %v2447, 0
    %v2523 = vsel %vm1983, %v2448, 0
    %v2526 = vsel %vm1983, %v2449, 0
    %v2529 = vsel %vm1983, %v2450, 0
    %v2532 = vsel %vm1983, %v2451, 0
    %v2535 = vsel %vm1983, %v2452, 0
    %v2538 = vsel %vm1983, %v2453, 0
    %v2541 = vsel %vm1983, %v2454, 0
    %v2544 = vsel %vm1983, %v2455, 0
    %v2547 = vsel %vm1983, %v2456, 0
    %v2550 = vsel %vm1983, %v2457, 0
    %v2553 = vsel %vm1983, %v2458, 0
    %v2556 = vsel %vm1983, %v2459, 0
    %v2559 = vsel %vm1983, %v2460, 0
    %v2562 = vsel %vm1983, %v2461, 0
    %v2565 = vsel %vm1983, %v2462, 0
    %v2568 = vsel %vm1983, %v2463, 0
    %v2571 = vsel %vm1983, %v2464, 0
    %2573 = vmatprep.subr.bf16.mxu0 0
    %2574 = vmatpush1.bf16.msra.mxu0 0
    %2575 = vmatprep.subr.bf16.mxu0 0
    %2576 = vmatpush1.bf16.msra.mxu0 0
    %2577 = vmatprep.subr.bf16.mxu0 0
    %2578 = vmatpush1.bf16.msra.mxu0 0
    %2579 = vmatprep.subr.bf16.mxu0 0
    %2580 = vmatpush1.bf16.msra.mxu0 0
    %2581 = vmatprep.subr.bf16.mxu0 0
    %2582 = vmatpush1.bf16.msra.mxu0 0
    %2583 = vmatprep.subr.bf16.mxu0 0
    %2584 = vmatpush1.bf16.msra.mxu0 0
    %2585 = vmatprep.subr.bf16.mxu0 0
    %2586 = vmatpush1.bf16.msra.mxu0 %v2474
    %2587 = vmatprep.subr.bf16.mxu0 0
    %2588 = vmatpush1.bf16.msra.mxu0 %v2473
    %2589 = vmatprep.subr.bf16.mxu0 0
    %2590 = vmatpush2.bf16.msra.mxu0 0
    %2591 = vmatprep.subr.bf16.mxu0 0
    %2592 = vmatpush2.bf16.msra.mxu0 0
    %2593 = vmatprep.subr.bf16.mxu0 0
    %2594 = vmatpush2.bf16.msra.mxu0 0
    %2595 = vmatprep.subr.bf16.mxu0 0
    %2596 = vmatpush2.bf16.msra.mxu0 0
    %2597 = vmatprep.subr.bf16.mxu0 0
    %2598 = vmatpush2.bf16.msra.mxu0 0
    %2599 = vmatprep.subr.bf16.mxu0 0
    %2600 = vmatpush2.bf16.msra.mxu0 0
    %2601 = vmatprep.subr.bf16.mxu0 0
    %2602 = vmatpush2.bf16.msra.mxu0 0
    %2603 = vmatprep.subr.bf16.mxu0 0
    %2604 = vmatpush2.bf16.msra.mxu0 0
    %2605 = vmatprep.mubr.bf16.mxu0 0
    %2606 = vmatmul.mubr.bf16.gmra.mxu0 %v2478
    %v2607 = vpop.f32.mrf.mxu0
    %v2608 = vadd.f32 %v2115, %v2607
    %v2609 = vpop.f32.mrf.mxu0
    %v2610 = vpop.f32.mrf.mxu0
    %v2611 = vadd.f32 %v2118, %v2610
    %v2612 = vpop.f32.mrf.mxu0
    %2613 = vmatprep.mubr.bf16.mxu0 0
    %2614 = vmatmul.mubr.bf16.gmra.mxu0 %v2481
    %v2615 = vpop.f32.mrf.mxu0
    %v2616 = vadd.f32 %v2123, %v2615
    %v2617 = vpop.f32.mrf.mxu0
    %v2618 = vpop.f32.mrf.mxu0
    %v2619 = vadd.f32 %v2126, %v2618
    %v2620 = vpop.f32.mrf.mxu0
    %2621 = vmatprep.mubr.bf16.mxu0 0
    %2622 = vmatmul.mubr.bf16.gmra.mxu0 %v2484
    %v2623 = vpop.f32.mrf.mxu0
    %v2624 = vadd.f32 %v2131, %v2623
    %v2625 = vpop.f32.mrf.mxu0
    %v2626 = vpop.f32.mrf.mxu0
    %v2627 = vadd.f32 %v2134, %v2626
    %v2628 = vpop.f32.mrf.mxu0
    %2629 = vmatprep.mubr.bf16.mxu0 0
    %2630 = vmatmul.mubr.bf16.gmra.mxu0 %v2487
    %v2631 = vpop.f32.mrf.mxu0
    %v2632 = vadd.f32 %v2139, %v2631
    %v2633 = vpop.f32.mrf.mxu0
    %v2634 = vpop.f32.mrf.mxu0
    %v2635 = vadd.f32 %v2142, %v2634
    %v2636 = vpop.f32.mrf.mxu0
    %2637 = vmatprep.mubr.bf16.mxu0 0
    %2638 = vmatmul.mubr.bf16.gmra.mxu0 %v2490
    %v2639 = vpop.f32.mrf.mxu0
    %v2640 = vadd.f32 %v2147, %v2639
    %v2641 = vpop.f32.mrf.mxu0
    %v2642 = vpop.f32.mrf.mxu0
    %v2643 = vadd.f32 %v2150, %v2642
    %v2644 = vpop.f32.mrf.mxu0
    %2645 = vmatprep.mubr.bf16.mxu0 0
    %2646 = vmatmul.mubr.bf16.gmra.mxu0 %v2493
    %v2647 = vpop.f32.mrf.mxu0
    %v2648 = vadd.f32 %v2155, %v2647
    %v2649 = vpop.f32.mrf.mxu0
    %v2650 = vpop.f32.mrf.mxu0
    %v2651 = vadd.f32 %v2158, %v2650
    %v2652 = vpop.f32.mrf.mxu0
    %2653 = vmatprep.mubr.bf16.mxu0 0
    %2654 = vmatmul.mubr.bf16.gmra.mxu0 %v2496
    %v2655 = vpop.f32.mrf.mxu0
    %v2656 = vadd.f32 %v2163, %v2655
    %v2657 = vpop.f32.mrf.mxu0
    %v2658 = vpop.f32.mrf.mxu0
    %v2659 = vadd.f32 %v2166, %v2658
    %v2660 = vpop.f32.mrf.mxu0
    %2661 = vmatprep.mubr.bf16.mxu0 0
    %2662 = vmatmul.mubr.bf16.gmra.mxu0 %v2499
    %v2663 = vpop.f32.mrf.mxu0
    %v2664 = vadd.f32 %v2171, %v2663
    %v2665 = vpop.f32.mrf.mxu0
    %v2666 = vpop.f32.mrf.mxu0
    %v2667 = vadd.f32 %v2174, %v2666
    %v2668 = vpop.f32.mrf.mxu0
    %2669 = vmatprep.mubr.bf16.mxu0 0
    %2670 = vmatmul.mubr.bf16.gmra.mxu0 %v2502
    %v2671 = vpop.f32.mrf.mxu0
    %v2672 = vadd.f32 %v2179, %v2671
    %v2673 = vpop.f32.mrf.mxu0
    %v2674 = vpop.f32.mrf.mxu0
    %v2675 = vadd.f32 %v2182, %v2674
    %v2676 = vpop.f32.mrf.mxu0
    %2677 = vmatprep.mubr.bf16.mxu0 0
    %2678 = vmatmul.mubr.bf16.gmra.mxu0 %v2505
    %v2679 = vpop.f32.mrf.mxu0
    %v2680 = vadd.f32 %v2187, %v2679
    %v2681 = vpop.f32.mrf.mxu0
    %v2682 = vpop.f32.mrf.mxu0
    %v2683 = vadd.f32 %v2190, %v2682
    %v2684 = vpop.f32.mrf.mxu0
    %2685 = vmatprep.mubr.bf16.mxu0 0
    %2686 = vmatmul.mubr.bf16.gmra.mxu0 %v2508
    %v2687 = vpop.f32.mrf.mxu0
    %v2688 = vadd.f32 %v2195, %v2687
    %v2689 = vpop.f32.mrf.mxu0
    %v2690 = vpop.f32.mrf.mxu0
    %v2691 = vadd.f32 %v2198, %v2690
    %v2692 = vpop.f32.mrf.mxu0
    %2693 = vmatprep.mubr.bf16.mxu0 0
    %2694 = vmatmul.mubr.bf16.gmra.mxu0 %v2511
    %v2695 = vpop.f32.mrf.mxu0
    %v2696 = vadd.f32 %v2203, %v2695
    %v2697 = vpop.f32.mrf.mxu0
    %v2698 = vpop.f32.mrf.mxu0
    %v2699 = vadd.f32 %v2206, %v2698
    %v2700 = vpop.f32.mrf.mxu0
    %2701 = vmatprep.mubr.bf16.mxu0 0
    %2702 = vmatmul.mubr.bf16.gmra.mxu0 %v2514
    %v2703 = vpop.f32.mrf.mxu0
    %v2704 = vadd.f32 %v2211, %v2703
    %v2705 = vpop.f32.mrf.mxu0
    %v2706 = vpop.f32.mrf.mxu0
    %v2707 = vadd.f32 %v2214, %v2706
    %v2708 = vpop.f32.mrf.mxu0
    %2709 = vmatprep.mubr.bf16.mxu0 0
    %2710 = vmatmul.mubr.bf16.gmra.mxu0 %v2517
    %v2711 = vpop.f32.mrf.mxu0
    %v2712 = vadd.f32 %v2219, %v2711
    %v2713 = vpop.f32.mrf.mxu0
    %v2714 = vpop.f32.mrf.mxu0
    %v2715 = vadd.f32 %v2222, %v2714
    %v2716 = vpop.f32.mrf.mxu0
    %2717 = vmatprep.mubr.bf16.mxu0 0
    %2718 = vmatmul.mubr.bf16.gmra.mxu0 %v2520
    %v2719 = vpop.f32.mrf.mxu0
    %v2720 = vadd.f32 %v2227, %v2719
    %v2721 = vpop.f32.mrf.mxu0
    %v2722 = vpop.f32.mrf.mxu0
    %v2723 = vadd.f32 %v2230, %v2722
    %v2724 = vpop.f32.mrf.mxu0
    %2725 = vmatprep.mubr.bf16.mxu0 0
    %2726 = vmatmul.mubr.bf16.gmra.mxu0 %v2523
    %v2727 = vpop.f32.mrf.mxu0
    %v2728 = vadd.f32 %v2235, %v2727
    %v2729 = vpop.f32.mrf.mxu0
    %v2730 = vpop.f32.mrf.mxu0
    %v2731 = vadd.f32 %v2238, %v2730
    %v2732 = vpop.f32.mrf.mxu0
    %2733 = vmatprep.mubr.bf16.mxu0 0
    %2734 = vmatmul.mubr.bf16.gmra.mxu0 %v2526
    %v2735 = vpop.f32.mrf.mxu0
    %v2736 = vadd.f32 %v2243, %v2735
    %v2737 = vpop.f32.mrf.mxu0
    %v2738 = vpop.f32.mrf.mxu0
    %v2739 = vadd.f32 %v2246, %v2738
    %v2740 = vpop.f32.mrf.mxu0
    %2741 = vmatprep.mubr.bf16.mxu0 0
    %2742 = vmatmul.mubr.bf16.gmra.mxu0 %v2529
    %v2743 = vpop.f32.mrf.mxu0
    %v2744 = vadd.f32 %v2251, %v2743
    %v2745 = vpop.f32.mrf.mxu0
    %v2746 = vpop.f32.mrf.mxu0
    %v2747 = vadd.f32 %v2254, %v2746
    %v2748 = vpop.f32.mrf.mxu0
    %2749 = vmatprep.mubr.bf16.mxu0 0
    %2750 = vmatmul.mubr.bf16.gmra.mxu0 %v2532
    %v2751 = vpop.f32.mrf.mxu0
    %v2752 = vadd.f32 %v2259, %v2751
    %v2753 = vpop.f32.mrf.mxu0
    %v2754 = vpop.f32.mrf.mxu0
    %v2755 = vadd.f32 %v2262, %v2754
    %v2756 = vpop.f32.mrf.mxu0
    %2757 = vmatprep.mubr.bf16.mxu0 0
    %2758 = vmatmul.mubr.bf16.gmra.mxu0 %v2535
    %v2759 = vpop.f32.mrf.mxu0
    %v2760 = vadd.f32 %v2267, %v2759
    %v2761 = vpop.f32.mrf.mxu0
    %v2762 = vpop.f32.mrf.mxu0
    %v2763 = vadd.f32 %v2270, %v2762
    %v2764 = vpop.f32.mrf.mxu0
    %2765 = vmatprep.mubr.bf16.mxu0 0
    %2766 = vmatmul.mubr.bf16.gmra.mxu0 %v2538
    %v2767 = vpop.f32.mrf.mxu0
    %v2768 = vadd.f32 %v2275, %v2767
    %v2769 = vpop.f32.mrf.mxu0
    %v2770 = vpop.f32.mrf.mxu0
    %v2771 = vadd.f32 %v2278, %v2770
    %v2772 = vpop.f32.mrf.mxu0
    %2773 = vmatprep.mubr.bf16.mxu0 0
    %2774 = vmatmul.mubr.bf16.gmra.mxu0 %v2541
    %v2775 = vpop.f32.mrf.mxu0
    %v2776 = vadd.f32 %v2283, %v2775
    %v2777 = vpop.f32.mrf.mxu0
    %v2778 = vpop.f32.mrf.mxu0
    %v2779 = vadd.f32 %v2286, %v2778
    %v2780 = vpop.f32.mrf.mxu0
    %2781 = vmatprep.mubr.bf16.mxu0 0
    %2782 = vmatmul.mubr.bf16.gmra.mxu0 %v2544
    %v2783 = vpop.f32.mrf.mxu0
    %v2784 = vadd.f32 %v2291, %v2783
    %v2785 = vpop.f32.mrf.mxu0
    %v2786 = vpop.f32.mrf.mxu0
    %v2787 = vadd.f32 %v2294, %v2786
    %v2788 = vpop.f32.mrf.mxu0
    %2789 = vmatprep.mubr.bf16.mxu0 0
    %2790 = vmatmul.mubr.bf16.gmra.mxu0 %v2547
    %v2791 = vpop.f32.mrf.mxu0
    %v2792 = vadd.f32 %v2299, %v2791
    %v2793 = vpop.f32.mrf.mxu0
    %v2794 = vpop.f32.mrf.mxu0
    %v2795 = vadd.f32 %v2302, %v2794
    %v2796 = vpop.f32.mrf.mxu0
    %2797 = vmatprep.mubr.bf16.mxu0 0
    %2798 = vmatmul.mubr.bf16.gmra.mxu0 %v2550
    %v2799 = vpop.f32.mrf.mxu0
    %v2800 = vadd.f32 %v2307, %v2799
    %v2801 = vpop.f32.mrf.mxu0
    %v2802 = vpop.f32.mrf.mxu0
    %v2803 = vadd.f32 %v2310, %v2802
    %v2804 = vpop.f32.mrf.mxu0
    %2805 = vmatprep.mubr.bf16.mxu0 0
    %2806 = vmatmul.mubr.bf16.gmra.mxu0 %v2553
    %v2807 = vpop.f32.mrf.mxu0
    %v2808 = vadd.f32 %v2315, %v2807
    %v2809 = vpop.f32.mrf.mxu0
    %v2810 = vpop.f32.mrf.mxu0
    %v2811 = vadd.f32 %v2318, %v2810
    %v2812 = vpop.f32.mrf.mxu0
    %2813 = vmatprep.mubr.bf16.mxu0 0
    %2814 = vmatmul.mubr.bf16.gmra.mxu0 %v2556
    %v2815 = vpop.f32.mrf.mxu0
    %v2816 = vadd.f32 %v2323, %v2815
    %v2817 = vpop.f32.mrf.mxu0
    %v2818 = vpop.f32.mrf.mxu0
    %v2819 = vadd.f32 %v2326, %v2818
    %v2820 = vpop.f32.mrf.mxu0
    %2821 = vmatprep.mubr.bf16.mxu0 0
    %2822 = vmatmul.mubr.bf16.gmra.mxu0 %v2559
    %v2823 = vpop.f32.mrf.mxu0
    %v2824 = vadd.f32 %v2331, %v2823
    %v2825 = vpop.f32.mrf.mxu0
    %v2826 = vpop.f32.mrf.mxu0
    %v2827 = vadd.f32 %v2334, %v2826
    %v2828 = vpop.f32.mrf.mxu0
    %2829 = vmatprep.mubr.bf16.mxu0 0
    %2830 = vmatmul.mubr.bf16.gmra.mxu0 %v2562
    %v2831 = vpop.f32.mrf.mxu0
    %v2832 = vadd.f32 %v2339, %v2831
    %v2833 = vpop.f32.mrf.mxu0
    %v2834 = vpop.f32.mrf.mxu0
    %v2835 = vadd.f32 %v2342, %v2834
    %v2836 = vpop.f32.mrf.mxu0
    %2837 = vmatprep.mubr.bf16.mxu0 0
    %2838 = vmatmul.mubr.bf16.gmra.mxu0 %v2565
    %v2839 = vpop.f32.mrf.mxu0
    %v2840 = vadd.f32 %v2347, %v2839
    %v2841 = vpop.f32.mrf.mxu0
    %v2842 = vpop.f32.mrf.mxu0
    %v2843 = vadd.f32 %v2350, %v2842
    %v2844 = vpop.f32.mrf.mxu0
    %2845 = vmatprep.mubr.bf16.mxu0 0
    %2846 = vmatmul.mubr.bf16.gmra.mxu0 %v2568
    %v2847 = vpop.f32.mrf.mxu0
    %v2848 = vadd.f32 %v2355, %v2847
    %v2849 = vpop.f32.mrf.mxu0
    %v2850 = vpop.f32.mrf.mxu0
    %v2851 = vadd.f32 %v2358, %v2850
    %v2852 = vpop.f32.mrf.mxu0
    %2853 = vmatprep.mubr.bf16.mxu0 0
    %2854 = vmatmul.mubr.bf16.gmra.mxu0 %v2571
    %v2855 = vpop.f32.mrf.mxu0
    %v2856 = vadd.f32 %v2363, %v2855
    %v2857 = vpop.f32.mrf.mxu0
    %v2858 = vpop.f32.mrf.mxu0
    %v2859 = vadd.f32 %v2366, %v2858
    %v2860 = vpop.f32.mrf.mxu0
    %2861 = vdwg.mxu0
    %v2862 = vld [vmem:[%s3] sm:$0x1]
    %v2864 = vlaneseq
    %v2865 = vshrl.u32 %v2864, 7
    %v2866 = vsub.s32 0, %v2865
    %v2867 = vrot.slane %v2862, %v2866
    %v2869 = vadd.f32 %v2608, %v2867
    %v2870 = vadd.f32 %v2611, %v2867
    %v2871 = vadd.f32 %v2616, %v2867
    %v2872 = vadd.f32 %v2619, %v2867
    %v2873 = vadd.f32 %v2624, %v2867
    %v2874 = vadd.f32 %v2627, %v2867
    %v2875 = vadd.f32 %v2632, %v2867
    %v2876 = vadd.f32 %v2635, %v2867
    %v2877 = vadd.f32 %v2640, %v2867
    %v2878 = vadd.f32 %v2643, %v2867
    %v2879 = vadd.f32 %v2648, %v2867
    %v2880 = vadd.f32 %v2651, %v2867
    %v2881 = vadd.f32 %v2656, %v2867
    %v2882 = vadd.f32 %v2659, %v2867
    %v2883 = vadd.f32 %v2664, %v2867
    %v2884 = vadd.f32 %v2667, %v2867
    %v2885 = vadd.f32 %v2672, %v2867
    %v2886 = vadd.f32 %v2675, %v2867
    %v2887 = vadd.f32 %v2680, %v2867
    %v2888 = vadd.f32 %v2683, %v2867
    %v2889 = vadd.f32 %v2688, %v2867
    %v2890 = vadd.f32 %v2691, %v2867
    %v2891 = vadd.f32 %v2696, %v2867
    %v2892 = vadd.f32 %v2699, %v2867
    %v2893 = vadd.f32 %v2704, %v2867
    %v2894 = vadd.f32 %v2707, %v2867
    %v2895 = vadd.f32 %v2712, %v2867
    %v2896 = vadd.f32 %v2715, %v2867
    %v2897 = vadd.f32 %v2720, %v2867
    %v2898 = vadd.f32 %v2723, %v2867
    %v2899 = vadd.f32 %v2728, %v2867
    %v2900 = vadd.f32 %v2731, %v2867
    %v2901 = vadd.f32 %v2736, %v2867
    %v2902 = vadd.f32 %v2739, %v2867
    %v2903 = vadd.f32 %v2744, %v2867
    %v2904 = vadd.f32 %v2747, %v2867
    %v2905 = vadd.f32 %v2752, %v2867
    %v2906 = vadd.f32 %v2755, %v2867
    %v2907 = vadd.f32 %v2760, %v2867
    %v2908 = vadd.f32 %v2763, %v2867
    %v2909 = vadd.f32 %v2768, %v2867
    %v2910 = vadd.f32 %v2771, %v2867
    %v2911 = vadd.f32 %v2776, %v2867
    %v2912 = vadd.f32 %v2779, %v2867
    %v2913 = vadd.f32 %v2784, %v2867
    %v2914 = vadd.f32 %v2787, %v2867
    %v2915 = vadd.f32 %v2792, %v2867
    %v2916 = vadd.f32 %v2795, %v2867
    %v2917 = vadd.f32 %v2800, %v2867
    %v2918 = vadd.f32 %v2803, %v2867
    %v2919 = vadd.f32 %v2808, %v2867
    %v2920 = vadd.f32 %v2811, %v2867
    %v2921 = vadd.f32 %v2816, %v2867
    %v2922 = vadd.f32 %v2819, %v2867
    %v2923 = vadd.f32 %v2824, %v2867
    %v2924 = vadd.f32 %v2827, %v2867
    %v2925 = vadd.f32 %v2832, %v2867
    %v2926 = vadd.f32 %v2835, %v2867
    %v2927 = vadd.f32 %v2840, %v2867
    %v2928 = vadd.f32 %v2843, %v2867
    %v2929 = vadd.f32 %v2848, %v2867
    %v2930 = vadd.f32 %v2851, %v2867
    %v2931 = vadd.f32 %v2856, %v2867
    %v2932 = vadd.f32 %v2859, %v2867
    %v2933 = vld [vmem:[%s4] sm:$0x1]
    %v2934 = vld [vmem:[%s5] sm:$0x1]
    %vm2935 = vcmask 719872
    %v2936 = vsel %vm2935, %v2869, 0.0
    %v2937 = vsel %vm2935, %v2870, 0.0
    %v2938 = vadd.f32 %v2936, %v2937
    %v2939 = vsel %vm2935, %v2871, 0.0
    %v2940 = vadd.f32 %v2938, %v2939
    %v2941 = vsel %vm2935, %v2872, 0.0
    %v2942 = vadd.f32 %v2940, %v2941
    %v2943 = vsel %vm2935, %v2873, 0.0
    %v2944 = vadd.f32 %v2942, %v2943
    %v2945 = vsel %vm2935, %v2874, 0.0
    %v2946 = vadd.f32 %v2944, %v2945
    %v2947 = vsel %vm2935, %v2875, 0.0
    %v2948 = vadd.f32 %v2946, %v2947
    %v2949 = vsel %vm2935, %v2876, 0.0
    %v2950 = vadd.f32 %v2948, %v2949
    %v2951 = vsel %vm2935, %v2877, 0.0
    %v2952 = vadd.f32 %v2950, %v2951
    %v2953 = vsel %vm2935, %v2878, 0.0
    %v2954 = vadd.f32 %v2952, %v2953
    %v2955 = vsel %vm2935, %v2879, 0.0
    %v2956 = vadd.f32 %v2954, %v2955
    %v2957 = vsel %vm2935, %v2880, 0.0
    %v2958 = vadd.f32 %v2956, %v2957
    %v2959 = vsel %vm2935, %v2881, 0.0
    %v2960 = vadd.f32 %v2958, %v2959
    %v2961 = vsel %vm2935, %v2882, 0.0
    %v2962 = vadd.f32 %v2960, %v2961
    %v2963 = vsel %vm2935, %v2883, 0.0
    %v2964 = vadd.f32 %v2962, %v2963
    %v2965 = vsel %vm2935, %v2884, 0.0
    %v2966 = vadd.f32 %v2964, %v2965
    %v2967 = vsel %vm2935, %v2885, 0.0
    %v2968 = vadd.f32 %v2966, %v2967
    %v2969 = vsel %vm2935, %v2886, 0.0
    %v2970 = vadd.f32 %v2968, %v2969
    %v2971 = vsel %vm2935, %v2887, 0.0
    %v2972 = vadd.f32 %v2970, %v2971
    %v2973 = vsel %vm2935, %v2888, 0.0
    %v2974 = vadd.f32 %v2972, %v2973
    %v2975 = vsel %vm2935, %v2889, 0.0
    %v2976 = vadd.f32 %v2974, %v2975
    %v2977 = vsel %vm2935, %v2890, 0.0
    %v2978 = vadd.f32 %v2976, %v2977
    %v2979 = vsel %vm2935, %v2891, 0.0
    %v2980 = vadd.f32 %v2978, %v2979
    %v2981 = vsel %vm2935, %v2892, 0.0
    %v2982 = vadd.f32 %v2980, %v2981
    %v2983 = vsel %vm2935, %v2893, 0.0
    %v2984 = vadd.f32 %v2982, %v2983
    %v2985 = vsel %vm2935, %v2894, 0.0
    %v2986 = vadd.f32 %v2984, %v2985
    %v2987 = vsel %vm2935, %v2895, 0.0
    %v2988 = vadd.f32 %v2986, %v2987
    %v2989 = vsel %vm2935, %v2896, 0.0
    %v2990 = vadd.f32 %v2988, %v2989
    %v2991 = vsel %vm2935, %v2897, 0.0
    %v2992 = vadd.f32 %v2990, %v2991
    %v2993 = vsel %vm2935, %v2898, 0.0
    %v2994 = vadd.f32 %v2992, %v2993
    %v2995 = vsel %vm2935, %v2899, 0.0
    %v2996 = vadd.f32 %v2994, %v2995
    %v2997 = vsel %vm2935, %v2900, 0.0
    %v2998 = vadd.f32 %v2996, %v2997
    %v2999 = vsel %vm2935, %v2901, 0.0
    %v3000 = vadd.f32 %v2998, %v2999
    %v3001 = vsel %vm2935, %v2902, 0.0
    %v3002 = vadd.f32 %v3000, %v3001
    %v3003 = vsel %vm2935, %v2903, 0.0
    %v3004 = vadd.f32 %v3002, %v3003
    %v3005 = vsel %vm2935, %v2904, 0.0
    %v3006 = vadd.f32 %v3004, %v3005
    %v3007 = vsel %vm2935, %v2905, 0.0
    %v3008 = vadd.f32 %v3006, %v3007
    %v3009 = vsel %vm2935, %v2906, 0.0
    %v3010 = vadd.f32 %v3008, %v3009
    %v3011 = vsel %vm2935, %v2907, 0.0
    %v3012 = vadd.f32 %v3010, %v3011
    %v3013 = vsel %vm2935, %v2908, 0.0
    %v3014 = vadd.f32 %v3012, %v3013
    %v3015 = vsel %vm2935, %v2909, 0.0
    %v3016 = vadd.f32 %v3014, %v3015
    %v3017 = vsel %vm2935, %v2910, 0.0
    %v3018 = vadd.f32 %v3016, %v3017
    %v3019 = vsel %vm2935, %v2911, 0.0
    %v3020 = vadd.f32 %v3018, %v3019
    %v3021 = vsel %vm2935, %v2912, 0.0
    %v3022 = vadd.f32 %v3020, %v3021
    %v3023 = vsel %vm2935, %v2913, 0.0
    %v3024 = vadd.f32 %v3022, %v3023
    %v3025 = vsel %vm2935, %v2914, 0.0
    %v3026 = vadd.f32 %v3024, %v3025
    %v3027 = vsel %vm2935, %v2915, 0.0
    %v3028 = vadd.f32 %v3026, %v3027
    %v3029 = vsel %vm2935, %v2916, 0.0
    %v3030 = vadd.f32 %v3028, %v3029
    %v3031 = vsel %vm2935, %v2917, 0.0
    %v3032 = vadd.f32 %v3030, %v3031
    %v3033 = vsel %vm2935, %v2918, 0.0
    %v3034 = vadd.f32 %v3032, %v3033
    %v3035 = vsel %vm2935, %v2919, 0.0
    %v3036 = vadd.f32 %v3034, %v3035
    %v3037 = vsel %vm2935, %v2920, 0.0
    %v3038 = vadd.f32 %v3036, %v3037
    %v3039 = vsel %vm2935, %v2921, 0.0
    %v3040 = vadd.f32 %v3038, %v3039
    %v3041 = vsel %vm2935, %v2922, 0.0
    %v3042 = vadd.f32 %v3040, %v3041
    %v3043 = vsel %vm2935, %v2923, 0.0
    %v3044 = vadd.f32 %v3042, %v3043
    %v3045 = vsel %vm2935, %v2924, 0.0
    %v3046 = vadd.f32 %v3044, %v3045
    %v3047 = vsel %vm2935, %v2925, 0.0
    %v3048 = vadd.f32 %v3046, %v3047
    %v3049 = vsel %vm2935, %v2926, 0.0
    %v3050 = vadd.f32 %v3048, %v3049
    %v3051 = vsel %vm2935, %v2927, 0.0
    %v3052 = vadd.f32 %v3050, %v3051
    %v3053 = vsel %vm2935, %v2928, 0.0
    %v3054 = vadd.f32 %v3052, %v3053
    %v3055 = vsel %vm2935, %v2929, 0.0
    %v3056 = vadd.f32 %v3054, %v3055
    %v3057 = vsel %vm2935, %v2930, 0.0
    %v3058 = vadd.f32 %v3056, %v3057
    %v3059 = vsel %vm2935, %v2931, 0.0
    %v3060 = vadd.f32 %v3058, %v3059
    %v3061 = vsel %vm2935, %v2932, 0.0
    %v3062 = vadd.f32 %v3060, %v3061
    %v3063 = vrot.slane %v3062, 4
    %v3064 = vadd.f32 %v3062, %v3063
    %v3065 = vrot.slane %v3064, 2
    %v3066 = vadd.f32 %v3064, %v3065
    %v3067 = vrot.slane %v3066, 1
    %v3068 = vadd.f32 %v3066, %v3067
    %v3069 = vmul.f32 %v3068, 0.001953125
    %v3070 = vmul.f32 %v2869, %v2869
    %v3071 = vmul.f32 %v2870, %v2870
    %v3072 = vmul.f32 %v2871, %v2871
    %v3073 = vmul.f32 %v2872, %v2872
    %v3074 = vmul.f32 %v2873, %v2873
    %v3075 = vmul.f32 %v2874, %v2874
    %v3076 = vmul.f32 %v2875, %v2875
    %v3077 = vmul.f32 %v2876, %v2876
    %v3078 = vmul.f32 %v2877, %v2877
    %v3079 = vmul.f32 %v2878, %v2878
    %v3080 = vmul.f32 %v2879, %v2879
    %v3081 = vmul.f32 %v2880, %v2880
    %v3082 = vmul.f32 %v2881, %v2881
    %v3083 = vmul.f32 %v2882, %v2882
    %v3084 = vmul.f32 %v2883, %v2883
    %v3085 = vmul.f32 %v2884, %v2884
    %v3086 = vmul.f32 %v2885, %v2885
    %v3087 = vmul.f32 %v2886, %v2886
    %v3088 = vmul.f32 %v2887, %v2887
    %v3089 = vmul.f32 %v2888, %v2888
    %v3090 = vmul.f32 %v2889, %v2889
    %v3091 = vmul.f32 %v2890, %v2890
    %v3092 = vmul.f32 %v2891, %v2891
    %v3093 = vmul.f32 %v2892, %v2892
    %v3094 = vmul.f32 %v2893, %v2893
    %v3095 = vmul.f32 %v2894, %v2894
    %v3096 = vmul.f32 %v2895, %v2895
    %v3097 = vmul.f32 %v2896, %v2896
    %v3098 = vmul.f32 %v2897, %v2897
    %v3099 = vmul.f32 %v2898, %v2898
    %v3100 = vmul.f32 %v2899, %v2899
    %v3101 = vmul.f32 %v2900, %v2900
    %v3102 = vmul.f32 %v2901, %v2901
    %v3103 = vmul.f32 %v2902, %v2902
    %v3104 = vmul.f32 %v2903, %v2903
    %v3105 = vmul.f32 %v2904, %v2904
    %v3106 = vmul.f32 %v2905, %v2905
    %v3107 = vmul.f32 %v2906, %v2906
    %v3108 = vmul.f32 %v2907, %v2907
    %v3109 = vmul.f32 %v2908, %v2908
    %v3110 = vmul.f32 %v2909, %v2909
    %v3111 = vmul.f32 %v2910, %v2910
    %v3112 = vmul.f32 %v2911, %v2911
    %v3113 = vmul.f32 %v2912, %v2912
    %v3114 = vmul.f32 %v2913, %v2913
    %v3115 = vmul.f32 %v2914, %v2914
    %v3116 = vmul.f32 %v2915, %v2915
    %v3117 = vmul.f32 %v2916, %v2916
    %v3118 = vmul.f32 %v2917, %v2917
    %v3119 = vmul.f32 %v2918, %v2918
    %v3120 = vmul.f32 %v2919, %v2919
    %v3121 = vmul.f32 %v2920, %v2920
    %v3122 = vmul.f32 %v2921, %v2921
    %v3123 = vmul.f32 %v2922, %v2922
    %v3124 = vmul.f32 %v2923, %v2923
    %v3125 = vmul.f32 %v2924, %v2924
    %v3126 = vmul.f32 %v2925, %v2925
    %v3127 = vmul.f32 %v2926, %v2926
    %v3128 = vmul.f32 %v2927, %v2927
    %v3129 = vmul.f32 %v2928, %v2928
    %v3130 = vmul.f32 %v2929, %v2929
    %v3131 = vmul.f32 %v2930, %v2930
    %v3132 = vmul.f32 %v2931, %v2931
    %v3133 = vmul.f32 %v2932, %v2932
    %v3134 = vsel %vm2935, %v3070, 0.0
    %v3135 = vsel %vm2935, %v3071, 0.0
    %v3136 = vadd.f32 %v3134, %v3135
    %v3137 = vsel %vm2935, %v3072, 0.0
    %v3138 = vadd.f32 %v3136, %v3137
    %v3139 = vsel %vm2935, %v3073, 0.0
    %v3140 = vadd.f32 %v3138, %v3139
    %v3141 = vsel %vm2935, %v3074, 0.0
    %v3142 = vadd.f32 %v3140, %v3141
    %v3143 = vsel %vm2935, %v3075, 0.0
    %v3144 = vadd.f32 %v3142, %v3143
    %v3145 = vsel %vm2935, %v3076, 0.0
    %v3146 = vadd.f32 %v3144, %v3145
    %v3147 = vsel %vm2935, %v3077, 0.0
    %v3148 = vadd.f32 %v3146, %v3147
    %v3149 = vsel %vm2935, %v3078, 0.0
    %v3150 = vadd.f32 %v3148, %v3149
    %v3151 = vsel %vm2935, %v3079, 0.0
    %v3152 = vadd.f32 %v3150, %v3151
    %v3153 = vsel %vm2935, %v3080, 0.0
    %v3154 = vadd.f32 %v3152, %v3153
    %v3155 = vsel %vm2935, %v3081, 0.0
    %v3156 = vadd.f32 %v3154, %v3155
    %v3157 = vsel %vm2935, %v3082, 0.0
    %v3158 = vadd.f32 %v3156, %v3157
    %v3159 = vsel %vm2935, %v3083, 0.0
    %v3160 = vadd.f32 %v3158, %v3159
    %v3161 = vsel %vm2935, %v3084, 0.0
    %v3162 = vadd.f32 %v3160, %v3161
    %v3163 = vsel %vm2935, %v3085, 0.0
    %v3164 = vadd.f32 %v3162, %v3163
    %v3165 = vsel %vm2935, %v3086, 0.0
    %v3166 = vadd.f32 %v3164, %v3165
    %v3167 = vsel %vm2935, %v3087, 0.0
    %v3168 = vadd.f32 %v3166, %v3167
    %v3169 = vsel %vm2935, %v3088, 0.0
    %v3170 = vadd.f32 %v3168, %v3169
    %v3171 = vsel %vm2935, %v3089, 0.0
    %v3172 = vadd.f32 %v3170, %v3171
    %v3173 = vsel %vm2935, %v3090, 0.0
    %v3174 = vadd.f32 %v3172, %v3173
    %v3175 = vsel %vm2935, %v3091, 0.0
    %v3176 = vadd.f32 %v3174, %v3175
    %v3177 = vsel %vm2935, %v3092, 0.0
    %v3178 = vadd.f32 %v3176, %v3177
    %v3179 = vsel %vm2935, %v3093, 0.0
    %v3180 = vadd.f32 %v3178, %v3179
    %v3181 = vsel %vm2935, %v3094, 0.0
    %v3182 = vadd.f32 %v3180, %v3181
    %v3183 = vsel %vm2935, %v3095, 0.0
    %v3184 = vadd.f32 %v3182, %v3183
    %v3185 = vsel %vm2935, %v3096, 0.0
    %v3186 = vadd.f32 %v3184, %v3185
    %v3187 = vsel %vm2935, %v3097, 0.0
    %v3188 = vadd.f32 %v3186, %v3187
    %v3189 = vsel %vm2935, %v3098, 0.0
    %v3190 = vadd.f32 %v3188, %v3189
    %v3191 = vsel %vm2935, %v3099, 0.0
    %v3192 = vadd.f32 %v3190, %v3191
    %v3193 = vsel %vm2935, %v3100, 0.0
    %v3194 = vadd.f32 %v3192, %v3193
    %v3195 = vsel %vm2935, %v3101, 0.0
    %v3196 = vadd.f32 %v3194, %v3195
    %v3197 = vsel %vm2935, %v3102, 0.0
    %v3198 = vadd.f32 %v3196, %v3197
    %v3199 = vsel %vm2935, %v3103, 0.0
    %v3200 = vadd.f32 %v3198, %v3199
    %v3201 = vsel %vm2935, %v3104, 0.0
    %v3202 = vadd.f32 %v3200, %v3201
    %v3203 = vsel %vm2935, %v3105, 0.0
    %v3204 = vadd.f32 %v3202, %v3203
    %v3205 = vsel %vm2935, %v3106, 0.0
    %v3206 = vadd.f32 %v3204, %v3205
    %v3207 = vsel %vm2935, %v3107, 0.0
    %v3208 = vadd.f32 %v3206, %v3207
    %v3209 = vsel %vm2935, %v3108, 0.0
    %v3210 = vadd.f32 %v3208, %v3209
    %v3211 = vsel %vm2935, %v3109, 0.0
    %v3212 = vadd.f32 %v3210, %v3211
    %v3213 = vsel %vm2935, %v3110, 0.0
    %v3214 = vadd.f32 %v3212, %v3213
    %v3215 = vsel %vm2935, %v3111, 0.0
    %v3216 = vadd.f32 %v3214, %v3215
    %v3217 = vsel %vm2935, %v3112, 0.0
    %v3218 = vadd.f32 %v3216, %v3217
    %v3219 = vsel %vm2935, %v3113, 0.0
    %v3220 = vadd.f32 %v3218, %v3219
    %v3221 = vsel %vm2935, %v3114, 0.0
    %v3222 = vadd.f32 %v3220, %v3221
    %v3223 = vsel %vm2935, %v3115, 0.0
    %v3224 = vadd.f32 %v3222, %v3223
    %v3225 = vsel %vm2935, %v3116, 0.0
    %v3226 = vadd.f32 %v3224, %v3225
    %v3227 = vsel %vm2935, %v3117, 0.0
    %v3228 = vadd.f32 %v3226, %v3227
    %v3229 = vsel %vm2935, %v3118, 0.0
    %v3230 = vadd.f32 %v3228, %v3229
    %v3231 = vsel %vm2935, %v3119, 0.0
    %v3232 = vadd.f32 %v3230, %v3231
    %v3233 = vsel %vm2935, %v3120, 0.0
    %v3234 = vadd.f32 %v3232, %v3233
    %v3235 = vsel %vm2935, %v3121, 0.0
    %v3236 = vadd.f32 %v3234, %v3235
    %v3237 = vsel %vm2935, %v3122, 0.0
    %v3238 = vadd.f32 %v3236, %v3237
    %v3239 = vsel %vm2935, %v3123, 0.0
    %v3240 = vadd.f32 %v3238, %v3239
    %v3241 = vsel %vm2935, %v3124, 0.0
    %v3242 = vadd.f32 %v3240, %v3241
    %v3243 = vsel %vm2935, %v3125, 0.0
    %v3244 = vadd.f32 %v3242, %v3243
    %v3245 = vsel %vm2935, %v3126, 0.0
    %v3246 = vadd.f32 %v3244, %v3245
    %v3247 = vsel %vm2935, %v3127, 0.0
    %v3248 = vadd.f32 %v3246, %v3247
    %v3249 = vsel %vm2935, %v3128, 0.0
    %v3250 = vadd.f32 %v3248, %v3249
    %v3251 = vsel %vm2935, %v3129, 0.0
    %v3252 = vadd.f32 %v3250, %v3251
    %v3253 = vsel %vm2935, %v3130, 0.0
    %v3254 = vadd.f32 %v3252, %v3253
    %v3255 = vsel %vm2935, %v3131, 0.0
    %v3256 = vadd.f32 %v3254, %v3255
    %v3257 = vsel %vm2935, %v3132, 0.0
    %v3258 = vadd.f32 %v3256, %v3257
    %v3259 = vsel %vm2935, %v3133, 0.0
    %v3260 = vadd.f32 %v3258, %v3259
    %v3261 = vrot.slane %v3260, 4
    %v3262 = vadd.f32 %v3260, %v3261
    %v3263 = vrot.slane %v3262, 2
    %v3264 = vadd.f32 %v3262, %v3263
    %v3265 = vrot.slane %v3264, 1
    %v3266 = vadd.f32 %v3264, %v3265
    %v3267 = vmul.f32 %v3266, 0.001953125
    %v3268 = vmul.f32 %v3069, %v3069
    %v3269 = vsub.f32 %v3267, %v3268
    %v3270 = vmax.f32 %v3269, 0.0
    %v3271 = vadd.f32 %v3270, 1e-05
    %v3272 = vrsqrt.pop %v3271
    %v3273 = vmul.f32 %v2933, %v3272
    %v3274 = vmul.f32 %v3069, %v3273
    %v3275 = vsub.f32 %v2934, %v3274
    %v3277 = vlaneseq
    %v3278 = vshrl.u32 %v3277, 7
    %v3279 = vsub.s32 0, %v3278
    %v3280 = vrot.slane %v3273, %v3279
    %v3282 = vmul.f32 %v2869, %v3280
    %v3283 = vmul.f32 %v2870, %v3280
    %v3284 = vmul.f32 %v2871, %v3280
    %v3285 = vmul.f32 %v2872, %v3280
    %v3286 = vmul.f32 %v2873, %v3280
    %v3287 = vmul.f32 %v2874, %v3280
    %v3288 = vmul.f32 %v2875, %v3280
    %v3289 = vmul.f32 %v2876, %v3280
    %v3290 = vmul.f32 %v2877, %v3280
    %v3291 = vmul.f32 %v2878, %v3280
    %v3292 = vmul.f32 %v2879, %v3280
    %v3293 = vmul.f32 %v2880, %v3280
    %v3294 = vmul.f32 %v2881, %v3280
    %v3295 = vmul.f32 %v2882, %v3280
    %v3296 = vmul.f32 %v2883, %v3280
    %v3297 = vmul.f32 %v2884, %v3280
    %v3298 = vmul.f32 %v2885, %v3280
    %v3299 = vmul.f32 %v2886, %v3280
    %v3300 = vmul.f32 %v2887, %v3280
    %v3301 = vmul.f32 %v2888, %v3280
    %v3302 = vmul.f32 %v2889, %v3280
    %v3303 = vmul.f32 %v2890, %v3280
    %v3304 = vmul.f32 %v2891, %v3280
    %v3305 = vmul.f32 %v2892, %v3280
    %v3306 = vmul.f32 %v2893, %v3280
    %v3307 = vmul.f32 %v2894, %v3280
    %v3308 = vmul.f32 %v2895, %v3280
    %v3309 = vmul.f32 %v2896, %v3280
    %v3310 = vmul.f32 %v2897, %v3280
    %v3311 = vmul.f32 %v2898, %v3280
    %v3312 = vmul.f32 %v2899, %v3280
    %v3313 = vmul.f32 %v2900, %v3280
    %v3314 = vmul.f32 %v2901, %v3280
    %v3315 = vmul.f32 %v2902, %v3280
    %v3316 = vmul.f32 %v2903, %v3280
    %v3317 = vmul.f32 %v2904, %v3280
    %v3318 = vmul.f32 %v2905, %v3280
    %v3319 = vmul.f32 %v2906, %v3280
    %v3320 = vmul.f32 %v2907, %v3280
    %v3321 = vmul.f32 %v2908, %v3280
    %v3322 = vmul.f32 %v2909, %v3280
    %v3323 = vmul.f32 %v2910, %v3280
    %v3324 = vmul.f32 %v2911, %v3280
    %v3325 = vmul.f32 %v2912, %v3280
    %v3326 = vmul.f32 %v2913, %v3280
    %v3327 = vmul.f32 %v2914, %v3280
    %v3328 = vmul.f32 %v2915, %v3280
    %v3329 = vmul.f32 %v2916, %v3280
    %v3330 = vmul.f32 %v2917, %v3280
    %v3331 = vmul.f32 %v2918, %v3280
    %v3332 = vmul.f32 %v2919, %v3280
    %v3333 = vmul.f32 %v2920, %v3280
    %v3334 = vmul.f32 %v2921, %v3280
    %v3335 = vmul.f32 %v2922, %v3280
    %v3336 = vmul.f32 %v2923, %v3280
    %v3337 = vmul.f32 %v2924, %v3280
    %v3338 = vmul.f32 %v2925, %v3280
    %v3339 = vmul.f32 %v2926, %v3280
    %v3340 = vmul.f32 %v2927, %v3280
    %v3341 = vmul.f32 %v2928, %v3280
    %v3342 = vmul.f32 %v2929, %v3280
    %v3343 = vmul.f32 %v2930, %v3280
    %v3344 = vmul.f32 %v2931, %v3280
    %v3345 = vmul.f32 %v2932, %v3280
    %v3347 = vlaneseq
    %v3348 = vshrl.u32 %v3347, 7
    %v3349 = vsub.s32 0, %v3348
    %v3350 = vrot.slane %v3275, %v3349
    %v3352 = vadd.f32 %v3282, %v3350
    %v3353 = vadd.f32 %v3283, %v3350
    %v3354 = vadd.f32 %v3284, %v3350
    %v3355 = vadd.f32 %v3285, %v3350
    %v3356 = vadd.f32 %v3286, %v3350
    %v3357 = vadd.f32 %v3287, %v3350
    %v3358 = vadd.f32 %v3288, %v3350
    %v3359 = vadd.f32 %v3289, %v3350
    %v3360 = vadd.f32 %v3290, %v3350
    %v3361 = vadd.f32 %v3291, %v3350
    %v3362 = vadd.f32 %v3292, %v3350
    %v3363 = vadd.f32 %v3293, %v3350
    %v3364 = vadd.f32 %v3294, %v3350
    %v3365 = vadd.f32 %v3295, %v3350
    %v3366 = vadd.f32 %v3296, %v3350
    %v3367 = vadd.f32 %v3297, %v3350
    %v3368 = vadd.f32 %v3298, %v3350
    %v3369 = vadd.f32 %v3299, %v3350
    %v3370 = vadd.f32 %v3300, %v3350
    %v3371 = vadd.f32 %v3301, %v3350
    %v3372 = vadd.f32 %v3302, %v3350
    %v3373 = vadd.f32 %v3303, %v3350
    %v3374 = vadd.f32 %v3304, %v3350
    %v3375 = vadd.f32 %v3305, %v3350
    %v3376 = vadd.f32 %v3306, %v3350
    %v3377 = vadd.f32 %v3307, %v3350
    %v3378 = vadd.f32 %v3308, %v3350
    %v3379 = vadd.f32 %v3309, %v3350
    %v3380 = vadd.f32 %v3310, %v3350
    %v3381 = vadd.f32 %v3311, %v3350
    %v3382 = vadd.f32 %v3312, %v3350
    %v3383 = vadd.f32 %v3313, %v3350
    %v3384 = vadd.f32 %v3314, %v3350
    %v3385 = vadd.f32 %v3315, %v3350
    %v3386 = vadd.f32 %v3316, %v3350
    %v3387 = vadd.f32 %v3317, %v3350
    %v3388 = vadd.f32 %v3318, %v3350
    %v3389 = vadd.f32 %v3319, %v3350
    %v3390 = vadd.f32 %v3320, %v3350
    %v3391 = vadd.f32 %v3321, %v3350
    %v3392 = vadd.f32 %v3322, %v3350
    %v3393 = vadd.f32 %v3323, %v3350
    %v3394 = vadd.f32 %v3324, %v3350
    %v3395 = vadd.f32 %v3325, %v3350
    %v3396 = vadd.f32 %v3326, %v3350
    %v3397 = vadd.f32 %v3327, %v3350
    %v3398 = vadd.f32 %v3328, %v3350
    %v3399 = vadd.f32 %v3329, %v3350
    %v3400 = vadd.f32 %v3330, %v3350
    %v3401 = vadd.f32 %v3331, %v3350
    %v3402 = vadd.f32 %v3332, %v3350
    %v3403 = vadd.f32 %v3333, %v3350
    %v3404 = vadd.f32 %v3334, %v3350
    %v3405 = vadd.f32 %v3335, %v3350
    %v3406 = vadd.f32 %v3336, %v3350
    %v3407 = vadd.f32 %v3337, %v3350
    %v3408 = vadd.f32 %v3338, %v3350
    %v3409 = vadd.f32 %v3339, %v3350
    %v3410 = vadd.f32 %v3340, %v3350
    %v3411 = vadd.f32 %v3341, %v3350
    %v3412 = vadd.f32 %v3342, %v3350
    %v3413 = vadd.f32 %v3343, %v3350
    %v3414 = vadd.f32 %v3344, %v3350
    %v3415 = vadd.f32 %v3345, %v3350
    %v3416 = vmax.f32 %v3352, 0.0
    %v3417 = vmax.f32 %v3353, 0.0
    %v3418 = vmax.f32 %v3354, 0.0
    %v3419 = vmax.f32 %v3355, 0.0
    %v3420 = vmax.f32 %v3356, 0.0
    %v3421 = vmax.f32 %v3357, 0.0
    %v3422 = vmax.f32 %v3358, 0.0
    %v3423 = vmax.f32 %v3359, 0.0
    %v3424 = vmax.f32 %v3360, 0.0
    %v3425 = vmax.f32 %v3361, 0.0
    %v3426 = vmax.f32 %v3362, 0.0
    %v3427 = vmax.f32 %v3363, 0.0
    %v3428 = vmax.f32 %v3364, 0.0
    %v3429 = vmax.f32 %v3365, 0.0
    %v3430 = vmax.f32 %v3366, 0.0
    %v3431 = vmax.f32 %v3367, 0.0
    %v3432 = vmax.f32 %v3368, 0.0
    %v3433 = vmax.f32 %v3369, 0.0
    %v3434 = vmax.f32 %v3370, 0.0
    %v3435 = vmax.f32 %v3371, 0.0
    %v3436 = vmax.f32 %v3372, 0.0
    %v3437 = vmax.f32 %v3373, 0.0
    %v3438 = vmax.f32 %v3374, 0.0
    %v3439 = vmax.f32 %v3375, 0.0
    %v3440 = vmax.f32 %v3376, 0.0
    %v3441 = vmax.f32 %v3377, 0.0
    %v3442 = vmax.f32 %v3378, 0.0
    %v3443 = vmax.f32 %v3379, 0.0
    %v3444 = vmax.f32 %v3380, 0.0
    %v3445 = vmax.f32 %v3381, 0.0
    %v3446 = vmax.f32 %v3382, 0.0
    %v3447 = vmax.f32 %v3383, 0.0
    %v3448 = vmax.f32 %v3384, 0.0
    %v3449 = vmax.f32 %v3385, 0.0
    %v3450 = vmax.f32 %v3386, 0.0
    %v3451 = vmax.f32 %v3387, 0.0
    %v3452 = vmax.f32 %v3388, 0.0
    %v3453 = vmax.f32 %v3389, 0.0
    %v3454 = vmax.f32 %v3390, 0.0
    %v3455 = vmax.f32 %v3391, 0.0
    %v3456 = vmax.f32 %v3392, 0.0
    %v3457 = vmax.f32 %v3393, 0.0
    %v3458 = vmax.f32 %v3394, 0.0
    %v3459 = vmax.f32 %v3395, 0.0
    %v3460 = vmax.f32 %v3396, 0.0
    %v3461 = vmax.f32 %v3397, 0.0
    %v3462 = vmax.f32 %v3398, 0.0
    %v3463 = vmax.f32 %v3399, 0.0
    %v3464 = vmax.f32 %v3400, 0.0
    %v3465 = vmax.f32 %v3401, 0.0
    %v3466 = vmax.f32 %v3402, 0.0
    %v3467 = vmax.f32 %v3403, 0.0
    %v3468 = vmax.f32 %v3404, 0.0
    %v3469 = vmax.f32 %v3405, 0.0
    %v3470 = vmax.f32 %v3406, 0.0
    %v3471 = vmax.f32 %v3407, 0.0
    %v3472 = vmax.f32 %v3408, 0.0
    %v3473 = vmax.f32 %v3409, 0.0
    %v3474 = vmax.f32 %v3410, 0.0
    %v3475 = vmax.f32 %v3411, 0.0
    %v3476 = vmax.f32 %v3412, 0.0
    %v3477 = vmax.f32 %v3413, 0.0
    %v3478 = vmax.f32 %v3414, 0.0
    %v3479 = vmax.f32 %v3415, 0.0
    %v3480 = vpack.c.bf16 %v3417, %v3416
    %v3481 = vpack.c.bf16 %v3419, %v3418
    %v3482 = vpack.c.bf16 %v3421, %v3420
    %v3483 = vpack.c.bf16 %v3423, %v3422
    %v3484 = vpack.c.bf16 %v3425, %v3424
    %v3485 = vpack.c.bf16 %v3427, %v3426
    %v3486 = vpack.c.bf16 %v3429, %v3428
    %v3487 = vpack.c.bf16 %v3431, %v3430
    %v3488 = vpack.c.bf16 %v3433, %v3432
    %v3489 = vpack.c.bf16 %v3435, %v3434
    %v3490 = vpack.c.bf16 %v3437, %v3436
    %v3491 = vpack.c.bf16 %v3439, %v3438
    %v3492 = vpack.c.bf16 %v3441, %v3440
    %v3493 = vpack.c.bf16 %v3443, %v3442
    %v3494 = vpack.c.bf16 %v3445, %v3444
    %v3495 = vpack.c.bf16 %v3447, %v3446
    %v3496 = vpack.c.bf16 %v3449, %v3448
    %v3497 = vpack.c.bf16 %v3451, %v3450
    %v3498 = vpack.c.bf16 %v3453, %v3452
    %v3499 = vpack.c.bf16 %v3455, %v3454
    %v3500 = vpack.c.bf16 %v3457, %v3456
    %v3501 = vpack.c.bf16 %v3459, %v3458
    %v3502 = vpack.c.bf16 %v3461, %v3460
    %v3503 = vpack.c.bf16 %v3463, %v3462
    %v3504 = vpack.c.bf16 %v3465, %v3464
    %v3505 = vpack.c.bf16 %v3467, %v3466
    %v3506 = vpack.c.bf16 %v3469, %v3468
    %v3507 = vpack.c.bf16 %v3471, %v3470
    %v3508 = vpack.c.bf16 %v3473, %v3472
    %v3509 = vpack.c.bf16 %v3475, %v3474
    %v3510 = vpack.c.bf16 %v3477, %v3476
    %v3511 = vpack.c.bf16 %v3479, %v3478
    %vm3512 = vcmask 519168
    %3513 = vst.msk [vmem:[#allocation2] sm:$0xf] %vm3512, 0
    %3514 = vst.msk [vmem:[#allocation2 + $0x10] sm:$0xf] %vm3512, 0
    %3515 = vst.msk [vmem:[#allocation2 + $0x20] sm:$0xf] %vm3512, 0
    %3516 = vst.msk [vmem:[#allocation2 + $0x30] sm:$0xf] %vm3512, 0
    %3517 = vst.msk [vmem:[#allocation2 + $0x40] sm:$0xf] %vm3512, 0
    %3518 = vst.msk [vmem:[#allocation2 + $0x50] sm:$0xf] %vm3512, 0
    %3519 = vst.msk [vmem:[#allocation2 + $0x60] sm:$0xf] %vm3512, 0
    %3520 = vst.msk [vmem:[#allocation2 + $0x70] sm:$0xf] %vm3512, 0
    %3521 = vst.msk [vmem:[#allocation2 + $0x80] sm:$0xf] %vm3512, 0
    %3522 = vst.msk [vmem:[#allocation2 + $0x90] sm:$0xf] %vm3512, 0
    %3523 = vst.msk [vmem:[#allocation2 + $0xa0] sm:$0xf] %vm3512, 0
    %3524 = vst.msk [vmem:[#allocation2 + $0xb0] sm:$0xf] %vm3512, 0
    %3525 = vst.msk [vmem:[#allocation2 + $0xc0] sm:$0xf] %vm3512, 0
    %3526 = vst.msk [vmem:[#allocation2 + $0xd0] sm:$0xf] %vm3512, 0
    %3527 = vst.msk [vmem:[#allocation2 + $0xe0] sm:$0xf] %vm3512, 0
    %3528 = vst.msk [vmem:[#allocation2 + $0xf0] sm:$0xf] %vm3512, 0
    %3529 = vst.msk [vmem:[#allocation2 + $0x100] sm:$0xf] %vm3512, 0
    %3530 = vst.msk [vmem:[#allocation2 + $0x110] sm:$0xf] %vm3512, 0
    %3531 = vst.msk [vmem:[#allocation2 + $0x120] sm:$0xf] %vm3512, 0
    %3532 = vst.msk [vmem:[#allocation2 + $0x130] sm:$0xf] %vm3512, 0
    %3533 = vst.msk [vmem:[#allocation2 + $0x140] sm:$0xf] %vm3512, 0
    %3534 = vst.msk [vmem:[#allocation2 + $0x150] sm:$0xf] %vm3512, 0
    %3535 = vst.msk [vmem:[#allocation2 + $0x160] sm:$0xf] %vm3512, 0
    %3536 = vst.msk [vmem:[#allocation2 + $0x170] sm:$0xf] %vm3512, 0
    %3537 = vst.msk [vmem:[#allocation2 + $0x180] sm:$0xf] %vm3512, 0
    %3538 = vst.msk [vmem:[#allocation2 + $0x190] sm:$0xf] %vm3512, 0
    %3539 = vst.msk [vmem:[#allocation2 + $0x1a0] sm:$0xf] %vm3512, 0
    %3540 = vst.msk [vmem:[#allocation2 + $0x1b0] sm:$0xf] %vm3512, 0
    %3541 = vst.msk [vmem:[#allocation2 + $0x1c0] sm:$0xf] %vm3512, 0
    %3542 = vst.msk [vmem:[#allocation2 + $0x1d0] sm:$0xf] %vm3512, 0
    %3543 = vst.msk [vmem:[#allocation2 + $0x1e0] sm:$0xf] %vm3512, 0
    %3544 = vst.msk [vmem:[#allocation2 + $0x1f0] sm:$0xf] %vm3512, 0
    %3545 = vst.msk [vmem:[#allocation2 + $0xc] sm:$0xf] %vm3512, 0
    %3546 = vst.msk [vmem:[#allocation2 + $0x1c] sm:$0xf] %vm3512, 0
    %3547 = vst.msk [vmem:[#allocation2 + $0x2c] sm:$0xf] %vm3512, 0
    %3548 = vst.msk [vmem:[#allocation2 + $0x3c] sm:$0xf] %vm3512, 0
    %3549 = vst.msk [vmem:[#allocation2 + $0x4c] sm:$0xf] %vm3512, 0
    %3550 = vst.msk [vmem:[#allocation2 + $0x5c] sm:$0xf] %vm3512, 0
    %3551 = vst.msk [vmem:[#allocation2 + $0x6c] sm:$0xf] %vm3512, 0
    %3552 = vst.msk [vmem:[#allocation2 + $0x7c] sm:$0xf] %vm3512, 0
    %3553 = vst.msk [vmem:[#allocation2 + $0x8c] sm:$0xf] %vm3512, 0
    %3554 = vst.msk [vmem:[#allocation2 + $0x9c] sm:$0xf] %vm3512, 0
    %3555 = vst.msk [vmem:[#allocation2 + $0xac] sm:$0xf] %vm3512, 0
    %3556 = vst.msk [vmem:[#allocation2 + $0xbc] sm:$0xf] %vm3512, 0
    %3557 = vst.msk [vmem:[#allocation2 + $0xcc] sm:$0xf] %vm3512, 0
    %3558 = vst.msk [vmem:[#allocation2 + $0xdc] sm:$0xf] %vm3512, 0
    %3559 = vst.msk [vmem:[#allocation2 + $0xec] sm:$0xf] %vm3512, 0
    %3560 = vst.msk [vmem:[#allocation2 + $0xfc] sm:$0xf] %vm3512, 0
    %3561 = vst.msk [vmem:[#allocation2 + $0x10c] sm:$0xf] %vm3512, 0
    %3562 = vst.msk [vmem:[#allocation2 + $0x11c] sm:$0xf] %vm3512, 0
    %3563 = vst.msk [vmem:[#allocation2 + $0x12c] sm:$0xf] %vm3512, 0
    %3564 = vst.msk [vmem:[#allocation2 + $0x13c] sm:$0xf] %vm3512, 0
    %3565 = vst.msk [vmem:[#allocation2 + $0x14c] sm:$0xf] %vm3512, 0
    %3566 = vst.msk [vmem:[#allocation2 + $0x15c] sm:$0xf] %vm3512, 0
    %3567 = vst.msk [vmem:[#allocation2 + $0x16c] sm:$0xf] %vm3512, 0
    %3568 = vst.msk [vmem:[#allocation2 + $0x17c] sm:$0xf] %vm3512, 0
    %3569 = vst.msk [vmem:[#allocation2 + $0x18c] sm:$0xf] %vm3512, 0
    %3570 = vst.msk [vmem:[#allocation2 + $0x19c] sm:$0xf] %vm3512, 0
    %3571 = vst.msk [vmem:[#allocation2 + $0x1ac] sm:$0xf] %vm3512, 0
    %3572 = vst.msk [vmem:[#allocation2 + $0x1bc] sm:$0xf] %vm3512, 0
    %3573 = vst.msk [vmem:[#allocation2 + $0x1cc] sm:$0xf] %vm3512, 0
    %3574 = vst.msk [vmem:[#allocation2 + $0x1dc] sm:$0xf] %vm3512, 0
    %3575 = vst.msk [vmem:[#allocation2 + $0x1ec] sm:$0xf] %vm3512, 0
    %3576 = vst.msk [vmem:[#allocation2 + $0x1fc] sm:$0xf] %vm3512, 0
    %v3609 = vunpack.c.l.b16 %v3480
    %v3610 = vunpack.c.h.b16 %v3480
    %v3611 = vunpack.c.l.b16 %v3481
    %v3612 = vunpack.c.h.b16 %v3481
    %v3613 = vunpack.c.l.b16 %v3482
    %v3614 = vunpack.c.h.b16 %v3482
    %v3615 = vunpack.c.l.b16 %v3483
    %v3616 = vunpack.c.h.b16 %v3483
    %v3617 = vunpack.c.l.b16 %v3484
    %v3618 = vunpack.c.h.b16 %v3484
    %v3619 = vunpack.c.l.b16 %v3485
    %v3620 = vunpack.c.h.b16 %v3485
    %v3621 = vunpack.c.l.b16 %v3486
    %v3622 = vunpack.c.h.b16 %v3486
    %v3623 = vunpack.c.l.b16 %v3487
    %v3624 = vunpack.c.h.b16 %v3487
    %v3625 = vunpack.c.l.b16 %v3488
    %v3626 = vunpack.c.h.b16 %v3488
    %v3627 = vunpack.c.l.b16 %v3489
    %v3628 = vunpack.c.h.b16 %v3489
    %v3629 = vunpack.c.l.b16 %v3490
    %v3630 = vunpack.c.h.b16 %v3490
    %v3631 = vunpack.c.l.b16 %v3491
    %v3632 = vunpack.c.h.b16 %v3491
    %v3633 = vunpack.c.l.b16 %v3492
    %v3634 = vunpack.c.h.b16 %v3492
    %v3635 = vunpack.c.l.b16 %v3493
    %v3636 = vunpack.c.h.b16 %v3493
    %v3637 = vunpack.c.l.b16 %v3494
    %v3638 = vunpack.c.h.b16 %v3494
    %v3639 = vunpack.c.l.b16 %v3495
    %v3640 = vunpack.c.h.b16 %v3495
    %v3641 = vunpack.c.l.b16 %v3496
    %v3642 = vunpack.c.h.b16 %v3496
    %v3643 = vunpack.c.l.b16 %v3497
    %v3644 = vunpack.c.h.b16 %v3497
    %v3645 = vunpack.c.l.b16 %v3498
    %v3646 = vunpack.c.h.b16 %v3498
    %v3647 = vunpack.c.l.b16 %v3499
    %v3648 = vunpack.c.h.b16 %v3499
    %v3649 = vunpack.c.l.b16 %v3500
    %v3650 = vunpack.c.h.b16 %v3500
    %v3651 = vunpack.c.l.b16 %v3501
    %v3652 = vunpack.c.h.b16 %v3501
    %v3653 = vunpack.c.l.b16 %v3502
    %v3654 = vunpack.c.h.b16 %v3502
    %v3655 = vunpack.c.l.b16 %v3503
    %v3656 = vunpack.c.h.b16 %v3503
    %v3657 = vunpack.c.l.b16 %v3504
    %v3658 = vunpack.c.h.b16 %v3504
    %v3659 = vunpack.c.l.b16 %v3505
    %v3660 = vunpack.c.h.b16 %v3505
    %v3661 = vunpack.c.l.b16 %v3506
    %v3662 = vunpack.c.h.b16 %v3506
    %v3663 = vunpack.c.l.b16 %v3507
    %v3664 = vunpack.c.h.b16 %v3507
    %v3665 = vunpack.c.l.b16 %v3508
    %v3666 = vunpack.c.h.b16 %v3508
    %v3667 = vunpack.c.l.b16 %v3509
    %v3668 = vunpack.c.h.b16 %v3509
    %v3669 = vunpack.c.l.b16 %v3510
    %v3670 = vunpack.c.h.b16 %v3510
    %v3671 = vunpack.c.l.b16 %v3511
    %v3672 = vunpack.c.h.b16 %v3511
    %v3673 = vpack.c.b16 %v3609, %v3609
    %v3674 = vpack.c.b16 %v3610, %v3610
    %v3675 = vpack.c.b16 %v3611, %v3611
    %v3676 = vpack.c.b16 %v3612, %v3612
    %v3677 = vpack.c.b16 %v3613, %v3613
    %v3678 = vpack.c.b16 %v3614, %v3614
    %v3679 = vpack.c.b16 %v3615, %v3615
    %v3680 = vpack.c.b16 %v3616, %v3616
    %v3681 = vpack.c.b16 %v3617, %v3617
    %v3682 = vpack.c.b16 %v3618, %v3618
    %v3683 = vpack.c.b16 %v3619, %v3619
    %v3684 = vpack.c.b16 %v3620, %v3620
    %v3685 = vpack.c.b16 %v3621, %v3621
    %v3686 = vpack.c.b16 %v3622, %v3622
    %v3687 = vpack.c.b16 %v3623, %v3623
    %v3688 = vpack.c.b16 %v3624, %v3624
    %v3689 = vpack.c.b16 %v3625, %v3625
    %v3690 = vpack.c.b16 %v3626, %v3626
    %v3691 = vpack.c.b16 %v3627, %v3627
    %v3692 = vpack.c.b16 %v3628, %v3628
    %v3693 = vpack.c.b16 %v3629, %v3629
    %v3694 = vpack.c.b16 %v3630, %v3630
    %v3695 = vpack.c.b16 %v3631, %v3631
    %v3696 = vpack.c.b16 %v3632, %v3632
    %v3697 = vpack.c.b16 %v3633, %v3633
    %v3698 = vpack.c.b16 %v3634, %v3634
    %v3699 = vpack.c.b16 %v3635, %v3635
    %v3700 = vpack.c.b16 %v3636, %v3636
    %v3701 = vpack.c.b16 %v3637, %v3637
    %v3702 = vpack.c.b16 %v3638, %v3638
    %v3703 = vpack.c.b16 %v3639, %v3639
    %v3704 = vpack.c.b16 %v3640, %v3640
    %v3705 = vpack.c.b16 %v3641, %v3641
    %v3706 = vpack.c.b16 %v3642, %v3642
    %v3707 = vpack.c.b16 %v3643, %v3643
    %v3708 = vpack.c.b16 %v3644, %v3644
    %v3709 = vpack.c.b16 %v3645, %v3645
    %v3710 = vpack.c.b16 %v3646, %v3646
    %v3711 = vpack.c.b16 %v3647, %v3647
    %v3712 = vpack.c.b16 %v3648, %v3648
    %v3713 = vpack.c.b16 %v3649, %v3649
    %v3714 = vpack.c.b16 %v3650, %v3650
    %v3715 = vpack.c.b16 %v3651, %v3651
    %v3716 = vpack.c.b16 %v3652, %v3652
    %v3717 = vpack.c.b16 %v3653, %v3653
    %v3718 = vpack.c.b16 %v3654, %v3654
    %v3719 = vpack.c.b16 %v3655, %v3655
    %v3720 = vpack.c.b16 %v3656, %v3656
    %v3721 = vpack.c.b16 %v3657, %v3657
    %v3722 = vpack.c.b16 %v3658, %v3658
    %v3723 = vpack.c.b16 %v3659, %v3659
    %v3724 = vpack.c.b16 %v3660, %v3660
    %v3725 = vpack.c.b16 %v3661, %v3661
    %v3726 = vpack.c.b16 %v3662, %v3662
    %v3727 = vpack.c.b16 %v3663, %v3663
    %v3728 = vpack.c.b16 %v3664, %v3664
    %v3729 = vpack.c.b16 %v3665, %v3665
    %v3730 = vpack.c.b16 %v3666, %v3666
    %v3731 = vpack.c.b16 %v3667, %v3667
    %v3732 = vpack.c.b16 %v3668, %v3668
    %v3733 = vpack.c.b16 %v3669, %v3669
    %v3734 = vpack.c.b16 %v3670, %v3670
    %v3735 = vpack.c.b16 %v3671, %v3671
    %v3736 = vpack.c.b16 %v3672, %v3672
    %3801 = vst.msk [vmem:[#allocation2 + $0x4] sm:$0xf] %vm3512, %v3673
    %3802 = vst.msk [vmem:[#allocation2 + $0x8] sm:$0xf] %vm3512, %v3674
    %3803 = vst.msk [vmem:[#allocation2 + $0x14] sm:$0xf] %vm3512, %v3675
    %3804 = vst.msk [vmem:[#allocation2 + $0x18] sm:$0xf] %vm3512, %v3676
    %3805 = vst.msk [vmem:[#allocation2 + $0x24] sm:$0xf] %vm3512, %v3677
    %3806 = vst.msk [vmem:[#allocation2 + $0x28] sm:$0xf] %vm3512, %v3678
    %3807 = vst.msk [vmem:[#allocation2 + $0x34] sm:$0xf] %vm3512, %v3679
    %3808 = vst.msk [vmem:[#allocation2 + $0x38] sm:$0xf] %vm3512, %v3680
    %3809 = vst.msk [vmem:[#allocation2 + $0x44] sm:$0xf] %vm3512, %v3681
    %3810 = vst.msk [vmem:[#allocation2 + $0x48] sm:$0xf] %vm3512, %v3682
    %3811 = vst.msk [vmem:[#allocation2 + $0x54] sm:$0xf] %vm3512, %v3683
    %3812 = vst.msk [vmem:[#allocation2 + $0x58] sm:$0xf] %vm3512, %v3684
    %3813 = vst.msk [vmem:[#allocation2 + $0x64] sm:$0xf] %vm3512, %v3685
    %3814 = vst.msk [vmem:[#allocation2 + $0x68] sm:$0xf] %vm3512, %v3686
    %3815 = vst.msk [vmem:[#allocation2 + $0x74] sm:$0xf] %vm3512, %v3687
    %3816 = vst.msk [vmem:[#allocation2 + $0x78] sm:$0xf] %vm3512, %v3688
    %3817 = vst.msk [vmem:[#allocation2 + $0x84] sm:$0xf] %vm3512, %v3689
    %3818 = vst.msk [vmem:[#allocation2 + $0x88] sm:$0xf] %vm3512, %v3690
    %3819 = vst.msk [vmem:[#allocation2 + $0x94] sm:$0xf] %vm3512, %v3691
    %3820 = vst.msk [vmem:[#allocation2 + $0x98] sm:$0xf] %vm3512, %v3692
    %3821 = vst.msk [vmem:[#allocation2 + $0xa4] sm:$0xf] %vm3512, %v3693
    %3822 = vst.msk [vmem:[#allocation2 + $0xa8] sm:$0xf] %vm3512, %v3694
    %3823 = vst.msk [vmem:[#allocation2 + $0xb4] sm:$0xf] %vm3512, %v3695
    %3824 = vst.msk [vmem:[#allocation2 + $0xb8] sm:$0xf] %vm3512, %v3696
    %3825 = vst.msk [vmem:[#allocation2 + $0xc4] sm:$0xf] %vm3512, %v3697
    %3826 = vst.msk [vmem:[#allocation2 + $0xc8] sm:$0xf] %vm3512, %v3698
    %3827 = vst.msk [vmem:[#allocation2 + $0xd4] sm:$0xf] %vm3512, %v3699
    %3828 = vst.msk [vmem:[#allocation2 + $0xd8] sm:$0xf] %vm3512, %v3700
    %3829 = vst.msk [vmem:[#allocation2 + $0xe4] sm:$0xf] %vm3512, %v3701
    %3830 = vst.msk [vmem:[#allocation2 + $0xe8] sm:$0xf] %vm3512, %v3702
    %3831 = vst.msk [vmem:[#allocation2 + $0xf4] sm:$0xf] %vm3512, %v3703
    %3832 = vst.msk [vmem:[#allocation2 + $0xf8] sm:$0xf] %vm3512, %v3704
    %3833 = vst.msk [vmem:[#allocation2 + $0x104] sm:$0xf] %vm3512, %v3705
    %3834 = vst.msk [vmem:[#allocation2 + $0x108] sm:$0xf] %vm3512, %v3706
    %3835 = vst.msk [vmem:[#allocation2 + $0x114] sm:$0xf] %vm3512, %v3707
    %3836 = vst.msk [vmem:[#allocation2 + $0x118] sm:$0xf] %vm3512, %v3708
    %3837 = vst.msk [vmem:[#allocation2 + $0x124] sm:$0xf] %vm3512, %v3709
    %3838 = vst.msk [vmem:[#allocation2 + $0x128] sm:$0xf] %vm3512, %v3710
    %3839 = vst.msk [vmem:[#allocation2 + $0x134] sm:$0xf] %vm3512, %v3711
    %3840 = vst.msk [vmem:[#allocation2 + $0x138] sm:$0xf] %vm3512, %v3712
    %3841 = vst.msk [vmem:[#allocation2 + $0x144] sm:$0xf] %vm3512, %v3713
    %3842 = vst.msk [vmem:[#allocation2 + $0x148] sm:$0xf] %vm3512, %v3714
    %3843 = vst.msk [vmem:[#allocation2 + $0x154] sm:$0xf] %vm3512, %v3715
    %3844 = vst.msk [vmem:[#allocation2 + $0x158] sm:$0xf] %vm3512, %v3716
    %3845 = vst.msk [vmem:[#allocation2 + $0x164] sm:$0xf] %vm3512, %v3717
    %3846 = vst.msk [vmem:[#allocation2 + $0x168] sm:$0xf] %vm3512, %v3718
    %3847 = vst.msk [vmem:[#allocation2 + $0x174] sm:$0xf] %vm3512, %v3719
    %3848 = vst.msk [vmem:[#allocation2 + $0x178] sm:$0xf] %vm3512, %v3720
    %3849 = vst.msk [vmem:[#allocation2 + $0x184] sm:$0xf] %vm3512, %v3721
    %3850 = vst.msk [vmem:[#allocation2 + $0x188] sm:$0xf] %vm3512, %v3722
    %3851 = vst.msk [vmem:[#allocation2 + $0x194] sm:$0xf] %vm3512, %v3723
    %3852 = vst.msk [vmem:[#allocation2 + $0x198] sm:$0xf] %vm3512, %v3724
    %3853 = vst.msk [vmem:[#allocation2 + $0x1a4] sm:$0xf] %vm3512, %v3725
    %3854 = vst.msk [vmem:[#allocation2 + $0x1a8] sm:$0xf] %vm3512, %v3726
    %3855 = vst.msk [vmem:[#allocation2 + $0x1b4] sm:$0xf] %vm3512, %v3727
    %3856 = vst.msk [vmem:[#allocation2 + $0x1b8] sm:$0xf] %vm3512, %v3728
    %3857 = vst.msk [vmem:[#allocation2 + $0x1c4] sm:$0xf] %vm3512, %v3729
    %3858 = vst.msk [vmem:[#allocation2 + $0x1c8] sm:$0xf] %vm3512, %v3730
    %3859 = vst.msk [vmem:[#allocation2 + $0x1d4] sm:$0xf] %vm3512, %v3731
    %3860 = vst.msk [vmem:[#allocation2 + $0x1d8] sm:$0xf] %vm3512, %v3732
    %3861 = vst.msk [vmem:[#allocation2 + $0x1e4] sm:$0xf] %vm3512, %v3733
    %3862 = vst.msk [vmem:[#allocation2 + $0x1e8] sm:$0xf] %vm3512, %v3734
    %3863 = vst.msk [vmem:[#allocation2 + $0x1f4] sm:$0xf] %vm3512, %v3735
    %3864 = vst.msk [vmem:[#allocation2 + $0x1f8] sm:$0xf] %vm3512, %v3736
    %v3865 = vld [vmem:[#allocation2] sm:$0xc]
    %v3866 = vld [vmem:[#allocation2 + $0x4] sm:$0xf]
    %v3867 = vld [vmem:[#allocation2 + $0x8] sm:$0x7]
    %v3868 = vld [vmem:[#allocation2 + $0x10] sm:$0xc]
    %v3869 = vld [vmem:[#allocation2 + $0x14] sm:$0xf]
    %v3870 = vld [vmem:[#allocation2 + $0x18] sm:$0x7]
    %v3871 = vld [vmem:[#allocation2 + $0x20] sm:$0xc]
    %v3872 = vld [vmem:[#allocation2 + $0x24] sm:$0xf]
    %v3873 = vld [vmem:[#allocation2 + $0x28] sm:$0x7]
    %v3874 = vld [vmem:[#allocation2 + $0x30] sm:$0xc]
    %v3875 = vld [vmem:[#allocation2 + $0x34] sm:$0xf]
    %v3876 = vld [vmem:[#allocation2 + $0x38] sm:$0x7]
    %v3877 = vld [vmem:[#allocation2 + $0x40] sm:$0xc]
    %v3878 = vld [vmem:[#allocation2 + $0x44] sm:$0xf]
    %v3879 = vld [vmem:[#allocation2 + $0x48] sm:$0x7]
    %v3880 = vld [vmem:[#allocation2 + $0x50] sm:$0xc]
    %v3881 = vld [vmem:[#allocation2 + $0x54] sm:$0xf]
    %v3882 = vld [vmem:[#allocation2 + $0x58] sm:$0x7]
    %v3883 = vld [vmem:[#allocation2 + $0x60] sm:$0xc]
    %v3884 = vld [vmem:[#allocation2 + $0x64] sm:$0xf]
    %v3885 = vld [vmem:[#allocation2 + $0x68] sm:$0x7]
    %v3886 = vld [vmem:[#allocation2 + $0x70] sm:$0xc]
    %v3887 = vld [vmem:[#allocation2 + $0x74] sm:$0xf]
    %v3888 = vld [vmem:[#allocation2 + $0x78] sm:$0x7]
    %v3889 = vld [vmem:[#allocation2 + $0x80] sm:$0xc]
    %v3890 = vld [vmem:[#allocation2 + $0x84] sm:$0xf]
    %v3891 = vld [vmem:[#allocation2 + $0x88] sm:$0x7]
    %v3892 = vld [vmem:[#allocation2 + $0x90] sm:$0xc]
    %v3893 = vld [vmem:[#allocation2 + $0x94] sm:$0xf]
    %v3894 = vld [vmem:[#allocation2 + $0x98] sm:$0x7]
    %v3895 = vld [vmem:[#allocation2 + $0xa0] sm:$0xc]
    %v3896 = vld [vmem:[#allocation2 + $0xa4] sm:$0xf]
    %v3897 = vld [vmem:[#allocation2 + $0xa8] sm:$0x7]
    %v3898 = vld [vmem:[#allocation2 + $0xb0] sm:$0xc]
    %v3899 = vld [vmem:[#allocation2 + $0xb4] sm:$0xf]
    %v3900 = vld [vmem:[#allocation2 + $0xb8] sm:$0x7]
    %v3901 = vld [vmem:[#allocation2 + $0xc0] sm:$0xc]
    %v3902 = vld [vmem:[#allocation2 + $0xc4] sm:$0xf]
    %v3903 = vld [vmem:[#allocation2 + $0xc8] sm:$0x7]
    %v3904 = vld [vmem:[#allocation2 + $0xd0] sm:$0xc]
    %v3905 = vld [vmem:[#allocation2 + $0xd4] sm:$0xf]
    %v3906 = vld [vmem:[#allocation2 + $0xd8] sm:$0x7]
    %v3907 = vld [vmem:[#allocation2 + $0xe0] sm:$0xc]
    %v3908 = vld [vmem:[#allocation2 + $0xe4] sm:$0xf]
    %v3909 = vld [vmem:[#allocation2 + $0xe8] sm:$0x7]
    %v3910 = vld [vmem:[#allocation2 + $0xf0] sm:$0xc]
    %v3911 = vld [vmem:[#allocation2 + $0xf4] sm:$0xf]
    %v3912 = vld [vmem:[#allocation2 + $0xf8] sm:$0x7]
    %v3913 = vld [vmem:[#allocation2 + $0x100] sm:$0xc]
    %v3914 = vld [vmem:[#allocation2 + $0x104] sm:$0xf]
    %v3915 = vld [vmem:[#allocation2 + $0x108] sm:$0x7]
    %v3916 = vld [vmem:[#allocation2 + $0x110] sm:$0xc]
    %v3917 = vld [vmem:[#allocation2 + $0x114] sm:$0xf]
    %v3918 = vld [vmem:[#allocation2 + $0x118] sm:$0x7]
    %v3919 = vld [vmem:[#allocation2 + $0x120] sm:$0xc]
    %v3920 = vld [vmem:[#allocation2 + $0x124] sm:$0xf]
    %v3921 = vld [vmem:[#allocation2 + $0x128] sm:$0x7]
    %v3922 = vld [vmem:[#allocation2 + $0x130] sm:$0xc]
    %v3923 = vld [vmem:[#allocation2 + $0x134] sm:$0xf]
    %v3924 = vld [vmem:[#allocation2 + $0x138] sm:$0x7]
    %v3925 = vld [vmem:[#allocation2 + $0x140] sm:$0xc]
    %v3926 = vld [vmem:[#allocation2 + $0x144] sm:$0xf]
    %v3927 = vld [vmem:[#allocation2 + $0x148] sm:$0x7]
    %v3928 = vld [vmem:[#allocation2 + $0x150] sm:$0xc]
    %v3929 = vld [vmem:[#allocation2 + $0x154] sm:$0xf]
    %v3930 = vld [vmem:[#allocation2 + $0x158] sm:$0x7]
    %v3931 = vld [vmem:[#allocation2 + $0x160] sm:$0xc]
    %v3932 = vld [vmem:[#allocation2 + $0x164] sm:$0xf]
    %v3933 = vld [vmem:[#allocation2 + $0x168] sm:$0x7]
    %v3934 = vld [vmem:[#allocation2 + $0x170] sm:$0xc]
    %v3935 = vld [vmem:[#allocation2 + $0x174] sm:$0xf]
    %v3936 = vld [vmem:[#allocation2 + $0x178] sm:$0x7]
    %v3937 = vld [vmem:[#allocation2 + $0x180] sm:$0xc]
    %v3938 = vld [vmem:[#allocation2 + $0x184] sm:$0xf]
    %v3939 = vld [vmem:[#allocation2 + $0x188] sm:$0x7]
    %v3940 = vld [vmem:[#allocation2 + $0x190] sm:$0xc]
    %v3941 = vld [vmem:[#allocation2 + $0x194] sm:$0xf]
    %v3942 = vld [vmem:[#allocation2 + $0x198] sm:$0x7]
    %v3943 = vld [vmem:[#allocation2 + $0x1a0] sm:$0xc]
    %v3944 = vld [vmem:[#allocation2 + $0x1a4] sm:$0xf]
    %v3945 = vld [vmem:[#allocation2 + $0x1a8] sm:$0x7]
    %v3946 = vld [vmem:[#allocation2 + $0x1b0] sm:$0xc]
    %v3947 = vld [vmem:[#allocation2 + $0x1b4] sm:$0xf]
    %v3948 = vld [vmem:[#allocation2 + $0x1b8] sm:$0x7]
    %v3949 = vld [vmem:[#allocation2 + $0x1c0] sm:$0xc]
    %v3950 = vld [vmem:[#allocation2 + $0x1c4] sm:$0xf]
    %v3951 = vld [vmem:[#allocation2 + $0x1c8] sm:$0x7]
    %v3952 = vld [vmem:[#allocation2 + $0x1d0] sm:$0xc]
    %v3953 = vld [vmem:[#allocation2 + $0x1d4] sm:$0xf]
    %v3954 = vld [vmem:[#allocation2 + $0x1d8] sm:$0x7]
    %v3955 = vld [vmem:[#allocation2 + $0x1e0] sm:$0xc]
    %v3956 = vld [vmem:[#allocation2 + $0x1e4] sm:$0xf]
    %v3957 = vld [vmem:[#allocation2 + $0x1e8] sm:$0x7]
    %v3958 = vld [vmem:[#allocation2 + $0x1f0] sm:$0xc]
    %v3959 = vld [vmem:[#allocation2 + $0x1f4] sm:$0xf]
    %v3960 = vld [vmem:[#allocation2 + $0x1f8] sm:$0x7]
    %v3961 = vld [vmem:[#allocation2] sm:$0x8]
    %v3962 = vld [vmem:[#allocation2 + $0x10] sm:$0x8]
    %v3963 = vld [vmem:[#allocation2 + $0x20] sm:$0x8]
    %v3964 = vld [vmem:[#allocation2 + $0x30] sm:$0x8]
    %v3965 = vld [vmem:[#allocation2 + $0x40] sm:$0x8]
    %v3966 = vld [vmem:[#allocation2 + $0x50] sm:$0x8]
    %v3967 = vld [vmem:[#allocation2 + $0x60] sm:$0x8]
    %v3968 = vld [vmem:[#allocation2 + $0x70] sm:$0x8]
    %v3969 = vld [vmem:[#allocation2 + $0x80] sm:$0x8]
    %v3970 = vld [vmem:[#allocation2 + $0x90] sm:$0x8]
    %v3971 = vld [vmem:[#allocation2 + $0xa0] sm:$0x8]
    %v3972 = vld [vmem:[#allocation2 + $0xb0] sm:$0x8]
    %v3973 = vld [vmem:[#allocation2 + $0xc0] sm:$0x8]
    %v3974 = vld [vmem:[#allocation2 + $0xd0] sm:$0x8]
    %v3975 = vld [vmem:[#allocation2 + $0xe0] sm:$0x8]
    %v3976 = vld [vmem:[#allocation2 + $0xf0] sm:$0x8]
    %v3977 = vld [vmem:[#allocation2 + $0x100] sm:$0x8]
    %v3978 = vld [vmem:[#allocation2 + $0x110] sm:$0x8]
    %v3979 = vld [vmem:[#allocation2 + $0x120] sm:$0x8]
    %v3980 = vld [vmem:[#allocation2 + $0x130] sm:$0x8]
    %v3981 = vld [vmem:[#allocation2 + $0x140] sm:$0x8]
    %v3982 = vld [vmem:[#allocation2 + $0x150] sm:$0x8]
    %v3983 = vld [vmem:[#allocation2 + $0x160] sm:$0x8]
    %v3984 = vld [vmem:[#allocation2 + $0x170] sm:$0x8]
    %v3985 = vld [vmem:[#allocation2 + $0x180] sm:$0x8]
    %v3986 = vld [vmem:[#allocation2 + $0x190] sm:$0x8]
    %v3987 = vld [vmem:[#allocation2 + $0x1a0] sm:$0x8]
    %v3988 = vld [vmem:[#allocation2 + $0x1b0] sm:$0x8]
    %v3989 = vld [vmem:[#allocation2 + $0x1c0] sm:$0x8]
    %v3990 = vld [vmem:[#allocation2 + $0x1d0] sm:$0x8]
    %v3991 = vld [vmem:[#allocation2 + $0x1e0] sm:$0x8]
    %v3992 = vld [vmem:[#allocation2 + $0x1f0] sm:$0x8]
    %v3993 = vld [vmem:[#allocation2 + $0x8] sm:$0xf]
    %v3994 = vld [vmem:[#allocation2 + $0x18] sm:$0xf]
    %v3995 = vld [vmem:[#allocation2 + $0x28] sm:$0xf]
    %v3996 = vld [vmem:[#allocation2 + $0x38] sm:$0xf]
    %v3997 = vld [vmem:[#allocation2 + $0x48] sm:$0xf]
    %v3998 = vld [vmem:[#allocation2 + $0x58] sm:$0xf]
    %v3999 = vld [vmem:[#allocation2 + $0x68] sm:$0xf]
    %v4000 = vld [vmem:[#allocation2 + $0x78] sm:$0xf]
    %v4001 = vld [vmem:[#allocation2 + $0x88] sm:$0xf]
    %v4002 = vld [vmem:[#allocation2 + $0x98] sm:$0xf]
    %v4003 = vld [vmem:[#allocation2 + $0xa8] sm:$0xf]
    %v4004 = vld [vmem:[#allocation2 + $0xb8] sm:$0xf]
    %v4005 = vld [vmem:[#allocation2 + $0xc8] sm:$0xf]
    %v4006 = vld [vmem:[#allocation2 + $0xd8] sm:$0xf]
    %v4007 = vld [vmem:[#allocation2 + $0xe8] sm:$0xf]
    %v4008 = vld [vmem:[#allocation2 + $0xf8] sm:$0xf]
    %v4009 = vld [vmem:[#allocation2 + $0x108] sm:$0xf]
    %v4010 = vld [vmem:[#allocation2 + $0x118] sm:$0xf]
    %v4011 = vld [vmem:[#allocation2 + $0x128] sm:$0xf]
    %v4012 = vld [vmem:[#allocation2 + $0x138] sm:$0xf]
    %v4013 = vld [vmem:[#allocation2 + $0x148] sm:$0xf]
    %v4014 = vld [vmem:[#allocation2 + $0x158] sm:$0xf]
    %v4015 = vld [vmem:[#allocation2 + $0x168] sm:$0xf]
    %v4016 = vld [vmem:[#allocation2 + $0x178] sm:$0xf]
    %v4017 = vld [vmem:[#allocation2 + $0x188] sm:$0xf]
    %v4018 = vld [vmem:[#allocation2 + $0x198] sm:$0xf]
    %v4019 = vld [vmem:[#allocation2 + $0x1a8] sm:$0xf]
    %v4020 = vld [vmem:[#allocation2 + $0x1b8] sm:$0xf]
    %v4021 = vld [vmem:[#allocation2 + $0x1c8] sm:$0xf]
    %v4022 = vld [vmem:[#allocation2 + $0x1d8] sm:$0xf]
    %v4023 = vld [vmem:[#allocation2 + $0x1e8] sm:$0xf]
    %v4024 = vld [vmem:[#allocation2 + $0x1f8] sm:$0xf]
    %v4025 = vld [vmem:[#allocation2 + $0xc] sm:$0x1]
    %v4026 = vld [vmem:[#allocation2 + $0x1c] sm:$0x1]
    %v4027 = vld [vmem:[#allocation2 + $0x2c] sm:$0x1]
    %v4028 = vld [vmem:[#allocation2 + $0x3c] sm:$0x1]
    %v4029 = vld [vmem:[#allocation2 + $0x4c] sm:$0x1]
    %v4030 = vld [vmem:[#allocation2 + $0x5c] sm:$0x1]
    %v4031 = vld [vmem:[#allocation2 + $0x6c] sm:$0x1]
    %v4032 = vld [vmem:[#allocation2 + $0x7c] sm:$0x1]
    %v4033 = vld [vmem:[#allocation2 + $0x8c] sm:$0x1]
    %v4034 = vld [vmem:[#allocation2 + $0x9c] sm:$0x1]
    %v4035 = vld [vmem:[#allocation2 + $0xac] sm:$0x1]
    %v4036 = vld [vmem:[#allocation2 + $0xbc] sm:$0x1]
    %v4037 = vld [vmem:[#allocation2 + $0xcc] sm:$0x1]
    %v4038 = vld [vmem:[#allocation2 + $0xdc] sm:$0x1]
    %v4039 = vld [vmem:[#allocation2 + $0xec] sm:$0x1]
    %v4040 = vld [vmem:[#allocation2 + $0xfc] sm:$0x1]
    %v4041 = vld [vmem:[#allocation2 + $0x10c] sm:$0x1]
    %v4042 = vld [vmem:[#allocation2 + $0x11c] sm:$0x1]
    %v4043 = vld [vmem:[#allocation2 + $0x12c] sm:$0x1]
    %v4044 = vld [vmem:[#allocation2 + $0x13c] sm:$0x1]
    %v4045 = vld [vmem:[#allocation2 + $0x14c] sm:$0x1]
    %v4046 = vld [vmem:[#allocation2 + $0x15c] sm:$0x1]
    %v4047 = vld [vmem:[#allocation2 + $0x16c] sm:$0x1]
    %v4048 = vld [vmem:[#allocation2 + $0x17c] sm:$0x1]
    %v4049 = vld [vmem:[#allocation2 + $0x18c] sm:$0x1]
    %v4050 = vld [vmem:[#allocation2 + $0x19c] sm:$0x1]
    %v4051 = vld [vmem:[#allocation2 + $0x1ac] sm:$0x1]
    %v4052 = vld [vmem:[#allocation2 + $0x1bc] sm:$0x1]
    %v4053 = vld [vmem:[#allocation2 + $0x1cc] sm:$0x1]
    %v4054 = vld [vmem:[#allocation2 + $0x1dc] sm:$0x1]
    %v4055 = vld [vmem:[#allocation2 + $0x1ec] sm:$0x1]
    %v4056 = vld [vmem:[#allocation2 + $0x1fc] sm:$0x1]
    %v4057 = vld [vmem:[#allocation2 + $0x4] sm:$0xe]
    %v4058 = vld [vmem:[#allocation2 + $0x14] sm:$0xe]
    %v4059 = vld [vmem:[#allocation2 + $0x24] sm:$0xe]
    %v4060 = vld [vmem:[#allocation2 + $0x34] sm:$0xe]
    %v4061 = vld [vmem:[#allocation2 + $0x44] sm:$0xe]
    %v4062 = vld [vmem:[#allocation2 + $0x54] sm:$0xe]
    %v4063 = vld [vmem:[#allocation2 + $0x64] sm:$0xe]
    %v4064 = vld [vmem:[#allocation2 + $0x74] sm:$0xe]
    %v4065 = vld [vmem:[#allocation2 + $0x84] sm:$0xe]
    %v4066 = vld [vmem:[#allocation2 + $0x94] sm:$0xe]
    %v4067 = vld [vmem:[#allocation2 + $0xa4] sm:$0xe]
    %v4068 = vld [vmem:[#allocation2 + $0xb4] sm:$0xe]
    %v4069 = vld [vmem:[#allocation2 + $0xc4] sm:$0xe]
    %v4070 = vld [vmem:[#allocation2 + $0xd4] sm:$0xe]
    %v4071 = vld [vmem:[#allocation2 + $0xe4] sm:$0xe]
    %v4072 = vld [vmem:[#allocation2 + $0xf4] sm:$0xe]
    %v4073 = vld [vmem:[#allocation2 + $0x104] sm:$0xe]
    %v4074 = vld [vmem:[#allocation2 + $0x114] sm:$0xe]
    %v4075 = vld [vmem:[#allocation2 + $0x124] sm:$0xe]
    %v4076 = vld [vmem:[#allocation2 + $0x134] sm:$0xe]
    %v4077 = vld [vmem:[#allocation2 + $0x144] sm:$0xe]
    %v4078 = vld [vmem:[#allocation2 + $0x154] sm:$0xe]
    %v4079 = vld [vmem:[#allocation2 + $0x164] sm:$0xe]
    %v4080 = vld [vmem:[#allocation2 + $0x174] sm:$0xe]
    %v4081 = vld [vmem:[#allocation2 + $0x184] sm:$0xe]
    %v4082 = vld [vmem:[#allocation2 + $0x194] sm:$0xe]
    %v4083 = vld [vmem:[#allocation2 + $0x1a4] sm:$0xe]
    %v4084 = vld [vmem:[#allocation2 + $0x1b4] sm:$0xe]
    %v4085 = vld [vmem:[#allocation2 + $0x1c4] sm:$0xe]
    %v4086 = vld [vmem:[#allocation2 + $0x1d4] sm:$0xe]
    %v4087 = vld [vmem:[#allocation2 + $0x1e4] sm:$0xe]
    %v4088 = vld [vmem:[#allocation2 + $0x1f4] sm:$0xe]
    %v4089 = vld [vmem:[#allocation2 + $0xc] sm:$0x3]
    %v4090 = vld [vmem:[#allocation2 + $0x1c] sm:$0x3]
    %v4091 = vld [vmem:[#allocation2 + $0x2c] sm:$0x3]
    %v4092 = vld [vmem:[#allocation2 + $0x3c] sm:$0x3]
    %v4093 = vld [vmem:[#allocation2 + $0x4c] sm:$0x3]
    %v4094 = vld [vmem:[#allocation2 + $0x5c] sm:$0x3]
    %v4095 = vld [vmem:[#allocation2 + $0x6c] sm:$0x3]
    %v4096 = vld [vmem:[#allocation2 + $0x7c] sm:$0x3]
    %v4097 = vld [vmem:[#allocation2 + $0x8c] sm:$0x3]
    %v4098 = vld [vmem:[#allocation2 + $0x9c] sm:$0x3]
    %v4099 = vld [vmem:[#allocation2 + $0xac] sm:$0x3]
    %v4100 = vld [vmem:[#allocation2 + $0xbc] sm:$0x3]
    %v4101 = vld [vmem:[#allocation2 + $0xcc] sm:$0x3]
    %v4102 = vld [vmem:[#allocation2 + $0xdc] sm:$0x3]
    %v4103 = vld [vmem:[#allocation2 + $0xec] sm:$0x3]
    %v4104 = vld [vmem:[#allocation2 + $0xfc] sm:$0x3]
    %v4105 = vld [vmem:[#allocation2 + $0x10c] sm:$0x3]
    %v4106 = vld [vmem:[#allocation2 + $0x11c] sm:$0x3]
    %v4107 = vld [vmem:[#allocation2 + $0x12c] sm:$0x3]
    %v4108 = vld [vmem:[#allocation2 + $0x13c] sm:$0x3]
    %v4109 = vld [vmem:[#allocation2 + $0x14c] sm:$0x3]
    %v4110 = vld [vmem:[#allocation2 + $0x15c] sm:$0x3]
    %v4111 = vld [vmem:[#allocation2 + $0x16c] sm:$0x3]
    %v4112 = vld [vmem:[#allocation2 + $0x17c] sm:$0x3]
    %v4113 = vld [vmem:[#allocation2 + $0x18c] sm:$0x3]
    %v4114 = vld [vmem:[#allocation2 + $0x19c] sm:$0x3]
    %v4115 = vld [vmem:[#allocation2 + $0x1ac] sm:$0x3]
    %v4116 = vld [vmem:[#allocation2 + $0x1bc] sm:$0x3]
    %v4117 = vld [vmem:[#allocation2 + $0x1cc] sm:$0x3]
    %v4118 = vld [vmem:[#allocation2 + $0x1dc] sm:$0x3]
    %v4119 = vld [vmem:[#allocation2 + $0x1ec] sm:$0x3]
    %v4120 = vld [vmem:[#allocation2 + $0x1fc] sm:$0x3]
    %v4217 = vunpack.c.l.b16 %v3865
    %v4218 = vunpack.c.l.b16 %v3866
    %v4219 = vunpack.c.l.b16 %v3867
    %v4220 = vunpack.c.l.b16 %v3868
    %v4221 = vunpack.c.l.b16 %v3869
    %v4222 = vunpack.c.l.b16 %v3870
    %v4223 = vunpack.c.l.b16 %v3871
    %v4224 = vunpack.c.l.b16 %v3872
    %v4225 = vunpack.c.l.b16 %v3873
    %v4226 = vunpack.c.l.b16 %v3874
    %v4227 = vunpack.c.l.b16 %v3875
    %v4228 = vunpack.c.l.b16 %v3876
    %v4229 = vunpack.c.l.b16 %v3877
    %v4230 = vunpack.c.l.b16 %v3878
    %v4231 = vunpack.c.l.b16 %v3879
    %v4232 = vunpack.c.l.b16 %v3880
    %v4233 = vunpack.c.l.b16 %v3881
    %v4234 = vunpack.c.l.b16 %v3882
    %v4235 = vunpack.c.l.b16 %v3883
    %v4236 = vunpack.c.l.b16 %v3884
    %v4237 = vunpack.c.l.b16 %v3885
    %v4238 = vunpack.c.l.b16 %v3886
    %v4239 = vunpack.c.l.b16 %v3887
    %v4240 = vunpack.c.l.b16 %v3888
    %v4241 = vunpack.c.l.b16 %v3889
    %v4242 = vunpack.c.l.b16 %v3890
    %v4243 = vunpack.c.l.b16 %v3891
    %v4244 = vunpack.c.l.b16 %v3892
    %v4245 = vunpack.c.l.b16 %v3893
    %v4246 = vunpack.c.l.b16 %v3894
    %v4247 = vunpack.c.l.b16 %v3895
    %v4248 = vunpack.c.l.b16 %v3896
    %v4249 = vunpack.c.l.b16 %v3897
    %v4250 = vunpack.c.l.b16 %v3898
    %v4251 = vunpack.c.l.b16 %v3899
    %v4252 = vunpack.c.l.b16 %v3900
    %v4253 = vunpack.c.l.b16 %v3901
    %v4254 = vunpack.c.l.b16 %v3902
    %v4255 = vunpack.c.l.b16 %v3903
    %v4256 = vunpack.c.l.b16 %v3904
    %v4257 = vunpack.c.l.b16 %v3905
    %v4258 = vunpack.c.l.b16 %v3906
    %v4259 = vunpack.c.l.b16 %v3907
    %v4260 = vunpack.c.l.b16 %v3908
    %v4261 = vunpack.c.l.b16 %v3909
    %v4262 = vunpack.c.l.b16 %v3910
    %v4263 = vunpack.c.l.b16 %v3911
    %v4264 = vunpack.c.l.b16 %v3912
    %v4265 = vunpack.c.l.b16 %v3913
    %v4266 = vunpack.c.l.b16 %v3914
    %v4267 = vunpack.c.l.b16 %v3915
    %v4268 = vunpack.c.l.b16 %v3916
    %v4269 = vunpack.c.l.b16 %v3917
    %v4270 = vunpack.c.l.b16 %v3918
    %v4271 = vunpack.c.l.b16 %v3919
    %v4272 = vunpack.c.l.b16 %v3920
    %v4273 = vunpack.c.l.b16 %v3921
    %v4274 = vunpack.c.l.b16 %v3922
    %v4275 = vunpack.c.l.b16 %v3923
    %v4276 = vunpack.c.l.b16 %v3924
    %v4277 = vunpack.c.l.b16 %v3925
    %v4278 = vunpack.c.l.b16 %v3926
    %v4279 = vunpack.c.l.b16 %v3927
    %v4280 = vunpack.c.l.b16 %v3928
    %v4281 = vunpack.c.l.b16 %v3929
    %v4282 = vunpack.c.l.b16 %v3930
    %v4283 = vunpack.c.l.b16 %v3931
    %v4284 = vunpack.c.l.b16 %v3932
    %v4285 = vunpack.c.l.b16 %v3933
    %v4286 = vunpack.c.l.b16 %v3934
    %v4287 = vunpack.c.l.b16 %v3935
    %v4288 = vunpack.c.l.b16 %v3936
    %v4289 = vunpack.c.l.b16 %v3937
    %v4290 = vunpack.c.l.b16 %v3938
    %v4291 = vunpack.c.l.b16 %v3939
    %v4292 = vunpack.c.l.b16 %v3940
    %v4293 = vunpack.c.l.b16 %v3941
    %v4294 = vunpack.c.l.b16 %v3942
    %v4295 = vunpack.c.l.b16 %v3943
    %v4296 = vunpack.c.l.b16 %v3944
    %v4297 = vunpack.c.l.b16 %v3945
    %v4298 = vunpack.c.l.b16 %v3946
    %v4299 = vunpack.c.l.b16 %v3947
    %v4300 = vunpack.c.l.b16 %v3948
    %v4301 = vunpack.c.l.b16 %v3949
    %v4302 = vunpack.c.l.b16 %v3950
    %v4303 = vunpack.c.l.b16 %v3951
    %v4304 = vunpack.c.l.b16 %v3952
    %v4305 = vunpack.c.l.b16 %v3953
    %v4306 = vunpack.c.l.b16 %v3954
    %v4307 = vunpack.c.l.b16 %v3955
    %v4308 = vunpack.c.l.b16 %v3956
    %v4309 = vunpack.c.l.b16 %v3957
    %v4310 = vunpack.c.l.b16 %v3958
    %v4311 = vunpack.c.l.b16 %v3959
    %v4312 = vunpack.c.l.b16 %v3960
    %v4313 = vpack.c.b16 %v4218, %v4217
    %v4314 = vpack.c.b16 %v4219, %v4219
    %v4315 = vpack.c.b16 %v4221, %v4220
    %v4316 = vpack.c.b16 %v4222, %v4222
    %v4317 = vpack.c.b16 %v4224, %v4223
    %v4318 = vpack.c.b16 %v4225, %v4225
    %v4319 = vpack.c.b16 %v4227, %v4226
    %v4320 = vpack.c.b16 %v4228, %v4228
    %v4321 = vpack.c.b16 %v4230, %v4229
    %v4322 = vpack.c.b16 %v4231, %v4231
    %v4323 = vpack.c.b16 %v4233, %v4232
    %v4324 = vpack.c.b16 %v4234, %v4234
    %v4325 = vpack.c.b16 %v4236, %v4235
    %v4326 = vpack.c.b16 %v4237, %v4237
    %v4327 = vpack.c.b16 %v4239, %v4238
    %v4328 = vpack.c.b16 %v4240, %v4240
    %v4329 = vpack.c.b16 %v4242, %v4241
    %v4330 = vpack.c.b16 %v4243, %v4243
    %v4331 = vpack.c.b16 %v4245, %v4244
    %v4332 = vpack.c.b16 %v4246, %v4246
    %v4333 = vpack.c.b16 %v4248, %v4247
    %v4334 = vpack.c.b16 %v4249, %v4249
    %v4335 = vpack.c.b16 %v4251, %v4250
    %v4336 = vpack.c.b16 %v4252, %v4252
    %v4337 = vpack.c.b16 %v4254, %v4253
    %v4338 = vpack.c.b16 %v4255, %v4255
    %v4339 = vpack.c.b16 %v4257, %v4256
    %v4340 = vpack.c.b16 %v4258, %v4258
    %v4341 = vpack.c.b16 %v4260, %v4259
    %v4342 = vpack.c.b16 %v4261, %v4261
    %v4343 = vpack.c.b16 %v4263, %v4262
    %v4344 = vpack.c.b16 %v4264, %v4264
    %v4345 = vpack.c.b16 %v4266, %v4265
    %v4346 = vpack.c.b16 %v4267, %v4267
    %v4347 = vpack.c.b16 %v4269, %v4268
    %v4348 = vpack.c.b16 %v4270, %v4270
    %v4349 = vpack.c.b16 %v4272, %v4271
    %v4350 = vpack.c.b16 %v4273, %v4273
    %v4351 = vpack.c.b16 %v4275, %v4274
    %v4352 = vpack.c.b16 %v4276, %v4276
    %v4353 = vpack.c.b16 %v4278, %v4277
    %v4354 = vpack.c.b16 %v4279, %v4279
    %v4355 = vpack.c.b16 %v4281, %v4280
    %v4356 = vpack.c.b16 %v4282, %v4282
    %v4357 = vpack.c.b16 %v4284, %v4283
    %v4358 = vpack.c.b16 %v4285, %v4285
    %v4359 = vpack.c.b16 %v4287, %v4286
    %v4360 = vpack.c.b16 %v4288, %v4288
    %v4361 = vpack.c.b16 %v4290, %v4289
    %v4362 = vpack.c.b16 %v4291, %v4291
    %v4363 = vpack.c.b16 %v4293, %v4292
    %v4364 = vpack.c.b16 %v4294, %v4294
    %v4365 = vpack.c.b16 %v4296, %v4295
    %v4366 = vpack.c.b16 %v4297, %v4297
    %v4367 = vpack.c.b16 %v4299, %v4298
    %v4368 = vpack.c.b16 %v4300, %v4300
    %v4369 = vpack.c.b16 %v4302, %v4301
    %v4370 = vpack.c.b16 %v4303, %v4303
    %v4371 = vpack.c.b16 %v4305, %v4304
    %v4372 = vpack.c.b16 %v4306, %v4306
    %v4373 = vpack.c.b16 %v4308, %v4307
    %v4374 = vpack.c.b16 %v4309, %v4309
    %v4375 = vpack.c.b16 %v4311, %v4310
    %v4376 = vpack.c.b16 %v4312, %v4312
    %v4409 = vunpack.c.l.b16 %v3961
    %v4410 = vunpack.c.l.b16 %v3962
    %v4411 = vunpack.c.l.b16 %v3963
    %v4412 = vunpack.c.l.b16 %v3964
    %v4413 = vunpack.c.l.b16 %v3965
    %v4414 = vunpack.c.l.b16 %v3966
    %v4415 = vunpack.c.l.b16 %v3967
    %v4416 = vunpack.c.l.b16 %v3968
    %v4417 = vunpack.c.l.b16 %v3969
    %v4418 = vunpack.c.l.b16 %v3970
    %v4419 = vunpack.c.l.b16 %v3971
    %v4420 = vunpack.c.l.b16 %v3972
    %v4421 = vunpack.c.l.b16 %v3973
    %v4422 = vunpack.c.l.b16 %v3974
    %v4423 = vunpack.c.l.b16 %v3975
    %v4424 = vunpack.c.l.b16 %v3976
    %v4425 = vunpack.c.l.b16 %v3977
    %v4426 = vunpack.c.l.b16 %v3978
    %v4427 = vunpack.c.l.b16 %v3979
    %v4428 = vunpack.c.l.b16 %v3980
    %v4429 = vunpack.c.l.b16 %v3981
    %v4430 = vunpack.c.l.b16 %v3982
    %v4431 = vunpack.c.l.b16 %v3983
    %v4432 = vunpack.c.l.b16 %v3984
    %v4433 = vunpack.c.l.b16 %v3985
    %v4434 = vunpack.c.l.b16 %v3986
    %v4435 = vunpack.c.l.b16 %v3987
    %v4436 = vunpack.c.l.b16 %v3988
    %v4437 = vunpack.c.l.b16 %v3989
    %v4438 = vunpack.c.l.b16 %v3990
    %v4439 = vunpack.c.l.b16 %v3991
    %v4440 = vunpack.c.l.b16 %v3992
    %v4441 = vpack.c.b16 %v4218, %v4409
    %v4442 = vpack.c.b16 %v4221, %v4410
    %v4443 = vpack.c.b16 %v4224, %v4411
    %v4444 = vpack.c.b16 %v4227, %v4412
    %v4445 = vpack.c.b16 %v4230, %v4413
    %v4446 = vpack.c.b16 %v4233, %v4414
    %v4447 = vpack.c.b16 %v4236, %v4415
    %v4448 = vpack.c.b16 %v4239, %v4416
    %v4449 = vpack.c.b16 %v4242, %v4417
    %v4450 = vpack.c.b16 %v4245, %v4418
    %v4451 = vpack.c.b16 %v4248, %v4419
    %v4452 = vpack.c.b16 %v4251, %v4420
    %v4453 = vpack.c.b16 %v4254, %v4421
    %v4454 = vpack.c.b16 %v4257, %v4422
    %v4455 = vpack.c.b16 %v4260, %v4423
    %v4456 = vpack.c.b16 %v4263, %v4424
    %v4457 = vpack.c.b16 %v4266, %v4425
    %v4458 = vpack.c.b16 %v4269, %v4426
    %v4459 = vpack.c.b16 %v4272, %v4427
    %v4460 = vpack.c.b16 %v4275, %v4428
    %v4461 = vpack.c.b16 %v4278, %v4429
    %v4462 = vpack.c.b16 %v4281, %v4430
    %v4463 = vpack.c.b16 %v4284, %v4431
    %v4464 = vpack.c.b16 %v4287, %v4432
    %v4465 = vpack.c.b16 %v4290, %v4433
    %v4466 = vpack.c.b16 %v4293, %v4434
    %v4467 = vpack.c.b16 %v4296, %v4435
    %v4468 = vpack.c.b16 %v4299, %v4436
    %v4469 = vpack.c.b16 %v4302, %v4437
    %v4470 = vpack.c.b16 %v4305, %v4438
    %v4471 = vpack.c.b16 %v4308, %v4439
    %v4472 = vpack.c.b16 %v4311, %v4440
    %vm4473 = vsmask.f32 7424
    %v4475 = vshrl.u32 %v4441, 16
    %v4477 = vshll.u32 %v4441, 16
    %v4479 = vrot.slane %v4477, 1
    %v4480 = vor.u32 %v4475, %v4479
    %v4482 = vshll.u32 %v4314, 16
    %v4484 = vrot.slane %v4482, 1
    %v4485 = vsel %vm4473, %v4480, %v4484
    %v4486 = vshrl.u32 %v4314, 16
    %v4488 = vor.u32 %v4486, %v4484
    %v4490 = vshrl.u32 %v4442, 16
    %v4492 = vshll.u32 %v4442, 16
    %v4494 = vrot.slane %v4492, 1
    %v4495 = vor.u32 %v4490, %v4494
    %v4497 = vshll.u32 %v4316, 16
    %v4499 = vrot.slane %v4497, 1
    %v4500 = vsel %vm4473, %v4495, %v4499
    %v4501 = vshrl.u32 %v4316, 16
    %v4503 = vor.u32 %v4501, %v4499
    %v4505 = vshrl.u32 %v4443, 16
    %v4507 = vshll.u32 %v4443, 16
    %v4509 = vrot.slane %v4507, 1
    %v4510 = vor.u32 %v4505, %v4509
    %v4512 = vshll.u32 %v4318, 16
    %v4514 = vrot.slane %v4512, 1
    %v4515 = vsel %vm4473, %v4510, %v4514
    %v4516 = vshrl.u32 %v4318, 16
    %v4518 = vor.u32 %v4516, %v4514
    %v4520 = vshrl.u32 %v4444, 16
    %v4522 = vshll.u32 %v4444, 16
    %v4524 = vrot.slane %v4522, 1
    %v4525 = vor.u32 %v4520, %v4524
    %v4527 = vshll.u32 %v4320, 16
    %v4529 = vrot.slane %v4527, 1
    %v4530 = vsel %vm4473, %v4525, %v4529
    %v4531 = vshrl.u32 %v4320, 16
    %v4533 = vor.u32 %v4531, %v4529
    %v4535 = vshrl.u32 %v4445, 16
    %v4537 = vshll.u32 %v4445, 16
    %v4539 = vrot.slane %v4537, 1
    %v4540 = vor.u32 %v4535, %v4539
    %v4542 = vshll.u32 %v4322, 16
    %v4544 = vrot.slane %v4542, 1
    %v4545 = vsel %vm4473, %v4540, %v4544
    %v4546 = vshrl.u32 %v4322, 16
    %v4548 = vor.u32 %v4546, %v4544
    %v4550 = vshrl.u32 %v4446, 16
    %v4552 = vshll.u32 %v4446, 16
    %v4554 = vrot.slane %v4552, 1
    %v4555 = vor.u32 %v4550, %v4554
    %v4557 = vshll.u32 %v4324, 16
    %v4559 = vrot.slane %v4557, 1
    %v4560 = vsel %vm4473, %v4555, %v4559
    %v4561 = vshrl.u32 %v4324, 16
    %v4563 = vor.u32 %v4561, %v4559
    %v4565 = vshrl.u32 %v4447, 16
    %v4567 = vshll.u32 %v4447, 16
    %v4569 = vrot.slane %v4567, 1
    %v4570 = vor.u32 %v4565, %v4569
    %v4572 = vshll.u32 %v4326, 16
    %v4574 = vrot.slane %v4572, 1
    %v4575 = vsel %vm4473, %v4570, %v4574
    %v4576 = vshrl.u32 %v4326, 16
    %v4578 = vor.u32 %v4576, %v4574
    %v4580 = vshrl.u32 %v4448, 16
    %v4582 = vshll.u32 %v4448, 16
    %v4584 = vrot.slane %v4582, 1
    %v4585 = vor.u32 %v4580, %v4584
    %v4587 = vshll.u32 %v4328, 16
    %v4589 = vrot.slane %v4587, 1
    %v4590 = vsel %vm4473, %v4585, %v4589
    %v4591 = vshrl.u32 %v4328, 16
    %v4593 = vor.u32 %v4591, %v4589
    %v4595 = vshrl.u32 %v4449, 16
    %v4597 = vshll.u32 %v4449, 16
    %v4599 = vrot.slane %v4597, 1
    %v4600 = vor.u32 %v4595, %v4599
    %v4602 = vshll.u32 %v4330, 16
    %v4604 = vrot.slane %v4602, 1
    %v4605 = vsel %vm4473, %v4600, %v4604
    %v4606 = vshrl.u32 %v4330, 16
    %v4608 = vor.u32 %v4606, %v4604
    %v4610 = vshrl.u32 %v4450, 16
    %v4612 = vshll.u32 %v4450, 16
    %v4614 = vrot.slane %v4612, 1
    %v4615 = vor.u32 %v4610, %v4614
    %v4617 = vshll.u32 %v4332, 16
    %v4619 = vrot.slane %v4617, 1
    %v4620 = vsel %vm4473, %v4615, %v4619
    %v4621 = vshrl.u32 %v4332, 16
    %v4623 = vor.u32 %v4621, %v4619
    %v4625 = vshrl.u32 %v4451, 16
    %v4627 = vshll.u32 %v4451, 16
    %v4629 = vrot.slane %v4627, 1
    %v4630 = vor.u32 %v4625, %v4629
    %v4632 = vshll.u32 %v4334, 16
    %v4634 = vrot.slane %v4632, 1
    %v4635 = vsel %vm4473, %v4630, %v4634
    %v4636 = vshrl.u32 %v4334, 16
    %v4638 = vor.u32 %v4636, %v4634
    %v4640 = vshrl.u32 %v4452, 16
    %v4642 = vshll.u32 %v4452, 16
    %v4644 = vrot.slane %v4642, 1
    %v4645 = vor.u32 %v4640, %v4644
    %v4647 = vshll.u32 %v4336, 16
    %v4649 = vrot.slane %v4647, 1
    %v4650 = vsel %vm4473, %v4645, %v4649
    %v4651 = vshrl.u32 %v4336, 16
    %v4653 = vor.u32 %v4651, %v4649
    %v4655 = vshrl.u32 %v4453, 16
    %v4657 = vshll.u32 %v4453, 16
    %v4659 = vrot.slane %v4657, 1
    %v4660 = vor.u32 %v4655, %v4659
    %v4662 = vshll.u32 %v4338, 16
    %v4664 = vrot.slane %v4662, 1
    %v4665 = vsel %vm4473, %v4660, %v4664
    %v4666 = vshrl.u32 %v4338, 16
    %v4668 = vor.u32 %v4666, %v4664
    %v4670 = vshrl.u32 %v4454, 16
    %v4672 = vshll.u32 %v4454, 16
    %v4674 = vrot.slane %v4672, 1
    %v4675 = vor.u32 %v4670, %v4674
    %v4677 = vshll.u32 %v4340, 16
    %v4679 = vrot.slane %v4677, 1
    %v4680 = vsel %vm4473, %v4675, %v4679
    %v4681 = vshrl.u32 %v4340, 16
    %v4683 = vor.u32 %v4681, %v4679
    %v4685 = vshrl.u32 %v4455, 16
    %v4687 = vshll.u32 %v4455, 16
    %v4689 = vrot.slane %v4687, 1
    %v4690 = vor.u32 %v4685, %v4689
    %v4692 = vshll.u32 %v4342, 16
    %v4694 = vrot.slane %v4692, 1
    %v4695 = vsel %vm4473, %v4690, %v4694
    %v4696 = vshrl.u32 %v4342, 16
    %v4698 = vor.u32 %v4696, %v4694
    %v4700 = vshrl.u32 %v4456, 16
    %v4702 = vshll.u32 %v4456, 16
    %v4704 = vrot.slane %v4702, 1
    %v4705 = vor.u32 %v4700, %v4704
    %v4707 = vshll.u32 %v4344, 16
    %v4709 = vrot.slane %v4707, 1
    %v4710 = vsel %vm4473, %v4705, %v4709
    %v4711 = vshrl.u32 %v4344, 16
    %v4713 = vor.u32 %v4711, %v4709
    %v4715 = vshrl.u32 %v4457, 16
    %v4717 = vshll.u32 %v4457, 16
    %v4719 = vrot.slane %v4717, 1
    %v4720 = vor.u32 %v4715, %v4719
    %v4722 = vshll.u32 %v4346, 16
    %v4724 = vrot.slane %v4722, 1
    %v4725 = vsel %vm4473, %v4720, %v4724
    %v4726 = vshrl.u32 %v4346, 16
    %v4728 = vor.u32 %v4726, %v4724
    %v4730 = vshrl.u32 %v4458, 16
    %v4732 = vshll.u32 %v4458, 16
    %v4734 = vrot.slane %v4732, 1
    %v4735 = vor.u32 %v4730, %v4734
    %v4737 = vshll.u32 %v4348, 16
    %v4739 = vrot.slane %v4737, 1
    %v4740 = vsel %vm4473, %v4735, %v4739
    %v4741 = vshrl.u32 %v4348, 16
    %v4743 = vor.u32 %v4741, %v4739
    %v4745 = vshrl.u32 %v4459, 16
    %v4747 = vshll.u32 %v4459, 16
    %v4749 = vrot.slane %v4747, 1
    %v4750 = vor.u32 %v4745, %v4749
    %v4752 = vshll.u32 %v4350, 16
    %v4754 = vrot.slane %v4752, 1
    %v4755 = vsel %vm4473, %v4750, %v4754
    %v4756 = vshrl.u32 %v4350, 16
    %v4758 = vor.u32 %v4756, %v4754
    %v4760 = vshrl.u32 %v4460, 16
    %v4762 = vshll.u32 %v4460, 16
    %v4764 = vrot.slane %v4762, 1
    %v4765 = vor.u32 %v4760, %v4764
    %v4767 = vshll.u32 %v4352, 16
    %v4769 = vrot.slane %v4767, 1
    %v4770 = vsel %vm4473, %v4765, %v4769
    %v4771 = vshrl.u32 %v4352, 16
    %v4773 = vor.u32 %v4771, %v4769
    %v4775 = vshrl.u32 %v4461, 16
    %v4777 = vshll.u32 %v4461, 16
    %v4779 = vrot.slane %v4777, 1
    %v4780 = vor.u32 %v4775, %v4779
    %v4782 = vshll.u32 %v4354, 16
    %v4784 = vrot.slane %v4782, 1
    %v4785 = vsel %vm4473, %v4780, %v4784
    %v4786 = vshrl.u32 %v4354, 16
    %v4788 = vor.u32 %v4786, %v4784
    %v4790 = vshrl.u32 %v4462, 16
    %v4792 = vshll.u32 %v4462, 16
    %v4794 = vrot.slane %v4792, 1
    %v4795 = vor.u32 %v4790, %v4794
    %v4797 = vshll.u32 %v4356, 16
    %v4799 = vrot.slane %v4797, 1
    %v4800 = vsel %vm4473, %v4795, %v4799
    %v4801 = vshrl.u32 %v4356, 16
    %v4803 = vor.u32 %v4801, %v4799
    %v4805 = vshrl.u32 %v4463, 16
    %v4807 = vshll.u32 %v4463, 16
    %v4809 = vrot.slane %v4807, 1
    %v4810 = vor.u32 %v4805, %v4809
    %v4812 = vshll.u32 %v4358, 16
    %v4814 = vrot.slane %v4812, 1
    %v4815 = vsel %vm4473, %v4810, %v4814
    %v4816 = vshrl.u32 %v4358, 16
    %v4818 = vor.u32 %v4816, %v4814
    %v4820 = vshrl.u32 %v4464, 16
    %v4822 = vshll.u32 %v4464, 16
    %v4824 = vrot.slane %v4822, 1
    %v4825 = vor.u32 %v4820, %v4824
    %v4827 = vshll.u32 %v4360, 16
    %v4829 = vrot.slane %v4827, 1
    %v4830 = vsel %vm4473, %v4825, %v4829
    %v4831 = vshrl.u32 %v4360, 16
    %v4833 = vor.u32 %v4831, %v4829
    %v4835 = vshrl.u32 %v4465, 16
    %v4837 = vshll.u32 %v4465, 16
    %v4839 = vrot.slane %v4837, 1
    %v4840 = vor.u32 %v4835, %v4839
    %v4842 = vshll.u32 %v4362, 16
    %v4844 = vrot.slane %v4842, 1
    %v4845 = vsel %vm4473, %v4840, %v4844
    %v4846 = vshrl.u32 %v4362, 16
    %v4848 = vor.u32 %v4846, %v4844
    %v4850 = vshrl.u32 %v4466, 16
    %v4852 = vshll.u32 %v4466, 16
    %v4854 = vrot.slane %v4852, 1
    %v4855 = vor.u32 %v4850, %v4854
    %v4857 = vshll.u32 %v4364, 16
    %v4859 = vrot.slane %v4857, 1
    %v4860 = vsel %vm4473, %v4855, %v4859
    %v4861 = vshrl.u32 %v4364, 16
    %v4863 = vor.u32 %v4861, %v4859
    %v4865 = vshrl.u32 %v4467, 16
    %v4867 = vshll.u32 %v4467, 16
    %v4869 = vrot.slane %v4867, 1
    %v4870 = vor.u32 %v4865, %v4869
    %v4872 = vshll.u32 %v4366, 16
    %v4874 = vrot.slane %v4872, 1
    %v4875 = vsel %vm4473, %v4870, %v4874
    %v4876 = vshrl.u32 %v4366, 16
    %v4878 = vor.u32 %v4876, %v4874
    %v4880 = vshrl.u32 %v4468, 16
    %v4882 = vshll.u32 %v4468, 16
    %v4884 = vrot.slane %v4882, 1
    %v4885 = vor.u32 %v4880, %v4884
    %v4887 = vshll.u32 %v4368, 16
    %v4889 = vrot.slane %v4887, 1
    %v4890 = vsel %vm4473, %v4885, %v4889
    %v4891 = vshrl.u32 %v4368, 16
    %v4893 = vor.u32 %v4891, %v4889
    %v4895 = vshrl.u32 %v4469, 16
    %v4897 = vshll.u32 %v4469, 16
    %v4899 = vrot.slane %v4897, 1
    %v4900 = vor.u32 %v4895, %v4899
    %v4902 = vshll.u32 %v4370, 16
    %v4904 = vrot.slane %v4902, 1
    %v4905 = vsel %vm4473, %v4900, %v4904
    %v4906 = vshrl.u32 %v4370, 16
    %v4908 = vor.u32 %v4906, %v4904
    %v4910 = vshrl.u32 %v4470, 16
    %v4912 = vshll.u32 %v4470, 16
    %v4914 = vrot.slane %v4912, 1
    %v4915 = vor.u32 %v4910, %v4914
    %v4917 = vshll.u32 %v4372, 16
    %v4919 = vrot.slane %v4917, 1
    %v4920 = vsel %vm4473, %v4915, %v4919
    %v4921 = vshrl.u32 %v4372, 16
    %v4923 = vor.u32 %v4921, %v4919
    %v4925 = vshrl.u32 %v4471, 16
    %v4927 = vshll.u32 %v4471, 16
    %v4929 = vrot.slane %v4927, 1
    %v4930 = vor.u32 %v4925, %v4929
    %v4932 = vshll.u32 %v4374, 16
    %v4934 = vrot.slane %v4932, 1
    %v4935 = vsel %vm4473, %v4930, %v4934
    %v4936 = vshrl.u32 %v4374, 16
    %v4938 = vor.u32 %v4936, %v4934
    %v4940 = vshrl.u32 %v4472, 16
    %v4942 = vshll.u32 %v4472, 16
    %v4944 = vrot.slane %v4942, 1
    %v4945 = vor.u32 %v4940, %v4944
    %v4947 = vshll.u32 %v4376, 16
    %v4949 = vrot.slane %v4947, 1
    %v4950 = vsel %vm4473, %v4945, %v4949
    %v4951 = vshrl.u32 %v4376, 16
    %v4953 = vor.u32 %v4951, %v4949
    %4954 = vrot.lane.b32.xlu0 %v4485, 64
    %v4955 = vpop.permute.xlu0 %4954
    %4956 = vrot.lane.b32.xlu0 %v4488, 64
    %v4957 = vpop.permute.xlu0 %4956
    %4958 = vrot.lane.b32.xlu0 %v4500, 64
    %v4959 = vpop.permute.xlu0 %4958
    %4960 = vrot.lane.b32.xlu0 %v4503, 64
    %v4961 = vpop.permute.xlu0 %4960
    %4962 = vrot.lane.b32.xlu0 %v4515, 64
    %v4963 = vpop.permute.xlu0 %4962
    %4964 = vrot.lane.b32.xlu0 %v4518, 64
    %v4965 = vpop.permute.xlu0 %4964
    %4966 = vrot.lane.b32.xlu0 %v4530, 64
    %v4967 = vpop.permute.xlu0 %4966
    %4968 = vrot.lane.b32.xlu0 %v4533, 64
    %v4969 = vpop.permute.xlu0 %4968
    %4970 = vrot.lane.b32.xlu0 %v4545, 64
    %v4971 = vpop.permute.xlu0 %4970
    %4972 = vrot.lane.b32.xlu0 %v4548, 64
    %v4973 = vpop.permute.xlu0 %4972
    %4974 = vrot.lane.b32.xlu0 %v4560, 64
    %v4975 = vpop.permute.xlu0 %4974
    %4976 = vrot.lane.b32.xlu0 %v4563, 64
    %v4977 = vpop.permute.xlu0 %4976
    %4978 = vrot.lane.b32.xlu0 %v4575, 64
    %v4979 = vpop.permute.xlu0 %4978
    %4980 = vrot.lane.b32.xlu0 %v4578, 64
    %v4981 = vpop.permute.xlu0 %4980
    %4982 = vrot.lane.b32.xlu0 %v4590, 64
    %v4983 = vpop.permute.xlu0 %4982
    %4984 = vrot.lane.b32.xlu0 %v4593, 64
    %v4985 = vpop.permute.xlu0 %4984
    %4986 = vrot.lane.b32.xlu0 %v4605, 64
    %v4987 = vpop.permute.xlu0 %4986
    %4988 = vrot.lane.b32.xlu0 %v4608, 64
    %v4989 = vpop.permute.xlu0 %4988
    %4990 = vrot.lane.b32.xlu0 %v4620, 64
    %v4991 = vpop.permute.xlu0 %4990
    %4992 = vrot.lane.b32.xlu0 %v4623, 64
    %v4993 = vpop.permute.xlu0 %4992
    %4994 = vrot.lane.b32.xlu0 %v4635, 64
    %v4995 = vpop.permute.xlu0 %4994
    %4996 = vrot.lane.b32.xlu0 %v4638, 64
    %v4997 = vpop.permute.xlu0 %4996
    %4998 = vrot.lane.b32.xlu0 %v4650, 64
    %v4999 = vpop.permute.xlu0 %4998
    %5000 = vrot.lane.b32.xlu0 %v4653, 64
    %v5001 = vpop.permute.xlu0 %5000
    %5002 = vrot.lane.b32.xlu0 %v4665, 64
    %v5003 = vpop.permute.xlu0 %5002
    %5004 = vrot.lane.b32.xlu0 %v4668, 64
    %v5005 = vpop.permute.xlu0 %5004
    %5006 = vrot.lane.b32.xlu0 %v4680, 64
    %v5007 = vpop.permute.xlu0 %5006
    %5008 = vrot.lane.b32.xlu0 %v4683, 64
    %v5009 = vpop.permute.xlu0 %5008
    %5010 = vrot.lane.b32.xlu0 %v4695, 64
    %v5011 = vpop.permute.xlu0 %5010
    %5012 = vrot.lane.b32.xlu0 %v4698, 64
    %v5013 = vpop.permute.xlu0 %5012
    %5014 = vrot.lane.b32.xlu0 %v4710, 64
    %v5015 = vpop.permute.xlu0 %5014
    %5016 = vrot.lane.b32.xlu0 %v4713, 64
    %v5017 = vpop.permute.xlu0 %5016
    %5018 = vrot.lane.b32.xlu0 %v4725, 64
    %v5019 = vpop.permute.xlu0 %5018
    %5020 = vrot.lane.b32.xlu0 %v4728, 64
    %v5021 = vpop.permute.xlu0 %5020
    %5022 = vrot.lane.b32.xlu0 %v4740, 64
    %v5023 = vpop.permute.xlu0 %5022
    %5024 = vrot.lane.b32.xlu0 %v4743, 64
    %v5025 = vpop.permute.xlu0 %5024
    %5026 = vrot.lane.b32.xlu0 %v4755, 64
    %v5027 = vpop.permute.xlu0 %5026
    %5028 = vrot.lane.b32.xlu0 %v4758, 64
    %v5029 = vpop.permute.xlu0 %5028
    %5030 = vrot.lane.b32.xlu0 %v4770, 64
    %v5031 = vpop.permute.xlu0 %5030
    %5032 = vrot.lane.b32.xlu0 %v4773, 64
    %v5033 = vpop.permute.xlu0 %5032
    %5034 = vrot.lane.b32.xlu0 %v4785, 64
    %v5035 = vpop.permute.xlu0 %5034
    %5036 = vrot.lane.b32.xlu0 %v4788, 64
    %v5037 = vpop.permute.xlu0 %5036
    %5038 = vrot.lane.b32.xlu0 %v4800, 64
    %v5039 = vpop.permute.xlu0 %5038
    %5040 = vrot.lane.b32.xlu0 %v4803, 64
    %v5041 = vpop.permute.xlu0 %5040
    %5042 = vrot.lane.b32.xlu0 %v4815, 64
    %v5043 = vpop.permute.xlu0 %5042
    %5044 = vrot.lane.b32.xlu0 %v4818, 64
    %v5045 = vpop.permute.xlu0 %5044
    %5046 = vrot.lane.b32.xlu0 %v4830, 64
    %v5047 = vpop.permute.xlu0 %5046
    %5048 = vrot.lane.b32.xlu0 %v4833, 64
    %v5049 = vpop.permute.xlu0 %5048
    %5050 = vrot.lane.b32.xlu0 %v4845, 64
    %v5051 = vpop.permute.xlu0 %5050
    %5052 = vrot.lane.b32.xlu0 %v4848, 64
    %v5053 = vpop.permute.xlu0 %5052
    %5054 = vrot.lane.b32.xlu0 %v4860, 64
    %v5055 = vpop.permute.xlu0 %5054
    %5056 = vrot.lane.b32.xlu0 %v4863, 64
    %v5057 = vpop.permute.xlu0 %5056
    %5058 = vrot.lane.b32.xlu0 %v4875, 64
    %v5059 = vpop.permute.xlu0 %5058
    %5060 = vrot.lane.b32.xlu0 %v4878, 64
    %v5061 = vpop.permute.xlu0 %5060
    %5062 = vrot.lane.b32.xlu0 %v4890, 64
    %v5063 = vpop.permute.xlu0 %5062
    %5064 = vrot.lane.b32.xlu0 %v4893, 64
    %v5065 = vpop.permute.xlu0 %5064
    %5066 = vrot.lane.b32.xlu0 %v4905, 64
    %v5067 = vpop.permute.xlu0 %5066
    %5068 = vrot.lane.b32.xlu0 %v4908, 64
    %v5069 = vpop.permute.xlu0 %5068
    %5070 = vrot.lane.b32.xlu0 %v4920, 64
    %v5071 = vpop.permute.xlu0 %5070
    %5072 = vrot.lane.b32.xlu0 %v4923, 64
    %v5073 = vpop.permute.xlu0 %5072
    %5074 = vrot.lane.b32.xlu0 %v4935, 64
    %v5075 = vpop.permute.xlu0 %5074
    %5076 = vrot.lane.b32.xlu0 %v4938, 64
    %v5077 = vpop.permute.xlu0 %5076
    %5078 = vrot.lane.b32.xlu0 %v4950, 64
    %v5079 = vpop.permute.xlu0 %5078
    %5080 = vrot.lane.b32.xlu0 %v4953, 64
    %v5081 = vpop.permute.xlu0 %5080
    %v5114 = vunpack.c.l.b16 %v3993
    %v5115 = vunpack.c.l.b16 %v3994
    %v5116 = vunpack.c.l.b16 %v3995
    %v5117 = vunpack.c.l.b16 %v3996
    %v5118 = vunpack.c.l.b16 %v3997
    %v5119 = vunpack.c.l.b16 %v3998
    %v5120 = vunpack.c.l.b16 %v3999
    %v5121 = vunpack.c.l.b16 %v4000
    %v5122 = vunpack.c.l.b16 %v4001
    %v5123 = vunpack.c.l.b16 %v4002
    %v5124 = vunpack.c.l.b16 %v4003
    %v5125 = vunpack.c.l.b16 %v4004
    %v5126 = vunpack.c.l.b16 %v4005
    %v5127 = vunpack.c.l.b16 %v4006
    %v5128 = vunpack.c.l.b16 %v4007
    %v5129 = vunpack.c.l.b16 %v4008
    %v5130 = vunpack.c.l.b16 %v4009
    %v5131 = vunpack.c.l.b16 %v4010
    %v5132 = vunpack.c.l.b16 %v4011
    %v5133 = vunpack.c.l.b16 %v4012
    %v5134 = vunpack.c.l.b16 %v4013
    %v5135 = vunpack.c.l.b16 %v4014
    %v5136 = vunpack.c.l.b16 %v4015
    %v5137 = vunpack.c.l.b16 %v4016
    %v5138 = vunpack.c.l.b16 %v4017
    %v5139 = vunpack.c.l.b16 %v4018
    %v5140 = vunpack.c.l.b16 %v4019
    %v5141 = vunpack.c.l.b16 %v4020
    %v5142 = vunpack.c.l.b16 %v4021
    %v5143 = vunpack.c.l.b16 %v4022
    %v5144 = vunpack.c.l.b16 %v4023
    %v5145 = vunpack.c.l.b16 %v4024
    %v5146 = vpack.c.b16 %v5114, %v5114
    %v5147 = vpack.c.b16 %v5115, %v5115
    %v5148 = vpack.c.b16 %v5116, %v5116
    %v5149 = vpack.c.b16 %v5117, %v5117
    %v5150 = vpack.c.b16 %v5118, %v5118
    %v5151 = vpack.c.b16 %v5119, %v5119
    %v5152 = vpack.c.b16 %v5120, %v5120
    %v5153 = vpack.c.b16 %v5121, %v5121
    %v5154 = vpack.c.b16 %v5122, %v5122
    %v5155 = vpack.c.b16 %v5123, %v5123
    %v5156 = vpack.c.b16 %v5124, %v5124
    %v5157 = vpack.c.b16 %v5125, %v5125
    %v5158 = vpack.c.b16 %v5126, %v5126
    %v5159 = vpack.c.b16 %v5127, %v5127
    %v5160 = vpack.c.b16 %v5128, %v5128
    %v5161 = vpack.c.b16 %v5129, %v5129
    %v5162 = vpack.c.b16 %v5130, %v5130
    %v5163 = vpack.c.b16 %v5131, %v5131
    %v5164 = vpack.c.b16 %v5132, %v5132
    %v5165 = vpack.c.b16 %v5133, %v5133
    %v5166 = vpack.c.b16 %v5134, %v5134
    %v5167 = vpack.c.b16 %v5135, %v5135
    %v5168 = vpack.c.b16 %v5136, %v5136
    %v5169 = vpack.c.b16 %v5137, %v5137
    %v5170 = vpack.c.b16 %v5138, %v5138
    %v5171 = vpack.c.b16 %v5139, %v5139
    %v5172 = vpack.c.b16 %v5140, %v5140
    %v5173 = vpack.c.b16 %v5141, %v5141
    %v5174 = vpack.c.b16 %v5142, %v5142
    %v5175 = vpack.c.b16 %v5143, %v5143
    %v5176 = vpack.c.b16 %v5144, %v5144
    %v5177 = vpack.c.b16 %v5145, %v5145
    %vm5178 = vcmask 1046528
    %v5179 = vrot.slane %v4441, 1
    %v5180 = vrot.slane %v5146, 1
    %v5181 = vsel %vm5178, %v5179, %v5180
    %v5182 = vrot.slane %v4442, 1
    %v5183 = vrot.slane %v5147, 1
    %v5184 = vsel %vm5178, %v5182, %v5183
    %v5185 = vrot.slane %v4443, 1
    %v5186 = vrot.slane %v5148, 1
    %v5187 = vsel %vm5178, %v5185, %v5186
    %v5188 = vrot.slane %v4444, 1
    %v5189 = vrot.slane %v5149, 1
    %v5190 = vsel %vm5178, %v5188, %v5189
    %v5191 = vrot.slane %v4445, 1
    %v5192 = vrot.slane %v5150, 1
    %v5193 = vsel %vm5178, %v5191, %v5192
    %v5194 = vrot.slane %v4446, 1
    %v5195 = vrot.slane %v5151, 1
    %v5196 = vsel %vm5178, %v5194, %v5195
    %v5197 = vrot.slane %v4447, 1
    %v5198 = vrot.slane %v5152, 1
    %v5199 = vsel %vm5178, %v5197, %v5198
    %v5200 = vrot.slane %v4448, 1
    %v5201 = vrot.slane %v5153, 1
    %v5202 = vsel %vm5178, %v5200, %v5201
    %v5203 = vrot.slane %v4449, 1
    %v5204 = vrot.slane %v5154, 1
    %v5205 = vsel %vm5178, %v5203, %v5204
    %v5206 = vrot.slane %v4450, 1
    %v5207 = vrot.slane %v5155, 1
    %v5208 = vsel %vm5178, %v5206, %v5207
    %v5209 = vrot.slane %v4451, 1
    %v5210 = vrot.slane %v5156, 1
    %v5211 = vsel %vm5178, %v5209, %v5210
    %v5212 = vrot.slane %v4452, 1
    %v5213 = vrot.slane %v5157, 1
    %v5214 = vsel %vm5178, %v5212, %v5213
    %v5215 = vrot.slane %v4453, 1
    %v5216 = vrot.slane %v5158, 1
    %v5217 = vsel %vm5178, %v5215, %v5216
    %v5218 = vrot.slane %v4454, 1
    %v5219 = vrot.slane %v5159, 1
    %v5220 = vsel %vm5178, %v5218, %v5219
    %v5221 = vrot.slane %v4455, 1
    %v5222 = vrot.slane %v5160, 1
    %v5223 = vsel %vm5178, %v5221, %v5222
    %v5224 = vrot.slane %v4456, 1
    %v5225 = vrot.slane %v5161, 1
    %v5226 = vsel %vm5178, %v5224, %v5225
    %v5227 = vrot.slane %v4457, 1
    %v5228 = vrot.slane %v5162, 1
    %v5229 = vsel %vm5178, %v5227, %v5228
    %v5230 = vrot.slane %v4458, 1
    %v5231 = vrot.slane %v5163, 1
    %v5232 = vsel %vm5178, %v5230, %v5231
    %v5233 = vrot.slane %v4459, 1
    %v5234 = vrot.slane %v5164, 1
    %v5235 = vsel %vm5178, %v5233, %v5234
    %v5236 = vrot.slane %v4460, 1
    %v5237 = vrot.slane %v5165, 1
    %v5238 = vsel %vm5178, %v5236, %v5237
    %v5239 = vrot.slane %v4461, 1
    %v5240 = vrot.slane %v5166, 1
    %v5241 = vsel %vm5178, %v5239, %v5240
    %v5242 = vrot.slane %v4462, 1
    %v5243 = vrot.slane %v5167, 1
    %v5244 = vsel %vm5178, %v5242, %v5243
    %v5245 = vrot.slane %v4463, 1
    %v5246 = vrot.slane %v5168, 1
    %v5247 = vsel %vm5178, %v5245, %v5246
    %v5248 = vrot.slane %v4464, 1
    %v5249 = vrot.slane %v5169, 1
    %v5250 = vsel %vm5178, %v5248, %v5249
    %v5251 = vrot.slane %v4465, 1
    %v5252 = vrot.slane %v5170, 1
    %v5253 = vsel %vm5178, %v5251, %v5252
    %v5254 = vrot.slane %v4466, 1
    %v5255 = vrot.slane %v5171, 1
    %v5256 = vsel %vm5178, %v5254, %v5255
    %v5257 = vrot.slane %v4467, 1
    %v5258 = vrot.slane %v5172, 1
    %v5259 = vsel %vm5178, %v5257, %v5258
    %v5260 = vrot.slane %v4468, 1
    %v5261 = vrot.slane %v5173, 1
    %v5262 = vsel %vm5178, %v5260, %v5261
    %v5263 = vrot.slane %v4469, 1
    %v5264 = vrot.slane %v5174, 1
    %v5265 = vsel %vm5178, %v5263, %v5264
    %v5266 = vrot.slane %v4470, 1
    %v5267 = vrot.slane %v5175, 1
    %v5268 = vsel %vm5178, %v5266, %v5267
    %v5269 = vrot.slane %v4471, 1
    %v5270 = vrot.slane %v5176, 1
    %v5271 = vsel %vm5178, %v5269, %v5270
    %v5272 = vrot.slane %v4472, 1
    %v5273 = vrot.slane %v5177, 1
    %v5274 = vsel %vm5178, %v5272, %v5273
    %v5275 = vpack.c.b16 %v5114, %v4218
    %v5276 = vpack.c.b16 %v5115, %v4221
    %v5277 = vpack.c.b16 %v5116, %v4224
    %v5278 = vpack.c.b16 %v5117, %v4227
    %v5279 = vpack.c.b16 %v5118, %v4230
    %v5280 = vpack.c.b16 %v5119, %v4233
    %v5281 = vpack.c.b16 %v5120, %v4236
    %v5282 = vpack.c.b16 %v5121, %v4239
    %v5283 = vpack.c.b16 %v5122, %v4242
    %v5284 = vpack.c.b16 %v5123, %v4245
    %v5285 = vpack.c.b16 %v5124, %v4248
    %v5286 = vpack.c.b16 %v5125, %v4251
    %v5287 = vpack.c.b16 %v5126, %v4254
    %v5288 = vpack.c.b16 %v5127, %v4257
    %v5289 = vpack.c.b16 %v5128, %v4260
    %v5290 = vpack.c.b16 %v5129, %v4263
    %v5291 = vpack.c.b16 %v5130, %v4266
    %v5292 = vpack.c.b16 %v5131, %v4269
    %v5293 = vpack.c.b16 %v5132, %v4272
    %v5294 = vpack.c.b16 %v5133, %v4275
    %v5295 = vpack.c.b16 %v5134, %v4278
    %v5296 = vpack.c.b16 %v5135, %v4281
    %v5297 = vpack.c.b16 %v5136, %v4284
    %v5298 = vpack.c.b16 %v5137, %v4287
    %v5299 = vpack.c.b16 %v5138, %v4290
    %v5300 = vpack.c.b16 %v5139, %v4293
    %v5301 = vpack.c.b16 %v5140, %v4296
    %v5302 = vpack.c.b16 %v5141, %v4299
    %v5303 = vpack.c.b16 %v5142, %v4302
    %v5304 = vpack.c.b16 %v5143, %v4305
    %v5305 = vpack.c.b16 %v5144, %v4308
    %v5306 = vpack.c.b16 %v5145, %v4311
    %v5308 = vshrl.u32 %v5275, 16
    %v5310 = vrot.slane %v5308, 5
    %v5311 = vshll.u32 %v5275, 16
    %v5313 = vrot.slane %v5311, 6
    %v5314 = vor.u32 %v5310, %v5313
    %v5316 = vshrl.u32 %v5276, 16
    %v5318 = vrot.slane %v5316, 5
    %v5319 = vshll.u32 %v5276, 16
    %v5321 = vrot.slane %v5319, 6
    %v5322 = vor.u32 %v5318, %v5321
    %v5324 = vshrl.u32 %v5277, 16
    %v5326 = vrot.slane %v5324, 5
    %v5327 = vshll.u32 %v5277, 16
    %v5329 = vrot.slane %v5327, 6
    %v5330 = vor.u32 %v5326, %v5329
    %v5332 = vshrl.u32 %v5278, 16
    %v5334 = vrot.slane %v5332, 5
    %v5335 = vshll.u32 %v5278, 16
    %v5337 = vrot.slane %v5335, 6
    %v5338 = vor.u32 %v5334, %v5337
    %v5340 = vshrl.u32 %v5279, 16
    %v5342 = vrot.slane %v5340, 5
    %v5343 = vshll.u32 %v5279, 16
    %v5345 = vrot.slane %v5343, 6
    %v5346 = vor.u32 %v5342, %v5345
    %v5348 = vshrl.u32 %v5280, 16
    %v5350 = vrot.slane %v5348, 5
    %v5351 = vshll.u32 %v5280, 16
    %v5353 = vrot.slane %v5351, 6
    %v5354 = vor.u32 %v5350, %v5353
    %v5356 = vshrl.u32 %v5281, 16
    %v5358 = vrot.slane %v5356, 5
    %v5359 = vshll.u32 %v5281, 16
    %v5361 = vrot.slane %v5359, 6
    %v5362 = vor.u32 %v5358, %v5361
    %v5364 = vshrl.u32 %v5282, 16
    %v5366 = vrot.slane %v5364, 5
    %v5367 = vshll.u32 %v5282, 16
    %v5369 = vrot.slane %v5367, 6
    %v5370 = vor.u32 %v5366, %v5369
    %v5372 = vshrl.u32 %v5283, 16
    %v5374 = vrot.slane %v5372, 5
    %v5375 = vshll.u32 %v5283, 16
    %v5377 = vrot.slane %v5375, 6
    %v5378 = vor.u32 %v5374, %v5377
    %v5380 = vshrl.u32 %v5284, 16
    %v5382 = vrot.slane %v5380, 5
    %v5383 = vshll.u32 %v5284, 16
    %v5385 = vrot.slane %v5383, 6
    %v5386 = vor.u32 %v5382, %v5385
    %v5388 = vshrl.u32 %v5285, 16
    %v5390 = vrot.slane %v5388, 5
    %v5391 = vshll.u32 %v5285, 16
    %v5393 = vrot.slane %v5391, 6
    %v5394 = vor.u32 %v5390, %v5393
    %v5396 = vshrl.u32 %v5286, 16
    %v5398 = vrot.slane %v5396, 5
    %v5399 = vshll.u32 %v5286, 16
    %v5401 = vrot.slane %v5399, 6
    %v5402 = vor.u32 %v5398, %v5401
    %v5404 = vshrl.u32 %v5287, 16
    %v5406 = vrot.slane %v5404, 5
    %v5407 = vshll.u32 %v5287, 16
    %v5409 = vrot.slane %v5407, 6
    %v5410 = vor.u32 %v5406, %v5409
    %v5412 = vshrl.u32 %v5288, 16
    %v5414 = vrot.slane %v5412, 5
    %v5415 = vshll.u32 %v5288, 16
    %v5417 = vrot.slane %v5415, 6
    %v5418 = vor.u32 %v5414, %v5417
    %v5420 = vshrl.u32 %v5289, 16
    %v5422 = vrot.slane %v5420, 5
    %v5423 = vshll.u32 %v5289, 16
    %v5425 = vrot.slane %v5423, 6
    %v5426 = vor.u32 %v5422, %v5425
    %v5428 = vshrl.u32 %v5290, 16
    %v5430 = vrot.slane %v5428, 5
    %v5431 = vshll.u32 %v5290, 16
    %v5433 = vrot.slane %v5431, 6
    %v5434 = vor.u32 %v5430, %v5433
    %v5436 = vshrl.u32 %v5291, 16
    %v5438 = vrot.slane %v5436, 5
    %v5439 = vshll.u32 %v5291, 16
    %v5441 = vrot.slane %v5439, 6
    %v5442 = vor.u32 %v5438, %v5441
    %v5444 = vshrl.u32 %v5292, 16
    %v5446 = vrot.slane %v5444, 5
    %v5447 = vshll.u32 %v5292, 16
    %v5449 = vrot.slane %v5447, 6
    %v5450 = vor.u32 %v5446, %v5449
    %v5452 = vshrl.u32 %v5293, 16
    %v5454 = vrot.slane %v5452, 5
    %v5455 = vshll.u32 %v5293, 16
    %v5457 = vrot.slane %v5455, 6
    %v5458 = vor.u32 %v5454, %v5457
    %v5460 = vshrl.u32 %v5294, 16
    %v5462 = vrot.slane %v5460, 5
    %v5463 = vshll.u32 %v5294, 16
    %v5465 = vrot.slane %v5463, 6
    %v5466 = vor.u32 %v5462, %v5465
    %v5468 = vshrl.u32 %v5295, 16
    %v5470 = vrot.slane %v5468, 5
    %v5471 = vshll.u32 %v5295, 16
    %v5473 = vrot.slane %v5471, 6
    %v5474 = vor.u32 %v5470, %v5473
    %v5476 = vshrl.u32 %v5296, 16
    %v5478 = vrot.slane %v5476, 5
    %v5479 = vshll.u32 %v5296, 16
    %v5481 = vrot.slane %v5479, 6
    %v5482 = vor.u32 %v5478, %v5481
    %v5484 = vshrl.u32 %v5297, 16
    %v5486 = vrot.slane %v5484, 5
    %v5487 = vshll.u32 %v5297, 16
    %v5489 = vrot.slane %v5487, 6
    %v5490 = vor.u32 %v5486, %v5489
    %v5492 = vshrl.u32 %v5298, 16
    %v5494 = vrot.slane %v5492, 5
    %v5495 = vshll.u32 %v5298, 16
    %v5497 = vrot.slane %v5495, 6
    %v5498 = vor.u32 %v5494, %v5497
    %v5500 = vshrl.u32 %v5299, 16
    %v5502 = vrot.slane %v5500, 5
    %v5503 = vshll.u32 %v5299, 16
    %v5505 = vrot.slane %v5503, 6
    %v5506 = vor.u32 %v5502, %v5505
    %v5508 = vshrl.u32 %v5300, 16
    %v5510 = vrot.slane %v5508, 5
    %v5511 = vshll.u32 %v5300, 16
    %v5513 = vrot.slane %v5511, 6
    %v5514 = vor.u32 %v5510, %v5513
    %v5516 = vshrl.u32 %v5301, 16
    %v5518 = vrot.slane %v5516, 5
    %v5519 = vshll.u32 %v5301, 16
    %v5521 = vrot.slane %v5519, 6
    %v5522 = vor.u32 %v5518, %v5521
    %v5524 = vshrl.u32 %v5302, 16
    %v5526 = vrot.slane %v5524, 5
    %v5527 = vshll.u32 %v5302, 16
    %v5529 = vrot.slane %v5527, 6
    %v5530 = vor.u32 %v5526, %v5529
    %v5532 = vshrl.u32 %v5303, 16
    %v5534 = vrot.slane %v5532, 5
    %v5535 = vshll.u32 %v5303, 16
    %v5537 = vrot.slane %v5535, 6
    %v5538 = vor.u32 %v5534, %v5537
    %v5540 = vshrl.u32 %v5304, 16
    %v5542 = vrot.slane %v5540, 5
    %v5543 = vshll.u32 %v5304, 16
    %v5545 = vrot.slane %v5543, 6
    %v5546 = vor.u32 %v5542, %v5545
    %v5548 = vshrl.u32 %v5305, 16
    %v5550 = vrot.slane %v5548, 5
    %v5551 = vshll.u32 %v5305, 16
    %v5553 = vrot.slane %v5551, 6
    %v5554 = vor.u32 %v5550, %v5553
    %v5556 = vshrl.u32 %v5306, 16
    %v5558 = vrot.slane %v5556, 5
    %v5559 = vshll.u32 %v5306, 16
    %v5561 = vrot.slane %v5559, 6
    %v5562 = vor.u32 %v5558, %v5561
    %5563 = vrot.lane.b32.xlu0 %v5314, 64
    %v5564 = vpop.permute.xlu0 %5563
    %5565 = vrot.lane.b32.xlu0 %v5322, 64
    %v5566 = vpop.permute.xlu0 %5565
    %5567 = vrot.lane.b32.xlu0 %v5330, 64
    %v5568 = vpop.permute.xlu0 %5567
    %5569 = vrot.lane.b32.xlu0 %v5338, 64
    %v5570 = vpop.permute.xlu0 %5569
    %5571 = vrot.lane.b32.xlu0 %v5346, 64
    %v5572 = vpop.permute.xlu0 %5571
    %5573 = vrot.lane.b32.xlu0 %v5354, 64
    %v5574 = vpop.permute.xlu0 %5573
    %5575 = vrot.lane.b32.xlu0 %v5362, 64
    %v5576 = vpop.permute.xlu0 %5575
    %5577 = vrot.lane.b32.xlu0 %v5370, 64
    %v5578 = vpop.permute.xlu0 %5577
    %5579 = vrot.lane.b32.xlu0 %v5378, 64
    %v5580 = vpop.permute.xlu0 %5579
    %5581 = vrot.lane.b32.xlu0 %v5386, 64
    %v5582 = vpop.permute.xlu0 %5581
    %5583 = vrot.lane.b32.xlu0 %v5394, 64
    %v5584 = vpop.permute.xlu0 %5583
    %5585 = vrot.lane.b32.xlu0 %v5402, 64
    %v5586 = vpop.permute.xlu0 %5585
    %5587 = vrot.lane.b32.xlu0 %v5410, 64
    %v5588 = vpop.permute.xlu0 %5587
    %5589 = vrot.lane.b32.xlu0 %v5418, 64
    %v5590 = vpop.permute.xlu0 %5589
    %5591 = vrot.lane.b32.xlu0 %v5426, 64
    %v5592 = vpop.permute.xlu0 %5591
    %5593 = vrot.lane.b32.xlu0 %v5434, 64
    %v5594 = vpop.permute.xlu0 %5593
    %5595 = vrot.lane.b32.xlu0 %v5442, 64
    %v5596 = vpop.permute.xlu0 %5595
    %5597 = vrot.lane.b32.xlu0 %v5450, 64
    %v5598 = vpop.permute.xlu0 %5597
    %5599 = vrot.lane.b32.xlu0 %v5458, 64
    %v5600 = vpop.permute.xlu0 %5599
    %5601 = vrot.lane.b32.xlu0 %v5466, 64
    %v5602 = vpop.permute.xlu0 %5601
    %5603 = vrot.lane.b32.xlu0 %v5474, 64
    %v5604 = vpop.permute.xlu0 %5603
    %5605 = vrot.lane.b32.xlu0 %v5482, 64
    %v5606 = vpop.permute.xlu0 %5605
    %5607 = vrot.lane.b32.xlu0 %v5490, 64
    %v5608 = vpop.permute.xlu0 %5607
    %5609 = vrot.lane.b32.xlu0 %v5498, 64
    %v5610 = vpop.permute.xlu0 %5609
    %5611 = vrot.lane.b32.xlu0 %v5506, 64
    %v5612 = vpop.permute.xlu0 %5611
    %5613 = vrot.lane.b32.xlu0 %v5514, 64
    %v5614 = vpop.permute.xlu0 %5613
    %5615 = vrot.lane.b32.xlu0 %v5522, 64
    %v5616 = vpop.permute.xlu0 %5615
    %5617 = vrot.lane.b32.xlu0 %v5530, 64
    %v5618 = vpop.permute.xlu0 %5617
    %5619 = vrot.lane.b32.xlu0 %v5538, 64
    %v5620 = vpop.permute.xlu0 %5619
    %5621 = vrot.lane.b32.xlu0 %v5546, 64
    %v5622 = vpop.permute.xlu0 %5621
    %5623 = vrot.lane.b32.xlu0 %v5554, 64
    %v5624 = vpop.permute.xlu0 %5623
    %5625 = vrot.lane.b32.xlu0 %v5562, 64
    %v5626 = vpop.permute.xlu0 %5625
    %v5659 = vunpack.c.l.b16 %v4025
    %v5660 = vunpack.c.l.b16 %v4026
    %v5661 = vunpack.c.l.b16 %v4027
    %v5662 = vunpack.c.l.b16 %v4028
    %v5663 = vunpack.c.l.b16 %v4029
    %v5664 = vunpack.c.l.b16 %v4030
    %v5665 = vunpack.c.l.b16 %v4031
    %v5666 = vunpack.c.l.b16 %v4032
    %v5667 = vunpack.c.l.b16 %v4033
    %v5668 = vunpack.c.l.b16 %v4034
    %v5669 = vunpack.c.l.b16 %v4035
    %v5670 = vunpack.c.l.b16 %v4036
    %v5671 = vunpack.c.l.b16 %v4037
    %v5672 = vunpack.c.l.b16 %v4038
    %v5673 = vunpack.c.l.b16 %v4039
    %v5674 = vunpack.c.l.b16 %v4040
    %v5675 = vunpack.c.l.b16 %v4041
    %v5676 = vunpack.c.l.b16 %v4042
    %v5677 = vunpack.c.l.b16 %v4043
    %v5678 = vunpack.c.l.b16 %v4044
    %v5679 = vunpack.c.l.b16 %v4045
    %v5680 = vunpack.c.l.b16 %v4046
    %v5681 = vunpack.c.l.b16 %v4047
    %v5682 = vunpack.c.l.b16 %v4048
    %v5683 = vunpack.c.l.b16 %v4049
    %v5684 = vunpack.c.l.b16 %v4050
    %v5685 = vunpack.c.l.b16 %v4051
    %v5686 = vunpack.c.l.b16 %v4052
    %v5687 = vunpack.c.l.b16 %v4053
    %v5688 = vunpack.c.l.b16 %v4054
    %v5689 = vunpack.c.l.b16 %v4055
    %v5690 = vunpack.c.l.b16 %v4056
    %v5691 = vpack.c.b16 %v5659, %v5659
    %v5692 = vpack.c.b16 %v5660, %v5660
    %v5693 = vpack.c.b16 %v5661, %v5661
    %v5694 = vpack.c.b16 %v5662, %v5662
    %v5695 = vpack.c.b16 %v5663, %v5663
    %v5696 = vpack.c.b16 %v5664, %v5664
    %v5697 = vpack.c.b16 %v5665, %v5665
    %v5698 = vpack.c.b16 %v5666, %v5666
    %v5699 = vpack.c.b16 %v5667, %v5667
    %v5700 = vpack.c.b16 %v5668, %v5668
    %v5701 = vpack.c.b16 %v5669, %v5669
    %v5702 = vpack.c.b16 %v5670, %v5670
    %v5703 = vpack.c.b16 %v5671, %v5671
    %v5704 = vpack.c.b16 %v5672, %v5672
    %v5705 = vpack.c.b16 %v5673, %v5673
    %v5706 = vpack.c.b16 %v5674, %v5674
    %v5707 = vpack.c.b16 %v5675, %v5675
    %v5708 = vpack.c.b16 %v5676, %v5676
    %v5709 = vpack.c.b16 %v5677, %v5677
    %v5710 = vpack.c.b16 %v5678, %v5678
    %v5711 = vpack.c.b16 %v5679, %v5679
    %v5712 = vpack.c.b16 %v5680, %v5680
    %v5713 = vpack.c.b16 %v5681, %v5681
    %v5714 = vpack.c.b16 %v5682, %v5682
    %v5715 = vpack.c.b16 %v5683, %v5683
    %v5716 = vpack.c.b16 %v5684, %v5684
    %v5717 = vpack.c.b16 %v5685, %v5685
    %v5718 = vpack.c.b16 %v5686, %v5686
    %v5719 = vpack.c.b16 %v5687, %v5687
    %v5720 = vpack.c.b16 %v5688, %v5688
    %v5721 = vpack.c.b16 %v5689, %v5689
    %v5722 = vpack.c.b16 %v5690, %v5690
    %vm5723 = vcmask 1041408
    %v5724 = vrot.slane %v5275, 6
    %v5725 = vrot.slane %v5691, 6
    %v5726 = vsel %vm5723, %v5724, %v5725
    %v5727 = vrot.slane %v5276, 6
    %v5728 = vrot.slane %v5692, 6
    %v5729 = vsel %vm5723, %v5727, %v5728
    %v5730 = vrot.slane %v5277, 6
    %v5731 = vrot.slane %v5693, 6
    %v5732 = vsel %vm5723, %v5730, %v5731
    %v5733 = vrot.slane %v5278, 6
    %v5734 = vrot.slane %v5694, 6
    %v5735 = vsel %vm5723, %v5733, %v5734
    %v5736 = vrot.slane %v5279, 6
    %v5737 = vrot.slane %v5695, 6
    %v5738 = vsel %vm5723, %v5736, %v5737
    %v5739 = vrot.slane %v5280, 6
    %v5740 = vrot.slane %v5696, 6
    %v5741 = vsel %vm5723, %v5739, %v5740
    %v5742 = vrot.slane %v5281, 6
    %v5743 = vrot.slane %v5697, 6
    %v5744 = vsel %vm5723, %v5742, %v5743
    %v5745 = vrot.slane %v5282, 6
    %v5746 = vrot.slane %v5698, 6
    %v5747 = vsel %vm5723, %v5745, %v5746
    %v5748 = vrot.slane %v5283, 6
    %v5749 = vrot.slane %v5699, 6
    %v5750 = vsel %vm5723, %v5748, %v5749
    %v5751 = vrot.slane %v5284, 6
    %v5752 = vrot.slane %v5700, 6
    %v5753 = vsel %vm5723, %v5751, %v5752
    %v5754 = vrot.slane %v5285, 6
    %v5755 = vrot.slane %v5701, 6
    %v5756 = vsel %vm5723, %v5754, %v5755
    %v5757 = vrot.slane %v5286, 6
    %v5758 = vrot.slane %v5702, 6
    %v5759 = vsel %vm5723, %v5757, %v5758
    %v5760 = vrot.slane %v5287, 6
    %v5761 = vrot.slane %v5703, 6
    %v5762 = vsel %vm5723, %v5760, %v5761
    %v5763 = vrot.slane %v5288, 6
    %v5764 = vrot.slane %v5704, 6
    %v5765 = vsel %vm5723, %v5763, %v5764
    %v5766 = vrot.slane %v5289, 6
    %v5767 = vrot.slane %v5705, 6
    %v5768 = vsel %vm5723, %v5766, %v5767
    %v5769 = vrot.slane %v5290, 6
    %v5770 = vrot.slane %v5706, 6
    %v5771 = vsel %vm5723, %v5769, %v5770
    %v5772 = vrot.slane %v5291, 6
    %v5773 = vrot.slane %v5707, 6
    %v5774 = vsel %vm5723, %v5772, %v5773
    %v5775 = vrot.slane %v5292, 6
    %v5776 = vrot.slane %v5708, 6
    %v5777 = vsel %vm5723, %v5775, %v5776
    %v5778 = vrot.slane %v5293, 6
    %v5779 = vrot.slane %v5709, 6
    %v5780 = vsel %vm5723, %v5778, %v5779
    %v5781 = vrot.slane %v5294, 6
    %v5782 = vrot.slane %v5710, 6
    %v5783 = vsel %vm5723, %v5781, %v5782
    %v5784 = vrot.slane %v5295, 6
    %v5785 = vrot.slane %v5711, 6
    %v5786 = vsel %vm5723, %v5784, %v5785
    %v5787 = vrot.slane %v5296, 6
    %v5788 = vrot.slane %v5712, 6
    %v5789 = vsel %vm5723, %v5787, %v5788
    %v5790 = vrot.slane %v5297, 6
    %v5791 = vrot.slane %v5713, 6
    %v5792 = vsel %vm5723, %v5790, %v5791
    %v5793 = vrot.slane %v5298, 6
    %v5794 = vrot.slane %v5714, 6
    %v5795 = vsel %vm5723, %v5793, %v5794
    %v5796 = vrot.slane %v5299, 6
    %v5797 = vrot.slane %v5715, 6
    %v5798 = vsel %vm5723, %v5796, %v5797
    %v5799 = vrot.slane %v5300, 6
    %v5800 = vrot.slane %v5716, 6
    %v5801 = vsel %vm5723, %v5799, %v5800
    %v5802 = vrot.slane %v5301, 6
    %v5803 = vrot.slane %v5717, 6
    %v5804 = vsel %vm5723, %v5802, %v5803
    %v5805 = vrot.slane %v5302, 6
    %v5806 = vrot.slane %v5718, 6
    %v5807 = vsel %vm5723, %v5805, %v5806
    %v5808 = vrot.slane %v5303, 6
    %v5809 = vrot.slane %v5719, 6
    %v5810 = vsel %vm5723, %v5808, %v5809
    %v5811 = vrot.slane %v5304, 6
    %v5812 = vrot.slane %v5720, 6
    %v5813 = vsel %vm5723, %v5811, %v5812
    %v5814 = vrot.slane %v5305, 6
    %v5815 = vrot.slane %v5721, 6
    %v5816 = vsel %vm5723, %v5814, %v5815
    %v5817 = vrot.slane %v5306, 6
    %v5818 = vrot.slane %v5722, 6
    %v5819 = vsel %vm5723, %v5817, %v5818
    %v5852 = vunpack.c.l.b16 %v4057
    %v5853 = vunpack.c.l.b16 %v4058
    %v5854 = vunpack.c.l.b16 %v4059
    %v5855 = vunpack.c.l.b16 %v4060
    %v5856 = vunpack.c.l.b16 %v4061
    %v5857 = vunpack.c.l.b16 %v4062
    %v5858 = vunpack.c.l.b16 %v4063
    %v5859 = vunpack.c.l.b16 %v4064
    %v5860 = vunpack.c.l.b16 %v4065
    %v5861 = vunpack.c.l.b16 %v4066
    %v5862 = vunpack.c.l.b16 %v4067
    %v5863 = vunpack.c.l.b16 %v4068
    %v5864 = vunpack.c.l.b16 %v4069
    %v5865 = vunpack.c.l.b16 %v4070
    %v5866 = vunpack.c.l.b16 %v4071
    %v5867 = vunpack.c.l.b16 %v4072
    %v5868 = vunpack.c.l.b16 %v4073
    %v5869 = vunpack.c.l.b16 %v4074
    %v5870 = vunpack.c.l.b16 %v4075
    %v5871 = vunpack.c.l.b16 %v4076
    %v5872 = vunpack.c.l.b16 %v4077
    %v5873 = vunpack.c.l.b16 %v4078
    %v5874 = vunpack.c.l.b16 %v4079
    %v5875 = vunpack.c.l.b16 %v4080
    %v5876 = vunpack.c.l.b16 %v4081
    %v5877 = vunpack.c.l.b16 %v4082
    %v5878 = vunpack.c.l.b16 %v4083
    %v5879 = vunpack.c.l.b16 %v4084
    %v5880 = vunpack.c.l.b16 %v4085
    %v5881 = vunpack.c.l.b16 %v4086
    %v5882 = vunpack.c.l.b16 %v4087
    %v5883 = vunpack.c.l.b16 %v4088
    %v5884 = vpack.c.b16 %v5114, %v5852
    %v5885 = vpack.c.b16 %v5115, %v5853
    %v5886 = vpack.c.b16 %v5116, %v5854
    %v5887 = vpack.c.b16 %v5117, %v5855
    %v5888 = vpack.c.b16 %v5118, %v5856
    %v5889 = vpack.c.b16 %v5119, %v5857
    %v5890 = vpack.c.b16 %v5120, %v5858
    %v5891 = vpack.c.b16 %v5121, %v5859
    %v5892 = vpack.c.b16 %v5122, %v5860
    %v5893 = vpack.c.b16 %v5123, %v5861
    %v5894 = vpack.c.b16 %v5124, %v5862
    %v5895 = vpack.c.b16 %v5125, %v5863
    %v5896 = vpack.c.b16 %v5126, %v5864
    %v5897 = vpack.c.b16 %v5127, %v5865
    %v5898 = vpack.c.b16 %v5128, %v5866
    %v5899 = vpack.c.b16 %v5129, %v5867
    %v5900 = vpack.c.b16 %v5130, %v5868
    %v5901 = vpack.c.b16 %v5131, %v5869
    %v5902 = vpack.c.b16 %v5132, %v5870
    %v5903 = vpack.c.b16 %v5133, %v5871
    %v5904 = vpack.c.b16 %v5134, %v5872
    %v5905 = vpack.c.b16 %v5135, %v5873
    %v5906 = vpack.c.b16 %v5136, %v5874
    %v5907 = vpack.c.b16 %v5137, %v5875
    %v5908 = vpack.c.b16 %v5138, %v5876
    %v5909 = vpack.c.b16 %v5139, %v5877
    %v5910 = vpack.c.b16 %v5140, %v5878
    %v5911 = vpack.c.b16 %v5141, %v5879
    %v5912 = vpack.c.b16 %v5142, %v5880
    %v5913 = vpack.c.b16 %v5143, %v5881
    %v5914 = vpack.c.b16 %v5144, %v5882
    %v5915 = vpack.c.b16 %v5145, %v5883
    %vm5916 = vsmask.f32 1280
    %v5918 = vshrl.u32 %v5884, 16
    %v5920 = vrot.slane %v5918, 6
    %v5921 = vshll.u32 %v5884, 16
    %v5923 = vrot.slane %v5921, 7
    %v5924 = vor.u32 %v5920, %v5923
    %v5926 = vshrl.u32 %v5691, 16
    %v5928 = vrot.slane %v5926, 6
    %v5929 = vshll.u32 %v5691, 16
    %v5931 = vrot.slane %v5929, 7
    %v5932 = vor.u32 %v5928, %v5931
    %v5933 = vsel %vm5916, %v5924, %v5932
    %v5935 = vshrl.u32 %v5885, 16
    %v5937 = vrot.slane %v5935, 6
    %v5938 = vshll.u32 %v5885, 16
    %v5940 = vrot.slane %v5938, 7
    %v5941 = vor.u32 %v5937, %v5940
    %v5943 = vshrl.u32 %v5692, 16
    %v5945 = vrot.slane %v5943, 6
    %v5946 = vshll.u32 %v5692, 16
    %v5948 = vrot.slane %v5946, 7
    %v5949 = vor.u32 %v5945, %v5948
    %v5950 = vsel %vm5916, %v5941, %v5949
    %v5952 = vshrl.u32 %v5886, 16
    %v5954 = vrot.slane %v5952, 6
    %v5955 = vshll.u32 %v5886, 16
    %v5957 = vrot.slane %v5955, 7
    %v5958 = vor.u32 %v5954, %v5957
    %v5960 = vshrl.u32 %v5693, 16
    %v5962 = vrot.slane %v5960, 6
    %v5963 = vshll.u32 %v5693, 16
    %v5965 = vrot.slane %v5963, 7
    %v5966 = vor.u32 %v5962, %v5965
    %v5967 = vsel %vm5916, %v5958, %v5966
    %v5969 = vshrl.u32 %v5887, 16
    %v5971 = vrot.slane %v5969, 6
    %v5972 = vshll.u32 %v5887, 16
    %v5974 = vrot.slane %v5972, 7
    %v5975 = vor.u32 %v5971, %v5974
    %v5977 = vshrl.u32 %v5694, 16
    %v5979 = vrot.slane %v5977, 6
    %v5980 = vshll.u32 %v5694, 16
    %v5982 = vrot.slane %v5980, 7
    %v5983 = vor.u32 %v5979, %v5982
    %v5984 = vsel %vm5916, %v5975, %v5983
    %v5986 = vshrl.u32 %v5888, 16
    %v5988 = vrot.slane %v5986, 6
    %v5989 = vshll.u32 %v5888, 16
    %v5991 = vrot.slane %v5989, 7
    %v5992 = vor.u32 %v5988, %v5991
    %v5994 = vshrl.u32 %v5695, 16
    %v5996 = vrot.slane %v5994, 6
    %v5997 = vshll.u32 %v5695, 16
    %v5999 = vrot.slane %v5997, 7
    %v6000 = vor.u32 %v5996, %v5999
    %v6001 = vsel %vm5916, %v5992, %v6000
    %v6003 = vshrl.u32 %v5889, 16
    %v6005 = vrot.slane %v6003, 6
    %v6006 = vshll.u32 %v5889, 16
    %v6008 = vrot.slane %v6006, 7
    %v6009 = vor.u32 %v6005, %v6008
    %v6011 = vshrl.u32 %v5696, 16
    %v6013 = vrot.slane %v6011, 6
    %v6014 = vshll.u32 %v5696, 16
    %v6016 = vrot.slane %v6014, 7
    %v6017 = vor.u32 %v6013, %v6016
    %v6018 = vsel %vm5916, %v6009, %v6017
    %v6020 = vshrl.u32 %v5890, 16
    %v6022 = vrot.slane %v6020, 6
    %v6023 = vshll.u32 %v5890, 16
    %v6025 = vrot.slane %v6023, 7
    %v6026 = vor.u32 %v6022, %v6025
    %v6028 = vshrl.u32 %v5697, 16
    %v6030 = vrot.slane %v6028, 6
    %v6031 = vshll.u32 %v5697, 16
    %v6033 = vrot.slane %v6031, 7
    %v6034 = vor.u32 %v6030, %v6033
    %v6035 = vsel %vm5916, %v6026, %v6034
    %v6037 = vshrl.u32 %v5891, 16
    %v6039 = vrot.slane %v6037, 6
    %v6040 = vshll.u32 %v5891, 16
    %v6042 = vrot.slane %v6040, 7
    %v6043 = vor.u32 %v6039, %v6042
    %v6045 = vshrl.u32 %v5698, 16
    %v6047 = vrot.slane %v6045, 6
    %v6048 = vshll.u32 %v5698, 16
    %v6050 = vrot.slane %v6048, 7
    %v6051 = vor.u32 %v6047, %v6050
    %v6052 = vsel %vm5916, %v6043, %v6051
    %v6054 = vshrl.u32 %v5892, 16
    %v6056 = vrot.slane %v6054, 6
    %v6057 = vshll.u32 %v5892, 16
    %v6059 = vrot.slane %v6057, 7
    %v6060 = vor.u32 %v6056, %v6059
    %v6062 = vshrl.u32 %v5699, 16
    %v6064 = vrot.slane %v6062, 6
    %v6065 = vshll.u32 %v5699, 16
    %v6067 = vrot.slane %v6065, 7
    %v6068 = vor.u32 %v6064, %v6067
    %v6069 = vsel %vm5916, %v6060, %v6068
    %v6071 = vshrl.u32 %v5893, 16
    %v6073 = vrot.slane %v6071, 6
    %v6074 = vshll.u32 %v5893, 16
    %v6076 = vrot.slane %v6074, 7
    %v6077 = vor.u32 %v6073, %v6076
    %v6079 = vshrl.u32 %v5700, 16
    %v6081 = vrot.slane %v6079, 6
    %v6082 = vshll.u32 %v5700, 16
    %v6084 = vrot.slane %v6082, 7
    %v6085 = vor.u32 %v6081, %v6084
    %v6086 = vsel %vm5916, %v6077, %v6085
    %v6088 = vshrl.u32 %v5894, 16
    %v6090 = vrot.slane %v6088, 6
    %v6091 = vshll.u32 %v5894, 16
    %v6093 = vrot.slane %v6091, 7
    %v6094 = vor.u32 %v6090, %v6093
    %v6096 = vshrl.u32 %v5701, 16
    %v6098 = vrot.slane %v6096, 6
    %v6099 = vshll.u32 %v5701, 16
    %v6101 = vrot.slane %v6099, 7
    %v6102 = vor.u32 %v6098, %v6101
    %v6103 = vsel %vm5916, %v6094, %v6102
    %v6105 = vshrl.u32 %v5895, 16
    %v6107 = vrot.slane %v6105, 6
    %v6108 = vshll.u32 %v5895, 16
    %v6110 = vrot.slane %v6108, 7
    %v6111 = vor.u32 %v6107, %v6110
    %v6113 = vshrl.u32 %v5702, 16
    %v6115 = vrot.slane %v6113, 6
    %v6116 = vshll.u32 %v5702, 16
    %v6118 = vrot.slane %v6116, 7
    %v6119 = vor.u32 %v6115, %v6118
    %v6120 = vsel %vm5916, %v6111, %v6119
    %v6122 = vshrl.u32 %v5896, 16
    %v6124 = vrot.slane %v6122, 6
    %v6125 = vshll.u32 %v5896, 16
    %v6127 = vrot.slane %v6125, 7
    %v6128 = vor.u32 %v6124, %v6127
    %v6130 = vshrl.u32 %v5703, 16
    %v6132 = vrot.slane %v6130, 6
    %v6133 = vshll.u32 %v5703, 16
    %v6135 = vrot.slane %v6133, 7
    %v6136 = vor.u32 %v6132, %v6135
    %v6137 = vsel %vm5916, %v6128, %v6136
    %v6139 = vshrl.u32 %v5897, 16
    %v6141 = vrot.slane %v6139, 6
    %v6142 = vshll.u32 %v5897, 16
    %v6144 = vrot.slane %v6142, 7
    %v6145 = vor.u32 %v6141, %v6144
    %v6147 = vshrl.u32 %v5704, 16
    %v6149 = vrot.slane %v6147, 6
    %v6150 = vshll.u32 %v5704, 16
    %v6152 = vrot.slane %v6150, 7
    %v6153 = vor.u32 %v6149, %v6152
    %v6154 = vsel %vm5916, %v6145, %v6153
    %v6156 = vshrl.u32 %v5898, 16
    %v6158 = vrot.slane %v6156, 6
    %v6159 = vshll.u32 %v5898, 16
    %v6161 = vrot.slane %v6159, 7
    %v6162 = vor.u32 %v6158, %v6161
    %v6164 = vshrl.u32 %v5705, 16
    %v6166 = vrot.slane %v6164, 6
    %v6167 = vshll.u32 %v5705, 16
    %v6169 = vrot.slane %v6167, 7
    %v6170 = vor.u32 %v6166, %v6169
    %v6171 = vsel %vm5916, %v6162, %v6170
    %v6173 = vshrl.u32 %v5899, 16
    %v6175 = vrot.slane %v6173, 6
    %v6176 = vshll.u32 %v5899, 16
    %v6178 = vrot.slane %v6176, 7
    %v6179 = vor.u32 %v6175, %v6178
    %v6181 = vshrl.u32 %v5706, 16
    %v6183 = vrot.slane %v6181, 6
    %v6184 = vshll.u32 %v5706, 16
    %v6186 = vrot.slane %v6184, 7
    %v6187 = vor.u32 %v6183, %v6186
    %v6188 = vsel %vm5916, %v6179, %v6187
    %v6190 = vshrl.u32 %v5900, 16
    %v6192 = vrot.slane %v6190, 6
    %v6193 = vshll.u32 %v5900, 16
    %v6195 = vrot.slane %v6193, 7
    %v6196 = vor.u32 %v6192, %v6195
    %v6198 = vshrl.u32 %v5707, 16
    %v6200 = vrot.slane %v6198, 6
    %v6201 = vshll.u32 %v5707, 16
    %v6203 = vrot.slane %v6201, 7
    %v6204 = vor.u32 %v6200, %v6203
    %v6205 = vsel %vm5916, %v6196, %v6204
    %v6207 = vshrl.u32 %v5901, 16
    %v6209 = vrot.slane %v6207, 6
    %v6210 = vshll.u32 %v5901, 16
    %v6212 = vrot.slane %v6210, 7
    %v6213 = vor.u32 %v6209, %v6212
    %v6215 = vshrl.u32 %v5708, 16
    %v6217 = vrot.slane %v6215, 6
    %v6218 = vshll.u32 %v5708, 16
    %v6220 = vrot.slane %v6218, 7
    %v6221 = vor.u32 %v6217, %v6220
    %v6222 = vsel %vm5916, %v6213, %v6221
    %v6224 = vshrl.u32 %v5902, 16
    %v6226 = vrot.slane %v6224, 6
    %v6227 = vshll.u32 %v5902, 16
    %v6229 = vrot.slane %v6227, 7
    %v6230 = vor.u32 %v6226, %v6229
    %v6232 = vshrl.u32 %v5709, 16
    %v6234 = vrot.slane %v6232, 6
    %v6235 = vshll.u32 %v5709, 16
    %v6237 = vrot.slane %v6235, 7
    %v6238 = vor.u32 %v6234, %v6237
    %v6239 = vsel %vm5916, %v6230, %v6238
    %v6241 = vshrl.u32 %v5903, 16
    %v6243 = vrot.slane %v6241, 6
    %v6244 = vshll.u32 %v5903, 16
    %v6246 = vrot.slane %v6244, 7
    %v6247 = vor.u32 %v6243, %v6246
    %v6249 = vshrl.u32 %v5710, 16
    %v6251 = vrot.slane %v6249, 6
    %v6252 = vshll.u32 %v5710, 16
    %v6254 = vrot.slane %v6252, 7
    %v6255 = vor.u32 %v6251, %v6254
    %v6256 = vsel %vm5916, %v6247, %v6255
    %v6258 = vshrl.u32 %v5904, 16
    %v6260 = vrot.slane %v6258, 6
    %v6261 = vshll.u32 %v5904, 16
    %v6263 = vrot.slane %v6261, 7
    %v6264 = vor.u32 %v6260, %v6263
    %v6266 = vshrl.u32 %v5711, 16
    %v6268 = vrot.slane %v6266, 6
    %v6269 = vshll.u32 %v5711, 16
    %v6271 = vrot.slane %v6269, 7
    %v6272 = vor.u32 %v6268, %v6271
    %v6273 = vsel %vm5916, %v6264, %v6272
    %v6275 = vshrl.u32 %v5905, 16
    %v6277 = vrot.slane %v6275, 6
    %v6278 = vshll.u32 %v5905, 16
    %v6280 = vrot.slane %v6278, 7
    %v6281 = vor.u32 %v6277, %v6280
    %v6283 = vshrl.u32 %v5712, 16
    %v6285 = vrot.slane %v6283, 6
    %v6286 = vshll.u32 %v5712, 16
    %v6288 = vrot.slane %v6286, 7
    %v6289 = vor.u32 %v6285, %v6288
    %v6290 = vsel %vm5916, %v6281, %v6289
    %v6292 = vshrl.u32 %v5906, 16
    %v6294 = vrot.slane %v6292, 6
    %v6295 = vshll.u32 %v5906, 16
    %v6297 = vrot.slane %v6295, 7
    %v6298 = vor.u32 %v6294, %v6297
    %v6300 = vshrl.u32 %v5713, 16
    %v6302 = vrot.slane %v6300, 6
    %v6303 = vshll.u32 %v5713, 16
    %v6305 = vrot.slane %v6303, 7
    %v6306 = vor.u32 %v6302, %v6305
    %v6307 = vsel %vm5916, %v6298, %v6306
    %v6309 = vshrl.u32 %v5907, 16
    %v6311 = vrot.slane %v6309, 6
    %v6312 = vshll.u32 %v5907, 16
    %v6314 = vrot.slane %v6312, 7
    %v6315 = vor.u32 %v6311, %v6314
    %v6317 = vshrl.u32 %v5714, 16
    %v6319 = vrot.slane %v6317, 6
    %v6320 = vshll.u32 %v5714, 16
    %v6322 = vrot.slane %v6320, 7
    %v6323 = vor.u32 %v6319, %v6322
    %v6324 = vsel %vm5916, %v6315, %v6323
    %v6326 = vshrl.u32 %v5908, 16
    %v6328 = vrot.slane %v6326, 6
    %v6329 = vshll.u32 %v5908, 16
    %v6331 = vrot.slane %v6329, 7
    %v6332 = vor.u32 %v6328, %v6331
    %v6334 = vshrl.u32 %v5715, 16
    %v6336 = vrot.slane %v6334, 6
    %v6337 = vshll.u32 %v5715, 16
    %v6339 = vrot.slane %v6337, 7
    %v6340 = vor.u32 %v6336, %v6339
    %v6341 = vsel %vm5916, %v6332, %v6340
    %v6343 = vshrl.u32 %v5909, 16
    %v6345 = vrot.slane %v6343, 6
    %v6346 = vshll.u32 %v5909, 16
    %v6348 = vrot.slane %v6346, 7
    %v6349 = vor.u32 %v6345, %v6348
    %v6351 = vshrl.u32 %v5716, 16
    %v6353 = vrot.slane %v6351, 6
    %v6354 = vshll.u32 %v5716, 16
    %v6356 = vrot.slane %v6354, 7
    %v6357 = vor.u32 %v6353, %v6356
    %v6358 = vsel %vm5916, %v6349, %v6357
    %v6360 = vshrl.u32 %v5910, 16
    %v6362 = vrot.slane %v6360, 6
    %v6363 = vshll.u32 %v5910, 16
    %v6365 = vrot.slane %v6363, 7
    %v6366 = vor.u32 %v6362, %v6365
    %v6368 = vshrl.u32 %v5717, 16
    %v6370 = vrot.slane %v6368, 6
    %v6371 = vshll.u32 %v5717, 16
    %v6373 = vrot.slane %v6371, 7
    %v6374 = vor.u32 %v6370, %v6373
    %v6375 = vsel %vm5916, %v6366, %v6374
    %v6377 = vshrl.u32 %v5911, 16
    %v6379 = vrot.slane %v6377, 6
    %v6380 = vshll.u32 %v5911, 16
    %v6382 = vrot.slane %v6380, 7
    %v6383 = vor.u32 %v6379, %v6382
    %v6385 = vshrl.u32 %v5718, 16
    %v6387 = vrot.slane %v6385, 6
    %v6388 = vshll.u32 %v5718, 16
    %v6390 = vrot.slane %v6388, 7
    %v6391 = vor.u32 %v6387, %v6390
    %v6392 = vsel %vm5916, %v6383, %v6391
    %v6394 = vshrl.u32 %v5912, 16
    %v6396 = vrot.slane %v6394, 6
    %v6397 = vshll.u32 %v5912, 16
    %v6399 = vrot.slane %v6397, 7
    %v6400 = vor.u32 %v6396, %v6399
    %v6402 = vshrl.u32 %v5719, 16
    %v6404 = vrot.slane %v6402, 6
    %v6405 = vshll.u32 %v5719, 16
    %v6407 = vrot.slane %v6405, 7
    %v6408 = vor.u32 %v6404, %v6407
    %v6409 = vsel %vm5916, %v6400, %v6408
    %v6411 = vshrl.u32 %v5913, 16
    %v6413 = vrot.slane %v6411, 6
    %v6414 = vshll.u32 %v5913, 16
    %v6416 = vrot.slane %v6414, 7
    %v6417 = vor.u32 %v6413, %v6416
    %v6419 = vshrl.u32 %v5720, 16
    %v6421 = vrot.slane %v6419, 6
    %v6422 = vshll.u32 %v5720, 16
    %v6424 = vrot.slane %v6422, 7
    %v6425 = vor.u32 %v6421, %v6424
    %v6426 = vsel %vm5916, %v6417, %v6425
    %v6428 = vshrl.u32 %v5914, 16
    %v6430 = vrot.slane %v6428, 6
    %v6431 = vshll.u32 %v5914, 16
    %v6433 = vrot.slane %v6431, 7
    %v6434 = vor.u32 %v6430, %v6433
    %v6436 = vshrl.u32 %v5721, 16
    %v6438 = vrot.slane %v6436, 6
    %v6439 = vshll.u32 %v5721, 16
    %v6441 = vrot.slane %v6439, 7
    %v6442 = vor.u32 %v6438, %v6441
    %v6443 = vsel %vm5916, %v6434, %v6442
    %v6445 = vshrl.u32 %v5915, 16
    %v6447 = vrot.slane %v6445, 6
    %v6448 = vshll.u32 %v5915, 16
    %v6450 = vrot.slane %v6448, 7
    %v6451 = vor.u32 %v6447, %v6450
    %v6453 = vshrl.u32 %v5722, 16
    %v6455 = vrot.slane %v6453, 6
    %v6456 = vshll.u32 %v5722, 16
    %v6458 = vrot.slane %v6456, 7
    %v6459 = vor.u32 %v6455, %v6458
    %v6460 = vsel %vm5916, %v6451, %v6459
    %6461 = vrot.lane.b32.xlu0 %v5924, 64
    %v6462 = vpop.permute.xlu0 %6461
    %6463 = vrot.lane.b32.xlu0 %v5933, 64
    %v6464 = vpop.permute.xlu0 %6463
    %6465 = vrot.lane.b32.xlu0 %v5941, 64
    %v6466 = vpop.permute.xlu0 %6465
    %6467 = vrot.lane.b32.xlu0 %v5950, 64
    %v6468 = vpop.permute.xlu0 %6467
    %6469 = vrot.lane.b32.xlu0 %v5958, 64
    %v6470 = vpop.permute.xlu0 %6469
    %6471 = vrot.lane.b32.xlu0 %v5967, 64
    %v6472 = vpop.permute.xlu0 %6471
    %6473 = vrot.lane.b32.xlu0 %v5975, 64
    %v6474 = vpop.permute.xlu0 %6473
    %6475 = vrot.lane.b32.xlu0 %v5984, 64
    %v6476 = vpop.permute.xlu0 %6475
    %6477 = vrot.lane.b32.xlu0 %v5992, 64
    %v6478 = vpop.permute.xlu0 %6477
    %6479 = vrot.lane.b32.xlu0 %v6001, 64
    %v6480 = vpop.permute.xlu0 %6479
    %6481 = vrot.lane.b32.xlu0 %v6009, 64
    %v6482 = vpop.permute.xlu0 %6481
    %6483 = vrot.lane.b32.xlu0 %v6018, 64
    %v6484 = vpop.permute.xlu0 %6483
    %6485 = vrot.lane.b32.xlu0 %v6026, 64
    %v6486 = vpop.permute.xlu0 %6485
    %6487 = vrot.lane.b32.xlu0 %v6035, 64
    %v6488 = vpop.permute.xlu0 %6487
    %6489 = vrot.lane.b32.xlu0 %v6043, 64
    %v6490 = vpop.permute.xlu0 %6489
    %6491 = vrot.lane.b32.xlu0 %v6052, 64
    %v6492 = vpop.permute.xlu0 %6491
    %6493 = vrot.lane.b32.xlu0 %v6060, 64
    %v6494 = vpop.permute.xlu0 %6493
    %6495 = vrot.lane.b32.xlu0 %v6069, 64
    %v6496 = vpop.permute.xlu0 %6495
    %6497 = vrot.lane.b32.xlu0 %v6077, 64
    %v6498 = vpop.permute.xlu0 %6497
    %6499 = vrot.lane.b32.xlu0 %v6086, 64
    %v6500 = vpop.permute.xlu0 %6499
    %6501 = vrot.lane.b32.xlu0 %v6094, 64
    %v6502 = vpop.permute.xlu0 %6501
    %6503 = vrot.lane.b32.xlu0 %v6103, 64
    %v6504 = vpop.permute.xlu0 %6503
    %6505 = vrot.lane.b32.xlu0 %v6111, 64
    %v6506 = vpop.permute.xlu0 %6505
    %6507 = vrot.lane.b32.xlu0 %v6120, 64
    %v6508 = vpop.permute.xlu0 %6507
    %6509 = vrot.lane.b32.xlu0 %v6128, 64
    %v6510 = vpop.permute.xlu0 %6509
    %6511 = vrot.lane.b32.xlu0 %v6137, 64
    %v6512 = vpop.permute.xlu0 %6511
    %6513 = vrot.lane.b32.xlu0 %v6145, 64
    %v6514 = vpop.permute.xlu0 %6513
    %6515 = vrot.lane.b32.xlu0 %v6154, 64
    %v6516 = vpop.permute.xlu0 %6515
    %6517 = vrot.lane.b32.xlu0 %v6162, 64
    %v6518 = vpop.permute.xlu0 %6517
    %6519 = vrot.lane.b32.xlu0 %v6171, 64
    %v6520 = vpop.permute.xlu0 %6519
    %6521 = vrot.lane.b32.xlu0 %v6179, 64
    %v6522 = vpop.permute.xlu0 %6521
    %6523 = vrot.lane.b32.xlu0 %v6188, 64
    %v6524 = vpop.permute.xlu0 %6523
    %6525 = vrot.lane.b32.xlu0 %v6196, 64
    %v6526 = vpop.permute.xlu0 %6525
    %6527 = vrot.lane.b32.xlu0 %v6205, 64
    %v6528 = vpop.permute.xlu0 %6527
    %6529 = vrot.lane.b32.xlu0 %v6213, 64
    %v6530 = vpop.permute.xlu0 %6529
    %6531 = vrot.lane.b32.xlu0 %v6222, 64
    %v6532 = vpop.permute.xlu0 %6531
    %6533 = vrot.lane.b32.xlu0 %v6230, 64
    %v6534 = vpop.permute.xlu0 %6533
    %6535 = vrot.lane.b32.xlu0 %v6239, 64
    %v6536 = vpop.permute.xlu0 %6535
    %6537 = vrot.lane.b32.xlu0 %v6247, 64
    %v6538 = vpop.permute.xlu0 %6537
    %6539 = vrot.lane.b32.xlu0 %v6256, 64
    %v6540 = vpop.permute.xlu0 %6539
    %6541 = vrot.lane.b32.xlu0 %v6264, 64
    %v6542 = vpop.permute.xlu0 %6541
    %6543 = vrot.lane.b32.xlu0 %v6273, 64
    %v6544 = vpop.permute.xlu0 %6543
    %6545 = vrot.lane.b32.xlu0 %v6281, 64
    %v6546 = vpop.permute.xlu0 %6545
    %6547 = vrot.lane.b32.xlu0 %v6290, 64
    %v6548 = vpop.permute.xlu0 %6547
    %6549 = vrot.lane.b32.xlu0 %v6298, 64
    %v6550 = vpop.permute.xlu0 %6549
    %6551 = vrot.lane.b32.xlu0 %v6307, 64
    %v6552 = vpop.permute.xlu0 %6551
    %6553 = vrot.lane.b32.xlu0 %v6315, 64
    %v6554 = vpop.permute.xlu0 %6553
    %6555 = vrot.lane.b32.xlu0 %v6324, 64
    %v6556 = vpop.permute.xlu0 %6555
    %6557 = vrot.lane.b32.xlu0 %v6332, 64
    %v6558 = vpop.permute.xlu0 %6557
    %6559 = vrot.lane.b32.xlu0 %v6341, 64
    %v6560 = vpop.permute.xlu0 %6559
    %6561 = vrot.lane.b32.xlu0 %v6349, 64
    %v6562 = vpop.permute.xlu0 %6561
    %6563 = vrot.lane.b32.xlu0 %v6358, 64
    %v6564 = vpop.permute.xlu0 %6563
    %6565 = vrot.lane.b32.xlu0 %v6366, 64
    %v6566 = vpop.permute.xlu0 %6565
    %6567 = vrot.lane.b32.xlu0 %v6375, 64
    %v6568 = vpop.permute.xlu0 %6567
    %6569 = vrot.lane.b32.xlu0 %v6383, 64
    %v6570 = vpop.permute.xlu0 %6569
    %6571 = vrot.lane.b32.xlu0 %v6392, 64
    %v6572 = vpop.permute.xlu0 %6571
    %6573 = vrot.lane.b32.xlu0 %v6400, 64
    %v6574 = vpop.permute.xlu0 %6573
    %6575 = vrot.lane.b32.xlu0 %v6409, 64
    %v6576 = vpop.permute.xlu0 %6575
    %6577 = vrot.lane.b32.xlu0 %v6417, 64
    %v6578 = vpop.permute.xlu0 %6577
    %6579 = vrot.lane.b32.xlu0 %v6426, 64
    %v6580 = vpop.permute.xlu0 %6579
    %6581 = vrot.lane.b32.xlu0 %v6434, 64
    %v6582 = vpop.permute.xlu0 %6581
    %6583 = vrot.lane.b32.xlu0 %v6443, 64
    %v6584 = vpop.permute.xlu0 %6583
    %6585 = vrot.lane.b32.xlu0 %v6451, 64
    %v6586 = vpop.permute.xlu0 %6585
    %6587 = vrot.lane.b32.xlu0 %v6460, 64
    %v6588 = vpop.permute.xlu0 %6587
    %v6621 = vunpack.c.l.b16 %v4089
    %v6622 = vunpack.c.l.b16 %v4090
    %v6623 = vunpack.c.l.b16 %v4091
    %v6624 = vunpack.c.l.b16 %v4092
    %v6625 = vunpack.c.l.b16 %v4093
    %v6626 = vunpack.c.l.b16 %v4094
    %v6627 = vunpack.c.l.b16 %v4095
    %v6628 = vunpack.c.l.b16 %v4096
    %v6629 = vunpack.c.l.b16 %v4097
    %v6630 = vunpack.c.l.b16 %v4098
    %v6631 = vunpack.c.l.b16 %v4099
    %v6632 = vunpack.c.l.b16 %v4100
    %v6633 = vunpack.c.l.b16 %v4101
    %v6634 = vunpack.c.l.b16 %v4102
    %v6635 = vunpack.c.l.b16 %v4103
    %v6636 = vunpack.c.l.b16 %v4104
    %v6637 = vunpack.c.l.b16 %v4105
    %v6638 = vunpack.c.l.b16 %v4106
    %v6639 = vunpack.c.l.b16 %v4107
    %v6640 = vunpack.c.l.b16 %v4108
    %v6641 = vunpack.c.l.b16 %v4109
    %v6642 = vunpack.c.l.b16 %v4110
    %v6643 = vunpack.c.l.b16 %v4111
    %v6644 = vunpack.c.l.b16 %v4112
    %v6645 = vunpack.c.l.b16 %v4113
    %v6646 = vunpack.c.l.b16 %v4114
    %v6647 = vunpack.c.l.b16 %v4115
    %v6648 = vunpack.c.l.b16 %v4116
    %v6649 = vunpack.c.l.b16 %v4117
    %v6650 = vunpack.c.l.b16 %v4118
    %v6651 = vunpack.c.l.b16 %v4119
    %v6652 = vunpack.c.l.b16 %v4120
    %v6653 = vpack.c.b16 %v6621, %v6621
    %v6654 = vpack.c.b16 %v6622, %v6622
    %v6655 = vpack.c.b16 %v6623, %v6623
    %v6656 = vpack.c.b16 %v6624, %v6624
    %v6657 = vpack.c.b16 %v6625, %v6625
    %v6658 = vpack.c.b16 %v6626, %v6626
    %v6659 = vpack.c.b16 %v6627, %v6627
    %v6660 = vpack.c.b16 %v6628, %v6628
    %v6661 = vpack.c.b16 %v6629, %v6629
    %v6662 = vpack.c.b16 %v6630, %v6630
    %v6663 = vpack.c.b16 %v6631, %v6631
    %v6664 = vpack.c.b16 %v6632, %v6632
    %v6665 = vpack.c.b16 %v6633, %v6633
    %v6666 = vpack.c.b16 %v6634, %v6634
    %v6667 = vpack.c.b16 %v6635, %v6635
    %v6668 = vpack.c.b16 %v6636, %v6636
    %v6669 = vpack.c.b16 %v6637, %v6637
    %v6670 = vpack.c.b16 %v6638, %v6638
    %v6671 = vpack.c.b16 %v6639, %v6639
    %v6672 = vpack.c.b16 %v6640, %v6640
    %v6673 = vpack.c.b16 %v6641, %v6641
    %v6674 = vpack.c.b16 %v6642, %v6642
    %v6675 = vpack.c.b16 %v6643, %v6643
    %v6676 = vpack.c.b16 %v6644, %v6644
    %v6677 = vpack.c.b16 %v6645, %v6645
    %v6678 = vpack.c.b16 %v6646, %v6646
    %v6679 = vpack.c.b16 %v6647, %v6647
    %v6680 = vpack.c.b16 %v6648, %v6648
    %v6681 = vpack.c.b16 %v6649, %v6649
    %v6682 = vpack.c.b16 %v6650, %v6650
    %v6683 = vpack.c.b16 %v6651, %v6651
    %v6684 = vpack.c.b16 %v6652, %v6652
    %vm6685 = vcmask 1040384
    %v6686 = vrot.slane %v5884, 7
    %v6687 = vrot.slane %v6653, 7
    %v6688 = vsel %vm6685, %v6686, %v6687
    %v6689 = vrot.slane %v5885, 7
    %v6690 = vrot.slane %v6654, 7
    %v6691 = vsel %vm6685, %v6689, %v6690
    %v6692 = vrot.slane %v5886, 7
    %v6693 = vrot.slane %v6655, 7
    %v6694 = vsel %vm6685, %v6692, %v6693
    %v6695 = vrot.slane %v5887, 7
    %v6696 = vrot.slane %v6656, 7
    %v6697 = vsel %vm6685, %v6695, %v6696
    %v6698 = vrot.slane %v5888, 7
    %v6699 = vrot.slane %v6657, 7
    %v6700 = vsel %vm6685, %v6698, %v6699
    %v6701 = vrot.slane %v5889, 7
    %v6702 = vrot.slane %v6658, 7
    %v6703 = vsel %vm6685, %v6701, %v6702
    %v6704 = vrot.slane %v5890, 7
    %v6705 = vrot.slane %v6659, 7
    %v6706 = vsel %vm6685, %v6704, %v6705
    %v6707 = vrot.slane %v5891, 7
    %v6708 = vrot.slane %v6660, 7
    %v6709 = vsel %vm6685, %v6707, %v6708
    %v6710 = vrot.slane %v5892, 7
    %v6711 = vrot.slane %v6661, 7
    %v6712 = vsel %vm6685, %v6710, %v6711
    %v6713 = vrot.slane %v5893, 7
    %v6714 = vrot.slane %v6662, 7
    %v6715 = vsel %vm6685, %v6713, %v6714
    %v6716 = vrot.slane %v5894, 7
    %v6717 = vrot.slane %v6663, 7
    %v6718 = vsel %vm6685, %v6716, %v6717
    %v6719 = vrot.slane %v5895, 7
    %v6720 = vrot.slane %v6664, 7
    %v6721 = vsel %vm6685, %v6719, %v6720
    %v6722 = vrot.slane %v5896, 7
    %v6723 = vrot.slane %v6665, 7
    %v6724 = vsel %vm6685, %v6722, %v6723
    %v6725 = vrot.slane %v5897, 7
    %v6726 = vrot.slane %v6666, 7
    %v6727 = vsel %vm6685, %v6725, %v6726
    %v6728 = vrot.slane %v5898, 7
    %v6729 = vrot.slane %v6667, 7
    %v6730 = vsel %vm6685, %v6728, %v6729
    %v6731 = vrot.slane %v5899, 7
    %v6732 = vrot.slane %v6668, 7
    %v6733 = vsel %vm6685, %v6731, %v6732
    %v6734 = vrot.slane %v5900, 7
    %v6735 = vrot.slane %v6669, 7
    %v6736 = vsel %vm6685, %v6734, %v6735
    %v6737 = vrot.slane %v5901, 7
    %v6738 = vrot.slane %v6670, 7
    %v6739 = vsel %vm6685, %v6737, %v6738
    %v6740 = vrot.slane %v5902, 7
    %v6741 = vrot.slane %v6671, 7
    %v6742 = vsel %vm6685, %v6740, %v6741
    %v6743 = vrot.slane %v5903, 7
    %v6744 = vrot.slane %v6672, 7
    %v6745 = vsel %vm6685, %v6743, %v6744
    %v6746 = vrot.slane %v5904, 7
    %v6747 = vrot.slane %v6673, 7
    %v6748 = vsel %vm6685, %v6746, %v6747
    %v6749 = vrot.slane %v5905, 7
    %v6750 = vrot.slane %v6674, 7
    %v6751 = vsel %vm6685, %v6749, %v6750
    %v6752 = vrot.slane %v5906, 7
    %v6753 = vrot.slane %v6675, 7
    %v6754 = vsel %vm6685, %v6752, %v6753
    %v6755 = vrot.slane %v5907, 7
    %v6756 = vrot.slane %v6676, 7
    %v6757 = vsel %vm6685, %v6755, %v6756
    %v6758 = vrot.slane %v5908, 7
    %v6759 = vrot.slane %v6677, 7
    %v6760 = vsel %vm6685, %v6758, %v6759
    %v6761 = vrot.slane %v5909, 7
    %v6762 = vrot.slane %v6678, 7
    %v6763 = vsel %vm6685, %v6761, %v6762
    %v6764 = vrot.slane %v5910, 7
    %v6765 = vrot.slane %v6679, 7
    %v6766 = vsel %vm6685, %v6764, %v6765
    %v6767 = vrot.slane %v5911, 7
    %v6768 = vrot.slane %v6680, 7
    %v6769 = vsel %vm6685, %v6767, %v6768
    %v6770 = vrot.slane %v5912, 7
    %v6771 = vrot.slane %v6681, 7
    %v6772 = vsel %vm6685, %v6770, %v6771
    %v6773 = vrot.slane %v5913, 7
    %v6774 = vrot.slane %v6682, 7
    %v6775 = vsel %vm6685, %v6773, %v6774
    %v6776 = vrot.slane %v5914, 7
    %v6777 = vrot.slane %v6683, 7
    %v6778 = vsel %vm6685, %v6776, %v6777
    %v6779 = vrot.slane %v5915, 7
    %v6780 = vrot.slane %v6684, 7
    %v6781 = vsel %vm6685, %v6779, %v6780
    %vm6782 = vcmask 523264
    %v6785 = vsel %vm6782, %v4313, %v4955
    %v6787 = vsel %vm6782, %v4314, %v4957
    %v6790 = vsel %vm6782, %v4315, %v4959
    %v6792 = vsel %vm6782, %v4316, %v4961
    %v6795 = vsel %vm6782, %v4317, %v4963
    %v6797 = vsel %vm6782, %v4318, %v4965
    %v6800 = vsel %vm6782, %v4319, %v4967
    %v6802 = vsel %vm6782, %v4320, %v4969
    %v6805 = vsel %vm6782, %v4321, %v4971
    %v6807 = vsel %vm6782, %v4322, %v4973
    %v6810 = vsel %vm6782, %v4323, %v4975
    %v6812 = vsel %vm6782, %v4324, %v4977
    %v6815 = vsel %vm6782, %v4325, %v4979
    %v6817 = vsel %vm6782, %v4326, %v4981
    %v6820 = vsel %vm6782, %v4327, %v4983
    %v6822 = vsel %vm6782, %v4328, %v4985
    %v6825 = vsel %vm6782, %v4329, %v4987
    %v6827 = vsel %vm6782, %v4330, %v4989
    %v6830 = vsel %vm6782, %v4331, %v4991
    %v6832 = vsel %vm6782, %v4332, %v4993
    %v6835 = vsel %vm6782, %v4333, %v4995
    %v6837 = vsel %vm6782, %v4334, %v4997
    %v6840 = vsel %vm6782, %v4335, %v4999
    %v6842 = vsel %vm6782, %v4336, %v5001
    %v6845 = vsel %vm6782, %v4337, %v5003
    %v6847 = vsel %vm6782, %v4338, %v5005
    %v6850 = vsel %vm6782, %v4339, %v5007
    %v6852 = vsel %vm6782, %v4340, %v5009
    %v6855 = vsel %vm6782, %v4341, %v5011
    %v6857 = vsel %vm6782, %v4342, %v5013
    %v6860 = vsel %vm6782, %v4343, %v5015
    %v6862 = vsel %vm6782, %v4344, %v5017
    %v6865 = vsel %vm6782, %v4345, %v5019
    %v6867 = vsel %vm6782, %v4346, %v5021
    %v6870 = vsel %vm6782, %v4347, %v5023
    %v6872 = vsel %vm6782, %v4348, %v5025
    %v6875 = vsel %vm6782, %v4349, %v5027
    %v6877 = vsel %vm6782, %v4350, %v5029
    %v6880 = vsel %vm6782, %v4351, %v5031
    %v6882 = vsel %vm6782, %v4352, %v5033
    %v6885 = vsel %vm6782, %v4353, %v5035
    %v6887 = vsel %vm6782, %v4354, %v5037
    %v6890 = vsel %vm6782, %v4355, %v5039
    %v6892 = vsel %vm6782, %v4356, %v5041
    %v6895 = vsel %vm6782, %v4357, %v5043
    %v6897 = vsel %vm6782, %v4358, %v5045
    %v6900 = vsel %vm6782, %v4359, %v5047
    %v6902 = vsel %vm6782, %v4360, %v5049
    %v6905 = vsel %vm6782, %v4361, %v5051
    %v6907 = vsel %vm6782, %v4362, %v5053
    %v6910 = vsel %vm6782, %v4363, %v5055
    %v6912 = vsel %vm6782, %v4364, %v5057
    %v6915 = vsel %vm6782, %v4365, %v5059
    %v6917 = vsel %vm6782, %v4366, %v5061
    %v6920 = vsel %vm6782, %v4367, %v5063
    %v6922 = vsel %vm6782, %v4368, %v5065
    %v6925 = vsel %vm6782, %v4369, %v5067
    %v6927 = vsel %vm6782, %v4370, %v5069
    %v6930 = vsel %vm6782, %v4371, %v5071
    %v6932 = vsel %vm6782, %v4372, %v5073
    %v6935 = vsel %vm6782, %v4373, %v5075
    %v6937 = vsel %vm6782, %v4374, %v5077
    %v6940 = vsel %vm6782, %v4375, %v5079
    %v6942 = vsel %vm6782, %v4376, %v5081
    %v6945 = vsel %vm6782, %v5181, %v5564
    %v6947 = vsel %vm6782, %v5180, %v5564
    %v6950 = vsel %vm6782, %v5184, %v5566
    %v6952 = vsel %vm6782, %v5183, %v5566
    %v6955 = vsel %vm6782, %v5187, %v5568
    %v6957 = vsel %vm6782, %v5186, %v5568
    %v6960 = vsel %vm6782, %v5190, %v5570
    %v6962 = vsel %vm6782, %v5189, %v5570
    %v6965 = vsel %vm6782, %v5193, %v5572
    %v6967 = vsel %vm6782, %v5192, %v5572
    %v6970 = vsel %vm6782, %v5196, %v5574
    %v6972 = vsel %vm6782, %v5195, %v5574
    %v6975 = vsel %vm6782, %v5199, %v5576
    %v6977 = vsel %vm6782, %v5198, %v5576
    %v6980 = vsel %vm6782, %v5202, %v5578
    %v6982 = vsel %vm6782, %v5201, %v5578
    %v6985 = vsel %vm6782, %v5205, %v5580
    %v6987 = vsel %vm6782, %v5204, %v5580
    %v6990 = vsel %vm6782, %v5208, %v5582
    %v6992 = vsel %vm6782, %v5207, %v5582
    %v6995 = vsel %vm6782, %v5211, %v5584
    %v6997 = vsel %vm6782, %v5210, %v5584
    %v7000 = vsel %vm6782, %v5214, %v5586
    %v7002 = vsel %vm6782, %v5213, %v5586
    %v7005 = vsel %vm6782, %v5217, %v5588
    %v7007 = vsel %vm6782, %v5216, %v5588
    %v7010 = vsel %vm6782, %v5220, %v5590
    %v7012 = vsel %vm6782, %v5219, %v5590
    %v7015 = vsel %vm6782, %v5223, %v5592
    %v7017 = vsel %vm6782, %v5222, %v5592
    %v7020 = vsel %vm6782, %v5226, %v5594
    %v7022 = vsel %vm6782, %v5225, %v5594
    %v7025 = vsel %vm6782, %v5229, %v5596
    %v7027 = vsel %vm6782, %v5228, %v5596
    %v7030 = vsel %vm6782, %v5232, %v5598
    %v7032 = vsel %vm6782, %v5231, %v5598
    %v7035 = vsel %vm6782, %v5235, %v5600
    %v7037 = vsel %vm6782, %v5234, %v5600
    %v7040 = vsel %vm6782, %v5238, %v5602
    %v7042 = vsel %vm6782, %v5237, %v5602
    %v7045 = vsel %vm6782, %v5241, %v5604
    %v7047 = vsel %vm6782, %v5240, %v5604
    %v7050 = vsel %vm6782, %v5244, %v5606
    %v7052 = vsel %vm6782, %v5243, %v5606
    %v7055 = vsel %vm6782, %v5247, %v5608
    %v7057 = vsel %vm6782, %v5246, %v5608
    %v7060 = vsel %vm6782, %v5250, %v5610
    %v7062 = vsel %vm6782, %v5249, %v5610
    %v7065 = vsel %vm6782, %v5253, %v5612
    %v7067 = vsel %vm6782, %v5252, %v5612
    %v7070 = vsel %vm6782, %v5256, %v5614
    %v7072 = vsel %vm6782, %v5255, %v5614
    %v7075 = vsel %vm6782, %v5259, %v5616
    %v7077 = vsel %vm6782, %v5258, %v5616
    %v7080 = vsel %vm6782, %v5262, %v5618
    %v7082 = vsel %vm6782, %v5261, %v5618
    %v7085 = vsel %vm6782, %v5265, %v5620
    %v7087 = vsel %vm6782, %v5264, %v5620
    %v7090 = vsel %vm6782, %v5268, %v5622
    %v7092 = vsel %vm6782, %v5267, %v5622
    %v7095 = vsel %vm6782, %v5271, %v5624
    %v7097 = vsel %vm6782, %v5270, %v5624
    %v7100 = vsel %vm6782, %v5274, %v5626
    %v7102 = vsel %vm6782, %v5273, %v5626
    %v7105 = vsel %vm6782, %v5724, %v6462
    %v7108 = vsel %vm6782, %v5726, %v6464
    %v7111 = vsel %vm6782, %v5727, %v6466
    %v7114 = vsel %vm6782, %v5729, %v6468
    %v7117 = vsel %vm6782, %v5730, %v6470
    %v7120 = vsel %vm6782, %v5732, %v6472
    %v7123 = vsel %vm6782, %v5733, %v6474
    %v7126 = vsel %vm6782, %v5735, %v6476
    %v7129 = vsel %vm6782, %v5736, %v6478
    %v7132 = vsel %vm6782, %v5738, %v6480
    %v7135 = vsel %vm6782, %v5739, %v6482
    %v7138 = vsel %vm6782, %v5741, %v6484
    %v7141 = vsel %vm6782, %v5742, %v6486
    %v7144 = vsel %vm6782, %v5744, %v6488
    %v7147 = vsel %vm6782, %v5745, %v6490
    %v7150 = vsel %vm6782, %v5747, %v6492
    %v7153 = vsel %vm6782, %v5748, %v6494
    %v7156 = vsel %vm6782, %v5750, %v6496
    %v7159 = vsel %vm6782, %v5751, %v6498
    %v7162 = vsel %vm6782, %v5753, %v6500
    %v7165 = vsel %vm6782, %v5754, %v6502
    %v7168 = vsel %vm6782, %v5756, %v6504
    %v7171 = vsel %vm6782, %v5757, %v6506
    %v7174 = vsel %vm6782, %v5759, %v6508
    %v7177 = vsel %vm6782, %v5760, %v6510
    %v7180 = vsel %vm6782, %v5762, %v6512
    %v7183 = vsel %vm6782, %v5763, %v6514
    %v7186 = vsel %vm6782, %v5765, %v6516
    %v7189 = vsel %vm6782, %v5766, %v6518
    %v7192 = vsel %vm6782, %v5768, %v6520
    %v7195 = vsel %vm6782, %v5769, %v6522
    %v7198 = vsel %vm6782, %v5771, %v6524
    %v7201 = vsel %vm6782, %v5772, %v6526
    %v7204 = vsel %vm6782, %v5774, %v6528
    %v7207 = vsel %vm6782, %v5775, %v6530
    %v7210 = vsel %vm6782, %v5777, %v6532
    %v7213 = vsel %vm6782, %v5778, %v6534
    %v7216 = vsel %vm6782, %v5780, %v6536
    %v7219 = vsel %vm6782, %v5781, %v6538
    %v7222 = vsel %vm6782, %v5783, %v6540
    %v7225 = vsel %vm6782, %v5784, %v6542
    %v7228 = vsel %vm6782, %v5786, %v6544
    %v7231 = vsel %vm6782, %v5787, %v6546
    %v7234 = vsel %vm6782, %v5789, %v6548
    %v7237 = vsel %vm6782, %v5790, %v6550
    %v7240 = vsel %vm6782, %v5792, %v6552
    %v7243 = vsel %vm6782, %v5793, %v6554
    %v7246 = vsel %vm6782, %v5795, %v6556
    %v7249 = vsel %vm6782, %v5796, %v6558
    %v7252 = vsel %vm6782, %v5798, %v6560
    %v7255 = vsel %vm6782, %v5799, %v6562
    %v7258 = vsel %vm6782, %v5801, %v6564
    %v7261 = vsel %vm6782, %v5802, %v6566
    %v7264 = vsel %vm6782, %v5804, %v6568
    %v7267 = vsel %vm6782, %v5805, %v6570
    %v7270 = vsel %vm6782, %v5807, %v6572
    %v7273 = vsel %vm6782, %v5808, %v6574
    %v7276 = vsel %vm6782, %v5810, %v6576
    %v7279 = vsel %vm6782, %v5811, %v6578
    %v7282 = vsel %vm6782, %v5813, %v6580
    %v7285 = vsel %vm6782, %v5814, %v6582
    %v7288 = vsel %vm6782, %v5816, %v6584
    %v7291 = vsel %vm6782, %v5817, %v6586
    %v7294 = vsel %vm6782, %v5819, %v6588
    %vm7295 = vsmask.f32 5376
    %v7296 = vshrl.u32 %v6785, 16
    %v7298 = vrot.slane %v7296, 2
    %v7299 = vshll.u32 %v6785, 16
    %v7301 = vrot.slane %v7299, 3
    %v7302 = vor.u32 %v7298, %v7301
    %v7303 = vshrl.u32 %v6787, 16
    %v7305 = vrot.slane %v7303, 2
    %v7306 = vshll.u32 %v6787, 16
    %v7308 = vrot.slane %v7306, 3
    %v7309 = vor.u32 %v7305, %v7308
    %v7310 = vsel %vm7295, %v7302, %v7309
    %v7311 = vshrl.u32 %v6945, 16
    %v7313 = vrot.slane %v7311, 2
    %v7314 = vshll.u32 %v6945, 16
    %v7316 = vrot.slane %v7314, 3
    %v7317 = vor.u32 %v7313, %v7316
    %v7318 = vshrl.u32 %v6947, 16
    %v7320 = vrot.slane %v7318, 2
    %v7321 = vshll.u32 %v6947, 16
    %v7323 = vrot.slane %v7321, 3
    %v7324 = vor.u32 %v7320, %v7323
    %v7325 = vsel %vm7295, %v7317, %v7324
    %v7326 = vshrl.u32 %v7105, 16
    %v7328 = vrot.slane %v7326, 2
    %v7329 = vshll.u32 %v7105, 16
    %v7331 = vrot.slane %v7329, 3
    %v7332 = vor.u32 %v7328, %v7331
    %v7333 = vshrl.u32 %v7108, 16
    %v7335 = vrot.slane %v7333, 2
    %v7336 = vshll.u32 %v7108, 16
    %v7338 = vrot.slane %v7336, 3
    %v7339 = vor.u32 %v7335, %v7338
    %v7340 = vsel %vm7295, %v7332, %v7339
    %v7342 = vshrl.u32 %v6686, 16
    %v7344 = vrot.slane %v7342, 2
    %v7345 = vshll.u32 %v6686, 16
    %v7347 = vrot.slane %v7345, 3
    %v7348 = vor.u32 %v7344, %v7347
    %v7350 = vshrl.u32 %v6688, 16
    %v7352 = vrot.slane %v7350, 2
    %v7353 = vshll.u32 %v6688, 16
    %v7355 = vrot.slane %v7353, 3
    %v7356 = vor.u32 %v7352, %v7355
    %v7357 = vsel %vm7295, %v7348, %v7356
    %v7358 = vshrl.u32 %v6790, 16
    %v7360 = vrot.slane %v7358, 2
    %v7361 = vshll.u32 %v6790, 16
    %v7363 = vrot.slane %v7361, 3
    %v7364 = vor.u32 %v7360, %v7363
    %v7365 = vshrl.u32 %v6792, 16
    %v7367 = vrot.slane %v7365, 2
    %v7368 = vshll.u32 %v6792, 16
    %v7370 = vrot.slane %v7368, 3
    %v7371 = vor.u32 %v7367, %v7370
    %v7372 = vsel %vm7295, %v7364, %v7371
    %v7373 = vshrl.u32 %v6950, 16
    %v7375 = vrot.slane %v7373, 2
    %v7376 = vshll.u32 %v6950, 16
    %v7378 = vrot.slane %v7376, 3
    %v7379 = vor.u32 %v7375, %v7378
    %v7380 = vshrl.u32 %v6952, 16
    %v7382 = vrot.slane %v7380, 2
    %v7383 = vshll.u32 %v6952, 16
    %v7385 = vrot.slane %v7383, 3
    %v7386 = vor.u32 %v7382, %v7385
    %v7387 = vsel %vm7295, %v7379, %v7386
    %v7388 = vshrl.u32 %v7111, 16
    %v7390 = vrot.slane %v7388, 2
    %v7391 = vshll.u32 %v7111, 16
    %v7393 = vrot.slane %v7391, 3
    %v7394 = vor.u32 %v7390, %v7393
    %v7395 = vshrl.u32 %v7114, 16
    %v7397 = vrot.slane %v7395, 2
    %v7398 = vshll.u32 %v7114, 16
    %v7400 = vrot.slane %v7398, 3
    %v7401 = vor.u32 %v7397, %v7400
    %v7402 = vsel %vm7295, %v7394, %v7401
    %v7404 = vshrl.u32 %v6689, 16
    %v7406 = vrot.slane %v7404, 2
    %v7407 = vshll.u32 %v6689, 16
    %v7409 = vrot.slane %v7407, 3
    %v7410 = vor.u32 %v7406, %v7409
    %v7412 = vshrl.u32 %v6691, 16
    %v7414 = vrot.slane %v7412, 2
    %v7415 = vshll.u32 %v6691, 16
    %v7417 = vrot.slane %v7415, 3
    %v7418 = vor.u32 %v7414, %v7417
    %v7419 = vsel %vm7295, %v7410, %v7418
    %v7420 = vshrl.u32 %v6795, 16
    %v7422 = vrot.slane %v7420, 2
    %v7423 = vshll.u32 %v6795, 16
    %v7425 = vrot.slane %v7423, 3
    %v7426 = vor.u32 %v7422, %v7425
    %v7427 = vshrl.u32 %v6797, 16
    %v7429 = vrot.slane %v7427, 2
    %v7430 = vshll.u32 %v6797, 16
    %v7432 = vrot.slane %v7430, 3
    %v7433 = vor.u32 %v7429, %v7432
    %v7434 = vsel %vm7295, %v7426, %v7433
    %v7435 = vshrl.u32 %v6955, 16
    %v7437 = vrot.slane %v7435, 2
    %v7438 = vshll.u32 %v6955, 16
    %v7440 = vrot.slane %v7438, 3
    %v7441 = vor.u32 %v7437, %v7440
    %v7442 = vshrl.u32 %v6957, 16
    %v7444 = vrot.slane %v7442, 2
    %v7445 = vshll.u32 %v6957, 16
    %v7447 = vrot.slane %v7445, 3
    %v7448 = vor.u32 %v7444, %v7447
    %v7449 = vsel %vm7295, %v7441, %v7448
    %v7450 = vshrl.u32 %v7117, 16
    %v7452 = vrot.slane %v7450, 2
    %v7453 = vshll.u32 %v7117, 16
    %v7455 = vrot.slane %v7453, 3
    %v7456 = vor.u32 %v7452, %v7455
    %v7457 = vshrl.u32 %v7120, 16
    %v7459 = vrot.slane %v7457, 2
    %v7460 = vshll.u32 %v7120, 16
    %v7462 = vrot.slane %v7460, 3
    %v7463 = vor.u32 %v7459, %v7462
    %v7464 = vsel %vm7295, %v7456, %v7463
    %v7466 = vshrl.u32 %v6692, 16
    %v7468 = vrot.slane %v7466, 2
    %v7469 = vshll.u32 %v6692, 16
    %v7471 = vrot.slane %v7469, 3
    %v7472 = vor.u32 %v7468, %v7471
    %v7474 = vshrl.u32 %v6694, 16
    %v7476 = vrot.slane %v7474, 2
    %v7477 = vshll.u32 %v6694, 16
    %v7479 = vrot.slane %v7477, 3
    %v7480 = vor.u32 %v7476, %v7479
    %v7481 = vsel %vm7295, %v7472, %v7480
    %v7482 = vshrl.u32 %v6800, 16
    %v7484 = vrot.slane %v7482, 2
    %v7485 = vshll.u32 %v6800, 16
    %v7487 = vrot.slane %v7485, 3
    %v7488 = vor.u32 %v7484, %v7487
    %v7489 = vshrl.u32 %v6802, 16
    %v7491 = vrot.slane %v7489, 2
    %v7492 = vshll.u32 %v6802, 16
    %v7494 = vrot.slane %v7492, 3
    %v7495 = vor.u32 %v7491, %v7494
    %v7496 = vsel %vm7295, %v7488, %v7495
    %v7497 = vshrl.u32 %v6960, 16
    %v7499 = vrot.slane %v7497, 2
    %v7500 = vshll.u32 %v6960, 16
    %v7502 = vrot.slane %v7500, 3
    %v7503 = vor.u32 %v7499, %v7502
    %v7504 = vshrl.u32 %v6962, 16
    %v7506 = vrot.slane %v7504, 2
    %v7507 = vshll.u32 %v6962, 16
    %v7509 = vrot.slane %v7507, 3
    %v7510 = vor.u32 %v7506, %v7509
    %v7511 = vsel %vm7295, %v7503, %v7510
    %v7512 = vshrl.u32 %v7123, 16
    %v7514 = vrot.slane %v7512, 2
    %v7515 = vshll.u32 %v7123, 16
    %v7517 = vrot.slane %v7515, 3
    %v7518 = vor.u32 %v7514, %v7517
    %v7519 = vshrl.u32 %v7126, 16
    %v7521 = vrot.slane %v7519, 2
    %v7522 = vshll.u32 %v7126, 16
    %v7524 = vrot.slane %v7522, 3
    %v7525 = vor.u32 %v7521, %v7524
    %v7526 = vsel %vm7295, %v7518, %v7525
    %v7528 = vshrl.u32 %v6695, 16
    %v7530 = vrot.slane %v7528, 2
    %v7531 = vshll.u32 %v6695, 16
    %v7533 = vrot.slane %v7531, 3
    %v7534 = vor.u32 %v7530, %v7533
    %v7536 = vshrl.u32 %v6697, 16
    %v7538 = vrot.slane %v7536, 2
    %v7539 = vshll.u32 %v6697, 16
    %v7541 = vrot.slane %v7539, 3
    %v7542 = vor.u32 %v7538, %v7541
    %v7543 = vsel %vm7295, %v7534, %v7542
    %v7544 = vshrl.u32 %v6805, 16
    %v7546 = vrot.slane %v7544, 2
    %v7547 = vshll.u32 %v6805, 16
    %v7549 = vrot.slane %v7547, 3
    %v7550 = vor.u32 %v7546, %v7549
    %v7551 = vshrl.u32 %v6807, 16
    %v7553 = vrot.slane %v7551, 2
    %v7554 = vshll.u32 %v6807, 16
    %v7556 = vrot.slane %v7554, 3
    %v7557 = vor.u32 %v7553, %v7556
    %v7558 = vsel %vm7295, %v7550, %v7557
    %v7559 = vshrl.u32 %v6965, 16
    %v7561 = vrot.slane %v7559, 2
    %v7562 = vshll.u32 %v6965, 16
    %v7564 = vrot.slane %v7562, 3
    %v7565 = vor.u32 %v7561, %v7564
    %v7566 = vshrl.u32 %v6967, 16
    %v7568 = vrot.slane %v7566, 2
    %v7569 = vshll.u32 %v6967, 16
    %v7571 = vrot.slane %v7569, 3
    %v7572 = vor.u32 %v7568, %v7571
    %v7573 = vsel %vm7295, %v7565, %v7572
    %v7574 = vshrl.u32 %v7129, 16
    %v7576 = vrot.slane %v7574, 2
    %v7577 = vshll.u32 %v7129, 16
    %v7579 = vrot.slane %v7577, 3
    %v7580 = vor.u32 %v7576, %v7579
    %v7581 = vshrl.u32 %v7132, 16
    %v7583 = vrot.slane %v7581, 2
    %v7584 = vshll.u32 %v7132, 16
    %v7586 = vrot.slane %v7584, 3
    %v7587 = vor.u32 %v7583, %v7586
    %v7588 = vsel %vm7295, %v7580, %v7587
    %v7590 = vshrl.u32 %v6698, 16
    %v7592 = vrot.slane %v7590, 2
    %v7593 = vshll.u32 %v6698, 16
    %v7595 = vrot.slane %v7593, 3
    %v7596 = vor.u32 %v7592, %v7595
    %v7598 = vshrl.u32 %v6700, 16
    %v7600 = vrot.slane %v7598, 2
    %v7601 = vshll.u32 %v6700, 16
    %v7603 = vrot.slane %v7601, 3
    %v7604 = vor.u32 %v7600, %v7603
    %v7605 = vsel %vm7295, %v7596, %v7604
    %v7606 = vshrl.u32 %v6810, 16
    %v7608 = vrot.slane %v7606, 2
    %v7609 = vshll.u32 %v6810, 16
    %v7611 = vrot.slane %v7609, 3
    %v7612 = vor.u32 %v7608, %v7611
    %v7613 = vshrl.u32 %v6812, 16
    %v7615 = vrot.slane %v7613, 2
    %v7616 = vshll.u32 %v6812, 16
    %v7618 = vrot.slane %v7616, 3
    %v7619 = vor.u32 %v7615, %v7618
    %v7620 = vsel %vm7295, %v7612, %v7619
    %v7621 = vshrl.u32 %v6970, 16
    %v7623 = vrot.slane %v7621, 2
    %v7624 = vshll.u32 %v6970, 16
    %v7626 = vrot.slane %v7624, 3
    %v7627 = vor.u32 %v7623, %v7626
    %v7628 = vshrl.u32 %v6972, 16
    %v7630 = vrot.slane %v7628, 2
    %v7631 = vshll.u32 %v6972, 16
    %v7633 = vrot.slane %v7631, 3
    %v7634 = vor.u32 %v7630, %v7633
    %v7635 = vsel %vm7295, %v7627, %v7634
    %v7636 = vshrl.u32 %v7135, 16
    %v7638 = vrot.slane %v7636, 2
    %v7639 = vshll.u32 %v7135, 16
    %v7641 = vrot.slane %v7639, 3
    %v7642 = vor.u32 %v7638, %v7641
    %v7643 = vshrl.u32 %v7138, 16
    %v7645 = vrot.slane %v7643, 2
    %v7646 = vshll.u32 %v7138, 16
    %v7648 = vrot.slane %v7646, 3
    %v7649 = vor.u32 %v7645, %v7648
    %v7650 = vsel %vm7295, %v7642, %v7649
    %v7652 = vshrl.u32 %v6701, 16
    %v7654 = vrot.slane %v7652, 2
    %v7655 = vshll.u32 %v6701, 16
    %v7657 = vrot.slane %v7655, 3
    %v7658 = vor.u32 %v7654, %v7657
    %v7660 = vshrl.u32 %v6703, 16
    %v7662 = vrot.slane %v7660, 2
    %v7663 = vshll.u32 %v6703, 16
    %v7665 = vrot.slane %v7663, 3
    %v7666 = vor.u32 %v7662, %v7665
    %v7667 = vsel %vm7295, %v7658, %v7666
    %v7668 = vshrl.u32 %v6815, 16
    %v7670 = vrot.slane %v7668, 2
    %v7671 = vshll.u32 %v6815, 16
    %v7673 = vrot.slane %v7671, 3
    %v7674 = vor.u32 %v7670, %v7673
    %v7675 = vshrl.u32 %v6817, 16
    %v7677 = vrot.slane %v7675, 2
    %v7678 = vshll.u32 %v6817, 16
    %v7680 = vrot.slane %v7678, 3
    %v7681 = vor.u32 %v7677, %v7680
    %v7682 = vsel %vm7295, %v7674, %v7681
    %v7683 = vshrl.u32 %v6975, 16
    %v7685 = vrot.slane %v7683, 2
    %v7686 = vshll.u32 %v6975, 16
    %v7688 = vrot.slane %v7686, 3
    %v7689 = vor.u32 %v7685, %v7688
    %v7690 = vshrl.u32 %v6977, 16
    %v7692 = vrot.slane %v7690, 2
    %v7693 = vshll.u32 %v6977, 16
    %v7695 = vrot.slane %v7693, 3
    %v7696 = vor.u32 %v7692, %v7695
    %v7697 = vsel %vm7295, %v7689, %v7696
    %v7698 = vshrl.u32 %v7141, 16
    %v7700 = vrot.slane %v7698, 2
    %v7701 = vshll.u32 %v7141, 16
    %v7703 = vrot.slane %v7701, 3
    %v7704 = vor.u32 %v7700, %v7703
    %v7705 = vshrl.u32 %v7144, 16
    %v7707 = vrot.slane %v7705, 2
    %v7708 = vshll.u32 %v7144, 16
    %v7710 = vrot.slane %v7708, 3
    %v7711 = vor.u32 %v7707, %v7710
    %v7712 = vsel %vm7295, %v7704, %v7711
    %v7714 = vshrl.u32 %v6704, 16
    %v7716 = vrot.slane %v7714, 2
    %v7717 = vshll.u32 %v6704, 16
    %v7719 = vrot.slane %v7717, 3
    %v7720 = vor.u32 %v7716, %v7719
    %v7722 = vshrl.u32 %v6706, 16
    %v7724 = vrot.slane %v7722, 2
    %v7725 = vshll.u32 %v6706, 16
    %v7727 = vrot.slane %v7725, 3
    %v7728 = vor.u32 %v7724, %v7727
    %v7729 = vsel %vm7295, %v7720, %v7728
    %v7730 = vshrl.u32 %v6820, 16
    %v7732 = vrot.slane %v7730, 2
    %v7733 = vshll.u32 %v6820, 16
    %v7735 = vrot.slane %v7733, 3
    %v7736 = vor.u32 %v7732, %v7735
    %v7737 = vshrl.u32 %v6822, 16
    %v7739 = vrot.slane %v7737, 2
    %v7740 = vshll.u32 %v6822, 16
    %v7742 = vrot.slane %v7740, 3
    %v7743 = vor.u32 %v7739, %v7742
    %v7744 = vsel %vm7295, %v7736, %v7743
    %v7745 = vshrl.u32 %v6980, 16
    %v7747 = vrot.slane %v7745, 2
    %v7748 = vshll.u32 %v6980, 16
    %v7750 = vrot.slane %v7748, 3
    %v7751 = vor.u32 %v7747, %v7750
    %v7752 = vshrl.u32 %v6982, 16
    %v7754 = vrot.slane %v7752, 2
    %v7755 = vshll.u32 %v6982, 16
    %v7757 = vrot.slane %v7755, 3
    %v7758 = vor.u32 %v7754, %v7757
    %v7759 = vsel %vm7295, %v7751, %v7758
    %v7760 = vshrl.u32 %v7147, 16
    %v7762 = vrot.slane %v7760, 2
    %v7763 = vshll.u32 %v7147, 16
    %v7765 = vrot.slane %v7763, 3
    %v7766 = vor.u32 %v7762, %v7765
    %v7767 = vshrl.u32 %v7150, 16
    %v7769 = vrot.slane %v7767, 2
    %v7770 = vshll.u32 %v7150, 16
    %v7772 = vrot.slane %v7770, 3
    %v7773 = vor.u32 %v7769, %v7772
    %v7774 = vsel %vm7295, %v7766, %v7773
    %v7776 = vshrl.u32 %v6707, 16
    %v7778 = vrot.slane %v7776, 2
    %v7779 = vshll.u32 %v6707, 16
    %v7781 = vrot.slane %v7779, 3
    %v7782 = vor.u32 %v7778, %v7781
    %v7784 = vshrl.u32 %v6709, 16
    %v7786 = vrot.slane %v7784, 2
    %v7787 = vshll.u32 %v6709, 16
    %v7789 = vrot.slane %v7787, 3
    %v7790 = vor.u32 %v7786, %v7789
    %v7791 = vsel %vm7295, %v7782, %v7790
    %v7792 = vshrl.u32 %v6825, 16
    %v7794 = vrot.slane %v7792, 2
    %v7795 = vshll.u32 %v6825, 16
    %v7797 = vrot.slane %v7795, 3
    %v7798 = vor.u32 %v7794, %v7797
    %v7799 = vshrl.u32 %v6827, 16
    %v7801 = vrot.slane %v7799, 2
    %v7802 = vshll.u32 %v6827, 16
    %v7804 = vrot.slane %v7802, 3
    %v7805 = vor.u32 %v7801, %v7804
    %v7806 = vsel %vm7295, %v7798, %v7805
    %v7807 = vshrl.u32 %v6985, 16
    %v7809 = vrot.slane %v7807, 2
    %v7810 = vshll.u32 %v6985, 16
    %v7812 = vrot.slane %v7810, 3
    %v7813 = vor.u32 %v7809, %v7812
    %v7814 = vshrl.u32 %v6987, 16
    %v7816 = vrot.slane %v7814, 2
    %v7817 = vshll.u32 %v6987, 16
    %v7819 = vrot.slane %v7817, 3
    %v7820 = vor.u32 %v7816, %v7819
    %v7821 = vsel %vm7295, %v7813, %v7820
    %v7822 = vshrl.u32 %v7153, 16
    %v7824 = vrot.slane %v7822, 2
    %v7825 = vshll.u32 %v7153, 16
    %v7827 = vrot.slane %v7825, 3
    %v7828 = vor.u32 %v7824, %v7827
    %v7829 = vshrl.u32 %v7156, 16
    %v7831 = vrot.slane %v7829, 2
    %v7832 = vshll.u32 %v7156, 16
    %v7834 = vrot.slane %v7832, 3
    %v7835 = vor.u32 %v7831, %v7834
    %v7836 = vsel %vm7295, %v7828, %v7835
    %v7838 = vshrl.u32 %v6710, 16
    %v7840 = vrot.slane %v7838, 2
    %v7841 = vshll.u32 %v6710, 16
    %v7843 = vrot.slane %v7841, 3
    %v7844 = vor.u32 %v7840, %v7843
    %v7846 = vshrl.u32 %v6712, 16
    %v7848 = vrot.slane %v7846, 2
    %v7849 = vshll.u32 %v6712, 16
    %v7851 = vrot.slane %v7849, 3
    %v7852 = vor.u32 %v7848, %v7851
    %v7853 = vsel %vm7295, %v7844, %v7852
    %v7854 = vshrl.u32 %v6830, 16
    %v7856 = vrot.slane %v7854, 2
    %v7857 = vshll.u32 %v6830, 16
    %v7859 = vrot.slane %v7857, 3
    %v7860 = vor.u32 %v7856, %v7859
    %v7861 = vshrl.u32 %v6832, 16
    %v7863 = vrot.slane %v7861, 2
    %v7864 = vshll.u32 %v6832, 16
    %v7866 = vrot.slane %v7864, 3
    %v7867 = vor.u32 %v7863, %v7866
    %v7868 = vsel %vm7295, %v7860, %v7867
    %v7869 = vshrl.u32 %v6990, 16
    %v7871 = vrot.slane %v7869, 2
    %v7872 = vshll.u32 %v6990, 16
    %v7874 = vrot.slane %v7872, 3
    %v7875 = vor.u32 %v7871, %v7874
    %v7876 = vshrl.u32 %v6992, 16
    %v7878 = vrot.slane %v7876, 2
    %v7879 = vshll.u32 %v6992, 16
    %v7881 = vrot.slane %v7879, 3
    %v7882 = vor.u32 %v7878, %v7881
    %v7883 = vsel %vm7295, %v7875, %v7882
    %v7884 = vshrl.u32 %v7159, 16
    %v7886 = vrot.slane %v7884, 2
    %v7887 = vshll.u32 %v7159, 16
    %v7889 = vrot.slane %v7887, 3
    %v7890 = vor.u32 %v7886, %v7889
    %v7891 = vshrl.u32 %v7162, 16
    %v7893 = vrot.slane %v7891, 2
    %v7894 = vshll.u32 %v7162, 16
    %v7896 = vrot.slane %v7894, 3
    %v7897 = vor.u32 %v7893, %v7896
    %v7898 = vsel %vm7295, %v7890, %v7897
    %v7900 = vshrl.u32 %v6713, 16
    %v7902 = vrot.slane %v7900, 2
    %v7903 = vshll.u32 %v6713, 16
    %v7905 = vrot.slane %v7903, 3
    %v7906 = vor.u32 %v7902, %v7905
    %v7908 = vshrl.u32 %v6715, 16
    %v7910 = vrot.slane %v7908, 2
    %v7911 = vshll.u32 %v6715, 16
    %v7913 = vrot.slane %v7911, 3
    %v7914 = vor.u32 %v7910, %v7913
    %v7915 = vsel %vm7295, %v7906, %v7914
    %v7916 = vshrl.u32 %v6835, 16
    %v7918 = vrot.slane %v7916, 2
    %v7919 = vshll.u32 %v6835, 16
    %v7921 = vrot.slane %v7919, 3
    %v7922 = vor.u32 %v7918, %v7921
    %v7923 = vshrl.u32 %v6837, 16
    %v7925 = vrot.slane %v7923, 2
    %v7926 = vshll.u32 %v6837, 16
    %v7928 = vrot.slane %v7926, 3
    %v7929 = vor.u32 %v7925, %v7928
    %v7930 = vsel %vm7295, %v7922, %v7929
    %v7931 = vshrl.u32 %v6995, 16
    %v7933 = vrot.slane %v7931, 2
    %v7934 = vshll.u32 %v6995, 16
    %v7936 = vrot.slane %v7934, 3
    %v7937 = vor.u32 %v7933, %v7936
    %v7938 = vshrl.u32 %v6997, 16
    %v7940 = vrot.slane %v7938, 2
    %v7941 = vshll.u32 %v6997, 16
    %v7943 = vrot.slane %v7941, 3
    %v7944 = vor.u32 %v7940, %v7943
    %v7945 = vsel %vm7295, %v7937, %v7944
    %v7946 = vshrl.u32 %v7165, 16
    %v7948 = vrot.slane %v7946, 2
    %v7949 = vshll.u32 %v7165, 16
    %v7951 = vrot.slane %v7949, 3
    %v7952 = vor.u32 %v7948, %v7951
    %v7953 = vshrl.u32 %v7168, 16
    %v7955 = vrot.slane %v7953, 2
    %v7956 = vshll.u32 %v7168, 16
    %v7958 = vrot.slane %v7956, 3
    %v7959 = vor.u32 %v7955, %v7958
    %v7960 = vsel %vm7295, %v7952, %v7959
    %v7962 = vshrl.u32 %v6716, 16
    %v7964 = vrot.slane %v7962, 2
    %v7965 = vshll.u32 %v6716, 16
    %v7967 = vrot.slane %v7965, 3
    %v7968 = vor.u32 %v7964, %v7967
    %v7970 = vshrl.u32 %v6718, 16
    %v7972 = vrot.slane %v7970, 2
    %v7973 = vshll.u32 %v6718, 16
    %v7975 = vrot.slane %v7973, 3
    %v7976 = vor.u32 %v7972, %v7975
    %v7977 = vsel %vm7295, %v7968, %v7976
    %v7978 = vshrl.u32 %v6840, 16
    %v7980 = vrot.slane %v7978, 2
    %v7981 = vshll.u32 %v6840, 16
    %v7983 = vrot.slane %v7981, 3
    %v7984 = vor.u32 %v7980, %v7983
    %v7985 = vshrl.u32 %v6842, 16
    %v7987 = vrot.slane %v7985, 2
    %v7988 = vshll.u32 %v6842, 16
    %v7990 = vrot.slane %v7988, 3
    %v7991 = vor.u32 %v7987, %v7990
    %v7992 = vsel %vm7295, %v7984, %v7991
    %v7993 = vshrl.u32 %v7000, 16
    %v7995 = vrot.slane %v7993, 2
    %v7996 = vshll.u32 %v7000, 16
    %v7998 = vrot.slane %v7996, 3
    %v7999 = vor.u32 %v7995, %v7998
    %v8000 = vshrl.u32 %v7002, 16
    %v8002 = vrot.slane %v8000, 2
    %v8003 = vshll.u32 %v7002, 16
    %v8005 = vrot.slane %v8003, 3
    %v8006 = vor.u32 %v8002, %v8005
    %v8007 = vsel %vm7295, %v7999, %v8006
    %v8008 = vshrl.u32 %v7171, 16
    %v8010 = vrot.slane %v8008, 2
    %v8011 = vshll.u32 %v7171, 16
    %v8013 = vrot.slane %v8011, 3
    %v8014 = vor.u32 %v8010, %v8013
    %v8015 = vshrl.u32 %v7174, 16
    %v8017 = vrot.slane %v8015, 2
    %v8018 = vshll.u32 %v7174, 16
    %v8020 = vrot.slane %v8018, 3
    %v8021 = vor.u32 %v8017, %v8020
    %v8022 = vsel %vm7295, %v8014, %v8021
    %v8024 = vshrl.u32 %v6719, 16
    %v8026 = vrot.slane %v8024, 2
    %v8027 = vshll.u32 %v6719, 16
    %v8029 = vrot.slane %v8027, 3
    %v8030 = vor.u32 %v8026, %v8029
    %v8032 = vshrl.u32 %v6721, 16
    %v8034 = vrot.slane %v8032, 2
    %v8035 = vshll.u32 %v6721, 16
    %v8037 = vrot.slane %v8035, 3
    %v8038 = vor.u32 %v8034, %v8037
    %v8039 = vsel %vm7295, %v8030, %v8038
    %v8040 = vshrl.u32 %v6845, 16
    %v8042 = vrot.slane %v8040, 2
    %v8043 = vshll.u32 %v6845, 16
    %v8045 = vrot.slane %v8043, 3
    %v8046 = vor.u32 %v8042, %v8045
    %v8047 = vshrl.u32 %v6847, 16
    %v8049 = vrot.slane %v8047, 2
    %v8050 = vshll.u32 %v6847, 16
    %v8052 = vrot.slane %v8050, 3
    %v8053 = vor.u32 %v8049, %v8052
    %v8054 = vsel %vm7295, %v8046, %v8053
    %v8055 = vshrl.u32 %v7005, 16
    %v8057 = vrot.slane %v8055, 2
    %v8058 = vshll.u32 %v7005, 16
    %v8060 = vrot.slane %v8058, 3
    %v8061 = vor.u32 %v8057, %v8060
    %v8062 = vshrl.u32 %v7007, 16
    %v8064 = vrot.slane %v8062, 2
    %v8065 = vshll.u32 %v7007, 16
    %v8067 = vrot.slane %v8065, 3
    %v8068 = vor.u32 %v8064, %v8067
    %v8069 = vsel %vm7295, %v8061, %v8068
    %v8070 = vshrl.u32 %v7177, 16
    %v8072 = vrot.slane %v8070, 2
    %v8073 = vshll.u32 %v7177, 16
    %v8075 = vrot.slane %v8073, 3
    %v8076 = vor.u32 %v8072, %v8075
    %v8077 = vshrl.u32 %v7180, 16
    %v8079 = vrot.slane %v8077, 2
    %v8080 = vshll.u32 %v7180, 16
    %v8082 = vrot.slane %v8080, 3
    %v8083 = vor.u32 %v8079, %v8082
    %v8084 = vsel %vm7295, %v8076, %v8083
    %v8086 = vshrl.u32 %v6722, 16
    %v8088 = vrot.slane %v8086, 2
    %v8089 = vshll.u32 %v6722, 16
    %v8091 = vrot.slane %v8089, 3
    %v8092 = vor.u32 %v8088, %v8091
    %v8094 = vshrl.u32 %v6724, 16
    %v8096 = vrot.slane %v8094, 2
    %v8097 = vshll.u32 %v6724, 16
    %v8099 = vrot.slane %v8097, 3
    %v8100 = vor.u32 %v8096, %v8099
    %v8101 = vsel %vm7295, %v8092, %v8100
    %v8102 = vshrl.u32 %v6850, 16
    %v8104 = vrot.slane %v8102, 2
    %v8105 = vshll.u32 %v6850, 16
    %v8107 = vrot.slane %v8105, 3
    %v8108 = vor.u32 %v8104, %v8107
    %v8109 = vshrl.u32 %v6852, 16
    %v8111 = vrot.slane %v8109, 2
    %v8112 = vshll.u32 %v6852, 16
    %v8114 = vrot.slane %v8112, 3
    %v8115 = vor.u32 %v8111, %v8114
    %v8116 = vsel %vm7295, %v8108, %v8115
    %v8117 = vshrl.u32 %v7010, 16
    %v8119 = vrot.slane %v8117, 2
    %v8120 = vshll.u32 %v7010, 16
    %v8122 = vrot.slane %v8120, 3
    %v8123 = vor.u32 %v8119, %v8122
    %v8124 = vshrl.u32 %v7012, 16
    %v8126 = vrot.slane %v8124, 2
    %v8127 = vshll.u32 %v7012, 16
    %v8129 = vrot.slane %v8127, 3
    %v8130 = vor.u32 %v8126, %v8129
    %v8131 = vsel %vm7295, %v8123, %v8130
    %v8132 = vshrl.u32 %v7183, 16
    %v8134 = vrot.slane %v8132, 2
    %v8135 = vshll.u32 %v7183, 16
    %v8137 = vrot.slane %v8135, 3
    %v8138 = vor.u32 %v8134, %v8137
    %v8139 = vshrl.u32 %v7186, 16
    %v8141 = vrot.slane %v8139, 2
    %v8142 = vshll.u32 %v7186, 16
    %v8144 = vrot.slane %v8142, 3
    %v8145 = vor.u32 %v8141, %v8144
    %v8146 = vsel %vm7295, %v8138, %v8145
    %v8148 = vshrl.u32 %v6725, 16
    %v8150 = vrot.slane %v8148, 2
    %v8151 = vshll.u32 %v6725, 16
    %v8153 = vrot.slane %v8151, 3
    %v8154 = vor.u32 %v8150, %v8153
    %v8156 = vshrl.u32 %v6727, 16
    %v8158 = vrot.slane %v8156, 2
    %v8159 = vshll.u32 %v6727, 16
    %v8161 = vrot.slane %v8159, 3
    %v8162 = vor.u32 %v8158, %v8161
    %v8163 = vsel %vm7295, %v8154, %v8162
    %v8164 = vshrl.u32 %v6855, 16
    %v8166 = vrot.slane %v8164, 2
    %v8167 = vshll.u32 %v6855, 16
    %v8169 = vrot.slane %v8167, 3
    %v8170 = vor.u32 %v8166, %v8169
    %v8171 = vshrl.u32 %v6857, 16
    %v8173 = vrot.slane %v8171, 2
    %v8174 = vshll.u32 %v6857, 16
    %v8176 = vrot.slane %v8174, 3
    %v8177 = vor.u32 %v8173, %v8176
    %v8178 = vsel %vm7295, %v8170, %v8177
    %v8179 = vshrl.u32 %v7015, 16
    %v8181 = vrot.slane %v8179, 2
    %v8182 = vshll.u32 %v7015, 16
    %v8184 = vrot.slane %v8182, 3
    %v8185 = vor.u32 %v8181, %v8184
    %v8186 = vshrl.u32 %v7017, 16
    %v8188 = vrot.slane %v8186, 2
    %v8189 = vshll.u32 %v7017, 16
    %v8191 = vrot.slane %v8189, 3
    %v8192 = vor.u32 %v8188, %v8191
    %v8193 = vsel %vm7295, %v8185, %v8192
    %v8194 = vshrl.u32 %v7189, 16
    %v8196 = vrot.slane %v8194, 2
    %v8197 = vshll.u32 %v7189, 16
    %v8199 = vrot.slane %v8197, 3
    %v8200 = vor.u32 %v8196, %v8199
    %v8201 = vshrl.u32 %v7192, 16
    %v8203 = vrot.slane %v8201, 2
    %v8204 = vshll.u32 %v7192, 16
    %v8206 = vrot.slane %v8204, 3
    %v8207 = vor.u32 %v8203, %v8206
    %v8208 = vsel %vm7295, %v8200, %v8207
    %v8210 = vshrl.u32 %v6728, 16
    %v8212 = vrot.slane %v8210, 2
    %v8213 = vshll.u32 %v6728, 16
    %v8215 = vrot.slane %v8213, 3
    %v8216 = vor.u32 %v8212, %v8215
    %v8218 = vshrl.u32 %v6730, 16
    %v8220 = vrot.slane %v8218, 2
    %v8221 = vshll.u32 %v6730, 16
    %v8223 = vrot.slane %v8221, 3
    %v8224 = vor.u32 %v8220, %v8223
    %v8225 = vsel %vm7295, %v8216, %v8224
    %v8226 = vshrl.u32 %v6860, 16
    %v8228 = vrot.slane %v8226, 2
    %v8229 = vshll.u32 %v6860, 16
    %v8231 = vrot.slane %v8229, 3
    %v8232 = vor.u32 %v8228, %v8231
    %v8233 = vshrl.u32 %v6862, 16
    %v8235 = vrot.slane %v8233, 2
    %v8236 = vshll.u32 %v6862, 16
    %v8238 = vrot.slane %v8236, 3
    %v8239 = vor.u32 %v8235, %v8238
    %v8240 = vsel %vm7295, %v8232, %v8239
    %v8241 = vshrl.u32 %v7020, 16
    %v8243 = vrot.slane %v8241, 2
    %v8244 = vshll.u32 %v7020, 16
    %v8246 = vrot.slane %v8244, 3
    %v8247 = vor.u32 %v8243, %v8246
    %v8248 = vshrl.u32 %v7022, 16
    %v8250 = vrot.slane %v8248, 2
    %v8251 = vshll.u32 %v7022, 16
    %v8253 = vrot.slane %v8251, 3
    %v8254 = vor.u32 %v8250, %v8253
    %v8255 = vsel %vm7295, %v8247, %v8254
    %v8256 = vshrl.u32 %v7195, 16
    %v8258 = vrot.slane %v8256, 2
    %v8259 = vshll.u32 %v7195, 16
    %v8261 = vrot.slane %v8259, 3
    %v8262 = vor.u32 %v8258, %v8261
    %v8263 = vshrl.u32 %v7198, 16
    %v8265 = vrot.slane %v8263, 2
    %v8266 = vshll.u32 %v7198, 16
    %v8268 = vrot.slane %v8266, 3
    %v8269 = vor.u32 %v8265, %v8268
    %v8270 = vsel %vm7295, %v8262, %v8269
    %v8272 = vshrl.u32 %v6731, 16
    %v8274 = vrot.slane %v8272, 2
    %v8275 = vshll.u32 %v6731, 16
    %v8277 = vrot.slane %v8275, 3
    %v8278 = vor.u32 %v8274, %v8277
    %v8280 = vshrl.u32 %v6733, 16
    %v8282 = vrot.slane %v8280, 2
    %v8283 = vshll.u32 %v6733, 16
    %v8285 = vrot.slane %v8283, 3
    %v8286 = vor.u32 %v8282, %v8285
    %v8287 = vsel %vm7295, %v8278, %v8286
    %v8288 = vshrl.u32 %v6865, 16
    %v8290 = vrot.slane %v8288, 2
    %v8291 = vshll.u32 %v6865, 16
    %v8293 = vrot.slane %v8291, 3
    %v8294 = vor.u32 %v8290, %v8293
    %v8295 = vshrl.u32 %v6867, 16
    %v8297 = vrot.slane %v8295, 2
    %v8298 = vshll.u32 %v6867, 16
    %v8300 = vrot.slane %v8298, 3
    %v8301 = vor.u32 %v8297, %v8300
    %v8302 = vsel %vm7295, %v8294, %v8301
    %v8303 = vshrl.u32 %v7025, 16
    %v8305 = vrot.slane %v8303, 2
    %v8306 = vshll.u32 %v7025, 16
    %v8308 = vrot.slane %v8306, 3
    %v8309 = vor.u32 %v8305, %v8308
    %v8310 = vshrl.u32 %v7027, 16
    %v8312 = vrot.slane %v8310, 2
    %v8313 = vshll.u32 %v7027, 16
    %v8315 = vrot.slane %v8313, 3
    %v8316 = vor.u32 %v8312, %v8315
    %v8317 = vsel %vm7295, %v8309, %v8316
    %v8318 = vshrl.u32 %v7201, 16
    %v8320 = vrot.slane %v8318, 2
    %v8321 = vshll.u32 %v7201, 16
    %v8323 = vrot.slane %v8321, 3
    %v8324 = vor.u32 %v8320, %v8323
    %v8325 = vshrl.u32 %v7204, 16
    %v8327 = vrot.slane %v8325, 2
    %v8328 = vshll.u32 %v7204, 16
    %v8330 = vrot.slane %v8328, 3
    %v8331 = vor.u32 %v8327, %v8330
    %v8332 = vsel %vm7295, %v8324, %v8331
    %v8334 = vshrl.u32 %v6734, 16
    %v8336 = vrot.slane %v8334, 2
    %v8337 = vshll.u32 %v6734, 16
    %v8339 = vrot.slane %v8337, 3
    %v8340 = vor.u32 %v8336, %v8339
    %v8342 = vshrl.u32 %v6736, 16
    %v8344 = vrot.slane %v8342, 2
    %v8345 = vshll.u32 %v6736, 16
    %v8347 = vrot.slane %v8345, 3
    %v8348 = vor.u32 %v8344, %v8347
    %v8349 = vsel %vm7295, %v8340, %v8348
    %v8350 = vshrl.u32 %v6870, 16
    %v8352 = vrot.slane %v8350, 2
    %v8353 = vshll.u32 %v6870, 16
    %v8355 = vrot.slane %v8353, 3
    %v8356 = vor.u32 %v8352, %v8355
    %v8357 = vshrl.u32 %v6872, 16
    %v8359 = vrot.slane %v8357, 2
    %v8360 = vshll.u32 %v6872, 16
    %v8362 = vrot.slane %v8360, 3
    %v8363 = vor.u32 %v8359, %v8362
    %v8364 = vsel %vm7295, %v8356, %v8363
    %v8365 = vshrl.u32 %v7030, 16
    %v8367 = vrot.slane %v8365, 2
    %v8368 = vshll.u32 %v7030, 16
    %v8370 = vrot.slane %v8368, 3
    %v8371 = vor.u32 %v8367, %v8370
    %v8372 = vshrl.u32 %v7032, 16
    %v8374 = vrot.slane %v8372, 2
    %v8375 = vshll.u32 %v7032, 16
    %v8377 = vrot.slane %v8375, 3
    %v8378 = vor.u32 %v8374, %v8377
    %v8379 = vsel %vm7295, %v8371, %v8378
    %v8380 = vshrl.u32 %v7207, 16
    %v8382 = vrot.slane %v8380, 2
    %v8383 = vshll.u32 %v7207, 16
    %v8385 = vrot.slane %v8383, 3
    %v8386 = vor.u32 %v8382, %v8385
    %v8387 = vshrl.u32 %v7210, 16
    %v8389 = vrot.slane %v8387, 2
    %v8390 = vshll.u32 %v7210, 16
    %v8392 = vrot.slane %v8390, 3
    %v8393 = vor.u32 %v8389, %v8392
    %v8394 = vsel %vm7295, %v8386, %v8393
    %v8396 = vshrl.u32 %v6737, 16
    %v8398 = vrot.slane %v8396, 2
    %v8399 = vshll.u32 %v6737, 16
    %v8401 = vrot.slane %v8399, 3
    %v8402 = vor.u32 %v8398, %v8401
    %v8404 = vshrl.u32 %v6739, 16
    %v8406 = vrot.slane %v8404, 2
    %v8407 = vshll.u32 %v6739, 16
    %v8409 = vrot.slane %v8407, 3
    %v8410 = vor.u32 %v8406, %v8409
    %v8411 = vsel %vm7295, %v8402, %v8410
    %v8412 = vshrl.u32 %v6875, 16
    %v8414 = vrot.slane %v8412, 2
    %v8415 = vshll.u32 %v6875, 16
    %v8417 = vrot.slane %v8415, 3
    %v8418 = vor.u32 %v8414, %v8417
    %v8419 = vshrl.u32 %v6877, 16
    %v8421 = vrot.slane %v8419, 2
    %v8422 = vshll.u32 %v6877, 16
    %v8424 = vrot.slane %v8422, 3
    %v8425 = vor.u32 %v8421, %v8424
    %v8426 = vsel %vm7295, %v8418, %v8425
    %v8427 = vshrl.u32 %v7035, 16
    %v8429 = vrot.slane %v8427, 2
    %v8430 = vshll.u32 %v7035, 16
    %v8432 = vrot.slane %v8430, 3
    %v8433 = vor.u32 %v8429, %v8432
    %v8434 = vshrl.u32 %v7037, 16
    %v8436 = vrot.slane %v8434, 2
    %v8437 = vshll.u32 %v7037, 16
    %v8439 = vrot.slane %v8437, 3
    %v8440 = vor.u32 %v8436, %v8439
    %v8441 = vsel %vm7295, %v8433, %v8440
    %v8442 = vshrl.u32 %v7213, 16
    %v8444 = vrot.slane %v8442, 2
    %v8445 = vshll.u32 %v7213, 16
    %v8447 = vrot.slane %v8445, 3
    %v8448 = vor.u32 %v8444, %v8447
    %v8449 = vshrl.u32 %v7216, 16
    %v8451 = vrot.slane %v8449, 2
    %v8452 = vshll.u32 %v7216, 16
    %v8454 = vrot.slane %v8452, 3
    %v8455 = vor.u32 %v8451, %v8454
    %v8456 = vsel %vm7295, %v8448, %v8455
    %v8458 = vshrl.u32 %v6740, 16
    %v8460 = vrot.slane %v8458, 2
    %v8461 = vshll.u32 %v6740, 16
    %v8463 = vrot.slane %v8461, 3
    %v8464 = vor.u32 %v8460, %v8463
    %v8466 = vshrl.u32 %v6742, 16
    %v8468 = vrot.slane %v8466, 2
    %v8469 = vshll.u32 %v6742, 16
    %v8471 = vrot.slane %v8469, 3
    %v8472 = vor.u32 %v8468, %v8471
    %v8473 = vsel %vm7295, %v8464, %v8472
    %v8474 = vshrl.u32 %v6880, 16
    %v8476 = vrot.slane %v8474, 2
    %v8477 = vshll.u32 %v6880, 16
    %v8479 = vrot.slane %v8477, 3
    %v8480 = vor.u32 %v8476, %v8479
    %v8481 = vshrl.u32 %v6882, 16
    %v8483 = vrot.slane %v8481, 2
    %v8484 = vshll.u32 %v6882, 16
    %v8486 = vrot.slane %v8484, 3
    %v8487 = vor.u32 %v8483, %v8486
    %v8488 = vsel %vm7295, %v8480, %v8487
    %v8489 = vshrl.u32 %v7040, 16
    %v8491 = vrot.slane %v8489, 2
    %v8492 = vshll.u32 %v7040, 16
    %v8494 = vrot.slane %v8492, 3
    %v8495 = vor.u32 %v8491, %v8494
    %v8496 = vshrl.u32 %v7042, 16
    %v8498 = vrot.slane %v8496, 2
    %v8499 = vshll.u32 %v7042, 16
    %v8501 = vrot.slane %v8499, 3
    %v8502 = vor.u32 %v8498, %v8501
    %v8503 = vsel %vm7295, %v8495, %v8502
    %v8504 = vshrl.u32 %v7219, 16
    %v8506 = vrot.slane %v8504, 2
    %v8507 = vshll.u32 %v7219, 16
    %v8509 = vrot.slane %v8507, 3
    %v8510 = vor.u32 %v8506, %v8509
    %v8511 = vshrl.u32 %v7222, 16
    %v8513 = vrot.slane %v8511, 2
    %v8514 = vshll.u32 %v7222, 16
    %v8516 = vrot.slane %v8514, 3
    %v8517 = vor.u32 %v8513, %v8516
    %v8518 = vsel %vm7295, %v8510, %v8517
    %v8520 = vshrl.u32 %v6743, 16
    %v8522 = vrot.slane %v8520, 2
    %v8523 = vshll.u32 %v6743, 16
    %v8525 = vrot.slane %v8523, 3
    %v8526 = vor.u32 %v8522, %v8525
    %v8528 = vshrl.u32 %v6745, 16
    %v8530 = vrot.slane %v8528, 2
    %v8531 = vshll.u32 %v6745, 16
    %v8533 = vrot.slane %v8531, 3
    %v8534 = vor.u32 %v8530, %v8533
    %v8535 = vsel %vm7295, %v8526, %v8534
    %v8536 = vshrl.u32 %v6885, 16
    %v8538 = vrot.slane %v8536, 2
    %v8539 = vshll.u32 %v6885, 16
    %v8541 = vrot.slane %v8539, 3
    %v8542 = vor.u32 %v8538, %v8541
    %v8543 = vshrl.u32 %v6887, 16
    %v8545 = vrot.slane %v8543, 2
    %v8546 = vshll.u32 %v6887, 16
    %v8548 = vrot.slane %v8546, 3
    %v8549 = vor.u32 %v8545, %v8548
    %v8550 = vsel %vm7295, %v8542, %v8549
    %v8551 = vshrl.u32 %v7045, 16
    %v8553 = vrot.slane %v8551, 2
    %v8554 = vshll.u32 %v7045, 16
    %v8556 = vrot.slane %v8554, 3
    %v8557 = vor.u32 %v8553, %v8556
    %v8558 = vshrl.u32 %v7047, 16
    %v8560 = vrot.slane %v8558, 2
    %v8561 = vshll.u32 %v7047, 16
    %v8563 = vrot.slane %v8561, 3
    %v8564 = vor.u32 %v8560, %v8563
    %v8565 = vsel %vm7295, %v8557, %v8564
    %v8566 = vshrl.u32 %v7225, 16
    %v8568 = vrot.slane %v8566, 2
    %v8569 = vshll.u32 %v7225, 16
    %v8571 = vrot.slane %v8569, 3
    %v8572 = vor.u32 %v8568, %v8571
    %v8573 = vshrl.u32 %v7228, 16
    %v8575 = vrot.slane %v8573, 2
    %v8576 = vshll.u32 %v7228, 16
    %v8578 = vrot.slane %v8576, 3
    %v8579 = vor.u32 %v8575, %v8578
    %v8580 = vsel %vm7295, %v8572, %v8579
    %v8582 = vshrl.u32 %v6746, 16
    %v8584 = vrot.slane %v8582, 2
    %v8585 = vshll.u32 %v6746, 16
    %v8587 = vrot.slane %v8585, 3
    %v8588 = vor.u32 %v8584, %v8587
    %v8590 = vshrl.u32 %v6748, 16
    %v8592 = vrot.slane %v8590, 2
    %v8593 = vshll.u32 %v6748, 16
    %v8595 = vrot.slane %v8593, 3
    %v8596 = vor.u32 %v8592, %v8595
    %v8597 = vsel %vm7295, %v8588, %v8596
    %v8598 = vshrl.u32 %v6890, 16
    %v8600 = vrot.slane %v8598, 2
    %v8601 = vshll.u32 %v6890, 16
    %v8603 = vrot.slane %v8601, 3
    %v8604 = vor.u32 %v8600, %v8603
    %v8605 = vshrl.u32 %v6892, 16
    %v8607 = vrot.slane %v8605, 2
    %v8608 = vshll.u32 %v6892, 16
    %v8610 = vrot.slane %v8608, 3
    %v8611 = vor.u32 %v8607, %v8610
    %v8612 = vsel %vm7295, %v8604, %v8611
    %v8613 = vshrl.u32 %v7050, 16
    %v8615 = vrot.slane %v8613, 2
    %v8616 = vshll.u32 %v7050, 16
    %v8618 = vrot.slane %v8616, 3
    %v8619 = vor.u32 %v8615, %v8618
    %v8620 = vshrl.u32 %v7052, 16
    %v8622 = vrot.slane %v8620, 2
    %v8623 = vshll.u32 %v7052, 16
    %v8625 = vrot.slane %v8623, 3
    %v8626 = vor.u32 %v8622, %v8625
    %v8627 = vsel %vm7295, %v8619, %v8626
    %v8628 = vshrl.u32 %v7231, 16
    %v8630 = vrot.slane %v8628, 2
    %v8631 = vshll.u32 %v7231, 16
    %v8633 = vrot.slane %v8631, 3
    %v8634 = vor.u32 %v8630, %v8633
    %v8635 = vshrl.u32 %v7234, 16
    %v8637 = vrot.slane %v8635, 2
    %v8638 = vshll.u32 %v7234, 16
    %v8640 = vrot.slane %v8638, 3
    %v8641 = vor.u32 %v8637, %v8640
    %v8642 = vsel %vm7295, %v8634, %v8641
    %v8644 = vshrl.u32 %v6749, 16
    %v8646 = vrot.slane %v8644, 2
    %v8647 = vshll.u32 %v6749, 16
    %v8649 = vrot.slane %v8647, 3
    %v8650 = vor.u32 %v8646, %v8649
    %v8652 = vshrl.u32 %v6751, 16
    %v8654 = vrot.slane %v8652, 2
    %v8655 = vshll.u32 %v6751, 16
    %v8657 = vrot.slane %v8655, 3
    %v8658 = vor.u32 %v8654, %v8657
    %v8659 = vsel %vm7295, %v8650, %v8658
    %v8660 = vshrl.u32 %v6895, 16
    %v8662 = vrot.slane %v8660, 2
    %v8663 = vshll.u32 %v6895, 16
    %v8665 = vrot.slane %v8663, 3
    %v8666 = vor.u32 %v8662, %v8665
    %v8667 = vshrl.u32 %v6897, 16
    %v8669 = vrot.slane %v8667, 2
    %v8670 = vshll.u32 %v6897, 16
    %v8672 = vrot.slane %v8670, 3
    %v8673 = vor.u32 %v8669, %v8672
    %v8674 = vsel %vm7295, %v8666, %v8673
    %v8675 = vshrl.u32 %v7055, 16
    %v8677 = vrot.slane %v8675, 2
    %v8678 = vshll.u32 %v7055, 16
    %v8680 = vrot.slane %v8678, 3
    %v8681 = vor.u32 %v8677, %v8680
    %v8682 = vshrl.u32 %v7057, 16
    %v8684 = vrot.slane %v8682, 2
    %v8685 = vshll.u32 %v7057, 16
    %v8687 = vrot.slane %v8685, 3
    %v8688 = vor.u32 %v8684, %v8687
    %v8689 = vsel %vm7295, %v8681, %v8688
    %v8690 = vshrl.u32 %v7237, 16
    %v8692 = vrot.slane %v8690, 2
    %v8693 = vshll.u32 %v7237, 16
    %v8695 = vrot.slane %v8693, 3
    %v8696 = vor.u32 %v8692, %v8695
    %v8697 = vshrl.u32 %v7240, 16
    %v8699 = vrot.slane %v8697, 2
    %v8700 = vshll.u32 %v7240, 16
    %v8702 = vrot.slane %v8700, 3
    %v8703 = vor.u32 %v8699, %v8702
    %v8704 = vsel %vm7295, %v8696, %v8703
    %v8706 = vshrl.u32 %v6752, 16
    %v8708 = vrot.slane %v8706, 2
    %v8709 = vshll.u32 %v6752, 16
    %v8711 = vrot.slane %v8709, 3
    %v8712 = vor.u32 %v8708, %v8711
    %v8714 = vshrl.u32 %v6754, 16
    %v8716 = vrot.slane %v8714, 2
    %v8717 = vshll.u32 %v6754, 16
    %v8719 = vrot.slane %v8717, 3
    %v8720 = vor.u32 %v8716, %v8719
    %v8721 = vsel %vm7295, %v8712, %v8720
    %v8722 = vshrl.u32 %v6900, 16
    %v8724 = vrot.slane %v8722, 2
    %v8725 = vshll.u32 %v6900, 16
    %v8727 = vrot.slane %v8725, 3
    %v8728 = vor.u32 %v8724, %v8727
    %v8729 = vshrl.u32 %v6902, 16
    %v8731 = vrot.slane %v8729, 2
    %v8732 = vshll.u32 %v6902, 16
    %v8734 = vrot.slane %v8732, 3
    %v8735 = vor.u32 %v8731, %v8734
    %v8736 = vsel %vm7295, %v8728, %v8735
    %v8737 = vshrl.u32 %v7060, 16
    %v8739 = vrot.slane %v8737, 2
    %v8740 = vshll.u32 %v7060, 16
    %v8742 = vrot.slane %v8740, 3
    %v8743 = vor.u32 %v8739, %v8742
    %v8744 = vshrl.u32 %v7062, 16
    %v8746 = vrot.slane %v8744, 2
    %v8747 = vshll.u32 %v7062, 16
    %v8749 = vrot.slane %v8747, 3
    %v8750 = vor.u32 %v8746, %v8749
    %v8751 = vsel %vm7295, %v8743, %v8750
    %v8752 = vshrl.u32 %v7243, 16
    %v8754 = vrot.slane %v8752, 2
    %v8755 = vshll.u32 %v7243, 16
    %v8757 = vrot.slane %v8755, 3
    %v8758 = vor.u32 %v8754, %v8757
    %v8759 = vshrl.u32 %v7246, 16
    %v8761 = vrot.slane %v8759, 2
    %v8762 = vshll.u32 %v7246, 16
    %v8764 = vrot.slane %v8762, 3
    %v8765 = vor.u32 %v8761, %v8764
    %v8766 = vsel %vm7295, %v8758, %v8765
    %v8768 = vshrl.u32 %v6755, 16
    %v8770 = vrot.slane %v8768, 2
    %v8771 = vshll.u32 %v6755, 16
    %v8773 = vrot.slane %v8771, 3
    %v8774 = vor.u32 %v8770, %v8773
    %v8776 = vshrl.u32 %v6757, 16
    %v8778 = vrot.slane %v8776, 2
    %v8779 = vshll.u32 %v6757, 16
    %v8781 = vrot.slane %v8779, 3
    %v8782 = vor.u32 %v8778, %v8781
    %v8783 = vsel %vm7295, %v8774, %v8782
    %v8784 = vshrl.u32 %v6905, 16
    %v8786 = vrot.slane %v8784, 2
    %v8787 = vshll.u32 %v6905, 16
    %v8789 = vrot.slane %v8787, 3
    %v8790 = vor.u32 %v8786, %v8789
    %v8791 = vshrl.u32 %v6907, 16
    %v8793 = vrot.slane %v8791, 2
    %v8794 = vshll.u32 %v6907, 16
    %v8796 = vrot.slane %v8794, 3
    %v8797 = vor.u32 %v8793, %v8796
    %v8798 = vsel %vm7295, %v8790, %v8797
    %v8799 = vshrl.u32 %v7065, 16
    %v8801 = vrot.slane %v8799, 2
    %v8802 = vshll.u32 %v7065, 16
    %v8804 = vrot.slane %v8802, 3
    %v8805 = vor.u32 %v8801, %v8804
    %v8806 = vshrl.u32 %v7067, 16
    %v8808 = vrot.slane %v8806, 2
    %v8809 = vshll.u32 %v7067, 16
    %v8811 = vrot.slane %v8809, 3
    %v8812 = vor.u32 %v8808, %v8811
    %v8813 = vsel %vm7295, %v8805, %v8812
    %v8814 = vshrl.u32 %v7249, 16
    %v8816 = vrot.slane %v8814, 2
    %v8817 = vshll.u32 %v7249, 16
    %v8819 = vrot.slane %v8817, 3
    %v8820 = vor.u32 %v8816, %v8819
    %v8821 = vshrl.u32 %v7252, 16
    %v8823 = vrot.slane %v8821, 2
    %v8824 = vshll.u32 %v7252, 16
    %v8826 = vrot.slane %v8824, 3
    %v8827 = vor.u32 %v8823, %v8826
    %v8828 = vsel %vm7295, %v8820, %v8827
    %v8830 = vshrl.u32 %v6758, 16
    %v8832 = vrot.slane %v8830, 2
    %v8833 = vshll.u32 %v6758, 16
    %v8835 = vrot.slane %v8833, 3
    %v8836 = vor.u32 %v8832, %v8835
    %v8838 = vshrl.u32 %v6760, 16
    %v8840 = vrot.slane %v8838, 2
    %v8841 = vshll.u32 %v6760, 16
    %v8843 = vrot.slane %v8841, 3
    %v8844 = vor.u32 %v8840, %v8843
    %v8845 = vsel %vm7295, %v8836, %v8844
    %v8846 = vshrl.u32 %v6910, 16
    %v8848 = vrot.slane %v8846, 2
    %v8849 = vshll.u32 %v6910, 16
    %v8851 = vrot.slane %v8849, 3
    %v8852 = vor.u32 %v8848, %v8851
    %v8853 = vshrl.u32 %v6912, 16
    %v8855 = vrot.slane %v8853, 2
    %v8856 = vshll.u32 %v6912, 16
    %v8858 = vrot.slane %v8856, 3
    %v8859 = vor.u32 %v8855, %v8858
    %v8860 = vsel %vm7295, %v8852, %v8859
    %v8861 = vshrl.u32 %v7070, 16
    %v8863 = vrot.slane %v8861, 2
    %v8864 = vshll.u32 %v7070, 16
    %v8866 = vrot.slane %v8864, 3
    %v8867 = vor.u32 %v8863, %v8866
    %v8868 = vshrl.u32 %v7072, 16
    %v8870 = vrot.slane %v8868, 2
    %v8871 = vshll.u32 %v7072, 16
    %v8873 = vrot.slane %v8871, 3
    %v8874 = vor.u32 %v8870, %v8873
    %v8875 = vsel %vm7295, %v8867, %v8874
    %v8876 = vshrl.u32 %v7255, 16
    %v8878 = vrot.slane %v8876, 2
    %v8879 = vshll.u32 %v7255, 16
    %v8881 = vrot.slane %v8879, 3
    %v8882 = vor.u32 %v8878, %v8881
    %v8883 = vshrl.u32 %v7258, 16
    %v8885 = vrot.slane %v8883, 2
    %v8886 = vshll.u32 %v7258, 16
    %v8888 = vrot.slane %v8886, 3
    %v8889 = vor.u32 %v8885, %v8888
    %v8890 = vsel %vm7295, %v8882, %v8889
    %v8892 = vshrl.u32 %v6761, 16
    %v8894 = vrot.slane %v8892, 2
    %v8895 = vshll.u32 %v6761, 16
    %v8897 = vrot.slane %v8895, 3
    %v8898 = vor.u32 %v8894, %v8897
    %v8900 = vshrl.u32 %v6763, 16
    %v8902 = vrot.slane %v8900, 2
    %v8903 = vshll.u32 %v6763, 16
    %v8905 = vrot.slane %v8903, 3
    %v8906 = vor.u32 %v8902, %v8905
    %v8907 = vsel %vm7295, %v8898, %v8906
    %v8908 = vshrl.u32 %v6915, 16
    %v8910 = vrot.slane %v8908, 2
    %v8911 = vshll.u32 %v6915, 16
    %v8913 = vrot.slane %v8911, 3
    %v8914 = vor.u32 %v8910, %v8913
    %v8915 = vshrl.u32 %v6917, 16
    %v8917 = vrot.slane %v8915, 2
    %v8918 = vshll.u32 %v6917, 16
    %v8920 = vrot.slane %v8918, 3
    %v8921 = vor.u32 %v8917, %v8920
    %v8922 = vsel %vm7295, %v8914, %v8921
    %v8923 = vshrl.u32 %v7075, 16
    %v8925 = vrot.slane %v8923, 2
    %v8926 = vshll.u32 %v7075, 16
    %v8928 = vrot.slane %v8926, 3
    %v8929 = vor.u32 %v8925, %v8928
    %v8930 = vshrl.u32 %v7077, 16
    %v8932 = vrot.slane %v8930, 2
    %v8933 = vshll.u32 %v7077, 16
    %v8935 = vrot.slane %v8933, 3
    %v8936 = vor.u32 %v8932, %v8935
    %v8937 = vsel %vm7295, %v8929, %v8936
    %v8938 = vshrl.u32 %v7261, 16
    %v8940 = vrot.slane %v8938, 2
    %v8941 = vshll.u32 %v7261, 16
    %v8943 = vrot.slane %v8941, 3
    %v8944 = vor.u32 %v8940, %v8943
    %v8945 = vshrl.u32 %v7264, 16
    %v8947 = vrot.slane %v8945, 2
    %v8948 = vshll.u32 %v7264, 16
    %v8950 = vrot.slane %v8948, 3
    %v8951 = vor.u32 %v8947, %v8950
    %v8952 = vsel %vm7295, %v8944, %v8951
    %v8954 = vshrl.u32 %v6764, 16
    %v8956 = vrot.slane %v8954, 2
    %v8957 = vshll.u32 %v6764, 16
    %v8959 = vrot.slane %v8957, 3
    %v8960 = vor.u32 %v8956, %v8959
    %v8962 = vshrl.u32 %v6766, 16
    %v8964 = vrot.slane %v8962, 2
    %v8965 = vshll.u32 %v6766, 16
    %v8967 = vrot.slane %v8965, 3
    %v8968 = vor.u32 %v8964, %v8967
    %v8969 = vsel %vm7295, %v8960, %v8968
    %v8970 = vshrl.u32 %v6920, 16
    %v8972 = vrot.slane %v8970, 2
    %v8973 = vshll.u32 %v6920, 16
    %v8975 = vrot.slane %v8973, 3
    %v8976 = vor.u32 %v8972, %v8975
    %v8977 = vshrl.u32 %v6922, 16
    %v8979 = vrot.slane %v8977, 2
    %v8980 = vshll.u32 %v6922, 16
    %v8982 = vrot.slane %v8980, 3
    %v8983 = vor.u32 %v8979, %v8982
    %v8984 = vsel %vm7295, %v8976, %v8983
    %v8985 = vshrl.u32 %v7080, 16
    %v8987 = vrot.slane %v8985, 2
    %v8988 = vshll.u32 %v7080, 16
    %v8990 = vrot.slane %v8988, 3
    %v8991 = vor.u32 %v8987, %v8990
    %v8992 = vshrl.u32 %v7082, 16
    %v8994 = vrot.slane %v8992, 2
    %v8995 = vshll.u32 %v7082, 16
    %v8997 = vrot.slane %v8995, 3
    %v8998 = vor.u32 %v8994, %v8997
    %v8999 = vsel %vm7295, %v8991, %v8998
    %v9000 = vshrl.u32 %v7267, 16
    %v9002 = vrot.slane %v9000, 2
    %v9003 = vshll.u32 %v7267, 16
    %v9005 = vrot.slane %v9003, 3
    %v9006 = vor.u32 %v9002, %v9005
    %v9007 = vshrl.u32 %v7270, 16
    %v9009 = vrot.slane %v9007, 2
    %v9010 = vshll.u32 %v7270, 16
    %v9012 = vrot.slane %v9010, 3
    %v9013 = vor.u32 %v9009, %v9012
    %v9014 = vsel %vm7295, %v9006, %v9013
    %v9016 = vshrl.u32 %v6767, 16
    %v9018 = vrot.slane %v9016, 2
    %v9019 = vshll.u32 %v6767, 16
    %v9021 = vrot.slane %v9019, 3
    %v9022 = vor.u32 %v9018, %v9021
    %v9024 = vshrl.u32 %v6769, 16
    %v9026 = vrot.slane %v9024, 2
    %v9027 = vshll.u32 %v6769, 16
    %v9029 = vrot.slane %v9027, 3
    %v9030 = vor.u32 %v9026, %v9029
    %v9031 = vsel %vm7295, %v9022, %v9030
    %v9032 = vshrl.u32 %v6925, 16
    %v9034 = vrot.slane %v9032, 2
    %v9035 = vshll.u32 %v6925, 16
    %v9037 = vrot.slane %v9035, 3
    %v9038 = vor.u32 %v9034, %v9037
    %v9039 = vshrl.u32 %v6927, 16
    %v9041 = vrot.slane %v9039, 2
    %v9042 = vshll.u32 %v6927, 16
    %v9044 = vrot.slane %v9042, 3
    %v9045 = vor.u32 %v9041, %v9044
    %v9046 = vsel %vm7295, %v9038, %v9045
    %v9047 = vshrl.u32 %v7085, 16
    %v9049 = vrot.slane %v9047, 2
    %v9050 = vshll.u32 %v7085, 16
    %v9052 = vrot.slane %v9050, 3
    %v9053 = vor.u32 %v9049, %v9052
    %v9054 = vshrl.u32 %v7087, 16
    %v9056 = vrot.slane %v9054, 2
    %v9057 = vshll.u32 %v7087, 16
    %v9059 = vrot.slane %v9057, 3
    %v9060 = vor.u32 %v9056, %v9059
    %v9061 = vsel %vm7295, %v9053, %v9060
    %v9062 = vshrl.u32 %v7273, 16
    %v9064 = vrot.slane %v9062, 2
    %v9065 = vshll.u32 %v7273, 16
    %v9067 = vrot.slane %v9065, 3
    %v9068 = vor.u32 %v9064, %v9067
    %v9069 = vshrl.u32 %v7276, 16
    %v9071 = vrot.slane %v9069, 2
    %v9072 = vshll.u32 %v7276, 16
    %v9074 = vrot.slane %v9072, 3
    %v9075 = vor.u32 %v9071, %v9074
    %v9076 = vsel %vm7295, %v9068, %v9075
    %v9078 = vshrl.u32 %v6770, 16
    %v9080 = vrot.slane %v9078, 2
    %v9081 = vshll.u32 %v6770, 16
    %v9083 = vrot.slane %v9081, 3
    %v9084 = vor.u32 %v9080, %v9083
    %v9086 = vshrl.u32 %v6772, 16
    %v9088 = vrot.slane %v9086, 2
    %v9089 = vshll.u32 %v6772, 16
    %v9091 = vrot.slane %v9089, 3
    %v9092 = vor.u32 %v9088, %v9091
    %v9093 = vsel %vm7295, %v9084, %v9092
    %v9094 = vshrl.u32 %v6930, 16
    %v9096 = vrot.slane %v9094, 2
    %v9097 = vshll.u32 %v6930, 16
    %v9099 = vrot.slane %v9097, 3
    %v9100 = vor.u32 %v9096, %v9099
    %v9101 = vshrl.u32 %v6932, 16
    %v9103 = vrot.slane %v9101, 2
    %v9104 = vshll.u32 %v6932, 16
    %v9106 = vrot.slane %v9104, 3
    %v9107 = vor.u32 %v9103, %v9106
    %v9108 = vsel %vm7295, %v9100, %v9107
    %v9109 = vshrl.u32 %v7090, 16
    %v9111 = vrot.slane %v9109, 2
    %v9112 = vshll.u32 %v7090, 16
    %v9114 = vrot.slane %v9112, 3
    %v9115 = vor.u32 %v9111, %v9114
    %v9116 = vshrl.u32 %v7092, 16
    %v9118 = vrot.slane %v9116, 2
    %v9119 = vshll.u32 %v7092, 16
    %v9121 = vrot.slane %v9119, 3
    %v9122 = vor.u32 %v9118, %v9121
    %v9123 = vsel %vm7295, %v9115, %v9122
    %v9124 = vshrl.u32 %v7279, 16
    %v9126 = vrot.slane %v9124, 2
    %v9127 = vshll.u32 %v7279, 16
    %v9129 = vrot.slane %v9127, 3
    %v9130 = vor.u32 %v9126, %v9129
    %v9131 = vshrl.u32 %v7282, 16
    %v9133 = vrot.slane %v9131, 2
    %v9134 = vshll.u32 %v7282, 16
    %v9136 = vrot.slane %v9134, 3
    %v9137 = vor.u32 %v9133, %v9136
    %v9138 = vsel %vm7295, %v9130, %v9137
    %v9140 = vshrl.u32 %v6773, 16
    %v9142 = vrot.slane %v9140, 2
    %v9143 = vshll.u32 %v6773, 16
    %v9145 = vrot.slane %v9143, 3
    %v9146 = vor.u32 %v9142, %v9145
    %v9148 = vshrl.u32 %v6775, 16
    %v9150 = vrot.slane %v9148, 2
    %v9151 = vshll.u32 %v6775, 16
    %v9153 = vrot.slane %v9151, 3
    %v9154 = vor.u32 %v9150, %v9153
    %v9155 = vsel %vm7295, %v9146, %v9154
    %v9156 = vshrl.u32 %v6935, 16
    %v9158 = vrot.slane %v9156, 2
    %v9159 = vshll.u32 %v6935, 16
    %v9161 = vrot.slane %v9159, 3
    %v9162 = vor.u32 %v9158, %v9161
    %v9163 = vshrl.u32 %v6937, 16
    %v9165 = vrot.slane %v9163, 2
    %v9166 = vshll.u32 %v6937, 16
    %v9168 = vrot.slane %v9166, 3
    %v9169 = vor.u32 %v9165, %v9168
    %v9170 = vsel %vm7295, %v9162, %v9169
    %v9171 = vshrl.u32 %v7095, 16
    %v9173 = vrot.slane %v9171, 2
    %v9174 = vshll.u32 %v7095, 16
    %v9176 = vrot.slane %v9174, 3
    %v9177 = vor.u32 %v9173, %v9176
    %v9178 = vshrl.u32 %v7097, 16
    %v9180 = vrot.slane %v9178, 2
    %v9181 = vshll.u32 %v7097, 16
    %v9183 = vrot.slane %v9181, 3
    %v9184 = vor.u32 %v9180, %v9183
    %v9185 = vsel %vm7295, %v9177, %v9184
    %v9186 = vshrl.u32 %v7285, 16
    %v9188 = vrot.slane %v9186, 2
    %v9189 = vshll.u32 %v7285, 16
    %v9191 = vrot.slane %v9189, 3
    %v9192 = vor.u32 %v9188, %v9191
    %v9193 = vshrl.u32 %v7288, 16
    %v9195 = vrot.slane %v9193, 2
    %v9196 = vshll.u32 %v7288, 16
    %v9198 = vrot.slane %v9196, 3
    %v9199 = vor.u32 %v9195, %v9198
    %v9200 = vsel %vm7295, %v9192, %v9199
    %v9202 = vshrl.u32 %v6776, 16
    %v9204 = vrot.slane %v9202, 2
    %v9205 = vshll.u32 %v6776, 16
    %v9207 = vrot.slane %v9205, 3
    %v9208 = vor.u32 %v9204, %v9207
    %v9210 = vshrl.u32 %v6778, 16
    %v9212 = vrot.slane %v9210, 2
    %v9213 = vshll.u32 %v6778, 16
    %v9215 = vrot.slane %v9213, 3
    %v9216 = vor.u32 %v9212, %v9215
    %v9217 = vsel %vm7295, %v9208, %v9216
    %v9218 = vshrl.u32 %v6940, 16
    %v9220 = vrot.slane %v9218, 2
    %v9221 = vshll.u32 %v6940, 16
    %v9223 = vrot.slane %v9221, 3
    %v9224 = vor.u32 %v9220, %v9223
    %v9225 = vshrl.u32 %v6942, 16
    %v9227 = vrot.slane %v9225, 2
    %v9228 = vshll.u32 %v6942, 16
    %v9230 = vrot.slane %v9228, 3
    %v9231 = vor.u32 %v9227, %v9230
    %v9232 = vsel %vm7295, %v9224, %v9231
    %v9233 = vshrl.u32 %v7100, 16
    %v9235 = vrot.slane %v9233, 2
    %v9236 = vshll.u32 %v7100, 16
    %v9238 = vrot.slane %v9236, 3
    %v9239 = vor.u32 %v9235, %v9238
    %v9240 = vshrl.u32 %v7102, 16
    %v9242 = vrot.slane %v9240, 2
    %v9243 = vshll.u32 %v7102, 16
    %v9245 = vrot.slane %v9243, 3
    %v9246 = vor.u32 %v9242, %v9245
    %v9247 = vsel %vm7295, %v9239, %v9246
    %v9248 = vshrl.u32 %v7291, 16
    %v9250 = vrot.slane %v9248, 2
    %v9251 = vshll.u32 %v7291, 16
    %v9253 = vrot.slane %v9251, 3
    %v9254 = vor.u32 %v9250, %v9253
    %v9255 = vshrl.u32 %v7294, 16
    %v9257 = vrot.slane %v9255, 2
    %v9258 = vshll.u32 %v7294, 16
    %v9260 = vrot.slane %v9258, 3
    %v9261 = vor.u32 %v9257, %v9260
    %v9262 = vsel %vm7295, %v9254, %v9261
    %v9264 = vshrl.u32 %v6779, 16
    %v9266 = vrot.slane %v9264, 2
    %v9267 = vshll.u32 %v6779, 16
    %v9269 = vrot.slane %v9267, 3
    %v9270 = vor.u32 %v9266, %v9269
    %v9272 = vshrl.u32 %v6781, 16
    %v9274 = vrot.slane %v9272, 2
    %v9275 = vshll.u32 %v6781, 16
    %v9277 = vrot.slane %v9275, 3
    %v9278 = vor.u32 %v9274, %v9277
    %v9279 = vsel %vm7295, %v9270, %v9278
    %v9376 = vld [vmem:[%s6] sm:$0xf]
    %v9377 = vld [vmem:[%s6 + $0x4] sm:$0xf]
    %v9378 = vld [vmem:[%s6 + $0x8] sm:$0xf]
    %v9379 = vld [vmem:[%s6 + $0xc] sm:$0xf]
    %v9380 = vld [vmem:[%s6 + $0x10] sm:$0xf]
    %v9381 = vld [vmem:[%s6 + $0x14] sm:$0xf]
    %v9382 = vld [vmem:[%s6 + $0x18] sm:$0xf]
    %v9383 = vld [vmem:[%s6 + $0x1c] sm:$0xf]
    %v9384 = vld [vmem:[%s6 + $0x20] sm:$0xf]
    %v9385 = vld [vmem:[%s6 + $0x24] sm:$0xf]
    %v9386 = vld [vmem:[%s6 + $0x28] sm:$0xf]
    %v9387 = vld [vmem:[%s6 + $0x2c] sm:$0xf]
    %v9388 = vld [vmem:[%s6 + $0x30] sm:$0xf]
    %v9389 = vld [vmem:[%s6 + $0x34] sm:$0xf]
    %v9390 = vld [vmem:[%s6 + $0x38] sm:$0xf]
    %v9391 = vld [vmem:[%s6 + $0x3c] sm:$0xf]
    %v9392 = vld [vmem:[%s6 + $0x40] sm:$0xf]
    %v9393 = vld [vmem:[%s6 + $0x44] sm:$0xf]
    %v9394 = vld [vmem:[%s6 + $0x48] sm:$0xf]
    %v9395 = vld [vmem:[%s6 + $0x4c] sm:$0xf]
    %v9396 = vld [vmem:[%s6 + $0x50] sm:$0xf]
    %v9397 = vld [vmem:[%s6 + $0x54] sm:$0xf]
    %v9398 = vld [vmem:[%s6 + $0x58] sm:$0xf]
    %v9399 = vld [vmem:[%s6 + $0x5c] sm:$0xf]
    %v9400 = vld [vmem:[%s6 + $0x60] sm:$0xf]
    %v9401 = vld [vmem:[%s6 + $0x64] sm:$0xf]
    %v9402 = vld [vmem:[%s6 + $0x68] sm:$0xf]
    %v9403 = vld [vmem:[%s6 + $0x6c] sm:$0xf]
    %v9404 = vld [vmem:[%s6 + $0x70] sm:$0xf]
    %v9405 = vld [vmem:[%s6 + $0x74] sm:$0xf]
    %v9406 = vld [vmem:[%s6 + $0x78] sm:$0xf]
    %v9407 = vld [vmem:[%s6 + $0x7c] sm:$0xf]
    %v9408 = vld [vmem:[%s6 + $0x80] sm:$0xf]
    %v9409 = vld [vmem:[%s6 + $0x84] sm:$0xf]
    %v9410 = vld [vmem:[%s6 + $0x88] sm:$0xf]
    %v9411 = vld [vmem:[%s6 + $0x8c] sm:$0xf]
    %v9412 = vld [vmem:[%s6 + $0x90] sm:$0xf]
    %v9413 = vld [vmem:[%s6 + $0x94] sm:$0xf]
    %v9414 = vld [vmem:[%s6 + $0x98] sm:$0xf]
    %v9415 = vld [vmem:[%s6 + $0x9c] sm:$0xf]
    %v9416 = vld [vmem:[%s6 + $0xa0] sm:$0xf]
    %v9417 = vld [vmem:[%s6 + $0xa4] sm:$0xf]
    %v9418 = vld [vmem:[%s6 + $0xa8] sm:$0xf]
    %v9419 = vld [vmem:[%s6 + $0xac] sm:$0xf]
    %v9420 = vld [vmem:[%s6 + $0xb0] sm:$0xf]
    %v9421 = vld [vmem:[%s6 + $0xb4] sm:$0xf]
    %v9422 = vld [vmem:[%s6 + $0xb8] sm:$0xf]
    %v9423 = vld [vmem:[%s6 + $0xbc] sm:$0xf]
    %v9424 = vld [vmem:[%s6 + $0xc0] sm:$0xf]
    %v9425 = vld [vmem:[%s6 + $0xc4] sm:$0xf]
    %v9426 = vld [vmem:[%s6 + $0xc8] sm:$0xf]
    %v9427 = vld [vmem:[%s6 + $0xcc] sm:$0xf]
    %v9428 = vld [vmem:[%s6 + $0xd0] sm:$0xf]
    %v9429 = vld [vmem:[%s6 + $0xd4] sm:$0xf]
    %v9430 = vld [vmem:[%s6 + $0xd8] sm:$0xf]
    %v9431 = vld [vmem:[%s6 + $0xdc] sm:$0xf]
    %v9432 = vld [vmem:[%s7] sm:$0x1]
    %v9434 = vlaneseq
    %v9435 = vshrl.u32 %v9434, 7
    %v9436 = vsub.s32 0, %v9435
    %v9437 = vrot.slane %v9432, %v9436
    %v9495 = vunpack.c.l.b16 %v9376
    %v9496 = vunpack.c.l.b16 %v9377
    %v9497 = vunpack.c.l.b16 %v9378
    %v9498 = vunpack.c.l.b16 %v9379
    %v9499 = vunpack.c.l.b16 %v9380
    %v9500 = vunpack.c.l.b16 %v9381
    %v9501 = vunpack.c.l.b16 %v9382
    %v9502 = vunpack.c.l.b16 %v9383
    %v9503 = vunpack.c.l.b16 %v9384
    %v9504 = vunpack.c.l.b16 %v9385
    %v9505 = vunpack.c.l.b16 %v9386
    %v9506 = vunpack.c.l.b16 %v9387
    %v9507 = vunpack.c.l.b16 %v9388
    %v9508 = vunpack.c.l.b16 %v9389
    %v9509 = vunpack.c.l.b16 %v9390
    %v9510 = vunpack.c.l.b16 %v9391
    %v9511 = vunpack.c.l.b16 %v9392
    %v9512 = vunpack.c.l.b16 %v9393
    %v9513 = vunpack.c.l.b16 %v9394
    %v9514 = vunpack.c.l.b16 %v9395
    %v9515 = vunpack.c.l.b16 %v9396
    %v9516 = vunpack.c.l.b16 %v9397
    %v9517 = vunpack.c.l.b16 %v9398
    %v9518 = vunpack.c.l.b16 %v9399
    %v9519 = vunpack.c.l.b16 %v9400
    %v9520 = vunpack.c.l.b16 %v9401
    %v9521 = vunpack.c.l.b16 %v9402
    %v9522 = vunpack.c.l.b16 %v9403
    %v9523 = vunpack.c.l.b16 %v9404
    %v9524 = vunpack.c.l.b16 %v9405
    %v9525 = vunpack.c.l.b16 %v9406
    %v9526 = vunpack.c.l.b16 %v9407
    %v9527 = vunpack.c.l.b16 %v9408
    %v9528 = vunpack.c.l.b16 %v9409
    %v9529 = vunpack.c.l.b16 %v9410
    %v9530 = vunpack.c.l.b16 %v9411
    %v9531 = vunpack.c.l.b16 %v9412
    %v9532 = vunpack.c.l.b16 %v9413
    %v9533 = vunpack.c.l.b16 %v9414
    %v9534 = vunpack.c.l.b16 %v9415
    %v9535 = vunpack.c.l.b16 %v9416
    %v9536 = vunpack.c.l.b16 %v9417
    %v9537 = vunpack.c.l.b16 %v9418
    %v9538 = vunpack.c.l.b16 %v9419
    %v9539 = vunpack.c.l.b16 %v9420
    %v9540 = vunpack.c.l.b16 %v9421
    %v9541 = vunpack.c.l.b16 %v9422
    %v9542 = vunpack.c.l.b16 %v9423
    %v9543 = vunpack.c.l.b16 %v9424
    %v9544 = vunpack.c.l.b16 %v9425
    %v9545 = vunpack.c.l.b16 %v9426
    %v9546 = vunpack.c.l.b16 %v9427
    %v9547 = vunpack.c.l.b16 %v9428
    %v9548 = vunpack.c.l.b16 %v9429
    %v9549 = vunpack.c.l.b16 %v9430
    %v9550 = vunpack.c.l.b16 %v9431
    %v9551 = vpack.c.b16 %v9496, %v9495
    %v9552 = vpack.c.b16 %v9498, %v9497
    %v9553 = vpack.c.b16 %v9500, %v9499
    %v9554 = vpack.c.b16 %v9502, %v9501
    %v9555 = vpack.c.b16 %v9504, %v9503
    %v9556 = vpack.c.b16 %v9506, %v9505
    %v9557 = vpack.c.b16 %v9508, %v9507
    %v9558 = vpack.c.b16 %v9510, %v9509
    %v9559 = vpack.c.b16 %v9512, %v9511
    %v9560 = vpack.c.b16 %v9514, %v9513
    %v9561 = vpack.c.b16 %v9516, %v9515
    %v9562 = vpack.c.b16 %v9518, %v9517
    %v9563 = vpack.c.b16 %v9520, %v9519
    %v9564 = vpack.c.b16 %v9522, %v9521
    %v9565 = vpack.c.b16 %v9524, %v9523
    %v9566 = vpack.c.b16 %v9526, %v9525
    %v9567 = vpack.c.b16 %v9528, %v9527
    %v9568 = vpack.c.b16 %v9530, %v9529
    %v9569 = vpack.c.b16 %v9532, %v9531
    %v9570 = vpack.c.b16 %v9534, %v9533
    %v9571 = vpack.c.b16 %v9536, %v9535
    %v9572 = vpack.c.b16 %v9538, %v9537
    %v9573 = vpack.c.b16 %v9540, %v9539
    %v9574 = vpack.c.b16 %v9542, %v9541
    %v9575 = vpack.c.b16 %v9544, %v9543
    %v9576 = vpack.c.b16 %v9546, %v9545
    %v9577 = vpack.c.b16 %v9548, %v9547
    %v9578 = vpack.c.b16 %v9550, %v9549
    %v9608 = vsel %vm6782, %v7357, 0
    %v9611 = vsel %vm6782, %v7419, 0
    %v9614 = vsel %vm6782, %v7481, 0
    %v9617 = vsel %vm6782, %v7543, 0
    %v9620 = vsel %vm6782, %v7605, 0
    %v9623 = vsel %vm6782, %v7667, 0
    %v9626 = vsel %vm6782, %v7729, 0
    %v9629 = vsel %vm6782, %v7791, 0
    %v9632 = vsel %vm6782, %v7853, 0
    %v9635 = vsel %vm6782, %v7915, 0
    %v9638 = vsel %vm6782, %v7977, 0
    %v9641 = vsel %vm6782, %v8039, 0
    %v9644 = vsel %vm6782, %v8101, 0
    %v9647 = vsel %vm6782, %v8163, 0
    %v9650 = vsel %vm6782, %v8225, 0
    %v9653 = vsel %vm6782, %v8287, 0
    %v9656 = vsel %vm6782, %v8349, 0
    %v9659 = vsel %vm6782, %v8411, 0
    %v9662 = vsel %vm6782, %v8473, 0
    %v9665 = vsel %vm6782, %v8535, 0
    %v9668 = vsel %vm6782, %v8597, 0
    %v9671 = vsel %vm6782, %v8659, 0
    %v9674 = vsel %vm6782, %v8721, 0
    %v9677 = vsel %vm6782, %v8783, 0
    %v9680 = vsel %vm6782, %v8845, 0
    %v9683 = vsel %vm6782, %v8907, 0
    %v9686 = vsel %vm6782, %v8969, 0
    %v9689 = vsel %vm6782, %v9031, 0
    %v9692 = vsel %vm6782, %v9093, 0
    %v9695 = vsel %vm6782, %v9155, 0
    %v9698 = vsel %vm6782, %v9217, 0
    %v9701 = vsel %vm6782, %v9279, 0
    %9703 = vmatprep.subr.bf16.mxu0 0
    %9704 = vmatpush1.bf16.msra.mxu0 %v9558
    %9705 = vmatprep.subr.bf16.mxu0 0
    %9706 = vmatpush1.bf16.msra.mxu0 %v9557
    %9707 = vmatprep.subr.bf16.mxu0 0
    %9708 = vmatpush1.bf16.msra.mxu0 %v9556
    %9709 = vmatprep.subr.bf16.mxu0 0
    %9710 = vmatpush1.bf16.msra.mxu0 %v9555
    %9711 = vmatprep.subr.bf16.mxu0 0
    %9712 = vmatpush1.bf16.msra.mxu0 %v9554
    %9713 = vmatprep.subr.bf16.mxu0 0
    %9714 = vmatpush1.bf16.msra.mxu0 %v9553
    %9715 = vmatprep.subr.bf16.mxu0 0
    %9716 = vmatpush1.bf16.msra.mxu0 %v9552
    %9717 = vmatprep.subr.bf16.mxu0 0
    %9718 = vmatpush1.bf16.msra.mxu0 %v9551
    %9719 = vmatprep.subr.bf16.mxu0 0
    %9720 = vmatpush2.bf16.msra.mxu0 %v9566
    %9721 = vmatprep.subr.bf16.mxu0 0
    %9722 = vmatpush2.bf16.msra.mxu0 %v9565
    %9723 = vmatprep.subr.bf16.mxu0 0
    %9724 = vmatpush2.bf16.msra.mxu0 %v9564
    %9725 = vmatprep.subr.bf16.mxu0 0
    %9726 = vmatpush2.bf16.msra.mxu0 %v9563
    %9727 = vmatprep.subr.bf16.mxu0 0
    %9728 = vmatpush2.bf16.msra.mxu0 %v9562
    %9729 = vmatprep.subr.bf16.mxu0 0
    %9730 = vmatpush2.bf16.msra.mxu0 %v9561
    %9731 = vmatprep.subr.bf16.mxu0 0
    %9732 = vmatpush2.bf16.msra.mxu0 %v9560
    %9733 = vmatprep.subr.bf16.mxu0 0
    %9734 = vmatpush2.bf16.msra.mxu0 %v9559
    %9735 = vmatprep.mubr.bf16.mxu0 %v7325
    %9736 = vmatmul.mubr.bf16.gmra.mxu0 %v7310
    %v9737 = vpop.f32.mrf.mxu0
    %v9738 = vadd.f32 %v9437, %v9737
    %v9739 = vpop.f32.mrf.mxu0
    %v9740 = vpop.f32.mrf.mxu0
    %v9741 = vadd.f32 %v9437, %v9740
    %v9742 = vpop.f32.mrf.mxu0
    %9743 = vmatprep.mubr.bf16.mxu0 %v7387
    %9744 = vmatmul.mubr.bf16.gmra.mxu0 %v7372
    %v9745 = vpop.f32.mrf.mxu0
    %v9746 = vadd.f32 %v9437, %v9745
    %v9747 = vpop.f32.mrf.mxu0
    %v9748 = vpop.f32.mrf.mxu0
    %v9749 = vadd.f32 %v9437, %v9748
    %v9750 = vpop.f32.mrf.mxu0
    %9751 = vmatprep.mubr.bf16.mxu0 %v7449
    %9752 = vmatmul.mubr.bf16.gmra.mxu0 %v7434
    %v9753 = vpop.f32.mrf.mxu0
    %v9754 = vadd.f32 %v9437, %v9753
    %v9755 = vpop.f32.mrf.mxu0
    %v9756 = vpop.f32.mrf.mxu0
    %v9757 = vadd.f32 %v9437, %v9756
    %v9758 = vpop.f32.mrf.mxu0
    %9759 = vmatprep.mubr.bf16.mxu0 %v7511
    %9760 = vmatmul.mubr.bf16.gmra.mxu0 %v7496
    %v9761 = vpop.f32.mrf.mxu0
    %v9762 = vadd.f32 %v9437, %v9761
    %v9763 = vpop.f32.mrf.mxu0
    %v9764 = vpop.f32.mrf.mxu0
    %v9765 = vadd.f32 %v9437, %v9764
    %v9766 = vpop.f32.mrf.mxu0
    %9767 = vmatprep.mubr.bf16.mxu0 %v7573
    %9768 = vmatmul.mubr.bf16.gmra.mxu0 %v7558
    %v9769 = vpop.f32.mrf.mxu0
    %v9770 = vadd.f32 %v9437, %v9769
    %v9771 = vpop.f32.mrf.mxu0
    %v9772 = vpop.f32.mrf.mxu0
    %v9773 = vadd.f32 %v9437, %v9772
    %v9774 = vpop.f32.mrf.mxu0
    %9775 = vmatprep.mubr.bf16.mxu0 %v7635
    %9776 = vmatmul.mubr.bf16.gmra.mxu0 %v7620
    %v9777 = vpop.f32.mrf.mxu0
    %v9778 = vadd.f32 %v9437, %v9777
    %v9779 = vpop.f32.mrf.mxu0
    %v9780 = vpop.f32.mrf.mxu0
    %v9781 = vadd.f32 %v9437, %v9780
    %v9782 = vpop.f32.mrf.mxu0
    %9783 = vmatprep.mubr.bf16.mxu0 %v7697
    %9784 = vmatmul.mubr.bf16.gmra.mxu0 %v7682
    %v9785 = vpop.f32.mrf.mxu0
    %v9786 = vadd.f32 %v9437, %v9785
    %v9787 = vpop.f32.mrf.mxu0
    %v9788 = vpop.f32.mrf.mxu0
    %v9789 = vadd.f32 %v9437, %v9788
    %v9790 = vpop.f32.mrf.mxu0
    %9791 = vmatprep.mubr.bf16.mxu0 %v7759
    %9792 = vmatmul.mubr.bf16.gmra.mxu0 %v7744
    %v9793 = vpop.f32.mrf.mxu0
    %v9794 = vadd.f32 %v9437, %v9793
    %v9795 = vpop.f32.mrf.mxu0
    %v9796 = vpop.f32.mrf.mxu0
    %v9797 = vadd.f32 %v9437, %v9796
    %v9798 = vpop.f32.mrf.mxu0
    %9799 = vmatprep.mubr.bf16.mxu0 %v7821
    %9800 = vmatmul.mubr.bf16.gmra.mxu0 %v7806
    %v9801 = vpop.f32.mrf.mxu0
    %v9802 = vadd.f32 %v9437, %v9801
    %v9803 = vpop.f32.mrf.mxu0
    %v9804 = vpop.f32.mrf.mxu0
    %v9805 = vadd.f32 %v9437, %v9804
    %v9806 = vpop.f32.mrf.mxu0
    %9807 = vmatprep.mubr.bf16.mxu0 %v7883
    %9808 = vmatmul.mubr.bf16.gmra.mxu0 %v7868
    %v9809 = vpop.f32.mrf.mxu0
    %v9810 = vadd.f32 %v9437, %v9809
    %v9811 = vpop.f32.mrf.mxu0
    %v9812 = vpop.f32.mrf.mxu0
    %v9813 = vadd.f32 %v9437, %v9812
    %v9814 = vpop.f32.mrf.mxu0
    %9815 = vmatprep.mubr.bf16.mxu0 %v7945
    %9816 = vmatmul.mubr.bf16.gmra.mxu0 %v7930
    %v9817 = vpop.f32.mrf.mxu0
    %v9818 = vadd.f32 %v9437, %v9817
    %v9819 = vpop.f32.mrf.mxu0
    %v9820 = vpop.f32.mrf.mxu0
    %v9821 = vadd.f32 %v9437, %v9820
    %v9822 = vpop.f32.mrf.mxu0
    %9823 = vmatprep.mubr.bf16.mxu0 %v8007
    %9824 = vmatmul.mubr.bf16.gmra.mxu0 %v7992
    %v9825 = vpop.f32.mrf.mxu0
    %v9826 = vadd.f32 %v9437, %v9825
    %v9827 = vpop.f32.mrf.mxu0
    %v9828 = vpop.f32.mrf.mxu0
    %v9829 = vadd.f32 %v9437, %v9828
    %v9830 = vpop.f32.mrf.mxu0
    %9831 = vmatprep.mubr.bf16.mxu0 %v8069
    %9832 = vmatmul.mubr.bf16.gmra.mxu0 %v8054
    %v9833 = vpop.f32.mrf.mxu0
    %v9834 = vadd.f32 %v9437, %v9833
    %v9835 = vpop.f32.mrf.mxu0
    %v9836 = vpop.f32.mrf.mxu0
    %v9837 = vadd.f32 %v9437, %v9836
    %v9838 = vpop.f32.mrf.mxu0
    %9839 = vmatprep.mubr.bf16.mxu0 %v8131
    %9840 = vmatmul.mubr.bf16.gmra.mxu0 %v8116
    %v9841 = vpop.f32.mrf.mxu0
    %v9842 = vadd.f32 %v9437, %v9841
    %v9843 = vpop.f32.mrf.mxu0
    %v9844 = vpop.f32.mrf.mxu0
    %v9845 = vadd.f32 %v9437, %v9844
    %v9846 = vpop.f32.mrf.mxu0
    %9847 = vmatprep.mubr.bf16.mxu0 %v8193
    %9848 = vmatmul.mubr.bf16.gmra.mxu0 %v8178
    %v9849 = vpop.f32.mrf.mxu0
    %v9850 = vadd.f32 %v9437, %v9849
    %v9851 = vpop.f32.mrf.mxu0
    %v9852 = vpop.f32.mrf.mxu0
    %v9853 = vadd.f32 %v9437, %v9852
    %v9854 = vpop.f32.mrf.mxu0
    %9855 = vmatprep.mubr.bf16.mxu0 %v8255
    %9856 = vmatmul.mubr.bf16.gmra.mxu0 %v8240
    %v9857 = vpop.f32.mrf.mxu0
    %v9858 = vadd.f32 %v9437, %v9857
    %v9859 = vpop.f32.mrf.mxu0
    %v9860 = vpop.f32.mrf.mxu0
    %v9861 = vadd.f32 %v9437, %v9860
    %v9862 = vpop.f32.mrf.mxu0
    %9863 = vmatprep.mubr.bf16.mxu0 %v8317
    %9864 = vmatmul.mubr.bf16.gmra.mxu0 %v8302
    %v9865 = vpop.f32.mrf.mxu0
    %v9866 = vadd.f32 %v9437, %v9865
    %v9867 = vpop.f32.mrf.mxu0
    %v9868 = vpop.f32.mrf.mxu0
    %v9869 = vadd.f32 %v9437, %v9868
    %v9870 = vpop.f32.mrf.mxu0
    %9871 = vmatprep.mubr.bf16.mxu0 %v8379
    %9872 = vmatmul.mubr.bf16.gmra.mxu0 %v8364
    %v9873 = vpop.f32.mrf.mxu0
    %v9874 = vadd.f32 %v9437, %v9873
    %v9875 = vpop.f32.mrf.mxu0
    %v9876 = vpop.f32.mrf.mxu0
    %v9877 = vadd.f32 %v9437, %v9876
    %v9878 = vpop.f32.mrf.mxu0
    %9879 = vmatprep.mubr.bf16.mxu0 %v8441
    %9880 = vmatmul.mubr.bf16.gmra.mxu0 %v8426
    %v9881 = vpop.f32.mrf.mxu0
    %v9882 = vadd.f32 %v9437, %v9881
    %v9883 = vpop.f32.mrf.mxu0
    %v9884 = vpop.f32.mrf.mxu0
    %v9885 = vadd.f32 %v9437, %v9884
    %v9886 = vpop.f32.mrf.mxu0
    %9887 = vmatprep.mubr.bf16.mxu0 %v8503
    %9888 = vmatmul.mubr.bf16.gmra.mxu0 %v8488
    %v9889 = vpop.f32.mrf.mxu0
    %v9890 = vadd.f32 %v9437, %v9889
    %v9891 = vpop.f32.mrf.mxu0
    %v9892 = vpop.f32.mrf.mxu0
    %v9893 = vadd.f32 %v9437, %v9892
    %v9894 = vpop.f32.mrf.mxu0
    %9895 = vmatprep.mubr.bf16.mxu0 %v8565
    %9896 = vmatmul.mubr.bf16.gmra.mxu0 %v8550
    %v9897 = vpop.f32.mrf.mxu0
    %v9898 = vadd.f32 %v9437, %v9897
    %v9899 = vpop.f32.mrf.mxu0
    %v9900 = vpop.f32.mrf.mxu0
    %v9901 = vadd.f32 %v9437, %v9900
    %v9902 = vpop.f32.mrf.mxu0
    %9903 = vmatprep.mubr.bf16.mxu0 %v8627
    %9904 = vmatmul.mubr.bf16.gmra.mxu0 %v8612
    %v9905 = vpop.f32.mrf.mxu0
    %v9906 = vadd.f32 %v9437, %v9905
    %v9907 = vpop.f32.mrf.mxu0
    %v9908 = vpop.f32.mrf.mxu0
    %v9909 = vadd.f32 %v9437, %v9908
    %v9910 = vpop.f32.mrf.mxu0
    %9911 = vmatprep.mubr.bf16.mxu0 %v8689
    %9912 = vmatmul.mubr.bf16.gmra.mxu0 %v8674
    %v9913 = vpop.f32.mrf.mxu0
    %v9914 = vadd.f32 %v9437, %v9913
    %v9915 = vpop.f32.mrf.mxu0
    %v9916 = vpop.f32.mrf.mxu0
    %v9917 = vadd.f32 %v9437, %v9916
    %v9918 = vpop.f32.mrf.mxu0
    %9919 = vmatprep.mubr.bf16.mxu0 %v8751
    %9920 = vmatmul.mubr.bf16.gmra.mxu0 %v8736
    %v9921 = vpop.f32.mrf.mxu0
    %v9922 = vadd.f32 %v9437, %v9921
    %v9923 = vpop.f32.mrf.mxu0
    %v9924 = vpop.f32.mrf.mxu0
    %v9925 = vadd.f32 %v9437, %v9924
    %v9926 = vpop.f32.mrf.mxu0
    %9927 = vmatprep.mubr.bf16.mxu0 %v8813
    %9928 = vmatmul.mubr.bf16.gmra.mxu0 %v8798
    %v9929 = vpop.f32.mrf.mxu0
    %v9930 = vadd.f32 %v9437, %v9929
    %v9931 = vpop.f32.mrf.mxu0
    %v9932 = vpop.f32.mrf.mxu0
    %v9933 = vadd.f32 %v9437, %v9932
    %v9934 = vpop.f32.mrf.mxu0
    %9935 = vmatprep.mubr.bf16.mxu0 %v8875
    %9936 = vmatmul.mubr.bf16.gmra.mxu0 %v8860
    %v9937 = vpop.f32.mrf.mxu0
    %v9938 = vadd.f32 %v9437, %v9937
    %v9939 = vpop.f32.mrf.mxu0
    %v9940 = vpop.f32.mrf.mxu0
    %v9941 = vadd.f32 %v9437, %v9940
    %v9942 = vpop.f32.mrf.mxu0
    %9943 = vmatprep.mubr.bf16.mxu0 %v8937
    %9944 = vmatmul.mubr.bf16.gmra.mxu0 %v8922
    %v9945 = vpop.f32.mrf.mxu0
    %v9946 = vadd.f32 %v9437, %v9945
    %v9947 = vpop.f32.mrf.mxu0
    %v9948 = vpop.f32.mrf.mxu0
    %v9949 = vadd.f32 %v9437, %v9948
    %v9950 = vpop.f32.mrf.mxu0
    %9951 = vmatprep.mubr.bf16.mxu0 %v8999
    %9952 = vmatmul.mubr.bf16.gmra.mxu0 %v8984
    %v9953 = vpop.f32.mrf.mxu0
    %v9954 = vadd.f32 %v9437, %v9953
    %v9955 = vpop.f32.mrf.mxu0
    %v9956 = vpop.f32.mrf.mxu0
    %v9957 = vadd.f32 %v9437, %v9956
    %v9958 = vpop.f32.mrf.mxu0
    %9959 = vmatprep.mubr.bf16.mxu0 %v9061
    %9960 = vmatmul.mubr.bf16.gmra.mxu0 %v9046
    %v9961 = vpop.f32.mrf.mxu0
    %v9962 = vadd.f32 %v9437, %v9961
    %v9963 = vpop.f32.mrf.mxu0
    %v9964 = vpop.f32.mrf.mxu0
    %v9965 = vadd.f32 %v9437, %v9964
    %v9966 = vpop.f32.mrf.mxu0
    %9967 = vmatprep.mubr.bf16.mxu0 %v9123
    %9968 = vmatmul.mubr.bf16.gmra.mxu0 %v9108
    %v9969 = vpop.f32.mrf.mxu0
    %v9970 = vadd.f32 %v9437, %v9969
    %v9971 = vpop.f32.mrf.mxu0
    %v9972 = vpop.f32.mrf.mxu0
    %v9973 = vadd.f32 %v9437, %v9972
    %v9974 = vpop.f32.mrf.mxu0
    %9975 = vmatprep.mubr.bf16.mxu0 %v9185
    %9976 = vmatmul.mubr.bf16.gmra.mxu0 %v9170
    %v9977 = vpop.f32.mrf.mxu0
    %v9978 = vadd.f32 %v9437, %v9977
    %v9979 = vpop.f32.mrf.mxu0
    %v9980 = vpop.f32.mrf.mxu0
    %v9981 = vadd.f32 %v9437, %v9980
    %v9982 = vpop.f32.mrf.mxu0
    %9983 = vmatprep.mubr.bf16.mxu0 %v9247
    %9984 = vmatmul.mubr.bf16.gmra.mxu0 %v9232
    %v9985 = vpop.f32.mrf.mxu0
    %v9986 = vadd.f32 %v9437, %v9985
    %v9987 = vpop.f32.mrf.mxu0
    %v9988 = vpop.f32.mrf.mxu0
    %v9989 = vadd.f32 %v9437, %v9988
    %v9990 = vpop.f32.mrf.mxu0
    %9991 = vdwg.mxu0
    %9992 = vmatprep.subr.bf16.mxu0 0
    %9993 = vmatpush1.bf16.msra.mxu0 %v9574
    %9994 = vmatprep.subr.bf16.mxu0 0
    %9995 = vmatpush1.bf16.msra.mxu0 %v9573
    %9996 = vmatprep.subr.bf16.mxu0 0
    %9997 = vmatpush1.bf16.msra.mxu0 %v9572
    %9998 = vmatprep.subr.bf16.mxu0 0
    %9999 = vmatpush1.bf16.msra.mxu0 %v9571
    %10000 = vmatprep.subr.bf16.mxu0 0
    %10001 = vmatpush1.bf16.msra.mxu0 %v9570
    %10002 = vmatprep.subr.bf16.mxu0 0
    %10003 = vmatpush1.bf16.msra.mxu0 %v9569
    %10004 = vmatprep.subr.bf16.mxu0 0
    %10005 = vmatpush1.bf16.msra.mxu0 %v9568
    %10006 = vmatprep.subr.bf16.mxu0 0
    %10007 = vmatpush1.bf16.msra.mxu0 %v9567
    %10008 = vmatprep.subr.bf16.mxu0 0
    %10009 = vmatpush2.bf16.msra.mxu0 0
    %10010 = vmatprep.subr.bf16.mxu0 0
    %10011 = vmatpush2.bf16.msra.mxu0 0
    %10012 = vmatprep.subr.bf16.mxu0 0
    %10013 = vmatpush2.bf16.msra.mxu0 0
    %10014 = vmatprep.subr.bf16.mxu0 0
    %10015 = vmatpush2.bf16.msra.mxu0 0
    %10016 = vmatprep.subr.bf16.mxu0 0
    %10017 = vmatpush2.bf16.msra.mxu0 %v9578
    %10018 = vmatprep.subr.bf16.mxu0 0
    %10019 = vmatpush2.bf16.msra.mxu0 %v9577
    %10020 = vmatprep.subr.bf16.mxu0 0
    %10021 = vmatpush2.bf16.msra.mxu0 %v9576
    %10022 = vmatprep.subr.bf16.mxu0 0
    %10023 = vmatpush2.bf16.msra.mxu0 %v9575
    %10024 = vmatprep.mubr.bf16.mxu0 %v9608
    %10025 = vmatmul.mubr.bf16.gmra.mxu0 %v7340
    %v10026 = vpop.f32.mrf.mxu0
    %v10027 = vadd.f32 %v9738, %v10026
    %v10028 = vpop.f32.mrf.mxu0
    %v10029 = vpop.f32.mrf.mxu0
    %v10030 = vadd.f32 %v9741, %v10029
    %v10031 = vpop.f32.mrf.mxu0
    %10032 = vmatprep.mubr.bf16.mxu0 %v9611
    %10033 = vmatmul.mubr.bf16.gmra.mxu0 %v7402
    %v10034 = vpop.f32.mrf.mxu0
    %v10035 = vadd.f32 %v9746, %v10034
    %v10036 = vpop.f32.mrf.mxu0
    %v10037 = vpop.f32.mrf.mxu0
    %v10038 = vadd.f32 %v9749, %v10037
    %v10039 = vpop.f32.mrf.mxu0
    %10040 = vmatprep.mubr.bf16.mxu0 %v9614
    %10041 = vmatmul.mubr.bf16.gmra.mxu0 %v7464
    %v10042 = vpop.f32.mrf.mxu0
    %v10043 = vadd.f32 %v9754, %v10042
    %v10044 = vpop.f32.mrf.mxu0
    %v10045 = vpop.f32.mrf.mxu0
    %v10046 = vadd.f32 %v9757, %v10045
    %v10047 = vpop.f32.mrf.mxu0
    %10048 = vmatprep.mubr.bf16.mxu0 %v9617
    %10049 = vmatmul.mubr.bf16.gmra.mxu0 %v7526
    %v10050 = vpop.f32.mrf.mxu0
    %v10051 = vadd.f32 %v9762, %v10050
    %v10052 = vpop.f32.mrf.mxu0
    %v10053 = vpop.f32.mrf.mxu0
    %v10054 = vadd.f32 %v9765, %v10053
    %v10055 = vpop.f32.mrf.mxu0
    %10056 = vmatprep.mubr.bf16.mxu0 %v9620
    %10057 = vmatmul.mubr.bf16.gmra.mxu0 %v7588
    %v10058 = vpop.f32.mrf.mxu0
    %v10059 = vadd.f32 %v9770, %v10058
    %v10060 = vpop.f32.mrf.mxu0
    %v10061 = vpop.f32.mrf.mxu0
    %v10062 = vadd.f32 %v9773, %v10061
    %v10063 = vpop.f32.mrf.mxu0
    %10064 = vmatprep.mubr.bf16.mxu0 %v9623
    %10065 = vmatmul.mubr.bf16.gmra.mxu0 %v7650
    %v10066 = vpop.f32.mrf.mxu0
    %v10067 = vadd.f32 %v9778, %v10066
    %v10068 = vpop.f32.mrf.mxu0
    %v10069 = vpop.f32.mrf.mxu0
    %v10070 = vadd.f32 %v9781, %v10069
    %v10071 = vpop.f32.mrf.mxu0
    %10072 = vmatprep.mubr.bf16.mxu0 %v9626
    %10073 = vmatmul.mubr.bf16.gmra.mxu0 %v7712
    %v10074 = vpop.f32.mrf.mxu0
    %v10075 = vadd.f32 %v9786, %v10074
    %v10076 = vpop.f32.mrf.mxu0
    %v10077 = vpop.f32.mrf.mxu0
    %v10078 = vadd.f32 %v9789, %v10077
    %v10079 = vpop.f32.mrf.mxu0
    %10080 = vmatprep.mubr.bf16.mxu0 %v9629
    %10081 = vmatmul.mubr.bf16.gmra.mxu0 %v7774
    %v10082 = vpop.f32.mrf.mxu0
    %v10083 = vadd.f32 %v9794, %v10082
    %v10084 = vpop.f32.mrf.mxu0
    %v10085 = vpop.f32.mrf.mxu0
    %v10086 = vadd.f32 %v9797, %v10085
    %v10087 = vpop.f32.mrf.mxu0
    %10088 = vmatprep.mubr.bf16.mxu0 %v9632
    %10089 = vmatmul.mubr.bf16.gmra.mxu0 %v7836
    %v10090 = vpop.f32.mrf.mxu0
    %v10091 = vadd.f32 %v9802, %v10090
    %v10092 = vpop.f32.mrf.mxu0
    %v10093 = vpop.f32.mrf.mxu0
    %v10094 = vadd.f32 %v9805, %v10093
    %v10095 = vpop.f32.mrf.mxu0
    %10096 = vmatprep.mubr.bf16.mxu0 %v9635
    %10097 = vmatmul.mubr.bf16.gmra.mxu0 %v7898
    %v10098 = vpop.f32.mrf.mxu0
    %v10099 = vadd.f32 %v9810, %v10098
    %v10100 = vpop.f32.mrf.mxu0
    %v10101 = vpop.f32.mrf.mxu0
    %v10102 = vadd.f32 %v9813, %v10101
    %v10103 = vpop.f32.mrf.mxu0
    %10104 = vmatprep.mubr.bf16.mxu0 %v9638
    %10105 = vmatmul.mubr.bf16.gmra.mxu0 %v7960
    %v10106 = vpop.f32.mrf.mxu0
    %v10107 = vadd.f32 %v9818, %v10106
    %v10108 = vpop.f32.mrf.mxu0
    %v10109 = vpop.f32.mrf.mxu0
    %v10110 = vadd.f32 %v9821, %v10109
    %v10111 = vpop.f32.mrf.mxu0
    %10112 = vmatprep.mubr.bf16.mxu0 %v9641
    %10113 = vmatmul.mubr.bf16.gmra.mxu0 %v8022
    %v10114 = vpop.f32.mrf.mxu0
    %v10115 = vadd.f32 %v9826, %v10114
    %v10116 = vpop.f32.mrf.mxu0
    %v10117 = vpop.f32.mrf.mxu0
    %v10118 = vadd.f32 %v9829, %v10117
    %v10119 = vpop.f32.mrf.mxu0
    %10120 = vmatprep.mubr.bf16.mxu0 %v9644
    %10121 = vmatmul.mubr.bf16.gmra.mxu0 %v8084
    %v10122 = vpop.f32.mrf.mxu0
    %v10123 = vadd.f32 %v9834, %v10122
    %v10124 = vpop.f32.mrf.mxu0
    %v10125 = vpop.f32.mrf.mxu0
    %v10126 = vadd.f32 %v9837, %v10125
    %v10127 = vpop.f32.mrf.mxu0
    %10128 = vmatprep.mubr.bf16.mxu0 %v9647
    %10129 = vmatmul.mubr.bf16.gmra.mxu0 %v8146
    %v10130 = vpop.f32.mrf.mxu0
    %v10131 = vadd.f32 %v9842, %v10130
    %v10132 = vpop.f32.mrf.mxu0
    %v10133 = vpop.f32.mrf.mxu0
    %v10134 = vadd.f32 %v9845, %v10133
    %v10135 = vpop.f32.mrf.mxu0
    %10136 = vmatprep.mubr.bf16.mxu0 %v9650
    %10137 = vmatmul.mubr.bf16.gmra.mxu0 %v8208
    %v10138 = vpop.f32.mrf.mxu0
    %v10139 = vadd.f32 %v9850, %v10138
    %v10140 = vpop.f32.mrf.mxu0
    %v10141 = vpop.f32.mrf.mxu0
    %v10142 = vadd.f32 %v9853, %v10141
    %v10143 = vpop.f32.mrf.mxu0
    %10144 = vmatprep.mubr.bf16.mxu0 %v9653
    %10145 = vmatmul.mubr.bf16.gmra.mxu0 %v8270
    %v10146 = vpop.f32.mrf.mxu0
    %v10147 = vadd.f32 %v9858, %v10146
    %v10148 = vpop.f32.mrf.mxu0
    %v10149 = vpop.f32.mrf.mxu0
    %v10150 = vadd.f32 %v9861, %v10149
    %v10151 = vpop.f32.mrf.mxu0
    %10152 = vmatprep.mubr.bf16.mxu0 %v9656
    %10153 = vmatmul.mubr.bf16.gmra.mxu0 %v8332
    %v10154 = vpop.f32.mrf.mxu0
    %v10155 = vadd.f32 %v9866, %v10154
    %v10156 = vpop.f32.mrf.mxu0
    %v10157 = vpop.f32.mrf.mxu0
    %v10158 = vadd.f32 %v9869, %v10157
    %v10159 = vpop.f32.mrf.mxu0
    %10160 = vmatprep.mubr.bf16.mxu0 %v9659
    %10161 = vmatmul.mubr.bf16.gmra.mxu0 %v8394
    %v10162 = vpop.f32.mrf.mxu0
    %v10163 = vadd.f32 %v9874, %v10162
    %v10164 = vpop.f32.mrf.mxu0
    %v10165 = vpop.f32.mrf.mxu0
    %v10166 = vadd.f32 %v9877, %v10165
    %v10167 = vpop.f32.mrf.mxu0
    %10168 = vmatprep.mubr.bf16.mxu0 %v9662
    %10169 = vmatmul.mubr.bf16.gmra.mxu0 %v8456
    %v10170 = vpop.f32.mrf.mxu0
    %v10171 = vadd.f32 %v9882, %v10170
    %v10172 = vpop.f32.mrf.mxu0
    %v10173 = vpop.f32.mrf.mxu0
    %v10174 = vadd.f32 %v9885, %v10173
    %v10175 = vpop.f32.mrf.mxu0
    %10176 = vmatprep.mubr.bf16.mxu0 %v9665
    %10177 = vmatmul.mubr.bf16.gmra.mxu0 %v8518
    %v10178 = vpop.f32.mrf.mxu0
    %v10179 = vadd.f32 %v9890, %v10178
    %v10180 = vpop.f32.mrf.mxu0
    %v10181 = vpop.f32.mrf.mxu0
    %v10182 = vadd.f32 %v9893, %v10181
    %v10183 = vpop.f32.mrf.mxu0
    %10184 = vmatprep.mubr.bf16.mxu0 %v9668
    %10185 = vmatmul.mubr.bf16.gmra.mxu0 %v8580
    %v10186 = vpop.f32.mrf.mxu0
    %v10187 = vadd.f32 %v9898, %v10186
    %v10188 = vpop.f32.mrf.mxu0
    %v10189 = vpop.f32.mrf.mxu0
    %v10190 = vadd.f32 %v9901, %v10189
    %v10191 = vpop.f32.mrf.mxu0
    %10192 = vmatprep.mubr.bf16.mxu0 %v9671
    %10193 = vmatmul.mubr.bf16.gmra.mxu0 %v8642
    %v10194 = vpop.f32.mrf.mxu0
    %v10195 = vadd.f32 %v9906, %v10194
    %v10196 = vpop.f32.mrf.mxu0
    %v10197 = vpop.f32.mrf.mxu0
    %v10198 = vadd.f32 %v9909, %v10197
    %v10199 = vpop.f32.mrf.mxu0
    %10200 = vmatprep.mubr.bf16.mxu0 %v9674
    %10201 = vmatmul.mubr.bf16.gmra.mxu0 %v8704
    %v10202 = vpop.f32.mrf.mxu0
    %v10203 = vadd.f32 %v9914, %v10202
    %v10204 = vpop.f32.mrf.mxu0
    %v10205 = vpop.f32.mrf.mxu0
    %v10206 = vadd.f32 %v9917, %v10205
    %v10207 = vpop.f32.mrf.mxu0
    %10208 = vmatprep.mubr.bf16.mxu0 %v9677
    %10209 = vmatmul.mubr.bf16.gmra.mxu0 %v8766
    %v10210 = vpop.f32.mrf.mxu0
    %v10211 = vadd.f32 %v9922, %v10210
    %v10212 = vpop.f32.mrf.mxu0
    %v10213 = vpop.f32.mrf.mxu0
    %v10214 = vadd.f32 %v9925, %v10213
    %v10215 = vpop.f32.mrf.mxu0
    %10216 = vmatprep.mubr.bf16.mxu0 %v9680
    %10217 = vmatmul.mubr.bf16.gmra.mxu0 %v8828
    %v10218 = vpop.f32.mrf.mxu0
    %v10219 = vadd.f32 %v9930, %v10218
    %v10220 = vpop.f32.mrf.mxu0
    %v10221 = vpop.f32.mrf.mxu0
    %v10222 = vadd.f32 %v9933, %v10221
    %v10223 = vpop.f32.mrf.mxu0
    %10224 = vmatprep.mubr.bf16.mxu0 %v9683
    %10225 = vmatmul.mubr.bf16.gmra.mxu0 %v8890
    %v10226 = vpop.f32.mrf.mxu0
    %v10227 = vadd.f32 %v9938, %v10226
    %v10228 = vpop.f32.mrf.mxu0
    %v10229 = vpop.f32.mrf.mxu0
    %v10230 = vadd.f32 %v9941, %v10229
    %v10231 = vpop.f32.mrf.mxu0
    %10232 = vmatprep.mubr.bf16.mxu0 %v9686
    %10233 = vmatmul.mubr.bf16.gmra.mxu0 %v8952
    %v10234 = vpop.f32.mrf.mxu0
    %v10235 = vadd.f32 %v9946, %v10234
    %v10236 = vpop.f32.mrf.mxu0
    %v10237 = vpop.f32.mrf.mxu0
    %v10238 = vadd.f32 %v9949, %v10237
    %v10239 = vpop.f32.mrf.mxu0
    %10240 = vmatprep.mubr.bf16.mxu0 %v9689
    %10241 = vmatmul.mubr.bf16.gmra.mxu0 %v9014
    %v10242 = vpop.f32.mrf.mxu0
    %v10243 = vadd.f32 %v9954, %v10242
    %v10244 = vpop.f32.mrf.mxu0
    %v10245 = vpop.f32.mrf.mxu0
    %v10246 = vadd.f32 %v9957, %v10245
    %v10247 = vpop.f32.mrf.mxu0
    %10248 = vmatprep.mubr.bf16.mxu0 %v9692
    %10249 = vmatmul.mubr.bf16.gmra.mxu0 %v9076
    %v10250 = vpop.f32.mrf.mxu0
    %v10251 = vadd.f32 %v9962, %v10250
    %v10252 = vpop.f32.mrf.mxu0
    %v10253 = vpop.f32.mrf.mxu0
    %v10254 = vadd.f32 %v9965, %v10253
    %v10255 = vpop.f32.mrf.mxu0
    %10256 = vmatprep.mubr.bf16.mxu0 %v9695
    %10257 = vmatmul.mubr.bf16.gmra.mxu0 %v9138
    %v10258 = vpop.f32.mrf.mxu0
    %v10259 = vadd.f32 %v9970, %v10258
    %v10260 = vpop.f32.mrf.mxu0
    %v10261 = vpop.f32.mrf.mxu0
    %v10262 = vadd.f32 %v9973, %v10261
    %v10263 = vpop.f32.mrf.mxu0
    %10264 = vmatprep.mubr.bf16.mxu0 %v9698
    %10265 = vmatmul.mubr.bf16.gmra.mxu0 %v9200
    %v10266 = vpop.f32.mrf.mxu0
    %v10267 = vadd.f32 %v9978, %v10266
    %v10268 = vpop.f32.mrf.mxu0
    %v10269 = vpop.f32.mrf.mxu0
    %v10270 = vadd.f32 %v9981, %v10269
    %v10271 = vpop.f32.mrf.mxu0
    %10272 = vmatprep.mubr.bf16.mxu0 %v9701
    %10273 = vmatmul.mubr.bf16.gmra.mxu0 %v9262
    %v10274 = vpop.f32.mrf.mxu0
    %v10275 = vadd.f32 %v9986, %v10274
    %v10276 = vpop.f32.mrf.mxu0
    %v10277 = vpop.f32.mrf.mxu0
    %v10278 = vadd.f32 %v9989, %v10277
    %v10279 = vpop.f32.mrf.mxu0
    %10280 = vdwg.mxu0
    %v10281 = vld [vmem:[%s8] sm:$0x1]
    %v10282 = vld [vmem:[%s9] sm:$0x1]
    %vm10283 = vcmask 392192
    %v10284 = vsel %vm10283, %v10027, 0.0
    %v10285 = vsel %vm10283, %v10030, 0.0
    %v10286 = vadd.f32 %v10284, %v10285
    %v10287 = vsel %vm10283, %v10035, 0.0
    %v10288 = vadd.f32 %v10286, %v10287
    %v10289 = vsel %vm10283, %v10038, 0.0
    %v10290 = vadd.f32 %v10288, %v10289
    %v10291 = vsel %vm10283, %v10043, 0.0
    %v10292 = vadd.f32 %v10290, %v10291
    %v10293 = vsel %vm10283, %v10046, 0.0
    %v10294 = vadd.f32 %v10292, %v10293
    %v10295 = vsel %vm10283, %v10051, 0.0
    %v10296 = vadd.f32 %v10294, %v10295
    %v10297 = vsel %vm10283, %v10054, 0.0
    %v10298 = vadd.f32 %v10296, %v10297
    %v10299 = vsel %vm10283, %v10059, 0.0
    %v10300 = vadd.f32 %v10298, %v10299
    %v10301 = vsel %vm10283, %v10062, 0.0
    %v10302 = vadd.f32 %v10300, %v10301
    %v10303 = vsel %vm10283, %v10067, 0.0
    %v10304 = vadd.f32 %v10302, %v10303
    %v10305 = vsel %vm10283, %v10070, 0.0
    %v10306 = vadd.f32 %v10304, %v10305
    %v10307 = vsel %vm10283, %v10075, 0.0
    %v10308 = vadd.f32 %v10306, %v10307
    %v10309 = vsel %vm10283, %v10078, 0.0
    %v10310 = vadd.f32 %v10308, %v10309
    %v10311 = vsel %vm10283, %v10083, 0.0
    %v10312 = vadd.f32 %v10310, %v10311
    %v10313 = vsel %vm10283, %v10086, 0.0
    %v10314 = vadd.f32 %v10312, %v10313
    %v10315 = vsel %vm10283, %v10091, 0.0
    %v10316 = vadd.f32 %v10314, %v10315
    %v10317 = vsel %vm10283, %v10094, 0.0
    %v10318 = vadd.f32 %v10316, %v10317
    %v10319 = vsel %vm10283, %v10099, 0.0
    %v10320 = vadd.f32 %v10318, %v10319
    %v10321 = vsel %vm10283, %v10102, 0.0
    %v10322 = vadd.f32 %v10320, %v10321
    %v10323 = vsel %vm10283, %v10107, 0.0
    %v10324 = vadd.f32 %v10322, %v10323
    %v10325 = vsel %vm10283, %v10110, 0.0
    %v10326 = vadd.f32 %v10324, %v10325
    %v10327 = vsel %vm10283, %v10115, 0.0
    %v10328 = vadd.f32 %v10326, %v10327
    %v10329 = vsel %vm10283, %v10118, 0.0
    %v10330 = vadd.f32 %v10328, %v10329
    %v10331 = vsel %vm10283, %v10123, 0.0
    %v10332 = vadd.f32 %v10330, %v10331
    %v10333 = vsel %vm10283, %v10126, 0.0
    %v10334 = vadd.f32 %v10332, %v10333
    %v10335 = vsel %vm10283, %v10131, 0.0
    %v10336 = vadd.f32 %v10334, %v10335
    %v10337 = vsel %vm10283, %v10134, 0.0
    %v10338 = vadd.f32 %v10336, %v10337
    %v10339 = vsel %vm10283, %v10139, 0.0
    %v10340 = vadd.f32 %v10338, %v10339
    %v10341 = vsel %vm10283, %v10142, 0.0
    %v10342 = vadd.f32 %v10340, %v10341
    %v10343 = vsel %vm10283, %v10147, 0.0
    %v10344 = vadd.f32 %v10342, %v10343
    %v10345 = vsel %vm10283, %v10150, 0.0
    %v10346 = vadd.f32 %v10344, %v10345
    %v10347 = vsel %vm10283, %v10155, 0.0
    %v10348 = vadd.f32 %v10346, %v10347
    %v10349 = vsel %vm10283, %v10158, 0.0
    %v10350 = vadd.f32 %v10348, %v10349
    %v10351 = vsel %vm10283, %v10163, 0.0
    %v10352 = vadd.f32 %v10350, %v10351
    %v10353 = vsel %vm10283, %v10166, 0.0
    %v10354 = vadd.f32 %v10352, %v10353
    %v10355 = vsel %vm10283, %v10171, 0.0
    %v10356 = vadd.f32 %v10354, %v10355
    %v10357 = vsel %vm10283, %v10174, 0.0
    %v10358 = vadd.f32 %v10356, %v10357
    %v10359 = vsel %vm10283, %v10179, 0.0
    %v10360 = vadd.f32 %v10358, %v10359
    %v10361 = vsel %vm10283, %v10182, 0.0
    %v10362 = vadd.f32 %v10360, %v10361
    %v10363 = vsel %vm10283, %v10187, 0.0
    %v10364 = vadd.f32 %v10362, %v10363
    %v10365 = vsel %vm10283, %v10190, 0.0
    %v10366 = vadd.f32 %v10364, %v10365
    %v10367 = vsel %vm10283, %v10195, 0.0
    %v10368 = vadd.f32 %v10366, %v10367
    %v10369 = vsel %vm10283, %v10198, 0.0
    %v10370 = vadd.f32 %v10368, %v10369
    %v10371 = vsel %vm10283, %v10203, 0.0
    %v10372 = vadd.f32 %v10370, %v10371
    %v10373 = vsel %vm10283, %v10206, 0.0
    %v10374 = vadd.f32 %v10372, %v10373
    %v10375 = vsel %vm10283, %v10211, 0.0
    %v10376 = vadd.f32 %v10374, %v10375
    %v10377 = vsel %vm10283, %v10214, 0.0
    %v10378 = vadd.f32 %v10376, %v10377
    %v10379 = vsel %vm10283, %v10219, 0.0
    %v10380 = vadd.f32 %v10378, %v10379
    %v10381 = vsel %vm10283, %v10222, 0.0
    %v10382 = vadd.f32 %v10380, %v10381
    %v10383 = vsel %vm10283, %v10227, 0.0
    %v10384 = vadd.f32 %v10382, %v10383
    %v10385 = vsel %vm10283, %v10230, 0.0
    %v10386 = vadd.f32 %v10384, %v10385
    %v10387 = vsel %vm10283, %v10235, 0.0
    %v10388 = vadd.f32 %v10386, %v10387
    %v10389 = vsel %vm10283, %v10238, 0.0
    %v10390 = vadd.f32 %v10388, %v10389
    %v10391 = vsel %vm10283, %v10243, 0.0
    %v10392 = vadd.f32 %v10390, %v10391
    %v10393 = vsel %vm10283, %v10246, 0.0
    %v10394 = vadd.f32 %v10392, %v10393
    %v10395 = vsel %vm10283, %v10251, 0.0
    %v10396 = vadd.f32 %v10394, %v10395
    %v10397 = vsel %vm10283, %v10254, 0.0
    %v10398 = vadd.f32 %v10396, %v10397
    %v10399 = vsel %vm10283, %v10259, 0.0
    %v10400 = vadd.f32 %v10398, %v10399
    %v10401 = vsel %vm10283, %v10262, 0.0
    %v10402 = vadd.f32 %v10400, %v10401
    %v10403 = vsel %vm10283, %v10267, 0.0
    %v10404 = vadd.f32 %v10402, %v10403
    %v10405 = vsel %vm10283, %v10270, 0.0
    %v10406 = vadd.f32 %v10404, %v10405
    %v10407 = vsel %vm10283, %v10275, 0.0
    %v10408 = vadd.f32 %v10406, %v10407
    %v10409 = vsel %vm10283, %v10278, 0.0
    %v10410 = vadd.f32 %v10408, %v10409
    %v10411 = vrot.slane %v10410, 4
    %v10412 = vadd.f32 %v10410, %v10411
    %v10413 = vrot.slane %v10412, 2
    %v10414 = vadd.f32 %v10412, %v10413
    %v10415 = vrot.slane %v10414, 1
    %v10416 = vadd.f32 %v10414, %v10415
    %v10417 = vmul.f32 %v10416, 0.001953125
    %v10418 = vmul.f32 %v10027, %v10027
    %v10419 = vmul.f32 %v10030, %v10030
    %v10420 = vmul.f32 %v10035, %v10035
    %v10421 = vmul.f32 %v10038, %v10038
    %v10422 = vmul.f32 %v10043, %v10043
    %v10423 = vmul.f32 %v10046, %v10046
    %v10424 = vmul.f32 %v10051, %v10051
    %v10425 = vmul.f32 %v10054, %v10054
    %v10426 = vmul.f32 %v10059, %v10059
    %v10427 = vmul.f32 %v10062, %v10062
    %v10428 = vmul.f32 %v10067, %v10067
    %v10429 = vmul.f32 %v10070, %v10070
    %v10430 = vmul.f32 %v10075, %v10075
    %v10431 = vmul.f32 %v10078, %v10078
    %v10432 = vmul.f32 %v10083, %v10083
    %v10433 = vmul.f32 %v10086, %v10086
    %v10434 = vmul.f32 %v10091, %v10091
    %v10435 = vmul.f32 %v10094, %v10094
    %v10436 = vmul.f32 %v10099, %v10099
    %v10437 = vmul.f32 %v10102, %v10102
    %v10438 = vmul.f32 %v10107, %v10107
    %v10439 = vmul.f32 %v10110, %v10110
    %v10440 = vmul.f32 %v10115, %v10115
    %v10441 = vmul.f32 %v10118, %v10118
    %v10442 = vmul.f32 %v10123, %v10123
    %v10443 = vmul.f32 %v10126, %v10126
    %v10444 = vmul.f32 %v10131, %v10131
    %v10445 = vmul.f32 %v10134, %v10134
    %v10446 = vmul.f32 %v10139, %v10139
    %v10447 = vmul.f32 %v10142, %v10142
    %v10448 = vmul.f32 %v10147, %v10147
    %v10449 = vmul.f32 %v10150, %v10150
    %v10450 = vmul.f32 %v10155, %v10155
    %v10451 = vmul.f32 %v10158, %v10158
    %v10452 = vmul.f32 %v10163, %v10163
    %v10453 = vmul.f32 %v10166, %v10166
    %v10454 = vmul.f32 %v10171, %v10171
    %v10455 = vmul.f32 %v10174, %v10174
    %v10456 = vmul.f32 %v10179, %v10179
    %v10457 = vmul.f32 %v10182, %v10182
    %v10458 = vmul.f32 %v10187, %v10187
    %v10459 = vmul.f32 %v10190, %v10190
    %v10460 = vmul.f32 %v10195, %v10195
    %v10461 = vmul.f32 %v10198, %v10198
    %v10462 = vmul.f32 %v10203, %v10203
    %v10463 = vmul.f32 %v10206, %v10206
    %v10464 = vmul.f32 %v10211, %v10211
    %v10465 = vmul.f32 %v10214, %v10214
    %v10466 = vmul.f32 %v10219, %v10219
    %v10467 = vmul.f32 %v10222, %v10222
    %v10468 = vmul.f32 %v10227, %v10227
    %v10469 = vmul.f32 %v10230, %v10230
    %v10470 = vmul.f32 %v10235, %v10235
    %v10471 = vmul.f32 %v10238, %v10238
    %v10472 = vmul.f32 %v10243, %v10243
    %v10473 = vmul.f32 %v10246, %v10246
    %v10474 = vmul.f32 %v10251, %v10251
    %v10475 = vmul.f32 %v10254, %v10254
    %v10476 = vmul.f32 %v10259, %v10259
    %v10477 = vmul.f32 %v10262, %v10262
    %v10478 = vmul.f32 %v10267, %v10267
    %v10479 = vmul.f32 %v10270, %v10270
    %v10480 = vmul.f32 %v10275, %v10275
    %v10481 = vmul.f32 %v10278, %v10278
    %v10482 = vsel %vm10283, %v10418, 0.0
    %v10483 = vsel %vm10283, %v10419, 0.0
    %v10484 = vadd.f32 %v10482, %v10483
    %v10485 = vsel %vm10283, %v10420, 0.0
    %v10486 = vadd.f32 %v10484, %v10485
    %v10487 = vsel %vm10283, %v10421, 0.0
    %v10488 = vadd.f32 %v10486, %v10487
    %v10489 = vsel %vm10283, %v10422, 0.0
    %v10490 = vadd.f32 %v10488, %v10489
    %v10491 = vsel %vm10283, %v10423, 0.0
    %v10492 = vadd.f32 %v10490, %v10491
    %v10493 = vsel %vm10283, %v10424, 0.0
    %v10494 = vadd.f32 %v10492, %v10493
    %v10495 = vsel %vm10283, %v10425, 0.0
    %v10496 = vadd.f32 %v10494, %v10495
    %v10497 = vsel %vm10283, %v10426, 0.0
    %v10498 = vadd.f32 %v10496, %v10497
    %v10499 = vsel %vm10283, %v10427, 0.0
    %v10500 = vadd.f32 %v10498, %v10499
    %v10501 = vsel %vm10283, %v10428, 0.0
    %v10502 = vadd.f32 %v10500, %v10501
    %v10503 = vsel %vm10283, %v10429, 0.0
    %v10504 = vadd.f32 %v10502, %v10503
    %v10505 = vsel %vm10283, %v10430, 0.0
    %v10506 = vadd.f32 %v10504, %v10505
    %v10507 = vsel %vm10283, %v10431, 0.0
    %v10508 = vadd.f32 %v10506, %v10507
    %v10509 = vsel %vm10283, %v10432, 0.0
    %v10510 = vadd.f32 %v10508, %v10509
    %v10511 = vsel %vm10283, %v10433, 0.0
    %v10512 = vadd.f32 %v10510, %v10511
    %v10513 = vsel %vm10283, %v10434, 0.0
    %v10514 = vadd.f32 %v10512, %v10513
    %v10515 = vsel %vm10283, %v10435, 0.0
    %v10516 = vadd.f32 %v10514, %v10515
    %v10517 = vsel %vm10283, %v10436, 0.0
    %v10518 = vadd.f32 %v10516, %v10517
    %v10519 = vsel %vm10283, %v10437, 0.0
    %v10520 = vadd.f32 %v10518, %v10519
    %v10521 = vsel %vm10283, %v10438, 0.0
    %v10522 = vadd.f32 %v10520, %v10521
    %v10523 = vsel %vm10283, %v10439, 0.0
    %v10524 = vadd.f32 %v10522, %v10523
    %v10525 = vsel %vm10283, %v10440, 0.0
    %v10526 = vadd.f32 %v10524, %v10525
    %v10527 = vsel %vm10283, %v10441, 0.0
    %v10528 = vadd.f32 %v10526, %v10527
    %v10529 = vsel %vm10283, %v10442, 0.0
    %v10530 = vadd.f32 %v10528, %v10529
    %v10531 = vsel %vm10283, %v10443, 0.0
    %v10532 = vadd.f32 %v10530, %v10531
    %v10533 = vsel %vm10283, %v10444, 0.0
    %v10534 = vadd.f32 %v10532, %v10533
    %v10535 = vsel %vm10283, %v10445, 0.0
    %v10536 = vadd.f32 %v10534, %v10535
    %v10537 = vsel %vm10283, %v10446, 0.0
    %v10538 = vadd.f32 %v10536, %v10537
    %v10539 = vsel %vm10283, %v10447, 0.0
    %v10540 = vadd.f32 %v10538, %v10539
    %v10541 = vsel %vm10283, %v10448, 0.0
    %v10542 = vadd.f32 %v10540, %v10541
    %v10543 = vsel %vm10283, %v10449, 0.0
    %v10544 = vadd.f32 %v10542, %v10543
    %v10545 = vsel %vm10283, %v10450, 0.0
    %v10546 = vadd.f32 %v10544, %v10545
    %v10547 = vsel %vm10283, %v10451, 0.0
    %v10548 = vadd.f32 %v10546, %v10547
    %v10549 = vsel %vm10283, %v10452, 0.0
    %v10550 = vadd.f32 %v10548, %v10549
    %v10551 = vsel %vm10283, %v10453, 0.0
    %v10552 = vadd.f32 %v10550, %v10551
    %v10553 = vsel %vm10283, %v10454, 0.0
    %v10554 = vadd.f32 %v10552, %v10553
    %v10555 = vsel %vm10283, %v10455, 0.0
    %v10556 = vadd.f32 %v10554, %v10555
    %v10557 = vsel %vm10283, %v10456, 0.0
    %v10558 = vadd.f32 %v10556, %v10557
    %v10559 = vsel %vm10283, %v10457, 0.0
    %v10560 = vadd.f32 %v10558, %v10559
    %v10561 = vsel %vm10283, %v10458, 0.0
    %v10562 = vadd.f32 %v10560, %v10561
    %v10563 = vsel %vm10283, %v10459, 0.0
    %v10564 = vadd.f32 %v10562, %v10563
    %v10565 = vsel %vm10283, %v10460, 0.0
    %v10566 = vadd.f32 %v10564, %v10565
    %v10567 = vsel %vm10283, %v10461, 0.0
    %v10568 = vadd.f32 %v10566, %v10567
    %v10569 = vsel %vm10283, %v10462, 0.0
    %v10570 = vadd.f32 %v10568, %v10569
    %v10571 = vsel %vm10283, %v10463, 0.0
    %v10572 = vadd.f32 %v10570, %v10571
    %v10573 = vsel %vm10283, %v10464, 0.0
    %v10574 = vadd.f32 %v10572, %v10573
    %v10575 = vsel %vm10283, %v10465, 0.0
    %v10576 = vadd.f32 %v10574, %v10575
    %v10577 = vsel %vm10283, %v10466, 0.0
    %v10578 = vadd.f32 %v10576, %v10577
    %v10579 = vsel %vm10283, %v10467, 0.0
    %v10580 = vadd.f32 %v10578, %v10579
    %v10581 = vsel %vm10283, %v10468, 0.0
    %v10582 = vadd.f32 %v10580, %v10581
    %v10583 = vsel %vm10283, %v10469, 0.0
    %v10584 = vadd.f32 %v10582, %v10583
    %v10585 = vsel %vm10283, %v10470, 0.0
    %v10586 = vadd.f32 %v10584, %v10585
    %v10587 = vsel %vm10283, %v10471, 0.0
    %v10588 = vadd.f32 %v10586, %v10587
    %v10589 = vsel %vm10283, %v10472, 0.0
    %v10590 = vadd.f32 %v10588, %v10589
    %v10591 = vsel %vm10283, %v10473, 0.0
    %v10592 = vadd.f32 %v10590, %v10591
    %v10593 = vsel %vm10283, %v10474, 0.0
    %v10594 = vadd.f32 %v10592, %v10593
    %v10595 = vsel %vm10283, %v10475, 0.0
    %v10596 = vadd.f32 %v10594, %v10595
    %v10597 = vsel %vm10283, %v10476, 0.0
    %v10598 = vadd.f32 %v10596, %v10597
    %v10599 = vsel %vm10283, %v10477, 0.0
    %v10600 = vadd.f32 %v10598, %v10599
    %v10601 = vsel %vm10283, %v10478, 0.0
    %v10602 = vadd.f32 %v10600, %v10601
    %v10603 = vsel %vm10283, %v10479, 0.0
    %v10604 = vadd.f32 %v10602, %v10603
    %v10605 = vsel %vm10283, %v10480, 0.0
    %v10606 = vadd.f32 %v10604, %v10605
    %v10607 = vsel %vm10283, %v10481, 0.0
    %v10608 = vadd.f32 %v10606, %v10607
    %v10609 = vrot.slane %v10608, 4
    %v10610 = vadd.f32 %v10608, %v10609
    %v10611 = vrot.slane %v10610, 2
    %v10612 = vadd.f32 %v10610, %v10611
    %v10613 = vrot.slane %v10612, 1
    %v10614 = vadd.f32 %v10612, %v10613
    %v10615 = vmul.f32 %v10614, 0.001953125
    %v10616 = vmul.f32 %v10417, %v10417
    %v10617 = vsub.f32 %v10615, %v10616
    %v10618 = vmax.f32 %v10617, 0.0
    %v10619 = vadd.f32 %v10618, 1e-05
    %v10620 = vrsqrt.pop %v10619
    %v10621 = vmul.f32 %v10281, %v10620
    %v10622 = vmul.f32 %v10417, %v10621
    %v10623 = vsub.f32 %v10282, %v10622
    %v10625 = vlaneseq
    %v10626 = vshrl.u32 %v10625, 7
    %v10627 = vsub.s32 0, %v10626
    %v10628 = vrot.slane %v10621, %v10627
    %v10630 = vmul.f32 %v10027, %v10628
    %v10631 = vmul.f32 %v10030, %v10628
    %v10632 = vmul.f32 %v10035, %v10628
    %v10633 = vmul.f32 %v10038, %v10628
    %v10634 = vmul.f32 %v10043, %v10628
    %v10635 = vmul.f32 %v10046, %v10628
    %v10636 = vmul.f32 %v10051, %v10628
    %v10637 = vmul.f32 %v10054, %v10628
    %v10638 = vmul.f32 %v10059, %v10628
    %v10639 = vmul.f32 %v10062, %v10628
    %v10640 = vmul.f32 %v10067, %v10628
    %v10641 = vmul.f32 %v10070, %v10628
    %v10642 = vmul.f32 %v10075, %v10628
    %v10643 = vmul.f32 %v10078, %v10628
    %v10644 = vmul.f32 %v10083, %v10628
    %v10645 = vmul.f32 %v10086, %v10628
    %v10646 = vmul.f32 %v10091, %v10628
    %v10647 = vmul.f32 %v10094, %v10628
    %v10648 = vmul.f32 %v10099, %v10628
    %v10649 = vmul.f32 %v10102, %v10628
    %v10650 = vmul.f32 %v10107, %v10628
    %v10651 = vmul.f32 %v10110, %v10628
    %v10652 = vmul.f32 %v10115, %v10628
    %v10653 = vmul.f32 %v10118, %v10628
    %v10654 = vmul.f32 %v10123, %v10628
    %v10655 = vmul.f32 %v10126, %v10628
    %v10656 = vmul.f32 %v10131, %v10628
    %v10657 = vmul.f32 %v10134, %v10628
    %v10658 = vmul.f32 %v10139, %v10628
    %v10659 = vmul.f32 %v10142, %v10628
    %v10660 = vmul.f32 %v10147, %v10628
    %v10661 = vmul.f32 %v10150, %v10628
    %v10662 = vmul.f32 %v10155, %v10628
    %v10663 = vmul.f32 %v10158, %v10628
    %v10664 = vmul.f32 %v10163, %v10628
    %v10665 = vmul.f32 %v10166, %v10628
    %v10666 = vmul.f32 %v10171, %v10628
    %v10667 = vmul.f32 %v10174, %v10628
    %v10668 = vmul.f32 %v10179, %v10628
    %v10669 = vmul.f32 %v10182, %v10628
    %v10670 = vmul.f32 %v10187, %v10628
    %v10671 = vmul.f32 %v10190, %v10628
    %v10672 = vmul.f32 %v10195, %v10628
    %v10673 = vmul.f32 %v10198, %v10628
    %v10674 = vmul.f32 %v10203, %v10628
    %v10675 = vmul.f32 %v10206, %v10628
    %v10676 = vmul.f32 %v10211, %v10628
    %v10677 = vmul.f32 %v10214, %v10628
    %v10678 = vmul.f32 %v10219, %v10628
    %v10679 = vmul.f32 %v10222, %v10628
    %v10680 = vmul.f32 %v10227, %v10628
    %v10681 = vmul.f32 %v10230, %v10628
    %v10682 = vmul.f32 %v10235, %v10628
    %v10683 = vmul.f32 %v10238, %v10628
    %v10684 = vmul.f32 %v10243, %v10628
    %v10685 = vmul.f32 %v10246, %v10628
    %v10686 = vmul.f32 %v10251, %v10628
    %v10687 = vmul.f32 %v10254, %v10628
    %v10688 = vmul.f32 %v10259, %v10628
    %v10689 = vmul.f32 %v10262, %v10628
    %v10690 = vmul.f32 %v10267, %v10628
    %v10691 = vmul.f32 %v10270, %v10628
    %v10692 = vmul.f32 %v10275, %v10628
    %v10693 = vmul.f32 %v10278, %v10628
    %v10695 = vlaneseq
    %v10696 = vshrl.u32 %v10695, 7
    %v10697 = vsub.s32 0, %v10696
    %v10698 = vrot.slane %v10623, %v10697
    %v10700 = vadd.f32 %v10630, %v10698
    %v10701 = vadd.f32 %v10631, %v10698
    %v10702 = vadd.f32 %v10632, %v10698
    %v10703 = vadd.f32 %v10633, %v10698
    %v10704 = vadd.f32 %v10634, %v10698
    %v10705 = vadd.f32 %v10635, %v10698
    %v10706 = vadd.f32 %v10636, %v10698
    %v10707 = vadd.f32 %v10637, %v10698
    %v10708 = vadd.f32 %v10638, %v10698
    %v10709 = vadd.f32 %v10639, %v10698
    %v10710 = vadd.f32 %v10640, %v10698
    %v10711 = vadd.f32 %v10641, %v10698
    %v10712 = vadd.f32 %v10642, %v10698
    %v10713 = vadd.f32 %v10643, %v10698
    %v10714 = vadd.f32 %v10644, %v10698
    %v10715 = vadd.f32 %v10645, %v10698
    %v10716 = vadd.f32 %v10646, %v10698
    %v10717 = vadd.f32 %v10647, %v10698
    %v10718 = vadd.f32 %v10648, %v10698
    %v10719 = vadd.f32 %v10649, %v10698
    %v10720 = vadd.f32 %v10650, %v10698
    %v10721 = vadd.f32 %v10651, %v10698
    %v10722 = vadd.f32 %v10652, %v10698
    %v10723 = vadd.f32 %v10653, %v10698
    %v10724 = vadd.f32 %v10654, %v10698
    %v10725 = vadd.f32 %v10655, %v10698
    %v10726 = vadd.f32 %v10656, %v10698
    %v10727 = vadd.f32 %v10657, %v10698
    %v10728 = vadd.f32 %v10658, %v10698
    %v10729 = vadd.f32 %v10659, %v10698
    %v10730 = vadd.f32 %v10660, %v10698
    %v10731 = vadd.f32 %v10661, %v10698
    %v10732 = vadd.f32 %v10662, %v10698
    %v10733 = vadd.f32 %v10663, %v10698
    %v10734 = vadd.f32 %v10664, %v10698
    %v10735 = vadd.f32 %v10665, %v10698
    %v10736 = vadd.f32 %v10666, %v10698
    %v10737 = vadd.f32 %v10667, %v10698
    %v10738 = vadd.f32 %v10668, %v10698
    %v10739 = vadd.f32 %v10669, %v10698
    %v10740 = vadd.f32 %v10670, %v10698
    %v10741 = vadd.f32 %v10671, %v10698
    %v10742 = vadd.f32 %v10672, %v10698
    %v10743 = vadd.f32 %v10673, %v10698
    %v10744 = vadd.f32 %v10674, %v10698
    %v10745 = vadd.f32 %v10675, %v10698
    %v10746 = vadd.f32 %v10676, %v10698
    %v10747 = vadd.f32 %v10677, %v10698
    %v10748 = vadd.f32 %v10678, %v10698
    %v10749 = vadd.f32 %v10679, %v10698
    %v10750 = vadd.f32 %v10680, %v10698
    %v10751 = vadd.f32 %v10681, %v10698
    %v10752 = vadd.f32 %v10682, %v10698
    %v10753 = vadd.f32 %v10683, %v10698
    %v10754 = vadd.f32 %v10684, %v10698
    %v10755 = vadd.f32 %v10685, %v10698
    %v10756 = vadd.f32 %v10686, %v10698
    %v10757 = vadd.f32 %v10687, %v10698
    %v10758 = vadd.f32 %v10688, %v10698
    %v10759 = vadd.f32 %v10689, %v10698
    %v10760 = vadd.f32 %v10690, %v10698
    %v10761 = vadd.f32 %v10691, %v10698
    %v10762 = vadd.f32 %v10692, %v10698
    %v10763 = vadd.f32 %v10693, %v10698
    %v10764 = vmax.f32 %v10700, 0.0
    %v10765 = vmax.f32 %v10701, 0.0
    %v10766 = vmax.f32 %v10702, 0.0
    %v10767 = vmax.f32 %v10703, 0.0
    %v10768 = vmax.f32 %v10704, 0.0
    %v10769 = vmax.f32 %v10705, 0.0
    %v10770 = vmax.f32 %v10706, 0.0
    %v10771 = vmax.f32 %v10707, 0.0
    %v10772 = vmax.f32 %v10708, 0.0
    %v10773 = vmax.f32 %v10709, 0.0
    %v10774 = vmax.f32 %v10710, 0.0
    %v10775 = vmax.f32 %v10711, 0.0
    %v10776 = vmax.f32 %v10712, 0.0
    %v10777 = vmax.f32 %v10713, 0.0
    %v10778 = vmax.f32 %v10714, 0.0
    %v10779 = vmax.f32 %v10715, 0.0
    %v10780 = vmax.f32 %v10716, 0.0
    %v10781 = vmax.f32 %v10717, 0.0
    %v10782 = vmax.f32 %v10718, 0.0
    %v10783 = vmax.f32 %v10719, 0.0
    %v10784 = vmax.f32 %v10720, 0.0
    %v10785 = vmax.f32 %v10721, 0.0
    %v10786 = vmax.f32 %v10722, 0.0
    %v10787 = vmax.f32 %v10723, 0.0
    %v10788 = vmax.f32 %v10724, 0.0
    %v10789 = vmax.f32 %v10725, 0.0
    %v10790 = vmax.f32 %v10726, 0.0
    %v10791 = vmax.f32 %v10727, 0.0
    %v10792 = vmax.f32 %v10728, 0.0
    %v10793 = vmax.f32 %v10729, 0.0
    %v10794 = vmax.f32 %v10730, 0.0
    %v10795 = vmax.f32 %v10731, 0.0
    %v10796 = vmax.f32 %v10732, 0.0
    %v10797 = vmax.f32 %v10733, 0.0
    %v10798 = vmax.f32 %v10734, 0.0
    %v10799 = vmax.f32 %v10735, 0.0
    %v10800 = vmax.f32 %v10736, 0.0
    %v10801 = vmax.f32 %v10737, 0.0
    %v10802 = vmax.f32 %v10738, 0.0
    %v10803 = vmax.f32 %v10739, 0.0
    %v10804 = vmax.f32 %v10740, 0.0
    %v10805 = vmax.f32 %v10741, 0.0
    %v10806 = vmax.f32 %v10742, 0.0
    %v10807 = vmax.f32 %v10743, 0.0
    %v10808 = vmax.f32 %v10744, 0.0
    %v10809 = vmax.f32 %v10745, 0.0
    %v10810 = vmax.f32 %v10746, 0.0
    %v10811 = vmax.f32 %v10747, 0.0
    %v10812 = vmax.f32 %v10748, 0.0
    %v10813 = vmax.f32 %v10749, 0.0
    %v10814 = vmax.f32 %v10750, 0.0
    %v10815 = vmax.f32 %v10751, 0.0
    %v10816 = vmax.f32 %v10752, 0.0
    %v10817 = vmax.f32 %v10753, 0.0
    %v10818 = vmax.f32 %v10754, 0.0
    %v10819 = vmax.f32 %v10755, 0.0
    %v10820 = vmax.f32 %v10756, 0.0
    %v10821 = vmax.f32 %v10757, 0.0
    %v10822 = vmax.f32 %v10758, 0.0
    %v10823 = vmax.f32 %v10759, 0.0
    %v10824 = vmax.f32 %v10760, 0.0
    %v10825 = vmax.f32 %v10761, 0.0
    %v10826 = vmax.f32 %v10762, 0.0
    %v10827 = vmax.f32 %v10763, 0.0
    %v10828 = vpack.c.bf16 %v10765, %v10764
    %v10829 = vpack.c.bf16 %v10767, %v10766
    %v10830 = vpack.c.bf16 %v10769, %v10768
    %v10831 = vpack.c.bf16 %v10771, %v10770
    %v10832 = vpack.c.bf16 %v10773, %v10772
    %v10833 = vpack.c.bf16 %v10775, %v10774
    %v10834 = vpack.c.bf16 %v10777, %v10776
    %v10835 = vpack.c.bf16 %v10779, %v10778
    %v10836 = vpack.c.bf16 %v10781, %v10780
    %v10837 = vpack.c.bf16 %v10783, %v10782
    %v10838 = vpack.c.bf16 %v10785, %v10784
    %v10839 = vpack.c.bf16 %v10787, %v10786
    %v10840 = vpack.c.bf16 %v10789, %v10788
    %v10841 = vpack.c.bf16 %v10791, %v10790
    %v10842 = vpack.c.bf16 %v10793, %v10792
    %v10843 = vpack.c.bf16 %v10795, %v10794
    %v10844 = vpack.c.bf16 %v10797, %v10796
    %v10845 = vpack.c.bf16 %v10799, %v10798
    %v10846 = vpack.c.bf16 %v10801, %v10800
    %v10847 = vpack.c.bf16 %v10803, %v10802
    %v10848 = vpack.c.bf16 %v10805, %v10804
    %v10849 = vpack.c.bf16 %v10807, %v10806
    %v10850 = vpack.c.bf16 %v10809, %v10808
    %v10851 = vpack.c.bf16 %v10811, %v10810
    %v10852 = vpack.c.bf16 %v10813, %v10812
    %v10853 = vpack.c.bf16 %v10815, %v10814
    %v10854 = vpack.c.bf16 %v10817, %v10816
    %v10855 = vpack.c.bf16 %v10819, %v10818
    %v10856 = vpack.c.bf16 %v10821, %v10820
    %v10857 = vpack.c.bf16 %v10823, %v10822
    %v10858 = vpack.c.bf16 %v10825, %v10824
    %v10859 = vpack.c.bf16 %v10827, %v10826
    %10889 = vrot.lane.b32.xlu0 0, 48
    %v10890 = vpop.permute.xlu0 %10889
    %10891 = vrot.lane.b32.xlu0 %v10828, 48
    %v10892 = vpop.permute.xlu0 %10891
    %10893 = vrot.lane.b32.xlu0 %v10829, 48
    %v10894 = vpop.permute.xlu0 %10893
    %10895 = vrot.lane.b32.xlu0 %v10830, 48
    %v10896 = vpop.permute.xlu0 %10895
    %10897 = vrot.lane.b32.xlu0 %v10831, 48
    %v10898 = vpop.permute.xlu0 %10897
    %10899 = vrot.lane.b32.xlu0 %v10832, 48
    %v10900 = vpop.permute.xlu0 %10899
    %10901 = vrot.lane.b32.xlu0 %v10833, 48
    %v10902 = vpop.permute.xlu0 %10901
    %10903 = vrot.lane.b32.xlu0 %v10834, 48
    %v10904 = vpop.permute.xlu0 %10903
    %10905 = vrot.lane.b32.xlu0 %v10835, 48
    %v10906 = vpop.permute.xlu0 %10905
    %10907 = vrot.lane.b32.xlu0 %v10836, 48
    %v10908 = vpop.permute.xlu0 %10907
    %10909 = vrot.lane.b32.xlu0 %v10837, 48
    %v10910 = vpop.permute.xlu0 %10909
    %10911 = vrot.lane.b32.xlu0 %v10838, 48
    %v10912 = vpop.permute.xlu0 %10911
    %10913 = vrot.lane.b32.xlu0 %v10839, 48
    %v10914 = vpop.permute.xlu0 %10913
    %10915 = vrot.lane.b32.xlu0 %v10840, 48
    %v10916 = vpop.permute.xlu0 %10915
    %10917 = vrot.lane.b32.xlu0 %v10841, 48
    %v10918 = vpop.permute.xlu0 %10917
    %10919 = vrot.lane.b32.xlu0 %v10844, 48
    %v10920 = vpop.permute.xlu0 %10919
    %10921 = vrot.lane.b32.xlu0 %v10845, 48
    %v10922 = vpop.permute.xlu0 %10921
    %10923 = vrot.lane.b32.xlu0 %v10846, 48
    %v10924 = vpop.permute.xlu0 %10923
    %10925 = vrot.lane.b32.xlu0 %v10847, 48
    %v10926 = vpop.permute.xlu0 %10925
    %10927 = vrot.lane.b32.xlu0 %v10848, 48
    %v10928 = vpop.permute.xlu0 %10927
    %10929 = vrot.lane.b32.xlu0 %v10849, 48
    %v10930 = vpop.permute.xlu0 %10929
    %10931 = vrot.lane.b32.xlu0 %v10850, 48
    %v10932 = vpop.permute.xlu0 %10931
    %10933 = vrot.lane.b32.xlu0 %v10851, 48
    %v10934 = vpop.permute.xlu0 %10933
    %10935 = vrot.lane.b32.xlu0 %v10852, 48
    %v10936 = vpop.permute.xlu0 %10935
    %10937 = vrot.lane.b32.xlu0 %v10853, 48
    %v10938 = vpop.permute.xlu0 %10937
    %10939 = vrot.lane.b32.xlu0 %v10854, 48
    %v10940 = vpop.permute.xlu0 %10939
    %10941 = vrot.lane.b32.xlu0 %v10855, 48
    %v10942 = vpop.permute.xlu0 %10941
    %10943 = vrot.lane.b32.xlu0 %v10856, 48
    %v10944 = vpop.permute.xlu0 %10943
    %10945 = vrot.lane.b32.xlu0 %v10857, 48
    %v10946 = vpop.permute.xlu0 %10945
    %10949 = vrot.lane.b32.xlu0 0, 96
    %v10950 = vpop.permute.xlu0 %10949
    %10951 = vrot.lane.b32.xlu0 %v10828, 96
    %v10952 = vpop.permute.xlu0 %10951
    %10953 = vrot.lane.b32.xlu0 %v10829, 96
    %v10954 = vpop.permute.xlu0 %10953
    %10955 = vrot.lane.b32.xlu0 %v10830, 96
    %v10956 = vpop.permute.xlu0 %10955
    %10957 = vrot.lane.b32.xlu0 %v10831, 96
    %v10958 = vpop.permute.xlu0 %10957
    %10959 = vrot.lane.b32.xlu0 %v10832, 96
    %v10960 = vpop.permute.xlu0 %10959
    %10961 = vrot.lane.b32.xlu0 %v10833, 96
    %v10962 = vpop.permute.xlu0 %10961
    %10963 = vrot.lane.b32.xlu0 %v10834, 96
    %v10964 = vpop.permute.xlu0 %10963
    %10965 = vrot.lane.b32.xlu0 %v10835, 96
    %v10966 = vpop.permute.xlu0 %10965
    %10967 = vrot.lane.b32.xlu0 %v10836, 96
    %v10968 = vpop.permute.xlu0 %10967
    %10969 = vrot.lane.b32.xlu0 %v10837, 96
    %v10970 = vpop.permute.xlu0 %10969
    %10971 = vrot.lane.b32.xlu0 %v10838, 96
    %v10972 = vpop.permute.xlu0 %10971
    %10973 = vrot.lane.b32.xlu0 %v10839, 96
    %v10974 = vpop.permute.xlu0 %10973
    %10975 = vrot.lane.b32.xlu0 %v10840, 96
    %v10976 = vpop.permute.xlu0 %10975
    %10977 = vrot.lane.b32.xlu0 %v10841, 96
    %v10978 = vpop.permute.xlu0 %10977
    %10979 = vrot.lane.b32.xlu0 %v10842, 96
    %v10980 = vpop.permute.xlu0 %10979
    %10981 = vrot.lane.b32.xlu0 %v10844, 96
    %v10982 = vpop.permute.xlu0 %10981
    %10983 = vrot.lane.b32.xlu0 %v10845, 96
    %v10984 = vpop.permute.xlu0 %10983
    %10985 = vrot.lane.b32.xlu0 %v10846, 96
    %v10986 = vpop.permute.xlu0 %10985
    %10987 = vrot.lane.b32.xlu0 %v10847, 96
    %v10988 = vpop.permute.xlu0 %10987
    %10989 = vrot.lane.b32.xlu0 %v10848, 96
    %v10990 = vpop.permute.xlu0 %10989
    %10991 = vrot.lane.b32.xlu0 %v10849, 96
    %v10992 = vpop.permute.xlu0 %10991
    %10993 = vrot.lane.b32.xlu0 %v10850, 96
    %v10994 = vpop.permute.xlu0 %10993
    %10995 = vrot.lane.b32.xlu0 %v10851, 96
    %v10996 = vpop.permute.xlu0 %10995
    %10997 = vrot.lane.b32.xlu0 %v10852, 96
    %v10998 = vpop.permute.xlu0 %10997
    %10999 = vrot.lane.b32.xlu0 %v10853, 96
    %v11000 = vpop.permute.xlu0 %10999
    %11001 = vrot.lane.b32.xlu0 %v10854, 96
    %v11002 = vpop.permute.xlu0 %11001
    %11003 = vrot.lane.b32.xlu0 %v10855, 96
    %v11004 = vpop.permute.xlu0 %11003
    %11005 = vrot.lane.b32.xlu0 %v10856, 96
    %v11006 = vpop.permute.xlu0 %11005
    %11007 = vrot.lane.b32.xlu0 %v10857, 96
    %v11008 = vpop.permute.xlu0 %11007
    %11009 = vrot.lane.b32.xlu0 %v10858, 96
    %v11010 = vpop.permute.xlu0 %11009
    %11013 = vrot.lane.b32.xlu0 %v10828, 16
    %v11014 = vpop.permute.xlu0 %11013
    %11015 = vrot.lane.b32.xlu0 %v10829, 16
    %v11016 = vpop.permute.xlu0 %11015
    %11017 = vrot.lane.b32.xlu0 %v10830, 16
    %v11018 = vpop.permute.xlu0 %11017
    %11019 = vrot.lane.b32.xlu0 %v10831, 16
    %v11020 = vpop.permute.xlu0 %11019
    %11021 = vrot.lane.b32.xlu0 %v10832, 16
    %v11022 = vpop.permute.xlu0 %11021
    %11023 = vrot.lane.b32.xlu0 %v10833, 16
    %v11024 = vpop.permute.xlu0 %11023
    %11025 = vrot.lane.b32.xlu0 %v10834, 16
    %v11026 = vpop.permute.xlu0 %11025
    %11027 = vrot.lane.b32.xlu0 %v10835, 16
    %v11028 = vpop.permute.xlu0 %11027
    %11029 = vrot.lane.b32.xlu0 %v10836, 16
    %v11030 = vpop.permute.xlu0 %11029
    %11031 = vrot.lane.b32.xlu0 %v10837, 16
    %v11032 = vpop.permute.xlu0 %11031
    %11033 = vrot.lane.b32.xlu0 %v10838, 16
    %v11034 = vpop.permute.xlu0 %11033
    %11035 = vrot.lane.b32.xlu0 %v10839, 16
    %v11036 = vpop.permute.xlu0 %11035
    %11037 = vrot.lane.b32.xlu0 %v10840, 16
    %v11038 = vpop.permute.xlu0 %11037
    %11039 = vrot.lane.b32.xlu0 %v10841, 16
    %v11040 = vpop.permute.xlu0 %11039
    %11041 = vrot.lane.b32.xlu0 %v10842, 16
    %v11042 = vpop.permute.xlu0 %11041
    %11043 = vrot.lane.b32.xlu0 %v10843, 16
    %v11044 = vpop.permute.xlu0 %11043
    %11045 = vrot.lane.b32.xlu0 %v10844, 16
    %v11046 = vpop.permute.xlu0 %11045
    %11047 = vrot.lane.b32.xlu0 %v10845, 16
    %v11048 = vpop.permute.xlu0 %11047
    %11049 = vrot.lane.b32.xlu0 %v10846, 16
    %v11050 = vpop.permute.xlu0 %11049
    %11051 = vrot.lane.b32.xlu0 %v10847, 16
    %v11052 = vpop.permute.xlu0 %11051
    %11053 = vrot.lane.b32.xlu0 %v10848, 16
    %v11054 = vpop.permute.xlu0 %11053
    %11055 = vrot.lane.b32.xlu0 %v10849, 16
    %v11056 = vpop.permute.xlu0 %11055
    %11057 = vrot.lane.b32.xlu0 %v10850, 16
    %v11058 = vpop.permute.xlu0 %11057
    %11059 = vrot.lane.b32.xlu0 %v10851, 16
    %v11060 = vpop.permute.xlu0 %11059
    %11061 = vrot.lane.b32.xlu0 %v10852, 16
    %v11062 = vpop.permute.xlu0 %11061
    %11063 = vrot.lane.b32.xlu0 %v10853, 16
    %v11064 = vpop.permute.xlu0 %11063
    %11065 = vrot.lane.b32.xlu0 %v10854, 16
    %v11066 = vpop.permute.xlu0 %11065
    %11067 = vrot.lane.b32.xlu0 %v10855, 16
    %v11068 = vpop.permute.xlu0 %11067
    %11069 = vrot.lane.b32.xlu0 %v10856, 16
    %v11070 = vpop.permute.xlu0 %11069
    %11071 = vrot.lane.b32.xlu0 %v10857, 16
    %v11072 = vpop.permute.xlu0 %11071
    %11073 = vrot.lane.b32.xlu0 %v10858, 16
    %v11074 = vpop.permute.xlu0 %11073
    %11075 = vrot.lane.b32.xlu0 %v10859, 16
    %v11076 = vpop.permute.xlu0 %11075
    %11077 = vrot.lane.b32.xlu0 %v10829, 64
    %v11078 = vpop.permute.xlu0 %11077
    %11079 = vrot.lane.b32.xlu0 %v10830, 64
    %v11080 = vpop.permute.xlu0 %11079
    %11081 = vrot.lane.b32.xlu0 %v10831, 64
    %v11082 = vpop.permute.xlu0 %11081
    %11083 = vrot.lane.b32.xlu0 %v10832, 64
    %v11084 = vpop.permute.xlu0 %11083
    %11085 = vrot.lane.b32.xlu0 %v10833, 64
    %v11086 = vpop.permute.xlu0 %11085
    %11087 = vrot.lane.b32.xlu0 %v10834, 64
    %v11088 = vpop.permute.xlu0 %11087
    %11089 = vrot.lane.b32.xlu0 %v10835, 64
    %v11090 = vpop.permute.xlu0 %11089
    %11091 = vrot.lane.b32.xlu0 %v10836, 64
    %v11092 = vpop.permute.xlu0 %11091
    %11093 = vrot.lane.b32.xlu0 %v10837, 64
    %v11094 = vpop.permute.xlu0 %11093
    %11095 = vrot.lane.b32.xlu0 %v10838, 64
    %v11096 = vpop.permute.xlu0 %11095
    %11097 = vrot.lane.b32.xlu0 %v10839, 64
    %v11098 = vpop.permute.xlu0 %11097
    %11099 = vrot.lane.b32.xlu0 %v10840, 64
    %v11100 = vpop.permute.xlu0 %11099
    %11101 = vrot.lane.b32.xlu0 %v10841, 64
    %v11102 = vpop.permute.xlu0 %11101
    %11103 = vrot.lane.b32.xlu0 %v10842, 64
    %v11104 = vpop.permute.xlu0 %11103
    %11105 = vrot.lane.b32.xlu0 %v10843, 64
    %v11106 = vpop.permute.xlu0 %11105
    %11107 = vrot.lane.b32.xlu0 0, 64
    %v11108 = vpop.permute.xlu0 %11107
    %11109 = vrot.lane.b32.xlu0 %v10845, 64
    %v11110 = vpop.permute.xlu0 %11109
    %11111 = vrot.lane.b32.xlu0 %v10846, 64
    %v11112 = vpop.permute.xlu0 %11111
    %11113 = vrot.lane.b32.xlu0 %v10847, 64
    %v11114 = vpop.permute.xlu0 %11113
    %11115 = vrot.lane.b32.xlu0 %v10848, 64
    %v11116 = vpop.permute.xlu0 %11115
    %11117 = vrot.lane.b32.xlu0 %v10849, 64
    %v11118 = vpop.permute.xlu0 %11117
    %11119 = vrot.lane.b32.xlu0 %v10850, 64
    %v11120 = vpop.permute.xlu0 %11119
    %11121 = vrot.lane.b32.xlu0 %v10851, 64
    %v11122 = vpop.permute.xlu0 %11121
    %11123 = vrot.lane.b32.xlu0 %v10852, 64
    %v11124 = vpop.permute.xlu0 %11123
    %11125 = vrot.lane.b32.xlu0 %v10853, 64
    %v11126 = vpop.permute.xlu0 %11125
    %11127 = vrot.lane.b32.xlu0 %v10854, 64
    %v11128 = vpop.permute.xlu0 %11127
    %11129 = vrot.lane.b32.xlu0 %v10855, 64
    %v11130 = vpop.permute.xlu0 %11129
    %11131 = vrot.lane.b32.xlu0 %v10856, 64
    %v11132 = vpop.permute.xlu0 %11131
    %11133 = vrot.lane.b32.xlu0 %v10857, 64
    %v11134 = vpop.permute.xlu0 %11133
    %11135 = vrot.lane.b32.xlu0 %v10858, 64
    %v11136 = vpop.permute.xlu0 %11135
    %11137 = vrot.lane.b32.xlu0 %v10859, 64
    %v11138 = vpop.permute.xlu0 %11137
    %11139 = vrot.lane.b32.xlu0 %v10830, 112
    %v11140 = vpop.permute.xlu0 %11139
    %11141 = vrot.lane.b32.xlu0 %v10831, 112
    %v11142 = vpop.permute.xlu0 %11141
    %11143 = vrot.lane.b32.xlu0 %v10832, 112
    %v11144 = vpop.permute.xlu0 %11143
    %11145 = vrot.lane.b32.xlu0 %v10833, 112
    %v11146 = vpop.permute.xlu0 %11145
    %11147 = vrot.lane.b32.xlu0 %v10834, 112
    %v11148 = vpop.permute.xlu0 %11147
    %11149 = vrot.lane.b32.xlu0 %v10835, 112
    %v11150 = vpop.permute.xlu0 %11149
    %11151 = vrot.lane.b32.xlu0 %v10836, 112
    %v11152 = vpop.permute.xlu0 %11151
    %11153 = vrot.lane.b32.xlu0 %v10837, 112
    %v11154 = vpop.permute.xlu0 %11153
    %11155 = vrot.lane.b32.xlu0 %v10838, 112
    %v11156 = vpop.permute.xlu0 %11155
    %11157 = vrot.lane.b32.xlu0 %v10839, 112
    %v11158 = vpop.permute.xlu0 %11157
    %11159 = vrot.lane.b32.xlu0 %v10840, 112
    %v11160 = vpop.permute.xlu0 %11159
    %11161 = vrot.lane.b32.xlu0 %v10841, 112
    %v11162 = vpop.permute.xlu0 %11161
    %11163 = vrot.lane.b32.xlu0 %v10842, 112
    %v11164 = vpop.permute.xlu0 %11163
    %11165 = vrot.lane.b32.xlu0 %v10843, 112
    %v11166 = vpop.permute.xlu0 %11165
    %11167 = vrot.lane.b32.xlu0 0, 112
    %v11168 = vpop.permute.xlu0 %11167
    %11169 = vrot.lane.b32.xlu0 %v10846, 112
    %v11170 = vpop.permute.xlu0 %11169
    %11171 = vrot.lane.b32.xlu0 %v10847, 112
    %v11172 = vpop.permute.xlu0 %11171
    %11173 = vrot.lane.b32.xlu0 %v10848, 112
    %v11174 = vpop.permute.xlu0 %11173
    %11175 = vrot.lane.b32.xlu0 %v10849, 112
    %v11176 = vpop.permute.xlu0 %11175
    %11177 = vrot.lane.b32.xlu0 %v10850, 112
    %v11178 = vpop.permute.xlu0 %11177
    %11179 = vrot.lane.b32.xlu0 %v10851, 112
    %v11180 = vpop.permute.xlu0 %11179
    %11181 = vrot.lane.b32.xlu0 %v10852, 112
    %v11182 = vpop.permute.xlu0 %11181
    %11183 = vrot.lane.b32.xlu0 %v10853, 112
    %v11184 = vpop.permute.xlu0 %11183
    %11185 = vrot.lane.b32.xlu0 %v10854, 112
    %v11186 = vpop.permute.xlu0 %11185
    %11187 = vrot.lane.b32.xlu0 %v10855, 112
    %v11188 = vpop.permute.xlu0 %11187
    %11189 = vrot.lane.b32.xlu0 %v10856, 112
    %v11190 = vpop.permute.xlu0 %11189
    %11191 = vrot.lane.b32.xlu0 %v10857, 112
    %v11192 = vpop.permute.xlu0 %11191
    %11193 = vrot.lane.b32.xlu0 %v10858, 112
    %v11194 = vpop.permute.xlu0 %11193
    %11195 = vrot.lane.b32.xlu0 %v10859, 112
    %v11196 = vpop.permute.xlu0 %11195
    %11197 = vrot.lane.b32.xlu0 %v10831, 32
    %v11198 = vpop.permute.xlu0 %11197
    %11199 = vrot.lane.b32.xlu0 %v10832, 32
    %v11200 = vpop.permute.xlu0 %11199
    %11201 = vrot.lane.b32.xlu0 %v10833, 32
    %v11202 = vpop.permute.xlu0 %11201
    %11203 = vrot.lane.b32.xlu0 %v10834, 32
    %v11204 = vpop.permute.xlu0 %11203
    %11205 = vrot.lane.b32.xlu0 %v10835, 32
    %v11206 = vpop.permute.xlu0 %11205
    %11207 = vrot.lane.b32.xlu0 %v10836, 32
    %v11208 = vpop.permute.xlu0 %11207
    %11209 = vrot.lane.b32.xlu0 %v10837, 32
    %v11210 = vpop.permute.xlu0 %11209
    %11211 = vrot.lane.b32.xlu0 %v10838, 32
    %v11212 = vpop.permute.xlu0 %11211
    %11213 = vrot.lane.b32.xlu0 %v10839, 32
    %v11214 = vpop.permute.xlu0 %11213
    %11215 = vrot.lane.b32.xlu0 %v10840, 32
    %v11216 = vpop.permute.xlu0 %11215
    %11217 = vrot.lane.b32.xlu0 %v10841, 32
    %v11218 = vpop.permute.xlu0 %11217
    %11219 = vrot.lane.b32.xlu0 %v10842, 32
    %v11220 = vpop.permute.xlu0 %11219
    %11221 = vrot.lane.b32.xlu0 %v10843, 32
    %v11222 = vpop.permute.xlu0 %11221
    %11223 = vrot.lane.b32.xlu0 0, 32
    %v11224 = vpop.permute.xlu0 %11223
    %11225 = vrot.lane.b32.xlu0 %v10847, 32
    %v11226 = vpop.permute.xlu0 %11225
    %11227 = vrot.lane.b32.xlu0 %v10848, 32
    %v11228 = vpop.permute.xlu0 %11227
    %11229 = vrot.lane.b32.xlu0 %v10849, 32
    %v11230 = vpop.permute.xlu0 %11229
    %11231 = vrot.lane.b32.xlu0 %v10850, 32
    %v11232 = vpop.permute.xlu0 %11231
    %11233 = vrot.lane.b32.xlu0 %v10851, 32
    %v11234 = vpop.permute.xlu0 %11233
    %11235 = vrot.lane.b32.xlu0 %v10852, 32
    %v11236 = vpop.permute.xlu0 %11235
    %11237 = vrot.lane.b32.xlu0 %v10853, 32
    %v11238 = vpop.permute.xlu0 %11237
    %11239 = vrot.lane.b32.xlu0 %v10854, 32
    %v11240 = vpop.permute.xlu0 %11239
    %11241 = vrot.lane.b32.xlu0 %v10855, 32
    %v11242 = vpop.permute.xlu0 %11241
    %11243 = vrot.lane.b32.xlu0 %v10856, 32
    %v11244 = vpop.permute.xlu0 %11243
    %11245 = vrot.lane.b32.xlu0 %v10857, 32
    %v11246 = vpop.permute.xlu0 %11245
    %11247 = vrot.lane.b32.xlu0 %v10858, 32
    %v11248 = vpop.permute.xlu0 %11247
    %11249 = vrot.lane.b32.xlu0 %v10859, 32
    %v11250 = vpop.permute.xlu0 %11249
    %v11253 = vsel %vm10283, 0, %v10890
    %v11255 = vsel %vm10283, 0, %v10892
    %v11258 = vsel %vm10283, %v10828, %v10894
    %v11261 = vsel %vm10283, %v10829, %v10896
    %v11264 = vsel %vm10283, %v10830, %v10898
    %v11267 = vsel %vm10283, %v10831, %v10900
    %v11270 = vsel %vm10283, %v10832, %v10902
    %v11273 = vsel %vm10283, %v10833, %v10904
    %v11276 = vsel %vm10283, %v10834, %v10906
    %v11279 = vsel %vm10283, %v10835, %v10908
    %v11282 = vsel %vm10283, %v10836, %v10910
    %v11285 = vsel %vm10283, %v10837, %v10912
    %v11288 = vsel %vm10283, %v10838, %v10914
    %v11291 = vsel %vm10283, %v10839, %v10916
    %v11294 = vsel %vm10283, %v10840, %v10918
    %v11296 = vsel %vm10283, 0, %v10920
    %v11299 = vsel %vm10283, %v10844, %v10922
    %v11302 = vsel %vm10283, %v10845, %v10924
    %v11305 = vsel %vm10283, %v10846, %v10926
    %v11308 = vsel %vm10283, %v10847, %v10928
    %v11311 = vsel %vm10283, %v10848, %v10930
    %v11314 = vsel %vm10283, %v10849, %v10932
    %v11317 = vsel %vm10283, %v10850, %v10934
    %v11320 = vsel %vm10283, %v10851, %v10936
    %v11323 = vsel %vm10283, %v10852, %v10938
    %v11326 = vsel %vm10283, %v10853, %v10940
    %v11329 = vsel %vm10283, %v10854, %v10942
    %v11332 = vsel %vm10283, %v10855, %v10944
    %v11335 = vsel %vm10283, %v10856, %v10946
    %vm11336 = vcmask 785408
    %v11338 = vsel %vm11336, %v11253, %v10950
    %v11341 = vsel %vm11336, %v11253, %v10952
    %v11344 = vsel %vm11336, %v11255, %v10954
    %v11347 = vsel %vm11336, %v11258, %v10956
    %v11350 = vsel %vm11336, %v11261, %v10958
    %v11353 = vsel %vm11336, %v11264, %v10960
    %v11356 = vsel %vm11336, %v11267, %v10962
    %v11359 = vsel %vm11336, %v11270, %v10964
    %v11362 = vsel %vm11336, %v11273, %v10966
    %v11365 = vsel %vm11336, %v11276, %v10968
    %v11368 = vsel %vm11336, %v11279, %v10970
    %v11371 = vsel %vm11336, %v11282, %v10972
    %v11374 = vsel %vm11336, %v11285, %v10974
    %v11377 = vsel %vm11336, %v11288, %v10976
    %v11380 = vsel %vm11336, %v11291, %v10978
    %v11383 = vsel %vm11336, %v11294, %v10980
    %v11386 = vsel %vm11336, %v11253, %v10982
    %v11389 = vsel %vm11336, %v11296, %v10984
    %v11392 = vsel %vm11336, %v11299, %v10986
    %v11395 = vsel %vm11336, %v11302, %v10988
    %v11398 = vsel %vm11336, %v11305, %v10990
    %v11401 = vsel %vm11336, %v11308, %v10992
    %v11404 = vsel %vm11336, %v11311, %v10994
    %v11407 = vsel %vm11336, %v11314, %v10996
    %v11410 = vsel %vm11336, %v11317, %v10998
    %v11413 = vsel %vm11336, %v11320, %v11000
    %v11416 = vsel %vm11336, %v11323, %v11002
    %v11419 = vsel %vm11336, %v11326, %v11004
    %v11422 = vsel %vm11336, %v11329, %v11006
    %v11425 = vsel %vm11336, %v11332, %v11008
    %v11428 = vsel %vm11336, %v11335, %v11010
    %vm11430 = vcmask 130048
    %v11432 = vsel %vm11430, %v10950, %v11014
    %v11434 = vsel %vm11430, %v10952, %v11016
    %v11436 = vsel %vm11430, %v10954, %v11018
    %v11438 = vsel %vm11430, %v10956, %v11020
    %v11440 = vsel %vm11430, %v10958, %v11022
    %v11442 = vsel %vm11430, %v10960, %v11024
    %v11444 = vsel %vm11430, %v10962, %v11026
    %v11446 = vsel %vm11430, %v10964, %v11028
    %v11448 = vsel %vm11430, %v10966, %v11030
    %v11450 = vsel %vm11430, %v10968, %v11032
    %v11452 = vsel %vm11430, %v10970, %v11034
    %v11454 = vsel %vm11430, %v10972, %v11036
    %v11456 = vsel %vm11430, %v10974, %v11038
    %v11458 = vsel %vm11430, %v10976, %v11040
    %v11460 = vsel %vm11430, %v10978, %v11042
    %v11462 = vsel %vm11430, %v10980, %v11044
    %v11464 = vsel %vm11430, %v10950, %v11046
    %v11466 = vsel %vm11430, %v10982, %v11048
    %v11468 = vsel %vm11430, %v10984, %v11050
    %v11470 = vsel %vm11430, %v10986, %v11052
    %v11472 = vsel %vm11430, %v10988, %v11054
    %v11474 = vsel %vm11430, %v10990, %v11056
    %v11476 = vsel %vm11430, %v10992, %v11058
    %v11478 = vsel %vm11430, %v10994, %v11060
    %v11480 = vsel %vm11430, %v10996, %v11062
    %v11482 = vsel %vm11430, %v10998, %v11064
    %v11484 = vsel %vm11430, %v11000, %v11066
    %v11486 = vsel %vm11430, %v11002, %v11068
    %v11488 = vsel %vm11430, %v11004, %v11070
    %v11490 = vsel %vm11430, %v11006, %v11072
    %v11492 = vsel %vm11430, %v11008, %v11074
    %v11494 = vsel %vm11430, %v11010, %v11076
    %v11496 = vsel %vm6782, %v11432, %v11078
    %v11498 = vsel %vm6782, %v11434, %v11080
    %v11500 = vsel %vm6782, %v11436, %v11082
    %v11502 = vsel %vm6782, %v11438, %v11084
    %v11504 = vsel %vm6782, %v11440, %v11086
    %v11506 = vsel %vm6782, %v11442, %v11088
    %v11508 = vsel %vm6782, %v11444, %v11090
    %v11510 = vsel %vm6782, %v11446, %v11092
    %v11512 = vsel %vm6782, %v11448, %v11094
    %v11514 = vsel %vm6782, %v11450, %v11096
    %v11516 = vsel %vm6782, %v11452, %v11098
    %v11518 = vsel %vm6782, %v11454, %v11100
    %v11520 = vsel %vm6782, %v11456, %v11102
    %v11522 = vsel %vm6782, %v11458, %v11104
    %v11524 = vsel %vm6782, %v11460, %v11106
    %v11526 = vsel %vm6782, %v11462, %v11108
    %v11528 = vsel %vm6782, %v11464, %v11110
    %v11530 = vsel %vm6782, %v11466, %v11112
    %v11532 = vsel %vm6782, %v11468, %v11114
    %v11534 = vsel %vm6782, %v11470, %v11116
    %v11536 = vsel %vm6782, %v11472, %v11118
    %v11538 = vsel %vm6782, %v11474, %v11120
    %v11540 = vsel %vm6782, %v11476, %v11122
    %v11542 = vsel %vm6782, %v11478, %v11124
    %v11544 = vsel %vm6782, %v11480, %v11126
    %v11546 = vsel %vm6782, %v11482, %v11128
    %v11548 = vsel %vm6782, %v11484, %v11130
    %v11550 = vsel %vm6782, %v11486, %v11132
    %v11552 = vsel %vm6782, %v11488, %v11134
    %v11554 = vsel %vm6782, %v11490, %v11136
    %v11556 = vsel %vm6782, %v11492, %v11138
    %v11557 = vsel %vm6782, %v11494, %v11108
    %vm11558 = vcmask 916480
    %v11560 = vsel %vm11558, %v11496, %v11140
    %v11563 = vsel %vm11558, %v11498, %v11142
    %v11566 = vsel %vm11558, %v11500, %v11144
    %v11569 = vsel %vm11558, %v11502, %v11146
    %v11572 = vsel %vm11558, %v11504, %v11148
    %v11575 = vsel %vm11558, %v11506, %v11150
    %v11578 = vsel %vm11558, %v11508, %v11152
    %v11581 = vsel %vm11558, %v11510, %v11154
    %v11584 = vsel %vm11558, %v11512, %v11156
    %v11587 = vsel %vm11558, %v11514, %v11158
    %v11590 = vsel %vm11558, %v11516, %v11160
    %v11593 = vsel %vm11558, %v11518, %v11162
    %v11596 = vsel %vm11558, %v11520, %v11164
    %v11599 = vsel %vm11558, %v11522, %v11166
    %v11602 = vsel %vm11558, %v11524, %v11168
    %v11604 = vsel %vm11558, %v11526, %v11168
    %v11607 = vsel %vm11558, %v11528, %v11170
    %v11610 = vsel %vm11558, %v11530, %v11172
    %v11613 = vsel %vm11558, %v11532, %v11174
    %v11616 = vsel %vm11558, %v11534, %v11176
    %v11619 = vsel %vm11558, %v11536, %v11178
    %v11622 = vsel %vm11558, %v11538, %v11180
    %v11625 = vsel %vm11558, %v11540, %v11182
    %v11628 = vsel %vm11558, %v11542, %v11184
    %v11631 = vsel %vm11558, %v11544, %v11186
    %v11634 = vsel %vm11558, %v11546, %v11188
    %v11637 = vsel %vm11558, %v11548, %v11190
    %v11640 = vsel %vm11558, %v11550, %v11192
    %v11643 = vsel %vm11558, %v11552, %v11194
    %v11646 = vsel %vm11558, %v11554, %v11196
    %v11648 = vsel %vm11558, %v11556, %v11168
    %v11650 = vsel %vm11558, %v11557, %v11168
    %v11653 = vsel %vm1983, %v11140, %v11198
    %v11655 = vsel %vm1983, %v11142, %v11200
    %v11657 = vsel %vm1983, %v11144, %v11202
    %v11659 = vsel %vm1983, %v11146, %v11204
    %v11661 = vsel %vm1983, %v11148, %v11206
    %v11663 = vsel %vm1983, %v11150, %v11208
    %v11665 = vsel %vm1983, %v11152, %v11210
    %v11667 = vsel %vm1983, %v11154, %v11212
    %v11669 = vsel %vm1983, %v11156, %v11214
    %v11671 = vsel %vm1983, %v11158, %v11216
    %v11673 = vsel %vm1983, %v11160, %v11218
    %v11675 = vsel %vm1983, %v11162, %v11220
    %v11677 = vsel %vm1983, %v11164, %v11222
    %v11679 = vsel %vm1983, %v11166, %v11224
    %v11680 = vsel %vm1983, %v11168, %v11224
    %v11682 = vsel %vm1983, %v11170, %v11226
    %v11684 = vsel %vm1983, %v11172, %v11228
    %v11686 = vsel %vm1983, %v11174, %v11230
    %v11688 = vsel %vm1983, %v11176, %v11232
    %v11690 = vsel %vm1983, %v11178, %v11234
    %v11692 = vsel %vm1983, %v11180, %v11236
    %v11694 = vsel %vm1983, %v11182, %v11238
    %v11696 = vsel %vm1983, %v11184, %v11240
    %v11698 = vsel %vm1983, %v11186, %v11242
    %v11700 = vsel %vm1983, %v11188, %v11244
    %v11702 = vsel %vm1983, %v11190, %v11246
    %v11704 = vsel %vm1983, %v11192, %v11248
    %v11706 = vsel %vm1983, %v11194, %v11250
    %v11707 = vsel %vm1983, %v11196, %v11224
    %v11708 = vld [vmem:[%s10] sm:$0xf]
    %v11709 = vld [vmem:[%s10 + $0x4] sm:$0xf]
    %v11710 = vld [vmem:[%s10 + $0x8] sm:$0xf]
    %v11711 = vld [vmem:[%s10 + $0xc] sm:$0xf]
    %v11712 = vld [vmem:[%s10 + $0x10] sm:$0xf]
    %v11713 = vld [vmem:[%s10 + $0x14] sm:$0xf]
    %v11714 = vld [vmem:[%s10 + $0x18] sm:$0xf]
    %v11715 = vld [vmem:[%s10 + $0x1c] sm:$0xf]
    %v11716 = vld [vmem:[%s10 + $0x20] sm:$0xf]
    %v11717 = vld [vmem:[%s10 + $0x24] sm:$0xf]
    %v11718 = vld [vmem:[%s10 + $0x28] sm:$0xf]
    %v11719 = vld [vmem:[%s10 + $0x2c] sm:$0xf]
    %v11720 = vld [vmem:[%s10 + $0x30] sm:$0xf]
    %v11721 = vld [vmem:[%s10 + $0x34] sm:$0xf]
    %v11722 = vld [vmem:[%s10 + $0x38] sm:$0xf]
    %v11723 = vld [vmem:[%s10 + $0x3c] sm:$0xf]
    %v11724 = vld [vmem:[%s10 + $0x40] sm:$0xf]
    %v11725 = vld [vmem:[%s10 + $0x44] sm:$0xf]
    %v11726 = vld [vmem:[%s10 + $0x48] sm:$0xf]
    %v11727 = vld [vmem:[%s10 + $0x4c] sm:$0xf]
    %v11728 = vld [vmem:[%s10 + $0x50] sm:$0xf]
    %v11729 = vld [vmem:[%s10 + $0x54] sm:$0xf]
    %v11730 = vld [vmem:[%s10 + $0x58] sm:$0xf]
    %v11731 = vld [vmem:[%s10 + $0x5c] sm:$0xf]
    %v11732 = vld [vmem:[%s10 + $0x60] sm:$0xf]
    %v11733 = vld [vmem:[%s10 + $0x64] sm:$0xf]
    %v11734 = vld [vmem:[%s10 + $0x68] sm:$0xf]
    %v11735 = vld [vmem:[%s10 + $0x6c] sm:$0xf]
    %v11736 = vld [vmem:[%s10 + $0x70] sm:$0xf]
    %v11737 = vld [vmem:[%s10 + $0x74] sm:$0xf]
    %v11738 = vld [vmem:[%s10 + $0x78] sm:$0xf]
    %v11739 = vld [vmem:[%s10 + $0x7c] sm:$0xf]
    %v11740 = vld [vmem:[%s10 + $0x80] sm:$0xf]
    %v11741 = vld [vmem:[%s10 + $0x84] sm:$0xf]
    %v11742 = vld [vmem:[%s10 + $0x88] sm:$0xf]
    %v11743 = vld [vmem:[%s10 + $0x8c] sm:$0xf]
    %v11744 = vld [vmem:[%s10 + $0x90] sm:$0xf]
    %v11745 = vld [vmem:[%s10 + $0x94] sm:$0xf]
    %v11746 = vld [vmem:[%s10 + $0x98] sm:$0xf]
    %v11747 = vld [vmem:[%s10 + $0x9c] sm:$0xf]
    %v11748 = vld [vmem:[%s10 + $0xa0] sm:$0xf]
    %v11749 = vld [vmem:[%s10 + $0xa4] sm:$0xf]
    %v11750 = vld [vmem:[%s11] sm:$0x1]
    %v11752 = vlaneseq
    %v11753 = vshrl.u32 %v11752, 7
    %v11754 = vsub.s32 0, %v11753
    %v11755 = vrot.slane %v11750, %v11754
    %v11799 = vunpack.c.l.b16 %v11708
    %v11800 = vunpack.c.l.b16 %v11709
    %v11801 = vunpack.c.l.b16 %v11710
    %v11802 = vunpack.c.l.b16 %v11711
    %v11803 = vunpack.c.l.b16 %v11712
    %v11804 = vunpack.c.l.b16 %v11713
    %v11805 = vunpack.c.l.b16 %v11714
    %v11806 = vunpack.c.l.b16 %v11715
    %v11807 = vunpack.c.l.b16 %v11716
    %v11808 = vunpack.c.l.b16 %v11717
    %v11809 = vunpack.c.l.b16 %v11718
    %v11810 = vunpack.c.l.b16 %v11719
    %v11811 = vunpack.c.l.b16 %v11720
    %v11812 = vunpack.c.l.b16 %v11721
    %v11813 = vunpack.c.l.b16 %v11722
    %v11814 = vunpack.c.l.b16 %v11723
    %v11815 = vunpack.c.l.b16 %v11724
    %v11816 = vunpack.c.l.b16 %v11725
    %v11817 = vunpack.c.l.b16 %v11726
    %v11818 = vunpack.c.l.b16 %v11727
    %v11819 = vunpack.c.l.b16 %v11728
    %v11820 = vunpack.c.l.b16 %v11729
    %v11821 = vunpack.c.l.b16 %v11730
    %v11822 = vunpack.c.l.b16 %v11731
    %v11823 = vunpack.c.l.b16 %v11732
    %v11824 = vunpack.c.l.b16 %v11733
    %v11825 = vunpack.c.l.b16 %v11734
    %v11826 = vunpack.c.l.b16 %v11735
    %v11827 = vunpack.c.l.b16 %v11736
    %v11828 = vunpack.c.l.b16 %v11737
    %v11829 = vunpack.c.l.b16 %v11738
    %v11830 = vunpack.c.l.b16 %v11739
    %v11831 = vunpack.c.l.b16 %v11740
    %v11832 = vunpack.c.l.b16 %v11741
    %v11833 = vunpack.c.l.b16 %v11742
    %v11834 = vunpack.c.l.b16 %v11743
    %v11835 = vunpack.c.l.b16 %v11744
    %v11836 = vunpack.c.l.b16 %v11745
    %v11837 = vunpack.c.l.b16 %v11746
    %v11838 = vunpack.c.l.b16 %v11747
    %v11839 = vunpack.c.l.b16 %v11748
    %v11840 = vunpack.c.l.b16 %v11749
    %v11841 = vpack.c.b16 %v11800, %v11799
    %v11842 = vpack.c.b16 %v11802, %v11801
    %v11843 = vpack.c.b16 %v11804, %v11803
    %v11844 = vpack.c.b16 %v11806, %v11805
    %v11845 = vpack.c.b16 %v11808, %v11807
    %v11846 = vpack.c.b16 %v11810, %v11809
    %v11847 = vpack.c.b16 %v11812, %v11811
    %v11848 = vpack.c.b16 %v11814, %v11813
    %v11849 = vpack.c.b16 %v11816, %v11815
    %v11850 = vpack.c.b16 %v11818, %v11817
    %v11851 = vpack.c.b16 %v11820, %v11819
    %v11852 = vpack.c.b16 %v11822, %v11821
    %v11853 = vpack.c.b16 %v11824, %v11823
    %v11854 = vpack.c.b16 %v11826, %v11825
    %v11855 = vpack.c.b16 %v11828, %v11827
    %v11856 = vpack.c.b16 %v11830, %v11829
    %v11857 = vpack.c.b16 %v11832, %v11831
    %v11858 = vpack.c.b16 %v11834, %v11833
    %v11859 = vpack.c.b16 %v11836, %v11835
    %v11860 = vpack.c.b16 %v11838, %v11837
    %v11861 = vpack.c.b16 %v11840, %v11839
    %vm11883 = vcmask 654336
    %v11884 = vsel %vm11883, %v11653, 0
    %v11886 = vsel %vm11883, %v11655, 0
    %v11888 = vsel %vm11883, %v11657, 0
    %v11890 = vsel %vm11883, %v11659, 0
    %v11892 = vsel %vm11883, %v11661, 0
    %v11894 = vsel %vm11883, %v11663, 0
    %v11896 = vsel %vm11883, %v11665, 0
    %v11898 = vsel %vm11883, %v11667, 0
    %v11900 = vsel %vm11883, %v11669, 0
    %v11902 = vsel %vm11883, %v11671, 0
    %v11904 = vsel %vm11883, %v11673, 0
    %v11906 = vsel %vm11883, %v11675, 0
    %v11908 = vsel %vm11883, %v11677, 0
    %v11910 = vsel %vm11883, %v11679, 0
    %v11912 = vsel %vm11883, %v11680, 0
    %v11914 = vsel %vm11883, %v11682, 0
    %v11916 = vsel %vm11883, %v11684, 0
    %v11918 = vsel %vm11883, %v11686, 0
    %v11920 = vsel %vm11883, %v11688, 0
    %v11922 = vsel %vm11883, %v11690, 0
    %v11924 = vsel %vm11883, %v11692, 0
    %v11926 = vsel %vm11883, %v11694, 0
    %v11928 = vsel %vm11883, %v11696, 0
    %v11930 = vsel %vm11883, %v11698, 0
    %v11932 = vsel %vm11883, %v11700, 0
    %v11934 = vsel %vm11883, %v11702, 0
    %v11936 = vsel %vm11883, %v11704, 0
    %v11938 = vsel %vm11883, %v11706, 0
    %v11940 = vsel %vm11883, %v11707, 0
    %11942 = vmatprep.subr.bf16.mxu0 0
    %11943 = vmatpush1.bf16.msra.mxu0 %v11848
    %11944 = vmatprep.subr.bf16.mxu0 0
    %11945 = vmatpush1.bf16.msra.mxu0 %v11847
    %11946 = vmatprep.subr.bf16.mxu0 0
    %11947 = vmatpush1.bf16.msra.mxu0 %v11846
    %11948 = vmatprep.subr.bf16.mxu0 0
    %11949 = vmatpush1.bf16.msra.mxu0 %v11845
    %11950 = vmatprep.subr.bf16.mxu0 0
    %11951 = vmatpush1.bf16.msra.mxu0 %v11844
    %11952 = vmatprep.subr.bf16.mxu0 0
    %11953 = vmatpush1.bf16.msra.mxu0 %v11843
    %11954 = vmatprep.subr.bf16.mxu0 0
    %11955 = vmatpush1.bf16.msra.mxu0 %v11842
    %11956 = vmatprep.subr.bf16.mxu0 0
    %11957 = vmatpush1.bf16.msra.mxu0 %v11841
    %11958 = vmatprep.subr.bf16.mxu0 0
    %11959 = vmatpush2.bf16.msra.mxu0 %v11856
    %11960 = vmatprep.subr.bf16.mxu0 0
    %11961 = vmatpush2.bf16.msra.mxu0 %v11855
    %11962 = vmatprep.subr.bf16.mxu0 0
    %11963 = vmatpush2.bf16.msra.mxu0 %v11854
    %11964 = vmatprep.subr.bf16.mxu0 0
    %11965 = vmatpush2.bf16.msra.mxu0 %v11853
    %11966 = vmatprep.subr.bf16.mxu0 0
    %11967 = vmatpush2.bf16.msra.mxu0 %v11852
    %11968 = vmatprep.subr.bf16.mxu0 0
    %11969 = vmatpush2.bf16.msra.mxu0 %v11851
    %11970 = vmatprep.subr.bf16.mxu0 0
    %11971 = vmatpush2.bf16.msra.mxu0 %v11850
    %11972 = vmatprep.subr.bf16.mxu0 0
    %11973 = vmatpush2.bf16.msra.mxu0 %v11849
    %11974 = vmatprep.mubr.bf16.mxu0 %v11560
    %11975 = vmatmul.mubr.bf16.gmra.mxu0 %v11338
    %v11976 = vpop.f32.mrf.mxu0
    %v11977 = vadd.f32 %v11755, %v11976
    %v11978 = vpop.f32.mrf.mxu0
    %v11979 = vpop.f32.mrf.mxu0
    %v11980 = vadd.f32 %v11755, %v11979
    %v11981 = vpop.f32.mrf.mxu0
    %11982 = vmatprep.mubr.bf16.mxu0 %v11563
    %11983 = vmatmul.mubr.bf16.gmra.mxu0 %v11341
    %v11984 = vpop.f32.mrf.mxu0
    %v11985 = vadd.f32 %v11755, %v11984
    %v11986 = vpop.f32.mrf.mxu0
    %v11987 = vpop.f32.mrf.mxu0
    %v11988 = vadd.f32 %v11755, %v11987
    %v11989 = vpop.f32.mrf.mxu0
    %11990 = vmatprep.mubr.bf16.mxu0 %v11566
    %11991 = vmatmul.mubr.bf16.gmra.mxu0 %v11344
    %v11992 = vpop.f32.mrf.mxu0
    %v11993 = vadd.f32 %v11755, %v11992
    %v11994 = vpop.f32.mrf.mxu0
    %v11995 = vpop.f32.mrf.mxu0
    %v11996 = vadd.f32 %v11755, %v11995
    %v11997 = vpop.f32.mrf.mxu0
    %11998 = vmatprep.mubr.bf16.mxu0 %v11569
    %11999 = vmatmul.mubr.bf16.gmra.mxu0 %v11347
    %v12000 = vpop.f32.mrf.mxu0
    %v12001 = vadd.f32 %v11755, %v12000
    %v12002 = vpop.f32.mrf.mxu0
    %v12003 = vpop.f32.mrf.mxu0
    %v12004 = vadd.f32 %v11755, %v12003
    %v12005 = vpop.f32.mrf.mxu0
    %12006 = vmatprep.mubr.bf16.mxu0 %v11572
    %12007 = vmatmul.mubr.bf16.gmra.mxu0 %v11350
    %v12008 = vpop.f32.mrf.mxu0
    %v12009 = vadd.f32 %v11755, %v12008
    %v12010 = vpop.f32.mrf.mxu0
    %v12011 = vpop.f32.mrf.mxu0
    %v12012 = vadd.f32 %v11755, %v12011
    %v12013 = vpop.f32.mrf.mxu0
    %12014 = vmatprep.mubr.bf16.mxu0 %v11575
    %12015 = vmatmul.mubr.bf16.gmra.mxu0 %v11353
    %v12016 = vpop.f32.mrf.mxu0
    %v12017 = vadd.f32 %v11755, %v12016
    %v12018 = vpop.f32.mrf.mxu0
    %v12019 = vpop.f32.mrf.mxu0
    %v12020 = vadd.f32 %v11755, %v12019
    %v12021 = vpop.f32.mrf.mxu0
    %12022 = vmatprep.mubr.bf16.mxu0 %v11578
    %12023 = vmatmul.mubr.bf16.gmra.mxu0 %v11356
    %v12024 = vpop.f32.mrf.mxu0
    %v12025 = vadd.f32 %v11755, %v12024
    %v12026 = vpop.f32.mrf.mxu0
    %v12027 = vpop.f32.mrf.mxu0
    %v12028 = vadd.f32 %v11755, %v12027
    %v12029 = vpop.f32.mrf.mxu0
    %12030 = vmatprep.mubr.bf16.mxu0 %v11581
    %12031 = vmatmul.mubr.bf16.gmra.mxu0 %v11359
    %v12032 = vpop.f32.mrf.mxu0
    %v12033 = vadd.f32 %v11755, %v12032
    %v12034 = vpop.f32.mrf.mxu0
    %v12035 = vpop.f32.mrf.mxu0
    %v12036 = vadd.f32 %v11755, %v12035
    %v12037 = vpop.f32.mrf.mxu0
    %12038 = vmatprep.mubr.bf16.mxu0 %v11584
    %12039 = vmatmul.mubr.bf16.gmra.mxu0 %v11362
    %v12040 = vpop.f32.mrf.mxu0
    %v12041 = vadd.f32 %v11755, %v12040
    %v12042 = vpop.f32.mrf.mxu0
    %v12043 = vpop.f32.mrf.mxu0
    %v12044 = vadd.f32 %v11755, %v12043
    %v12045 = vpop.f32.mrf.mxu0
    %12046 = vmatprep.mubr.bf16.mxu0 %v11587
    %12047 = vmatmul.mubr.bf16.gmra.mxu0 %v11365
    %v12048 = vpop.f32.mrf.mxu0
    %v12049 = vadd.f32 %v11755, %v12048
    %v12050 = vpop.f32.mrf.mxu0
    %v12051 = vpop.f32.mrf.mxu0
    %v12052 = vadd.f32 %v11755, %v12051
    %v12053 = vpop.f32.mrf.mxu0
    %12054 = vmatprep.mubr.bf16.mxu0 %v11590
    %12055 = vmatmul.mubr.bf16.gmra.mxu0 %v11368
    %v12056 = vpop.f32.mrf.mxu0
    %v12057 = vadd.f32 %v11755, %v12056
    %v12058 = vpop.f32.mrf.mxu0
    %v12059 = vpop.f32.mrf.mxu0
    %v12060 = vadd.f32 %v11755, %v12059
    %v12061 = vpop.f32.mrf.mxu0
    %12062 = vmatprep.mubr.bf16.mxu0 %v11593
    %12063 = vmatmul.mubr.bf16.gmra.mxu0 %v11371
    %v12064 = vpop.f32.mrf.mxu0
    %v12065 = vadd.f32 %v11755, %v12064
    %v12066 = vpop.f32.mrf.mxu0
    %v12067 = vpop.f32.mrf.mxu0
    %v12068 = vadd.f32 %v11755, %v12067
    %v12069 = vpop.f32.mrf.mxu0
    %12070 = vmatprep.mubr.bf16.mxu0 %v11596
    %12071 = vmatmul.mubr.bf16.gmra.mxu0 %v11374
    %v12072 = vpop.f32.mrf.mxu0
    %v12073 = vadd.f32 %v11755, %v12072
    %v12074 = vpop.f32.mrf.mxu0
    %v12075 = vpop.f32.mrf.mxu0
    %v12076 = vadd.f32 %v11755, %v12075
    %v12077 = vpop.f32.mrf.mxu0
    %12078 = vmatprep.mubr.bf16.mxu0 %v11599
    %12079 = vmatmul.mubr.bf16.gmra.mxu0 %v11377
    %v12080 = vpop.f32.mrf.mxu0
    %v12081 = vadd.f32 %v11755, %v12080
    %v12082 = vpop.f32.mrf.mxu0
    %v12083 = vpop.f32.mrf.mxu0
    %v12084 = vadd.f32 %v11755, %v12083
    %v12085 = vpop.f32.mrf.mxu0
    %12086 = vmatprep.mubr.bf16.mxu0 %v11602
    %12087 = vmatmul.mubr.bf16.gmra.mxu0 %v11380
    %v12088 = vpop.f32.mrf.mxu0
    %v12089 = vadd.f32 %v11755, %v12088
    %v12090 = vpop.f32.mrf.mxu0
    %v12091 = vpop.f32.mrf.mxu0
    %v12092 = vadd.f32 %v11755, %v12091
    %v12093 = vpop.f32.mrf.mxu0
    %12094 = vmatprep.mubr.bf16.mxu0 %v11604
    %12095 = vmatmul.mubr.bf16.gmra.mxu0 %v11383
    %v12096 = vpop.f32.mrf.mxu0
    %v12097 = vadd.f32 %v11755, %v12096
    %v12098 = vpop.f32.mrf.mxu0
    %v12099 = vpop.f32.mrf.mxu0
    %v12100 = vadd.f32 %v11755, %v12099
    %v12101 = vpop.f32.mrf.mxu0
    %12102 = vmatprep.mubr.bf16.mxu0 %v11607
    %12103 = vmatmul.mubr.bf16.gmra.mxu0 %v11338
    %v12104 = vpop.f32.mrf.mxu0
    %v12105 = vadd.f32 %v11755, %v12104
    %v12106 = vpop.f32.mrf.mxu0
    %v12107 = vpop.f32.mrf.mxu0
    %v12108 = vadd.f32 %v11755, %v12107
    %v12109 = vpop.f32.mrf.mxu0
    %12110 = vmatprep.mubr.bf16.mxu0 %v11610
    %12111 = vmatmul.mubr.bf16.gmra.mxu0 %v11386
    %v12112 = vpop.f32.mrf.mxu0
    %v12113 = vadd.f32 %v11755, %v12112
    %v12114 = vpop.f32.mrf.mxu0
    %v12115 = vpop.f32.mrf.mxu0
    %v12116 = vadd.f32 %v11755, %v12115
    %v12117 = vpop.f32.mrf.mxu0
    %12118 = vmatprep.mubr.bf16.mxu0 %v11613
    %12119 = vmatmul.mubr.bf16.gmra.mxu0 %v11389
    %v12120 = vpop.f32.mrf.mxu0
    %v12121 = vadd.f32 %v11755, %v12120
    %v12122 = vpop.f32.mrf.mxu0
    %v12123 = vpop.f32.mrf.mxu0
    %v12124 = vadd.f32 %v11755, %v12123
    %v12125 = vpop.f32.mrf.mxu0
    %12126 = vmatprep.mubr.bf16.mxu0 %v11616
    %12127 = vmatmul.mubr.bf16.gmra.mxu0 %v11392
    %v12128 = vpop.f32.mrf.mxu0
    %v12129 = vadd.f32 %v11755, %v12128
    %v12130 = vpop.f32.mrf.mxu0
    %v12131 = vpop.f32.mrf.mxu0
    %v12132 = vadd.f32 %v11755, %v12131
    %v12133 = vpop.f32.mrf.mxu0
    %12134 = vmatprep.mubr.bf16.mxu0 %v11619
    %12135 = vmatmul.mubr.bf16.gmra.mxu0 %v11395
    %v12136 = vpop.f32.mrf.mxu0
    %v12137 = vadd.f32 %v11755, %v12136
    %v12138 = vpop.f32.mrf.mxu0
    %v12139 = vpop.f32.mrf.mxu0
    %v12140 = vadd.f32 %v11755, %v12139
    %v12141 = vpop.f32.mrf.mxu0
    %12142 = vmatprep.mubr.bf16.mxu0 %v11622
    %12143 = vmatmul.mubr.bf16.gmra.mxu0 %v11398
    %v12144 = vpop.f32.mrf.mxu0
    %v12145 = vadd.f32 %v11755, %v12144
    %v12146 = vpop.f32.mrf.mxu0
    %v12147 = vpop.f32.mrf.mxu0
    %v12148 = vadd.f32 %v11755, %v12147
    %v12149 = vpop.f32.mrf.mxu0
    %12150 = vmatprep.mubr.bf16.mxu0 %v11625
    %12151 = vmatmul.mubr.bf16.gmra.mxu0 %v11401
    %v12152 = vpop.f32.mrf.mxu0
    %v12153 = vadd.f32 %v11755, %v12152
    %v12154 = vpop.f32.mrf.mxu0
    %v12155 = vpop.f32.mrf.mxu0
    %v12156 = vadd.f32 %v11755, %v12155
    %v12157 = vpop.f32.mrf.mxu0
    %12158 = vmatprep.mubr.bf16.mxu0 %v11628
    %12159 = vmatmul.mubr.bf16.gmra.mxu0 %v11404
    %v12160 = vpop.f32.mrf.mxu0
    %v12161 = vadd.f32 %v11755, %v12160
    %v12162 = vpop.f32.mrf.mxu0
    %v12163 = vpop.f32.mrf.mxu0
    %v12164 = vadd.f32 %v11755, %v12163
    %v12165 = vpop.f32.mrf.mxu0
    %12166 = vmatprep.mubr.bf16.mxu0 %v11631
    %12167 = vmatmul.mubr.bf16.gmra.mxu0 %v11407
    %v12168 = vpop.f32.mrf.mxu0
    %v12169 = vadd.f32 %v11755, %v12168
    %v12170 = vpop.f32.mrf.mxu0
    %v12171 = vpop.f32.mrf.mxu0
    %v12172 = vadd.f32 %v11755, %v12171
    %v12173 = vpop.f32.mrf.mxu0
    %12174 = vmatprep.mubr.bf16.mxu0 %v11634
    %12175 = vmatmul.mubr.bf16.gmra.mxu0 %v11410
    %v12176 = vpop.f32.mrf.mxu0
    %v12177 = vadd.f32 %v11755, %v12176
    %v12178 = vpop.f32.mrf.mxu0
    %v12179 = vpop.f32.mrf.mxu0
    %v12180 = vadd.f32 %v11755, %v12179
    %v12181 = vpop.f32.mrf.mxu0
    %12182 = vmatprep.mubr.bf16.mxu0 %v11637
    %12183 = vmatmul.mubr.bf16.gmra.mxu0 %v11413
    %v12184 = vpop.f32.mrf.mxu0
    %v12185 = vadd.f32 %v11755, %v12184
    %v12186 = vpop.f32.mrf.mxu0
    %v12187 = vpop.f32.mrf.mxu0
    %v12188 = vadd.f32 %v11755, %v12187
    %v12189 = vpop.f32.mrf.mxu0
    %12190 = vmatprep.mubr.bf16.mxu0 %v11640
    %12191 = vmatmul.mubr.bf16.gmra.mxu0 %v11416
    %v12192 = vpop.f32.mrf.mxu0
    %v12193 = vadd.f32 %v11755, %v12192
    %v12194 = vpop.f32.mrf.mxu0
    %v12195 = vpop.f32.mrf.mxu0
    %v12196 = vadd.f32 %v11755, %v12195
    %v12197 = vpop.f32.mrf.mxu0
    %12198 = vmatprep.mubr.bf16.mxu0 %v11643
    %12199 = vmatmul.mubr.bf16.gmra.mxu0 %v11419
    %v12200 = vpop.f32.mrf.mxu0
    %v12201 = vadd.f32 %v11755, %v12200
    %v12202 = vpop.f32.mrf.mxu0
    %v12203 = vpop.f32.mrf.mxu0
    %v12204 = vadd.f32 %v11755, %v12203
    %v12205 = vpop.f32.mrf.mxu0
    %12206 = vmatprep.mubr.bf16.mxu0 %v11646
    %12207 = vmatmul.mubr.bf16.gmra.mxu0 %v11422
    %v12208 = vpop.f32.mrf.mxu0
    %v12209 = vadd.f32 %v11755, %v12208
    %v12210 = vpop.f32.mrf.mxu0
    %v12211 = vpop.f32.mrf.mxu0
    %v12212 = vadd.f32 %v11755, %v12211
    %v12213 = vpop.f32.mrf.mxu0
    %12214 = vmatprep.mubr.bf16.mxu0 %v11648
    %12215 = vmatmul.mubr.bf16.gmra.mxu0 %v11425
    %v12216 = vpop.f32.mrf.mxu0
    %v12217 = vadd.f32 %v11755, %v12216
    %v12218 = vpop.f32.mrf.mxu0
    %v12219 = vpop.f32.mrf.mxu0
    %v12220 = vadd.f32 %v11755, %v12219
    %v12221 = vpop.f32.mrf.mxu0
    %12222 = vmatprep.mubr.bf16.mxu0 %v11650
    %12223 = vmatmul.mubr.bf16.gmra.mxu0 %v11428
    %v12224 = vpop.f32.mrf.mxu0
    %v12225 = vadd.f32 %v11755, %v12224
    %v12226 = vpop.f32.mrf.mxu0
    %v12227 = vpop.f32.mrf.mxu0
    %v12228 = vadd.f32 %v11755, %v12227
    %v12229 = vpop.f32.mrf.mxu0
    %12230 = vdwg.mxu0
    %12231 = vmatprep.subr.bf16.mxu0 0
    %12232 = vmatpush1.bf16.msra.mxu0 0
    %12233 = vmatprep.subr.bf16.mxu0 0
    %12234 = vmatpush1.bf16.msra.mxu0 0
    %12235 = vmatprep.subr.bf16.mxu0 0
    %12236 = vmatpush1.bf16.msra.mxu0 0
    %12237 = vmatprep.subr.bf16.mxu0 0
    %12238 = vmatpush1.bf16.msra.mxu0 %v11861
    %12239 = vmatprep.subr.bf16.mxu0 0
    %12240 = vmatpush1.bf16.msra.mxu0 %v11860
    %12241 = vmatprep.subr.bf16.mxu0 0
    %12242 = vmatpush1.bf16.msra.mxu0 %v11859
    %12243 = vmatprep.subr.bf16.mxu0 0
    %12244 = vmatpush1.bf16.msra.mxu0 %v11858
    %12245 = vmatprep.subr.bf16.mxu0 0
    %12246 = vmatpush1.bf16.msra.mxu0 %v11857
    %12247 = vmatprep.subr.bf16.mxu0 0
    %12248 = vmatpush2.bf16.msra.mxu0 0
    %12249 = vmatprep.subr.bf16.mxu0 0
    %12250 = vmatpush2.bf16.msra.mxu0 0
    %12251 = vmatprep.subr.bf16.mxu0 0
    %12252 = vmatpush2.bf16.msra.mxu0 0
    %12253 = vmatprep.subr.bf16.mxu0 0
    %12254 = vmatpush2.bf16.msra.mxu0 0
    %12255 = vmatprep.subr.bf16.mxu0 0
    %12256 = vmatpush2.bf16.msra.mxu0 0
    %12257 = vmatprep.subr.bf16.mxu0 0
    %12258 = vmatpush2.bf16.msra.mxu0 0
    %12259 = vmatprep.subr.bf16.mxu0 0
    %12260 = vmatpush2.bf16.msra.mxu0 0
    %12261 = vmatprep.subr.bf16.mxu0 0
    %12262 = vmatpush2.bf16.msra.mxu0 0
    %12263 = vmatprep.mubr.bf16.mxu0 0
    %12264 = vmatmul.mubr.bf16.gmra.mxu0 %v11884
    %v12265 = vpop.f32.mrf.mxu0
    %v12266 = vadd.f32 %v11977, %v12265
    %v12267 = vpop.f32.mrf.mxu0
    %v12268 = vpop.f32.mrf.mxu0
    %v12269 = vadd.f32 %v11980, %v12268
    %v12270 = vpop.f32.mrf.mxu0
    %12271 = vmatprep.mubr.bf16.mxu0 0
    %12272 = vmatmul.mubr.bf16.gmra.mxu0 %v11886
    %v12273 = vpop.f32.mrf.mxu0
    %v12274 = vadd.f32 %v11985, %v12273
    %v12275 = vpop.f32.mrf.mxu0
    %v12276 = vpop.f32.mrf.mxu0
    %v12277 = vadd.f32 %v11988, %v12276
    %v12278 = vpop.f32.mrf.mxu0
    %12279 = vmatprep.mubr.bf16.mxu0 0
    %12280 = vmatmul.mubr.bf16.gmra.mxu0 %v11888
    %v12281 = vpop.f32.mrf.mxu0
    %v12282 = vadd.f32 %v11993, %v12281
    %v12283 = vpop.f32.mrf.mxu0
    %v12284 = vpop.f32.mrf.mxu0
    %v12285 = vadd.f32 %v11996, %v12284
    %v12286 = vpop.f32.mrf.mxu0
    %12287 = vmatprep.mubr.bf16.mxu0 0
    %12288 = vmatmul.mubr.bf16.gmra.mxu0 %v11890
    %v12289 = vpop.f32.mrf.mxu0
    %v12290 = vadd.f32 %v12001, %v12289
    %v12291 = vpop.f32.mrf.mxu0
    %v12292 = vpop.f32.mrf.mxu0
    %v12293 = vadd.f32 %v12004, %v12292
    %v12294 = vpop.f32.mrf.mxu0
    %12295 = vmatprep.mubr.bf16.mxu0 0
    %12296 = vmatmul.mubr.bf16.gmra.mxu0 %v11892
    %v12297 = vpop.f32.mrf.mxu0
    %v12298 = vadd.f32 %v12009, %v12297
    %v12299 = vpop.f32.mrf.mxu0
    %v12300 = vpop.f32.mrf.mxu0
    %v12301 = vadd.f32 %v12012, %v12300
    %v12302 = vpop.f32.mrf.mxu0
    %12303 = vmatprep.mubr.bf16.mxu0 0
    %12304 = vmatmul.mubr.bf16.gmra.mxu0 %v11894
    %v12305 = vpop.f32.mrf.mxu0
    %v12306 = vadd.f32 %v12017, %v12305
    %v12307 = vpop.f32.mrf.mxu0
    %v12308 = vpop.f32.mrf.mxu0
    %v12309 = vadd.f32 %v12020, %v12308
    %v12310 = vpop.f32.mrf.mxu0
    %12311 = vmatprep.mubr.bf16.mxu0 0
    %12312 = vmatmul.mubr.bf16.gmra.mxu0 %v11896
    %v12313 = vpop.f32.mrf.mxu0
    %v12314 = vadd.f32 %v12025, %v12313
    %v12315 = vpop.f32.mrf.mxu0
    %v12316 = vpop.f32.mrf.mxu0
    %v12317 = vadd.f32 %v12028, %v12316
    %v12318 = vpop.f32.mrf.mxu0
    %12319 = vmatprep.mubr.bf16.mxu0 0
    %12320 = vmatmul.mubr.bf16.gmra.mxu0 %v11898
    %v12321 = vpop.f32.mrf.mxu0
    %v12322 = vadd.f32 %v12033, %v12321
    %v12323 = vpop.f32.mrf.mxu0
    %v12324 = vpop.f32.mrf.mxu0
    %v12325 = vadd.f32 %v12036, %v12324
    %v12326 = vpop.f32.mrf.mxu0
    %12327 = vmatprep.mubr.bf16.mxu0 0
    %12328 = vmatmul.mubr.bf16.gmra.mxu0 %v11900
    %v12329 = vpop.f32.mrf.mxu0
    %v12330 = vadd.f32 %v12041, %v12329
    %v12331 = vpop.f32.mrf.mxu0
    %v12332 = vpop.f32.mrf.mxu0
    %v12333 = vadd.f32 %v12044, %v12332
    %v12334 = vpop.f32.mrf.mxu0
    %12335 = vmatprep.mubr.bf16.mxu0 0
    %12336 = vmatmul.mubr.bf16.gmra.mxu0 %v11902
    %v12337 = vpop.f32.mrf.mxu0
    %v12338 = vadd.f32 %v12049, %v12337
    %v12339 = vpop.f32.mrf.mxu0
    %v12340 = vpop.f32.mrf.mxu0
    %v12341 = vadd.f32 %v12052, %v12340
    %v12342 = vpop.f32.mrf.mxu0
    %12343 = vmatprep.mubr.bf16.mxu0 0
    %12344 = vmatmul.mubr.bf16.gmra.mxu0 %v11904
    %v12345 = vpop.f32.mrf.mxu0
    %v12346 = vadd.f32 %v12057, %v12345
    %v12347 = vpop.f32.mrf.mxu0
    %v12348 = vpop.f32.mrf.mxu0
    %v12349 = vadd.f32 %v12060, %v12348
    %v12350 = vpop.f32.mrf.mxu0
    %12351 = vmatprep.mubr.bf16.mxu0 0
    %12352 = vmatmul.mubr.bf16.gmra.mxu0 %v11906
    %v12353 = vpop.f32.mrf.mxu0
    %v12354 = vadd.f32 %v12065, %v12353
    %v12355 = vpop.f32.mrf.mxu0
    %v12356 = vpop.f32.mrf.mxu0
    %v12357 = vadd.f32 %v12068, %v12356
    %v12358 = vpop.f32.mrf.mxu0
    %12359 = vmatprep.mubr.bf16.mxu0 0
    %12360 = vmatmul.mubr.bf16.gmra.mxu0 %v11908
    %v12361 = vpop.f32.mrf.mxu0
    %v12362 = vadd.f32 %v12073, %v12361
    %v12363 = vpop.f32.mrf.mxu0
    %v12364 = vpop.f32.mrf.mxu0
    %v12365 = vadd.f32 %v12076, %v12364
    %v12366 = vpop.f32.mrf.mxu0
    %12367 = vmatprep.mubr.bf16.mxu0 0
    %12368 = vmatmul.mubr.bf16.gmra.mxu0 %v11910
    %v12369 = vpop.f32.mrf.mxu0
    %v12370 = vadd.f32 %v12081, %v12369
    %v12371 = vpop.f32.mrf.mxu0
    %v12372 = vpop.f32.mrf.mxu0
    %v12373 = vadd.f32 %v12084, %v12372
    %v12374 = vpop.f32.mrf.mxu0
    %12375 = vmatprep.mubr.bf16.mxu0 0
    %12376 = vmatmul.mubr.bf16.gmra.mxu0 %v11912
    %v12377 = vpop.f32.mrf.mxu0
    %v12378 = vadd.f32 %v12089, %v12377
    %v12379 = vpop.f32.mrf.mxu0
    %v12380 = vpop.f32.mrf.mxu0
    %v12381 = vadd.f32 %v12092, %v12380
    %v12382 = vpop.f32.mrf.mxu0
    %12383 = vmatprep.mubr.bf16.mxu0 0
    %12384 = vmatmul.mubr.bf16.gmra.mxu0 %v11912
    %v12385 = vpop.f32.mrf.mxu0
    %v12386 = vadd.f32 %v12097, %v12385
    %v12387 = vpop.f32.mrf.mxu0
    %v12388 = vpop.f32.mrf.mxu0
    %v12389 = vadd.f32 %v12100, %v12388
    %v12390 = vpop.f32.mrf.mxu0
    %12391 = vmatprep.mubr.bf16.mxu0 0
    %12392 = vmatmul.mubr.bf16.gmra.mxu0 %v11914
    %v12393 = vpop.f32.mrf.mxu0
    %v12394 = vadd.f32 %v12105, %v12393
    %v12395 = vpop.f32.mrf.mxu0
    %v12396 = vpop.f32.mrf.mxu0
    %v12397 = vadd.f32 %v12108, %v12396
    %v12398 = vpop.f32.mrf.mxu0
    %12399 = vmatprep.mubr.bf16.mxu0 0
    %12400 = vmatmul.mubr.bf16.gmra.mxu0 %v11916
    %v12401 = vpop.f32.mrf.mxu0
    %v12402 = vadd.f32 %v12113, %v12401
    %v12403 = vpop.f32.mrf.mxu0
    %v12404 = vpop.f32.mrf.mxu0
    %v12405 = vadd.f32 %v12116, %v12404
    %v12406 = vpop.f32.mrf.mxu0
    %12407 = vmatprep.mubr.bf16.mxu0 0
    %12408 = vmatmul.mubr.bf16.gmra.mxu0 %v11918
    %v12409 = vpop.f32.mrf.mxu0
    %v12410 = vadd.f32 %v12121, %v12409
    %v12411 = vpop.f32.mrf.mxu0
    %v12412 = vpop.f32.mrf.mxu0
    %v12413 = vadd.f32 %v12124, %v12412
    %v12414 = vpop.f32.mrf.mxu0
    %12415 = vmatprep.mubr.bf16.mxu0 0
    %12416 = vmatmul.mubr.bf16.gmra.mxu0 %v11920
    %v12417 = vpop.f32.mrf.mxu0
    %v12418 = vadd.f32 %v12129, %v12417
    %v12419 = vpop.f32.mrf.mxu0
    %v12420 = vpop.f32.mrf.mxu0
    %v12421 = vadd.f32 %v12132, %v12420
    %v12422 = vpop.f32.mrf.mxu0
    %12423 = vmatprep.mubr.bf16.mxu0 0
    %12424 = vmatmul.mubr.bf16.gmra.mxu0 %v11922
    %v12425 = vpop.f32.mrf.mxu0
    %v12426 = vadd.f32 %v12137, %v12425
    %v12427 = vpop.f32.mrf.mxu0
    %v12428 = vpop.f32.mrf.mxu0
    %v12429 = vadd.f32 %v12140, %v12428
    %v12430 = vpop.f32.mrf.mxu0
    %12431 = vmatprep.mubr.bf16.mxu0 0
    %12432 = vmatmul.mubr.bf16.gmra.mxu0 %v11924
    %v12433 = vpop.f32.mrf.mxu0
    %v12434 = vadd.f32 %v12145, %v12433
    %v12435 = vpop.f32.mrf.mxu0
    %v12436 = vpop.f32.mrf.mxu0
    %v12437 = vadd.f32 %v12148, %v12436
    %v12438 = vpop.f32.mrf.mxu0
    %12439 = vmatprep.mubr.bf16.mxu0 0
    %12440 = vmatmul.mubr.bf16.gmra.mxu0 %v11926
    %v12441 = vpop.f32.mrf.mxu0
    %v12442 = vadd.f32 %v12153, %v12441
    %v12443 = vpop.f32.mrf.mxu0
    %v12444 = vpop.f32.mrf.mxu0
    %v12445 = vadd.f32 %v12156, %v12444
    %v12446 = vpop.f32.mrf.mxu0
    %12447 = vmatprep.mubr.bf16.mxu0 0
    %12448 = vmatmul.mubr.bf16.gmra.mxu0 %v11928
    %v12449 = vpop.f32.mrf.mxu0
    %v12450 = vadd.f32 %v12161, %v12449
    %v12451 = vpop.f32.mrf.mxu0
    %v12452 = vpop.f32.mrf.mxu0
    %v12453 = vadd.f32 %v12164, %v12452
    %v12454 = vpop.f32.mrf.mxu0
    %12455 = vmatprep.mubr.bf16.mxu0 0
    %12456 = vmatmul.mubr.bf16.gmra.mxu0 %v11930
    %v12457 = vpop.f32.mrf.mxu0
    %v12458 = vadd.f32 %v12169, %v12457
    %v12459 = vpop.f32.mrf.mxu0
    %v12460 = vpop.f32.mrf.mxu0
    %v12461 = vadd.f32 %v12172, %v12460
    %v12462 = vpop.f32.mrf.mxu0
    %12463 = vmatprep.mubr.bf16.mxu0 0
    %12464 = vmatmul.mubr.bf16.gmra.mxu0 %v11932
    %v12465 = vpop.f32.mrf.mxu0
    %v12466 = vadd.f32 %v12177, %v12465
    %v12467 = vpop.f32.mrf.mxu0
    %v12468 = vpop.f32.mrf.mxu0
    %v12469 = vadd.f32 %v12180, %v12468
    %v12470 = vpop.f32.mrf.mxu0
    %12471 = vmatprep.mubr.bf16.mxu0 0
    %12472 = vmatmul.mubr.bf16.gmra.mxu0 %v11934
    %v12473 = vpop.f32.mrf.mxu0
    %v12474 = vadd.f32 %v12185, %v12473
    %v12475 = vpop.f32.mrf.mxu0
    %v12476 = vpop.f32.mrf.mxu0
    %v12477 = vadd.f32 %v12188, %v12476
    %v12478 = vpop.f32.mrf.mxu0
    %12479 = vmatprep.mubr.bf16.mxu0 0
    %12480 = vmatmul.mubr.bf16.gmra.mxu0 %v11936
    %v12481 = vpop.f32.mrf.mxu0
    %v12482 = vadd.f32 %v12193, %v12481
    %v12483 = vpop.f32.mrf.mxu0
    %v12484 = vpop.f32.mrf.mxu0
    %v12485 = vadd.f32 %v12196, %v12484
    %v12486 = vpop.f32.mrf.mxu0
    %12487 = vmatprep.mubr.bf16.mxu0 0
    %12488 = vmatmul.mubr.bf16.gmra.mxu0 %v11938
    %v12489 = vpop.f32.mrf.mxu0
    %v12490 = vadd.f32 %v12201, %v12489
    %v12491 = vpop.f32.mrf.mxu0
    %v12492 = vpop.f32.mrf.mxu0
    %v12493 = vadd.f32 %v12204, %v12492
    %v12494 = vpop.f32.mrf.mxu0
    %12495 = vmatprep.mubr.bf16.mxu0 0
    %12496 = vmatmul.mubr.bf16.gmra.mxu0 %v11940
    %v12497 = vpop.f32.mrf.mxu0
    %v12498 = vadd.f32 %v12209, %v12497
    %v12499 = vpop.f32.mrf.mxu0
    %v12500 = vpop.f32.mrf.mxu0
    %v12501 = vadd.f32 %v12212, %v12500
    %v12502 = vpop.f32.mrf.mxu0
    %12503 = vmatprep.mubr.bf16.mxu0 0
    %12504 = vmatmul.mubr.bf16.gmra.mxu0 %v11912
    %v12505 = vpop.f32.mrf.mxu0
    %v12506 = vadd.f32 %v12217, %v12505
    %v12507 = vpop.f32.mrf.mxu0
    %v12508 = vpop.f32.mrf.mxu0
    %v12509 = vadd.f32 %v12220, %v12508
    %v12510 = vpop.f32.mrf.mxu0
    %12511 = vmatprep.mubr.bf16.mxu0 0
    %12512 = vmatmul.mubr.bf16.gmra.mxu0 %v11912
    %v12513 = vpop.f32.mrf.mxu0
    %v12514 = vadd.f32 %v12225, %v12513
    %v12515 = vpop.f32.mrf.mxu0
    %v12516 = vpop.f32.mrf.mxu0
    %v12517 = vadd.f32 %v12228, %v12516
    %v12518 = vpop.f32.mrf.mxu0
    %12519 = vdwg.mxu0
    %v12520 = vld [vmem:[%s12] sm:$0x1]
    %v12521 = vld [vmem:[%s13] sm:$0x1]
    %vm12522 = vcmask 326656
    %v12523 = vsel %vm12522, %v12266, 0.0
    %v12524 = vsel %vm12522, %v12269, 0.0
    %v12525 = vadd.f32 %v12523, %v12524
    %v12526 = vsel %vm12522, %v12274, 0.0
    %v12527 = vadd.f32 %v12525, %v12526
    %v12528 = vsel %vm12522, %v12277, 0.0
    %v12529 = vadd.f32 %v12527, %v12528
    %v12530 = vsel %vm12522, %v12282, 0.0
    %v12531 = vadd.f32 %v12529, %v12530
    %v12532 = vsel %vm12522, %v12285, 0.0
    %v12533 = vadd.f32 %v12531, %v12532
    %v12534 = vsel %vm12522, %v12290, 0.0
    %v12535 = vadd.f32 %v12533, %v12534
    %v12536 = vsel %vm12522, %v12293, 0.0
    %v12537 = vadd.f32 %v12535, %v12536
    %v12538 = vsel %vm12522, %v12298, 0.0
    %v12539 = vadd.f32 %v12537, %v12538
    %v12540 = vsel %vm12522, %v12301, 0.0
    %v12541 = vadd.f32 %v12539, %v12540
    %v12542 = vsel %vm12522, %v12306, 0.0
    %v12543 = vadd.f32 %v12541, %v12542
    %v12544 = vsel %vm12522, %v12309, 0.0
    %v12545 = vadd.f32 %v12543, %v12544
    %v12546 = vsel %vm12522, %v12314, 0.0
    %v12547 = vadd.f32 %v12545, %v12546
    %v12548 = vsel %vm12522, %v12317, 0.0
    %v12549 = vadd.f32 %v12547, %v12548
    %v12550 = vsel %vm12522, %v12322, 0.0
    %v12551 = vadd.f32 %v12549, %v12550
    %v12552 = vsel %vm12522, %v12325, 0.0
    %v12553 = vadd.f32 %v12551, %v12552
    %v12554 = vsel %vm12522, %v12330, 0.0
    %v12555 = vadd.f32 %v12553, %v12554
    %v12556 = vsel %vm12522, %v12333, 0.0
    %v12557 = vadd.f32 %v12555, %v12556
    %v12558 = vsel %vm12522, %v12338, 0.0
    %v12559 = vadd.f32 %v12557, %v12558
    %v12560 = vsel %vm12522, %v12341, 0.0
    %v12561 = vadd.f32 %v12559, %v12560
    %v12562 = vsel %vm12522, %v12346, 0.0
    %v12563 = vadd.f32 %v12561, %v12562
    %v12564 = vsel %vm12522, %v12349, 0.0
    %v12565 = vadd.f32 %v12563, %v12564
    %v12566 = vsel %vm12522, %v12354, 0.0
    %v12567 = vadd.f32 %v12565, %v12566
    %v12568 = vsel %vm12522, %v12357, 0.0
    %v12569 = vadd.f32 %v12567, %v12568
    %v12570 = vsel %vm12522, %v12362, 0.0
    %v12571 = vadd.f32 %v12569, %v12570
    %v12572 = vsel %vm12522, %v12365, 0.0
    %v12573 = vadd.f32 %v12571, %v12572
    %v12574 = vsel %vm12522, %v12370, 0.0
    %v12575 = vadd.f32 %v12573, %v12574
    %v12576 = vsel %vm12522, %v12373, 0.0
    %v12577 = vadd.f32 %v12575, %v12576
    %v12578 = vsel %vm12522, %v12378, 0.0
    %v12579 = vadd.f32 %v12577, %v12578
    %v12580 = vsel %vm12522, %v12381, 0.0
    %v12581 = vadd.f32 %v12579, %v12580
    %v12582 = vsel %vm12522, %v12386, 0.0
    %v12583 = vadd.f32 %v12581, %v12582
    %v12584 = vsel %vm12522, %v12389, 0.0
    %v12585 = vadd.f32 %v12583, %v12584
    %v12586 = vsel %vm12522, %v12394, 0.0
    %v12587 = vadd.f32 %v12585, %v12586
    %v12588 = vsel %vm12522, %v12397, 0.0
    %v12589 = vadd.f32 %v12587, %v12588
    %v12590 = vsel %vm12522, %v12402, 0.0
    %v12591 = vadd.f32 %v12589, %v12590
    %v12592 = vsel %vm12522, %v12405, 0.0
    %v12593 = vadd.f32 %v12591, %v12592
    %v12594 = vsel %vm12522, %v12410, 0.0
    %v12595 = vadd.f32 %v12593, %v12594
    %v12596 = vsel %vm12522, %v12413, 0.0
    %v12597 = vadd.f32 %v12595, %v12596
    %v12598 = vsel %vm12522, %v12418, 0.0
    %v12599 = vadd.f32 %v12597, %v12598
    %v12600 = vsel %vm12522, %v12421, 0.0
    %v12601 = vadd.f32 %v12599, %v12600
    %v12602 = vsel %vm12522, %v12426, 0.0
    %v12603 = vadd.f32 %v12601, %v12602
    %v12604 = vsel %vm12522, %v12429, 0.0
    %v12605 = vadd.f32 %v12603, %v12604
    %v12606 = vsel %vm12522, %v12434, 0.0
    %v12607 = vadd.f32 %v12605, %v12606
    %v12608 = vsel %vm12522, %v12437, 0.0
    %v12609 = vadd.f32 %v12607, %v12608
    %v12610 = vsel %vm12522, %v12442, 0.0
    %v12611 = vadd.f32 %v12609, %v12610
    %v12612 = vsel %vm12522, %v12445, 0.0
    %v12613 = vadd.f32 %v12611, %v12612
    %v12614 = vsel %vm12522, %v12450, 0.0
    %v12615 = vadd.f32 %v12613, %v12614
    %v12616 = vsel %vm12522, %v12453, 0.0
    %v12617 = vadd.f32 %v12615, %v12616
    %v12618 = vsel %vm12522, %v12458, 0.0
    %v12619 = vadd.f32 %v12617, %v12618
    %v12620 = vsel %vm12522, %v12461, 0.0
    %v12621 = vadd.f32 %v12619, %v12620
    %v12622 = vsel %vm12522, %v12466, 0.0
    %v12623 = vadd.f32 %v12621, %v12622
    %v12624 = vsel %vm12522, %v12469, 0.0
    %v12625 = vadd.f32 %v12623, %v12624
    %v12626 = vsel %vm12522, %v12474, 0.0
    %v12627 = vadd.f32 %v12625, %v12626
    %v12628 = vsel %vm12522, %v12477, 0.0
    %v12629 = vadd.f32 %v12627, %v12628
    %v12630 = vsel %vm12522, %v12482, 0.0
    %v12631 = vadd.f32 %v12629, %v12630
    %v12632 = vsel %vm12522, %v12485, 0.0
    %v12633 = vadd.f32 %v12631, %v12632
    %v12634 = vsel %vm12522, %v12490, 0.0
    %v12635 = vadd.f32 %v12633, %v12634
    %v12636 = vsel %vm12522, %v12493, 0.0
    %v12637 = vadd.f32 %v12635, %v12636
    %v12638 = vsel %vm12522, %v12498, 0.0
    %v12639 = vadd.f32 %v12637, %v12638
    %v12640 = vsel %vm12522, %v12501, 0.0
    %v12641 = vadd.f32 %v12639, %v12640
    %v12642 = vsel %vm12522, %v12506, 0.0
    %v12643 = vadd.f32 %v12641, %v12642
    %v12644 = vsel %vm12522, %v12509, 0.0
    %v12645 = vadd.f32 %v12643, %v12644
    %v12646 = vsel %vm12522, %v12514, 0.0
    %v12647 = vadd.f32 %v12645, %v12646
    %v12648 = vsel %vm12522, %v12517, 0.0
    %v12649 = vadd.f32 %v12647, %v12648
    %v12650 = vrot.slane %v12649, 4
    %v12651 = vadd.f32 %v12649, %v12650
    %v12652 = vrot.slane %v12651, 2
    %v12653 = vadd.f32 %v12651, %v12652
    %v12654 = vrot.slane %v12653, 1
    %v12655 = vadd.f32 %v12653, %v12654
    %v12656 = vmul.f32 %v12655, 0.001953125
    %v12657 = vmul.f32 %v12266, %v12266
    %v12658 = vmul.f32 %v12269, %v12269
    %v12659 = vmul.f32 %v12274, %v12274
    %v12660 = vmul.f32 %v12277, %v12277
    %v12661 = vmul.f32 %v12282, %v12282
    %v12662 = vmul.f32 %v12285, %v12285
    %v12663 = vmul.f32 %v12290, %v12290
    %v12664 = vmul.f32 %v12293, %v12293
    %v12665 = vmul.f32 %v12298, %v12298
    %v12666 = vmul.f32 %v12301, %v12301
    %v12667 = vmul.f32 %v12306, %v12306
    %v12668 = vmul.f32 %v12309, %v12309
    %v12669 = vmul.f32 %v12314, %v12314
    %v12670 = vmul.f32 %v12317, %v12317
    %v12671 = vmul.f32 %v12322, %v12322
    %v12672 = vmul.f32 %v12325, %v12325
    %v12673 = vmul.f32 %v12330, %v12330
    %v12674 = vmul.f32 %v12333, %v12333
    %v12675 = vmul.f32 %v12338, %v12338
    %v12676 = vmul.f32 %v12341, %v12341
    %v12677 = vmul.f32 %v12346, %v12346
    %v12678 = vmul.f32 %v12349, %v12349
    %v12679 = vmul.f32 %v12354, %v12354
    %v12680 = vmul.f32 %v12357, %v12357
    %v12681 = vmul.f32 %v12362, %v12362
    %v12682 = vmul.f32 %v12365, %v12365
    %v12683 = vmul.f32 %v12370, %v12370
    %v12684 = vmul.f32 %v12373, %v12373
    %v12685 = vmul.f32 %v12378, %v12378
    %v12686 = vmul.f32 %v12381, %v12381
    %v12687 = vmul.f32 %v12386, %v12386
    %v12688 = vmul.f32 %v12389, %v12389
    %v12689 = vmul.f32 %v12394, %v12394
    %v12690 = vmul.f32 %v12397, %v12397
    %v12691 = vmul.f32 %v12402, %v12402
    %v12692 = vmul.f32 %v12405, %v12405
    %v12693 = vmul.f32 %v12410, %v12410
    %v12694 = vmul.f32 %v12413, %v12413
    %v12695 = vmul.f32 %v12418, %v12418
    %v12696 = vmul.f32 %v12421, %v12421
    %v12697 = vmul.f32 %v12426, %v12426
    %v12698 = vmul.f32 %v12429, %v12429
    %v12699 = vmul.f32 %v12434, %v12434
    %v12700 = vmul.f32 %v12437, %v12437
    %v12701 = vmul.f32 %v12442, %v12442
    %v12702 = vmul.f32 %v12445, %v12445
    %v12703 = vmul.f32 %v12450, %v12450
    %v12704 = vmul.f32 %v12453, %v12453
    %v12705 = vmul.f32 %v12458, %v12458
    %v12706 = vmul.f32 %v12461, %v12461
    %v12707 = vmul.f32 %v12466, %v12466
    %v12708 = vmul.f32 %v12469, %v12469
    %v12709 = vmul.f32 %v12474, %v12474
    %v12710 = vmul.f32 %v12477, %v12477
    %v12711 = vmul.f32 %v12482, %v12482
    %v12712 = vmul.f32 %v12485, %v12485
    %v12713 = vmul.f32 %v12490, %v12490
    %v12714 = vmul.f32 %v12493, %v12493
    %v12715 = vmul.f32 %v12498, %v12498
    %v12716 = vmul.f32 %v12501, %v12501
    %v12717 = vmul.f32 %v12506, %v12506
    %v12718 = vmul.f32 %v12509, %v12509
    %v12719 = vmul.f32 %v12514, %v12514
    %v12720 = vmul.f32 %v12517, %v12517
    %v12721 = vsel %vm12522, %v12657, 0.0
    %v12722 = vsel %vm12522, %v12658, 0.0
    %v12723 = vadd.f32 %v12721, %v12722
    %v12724 = vsel %vm12522, %v12659, 0.0
    %v12725 = vadd.f32 %v12723, %v12724
    %v12726 = vsel %vm12522, %v12660, 0.0
    %v12727 = vadd.f32 %v12725, %v12726
    %v12728 = vsel %vm12522, %v12661, 0.0
    %v12729 = vadd.f32 %v12727, %v12728
    %v12730 = vsel %vm12522, %v12662, 0.0
    %v12731 = vadd.f32 %v12729, %v12730
    %v12732 = vsel %vm12522, %v12663, 0.0
    %v12733 = vadd.f32 %v12731, %v12732
    %v12734 = vsel %vm12522, %v12664, 0.0
    %v12735 = vadd.f32 %v12733, %v12734
    %v12736 = vsel %vm12522, %v12665, 0.0
    %v12737 = vadd.f32 %v12735, %v12736
    %v12738 = vsel %vm12522, %v12666, 0.0
    %v12739 = vadd.f32 %v12737, %v12738
    %v12740 = vsel %vm12522, %v12667, 0.0
    %v12741 = vadd.f32 %v12739, %v12740
    %v12742 = vsel %vm12522, %v12668, 0.0
    %v12743 = vadd.f32 %v12741, %v12742
    %v12744 = vsel %vm12522, %v12669, 0.0
    %v12745 = vadd.f32 %v12743, %v12744
    %v12746 = vsel %vm12522, %v12670, 0.0
    %v12747 = vadd.f32 %v12745, %v12746
    %v12748 = vsel %vm12522, %v12671, 0.0
    %v12749 = vadd.f32 %v12747, %v12748
    %v12750 = vsel %vm12522, %v12672, 0.0
    %v12751 = vadd.f32 %v12749, %v12750
    %v12752 = vsel %vm12522, %v12673, 0.0
    %v12753 = vadd.f32 %v12751, %v12752
    %v12754 = vsel %vm12522, %v12674, 0.0
    %v12755 = vadd.f32 %v12753, %v12754
    %v12756 = vsel %vm12522, %v12675, 0.0
    %v12757 = vadd.f32 %v12755, %v12756
    %v12758 = vsel %vm12522, %v12676, 0.0
    %v12759 = vadd.f32 %v12757, %v12758
    %v12760 = vsel %vm12522, %v12677, 0.0
    %v12761 = vadd.f32 %v12759, %v12760
    %v12762 = vsel %vm12522, %v12678, 0.0
    %v12763 = vadd.f32 %v12761, %v12762
    %v12764 = vsel %vm12522, %v12679, 0.0
    %v12765 = vadd.f32 %v12763, %v12764
    %v12766 = vsel %vm12522, %v12680, 0.0
    %v12767 = vadd.f32 %v12765, %v12766
    %v12768 = vsel %vm12522, %v12681, 0.0
    %v12769 = vadd.f32 %v12767, %v12768
    %v12770 = vsel %vm12522, %v12682, 0.0
    %v12771 = vadd.f32 %v12769, %v12770
    %v12772 = vsel %vm12522, %v12683, 0.0
    %v12773 = vadd.f32 %v12771, %v12772
    %v12774 = vsel %vm12522, %v12684, 0.0
    %v12775 = vadd.f32 %v12773, %v12774
    %v12776 = vsel %vm12522, %v12685, 0.0
    %v12777 = vadd.f32 %v12775, %v12776
    %v12778 = vsel %vm12522, %v12686, 0.0
    %v12779 = vadd.f32 %v12777, %v12778
    %v12780 = vsel %vm12522, %v12687, 0.0
    %v12781 = vadd.f32 %v12779, %v12780
    %v12782 = vsel %vm12522, %v12688, 0.0
    %v12783 = vadd.f32 %v12781, %v12782
    %v12784 = vsel %vm12522, %v12689, 0.0
    %v12785 = vadd.f32 %v12783, %v12784
    %v12786 = vsel %vm12522, %v12690, 0.0
    %v12787 = vadd.f32 %v12785, %v12786
    %v12788 = vsel %vm12522, %v12691, 0.0
    %v12789 = vadd.f32 %v12787, %v12788
    %v12790 = vsel %vm12522, %v12692, 0.0
    %v12791 = vadd.f32 %v12789, %v12790
    %v12792 = vsel %vm12522, %v12693, 0.0
    %v12793 = vadd.f32 %v12791, %v12792
    %v12794 = vsel %vm12522, %v12694, 0.0
    %v12795 = vadd.f32 %v12793, %v12794
    %v12796 = vsel %vm12522, %v12695, 0.0
    %v12797 = vadd.f32 %v12795, %v12796
    %v12798 = vsel %vm12522, %v12696, 0.0
    %v12799 = vadd.f32 %v12797, %v12798
    %v12800 = vsel %vm12522, %v12697, 0.0
    %v12801 = vadd.f32 %v12799, %v12800
    %v12802 = vsel %vm12522, %v12698, 0.0
    %v12803 = vadd.f32 %v12801, %v12802
    %v12804 = vsel %vm12522, %v12699, 0.0
    %v12805 = vadd.f32 %v12803, %v12804
    %v12806 = vsel %vm12522, %v12700, 0.0
    %v12807 = vadd.f32 %v12805, %v12806
    %v12808 = vsel %vm12522, %v12701, 0.0
    %v12809 = vadd.f32 %v12807, %v12808
    %v12810 = vsel %vm12522, %v12702, 0.0
    %v12811 = vadd.f32 %v12809, %v12810
    %v12812 = vsel %vm12522, %v12703, 0.0
    %v12813 = vadd.f32 %v12811, %v12812
    %v12814 = vsel %vm12522, %v12704, 0.0
    %v12815 = vadd.f32 %v12813, %v12814
    %v12816 = vsel %vm12522, %v12705, 0.0
    %v12817 = vadd.f32 %v12815, %v12816
    %v12818 = vsel %vm12522, %v12706, 0.0
    %v12819 = vadd.f32 %v12817, %v12818
    %v12820 = vsel %vm12522, %v12707, 0.0
    %v12821 = vadd.f32 %v12819, %v12820
    %v12822 = vsel %vm12522, %v12708, 0.0
    %v12823 = vadd.f32 %v12821, %v12822
    %v12824 = vsel %vm12522, %v12709, 0.0
    %v12825 = vadd.f32 %v12823, %v12824
    %v12826 = vsel %vm12522, %v12710, 0.0
    %v12827 = vadd.f32 %v12825, %v12826
    %v12828 = vsel %vm12522, %v12711, 0.0
    %v12829 = vadd.f32 %v12827, %v12828
    %v12830 = vsel %vm12522, %v12712, 0.0
    %v12831 = vadd.f32 %v12829, %v12830
    %v12832 = vsel %vm12522, %v12713, 0.0
    %v12833 = vadd.f32 %v12831, %v12832
    %v12834 = vsel %vm12522, %v12714, 0.0
    %v12835 = vadd.f32 %v12833, %v12834
    %v12836 = vsel %vm12522, %v12715, 0.0
    %v12837 = vadd.f32 %v12835, %v12836
    %v12838 = vsel %vm12522, %v12716, 0.0
    %v12839 = vadd.f32 %v12837, %v12838
    %v12840 = vsel %vm12522, %v12717, 0.0
    %v12841 = vadd.f32 %v12839, %v12840
    %v12842 = vsel %vm12522, %v12718, 0.0
    %v12843 = vadd.f32 %v12841, %v12842
    %v12844 = vsel %vm12522, %v12719, 0.0
    %v12845 = vadd.f32 %v12843, %v12844
    %v12846 = vsel %vm12522, %v12720, 0.0
    %v12847 = vadd.f32 %v12845, %v12846
    %v12848 = vrot.slane %v12847, 4
    %v12849 = vadd.f32 %v12847, %v12848
    %v12850 = vrot.slane %v12849, 2
    %v12851 = vadd.f32 %v12849, %v12850
    %v12852 = vrot.slane %v12851, 1
    %v12853 = vadd.f32 %v12851, %v12852
    %v12854 = vmul.f32 %v12853, 0.001953125
    %v12855 = vmul.f32 %v12656, %v12656
    %v12856 = vsub.f32 %v12854, %v12855
    %v12857 = vmax.f32 %v12856, 0.0
    %v12858 = vadd.f32 %v12857, 1e-05
    %v12859 = vrsqrt.pop %v12858
    %v12860 = vmul.f32 %v12520, %v12859
    %v12861 = vmul.f32 %v12656, %v12860
    %v12862 = vsub.f32 %v12521, %v12861
    %v12864 = vlaneseq
    %v12865 = vshrl.u32 %v12864, 7
    %v12866 = vsub.s32 0, %v12865
    %v12867 = vrot.slane %v12860, %v12866
    %v12869 = vmul.f32 %v12266, %v12867
    %v12870 = vmul.f32 %v12269, %v12867
    %v12871 = vmul.f32 %v12274, %v12867
    %v12872 = vmul.f32 %v12277, %v12867
    %v12873 = vmul.f32 %v12282, %v12867
    %v12874 = vmul.f32 %v12285, %v12867
    %v12875 = vmul.f32 %v12290, %v12867
    %v12876 = vmul.f32 %v12293, %v12867
    %v12877 = vmul.f32 %v12298, %v12867
    %v12878 = vmul.f32 %v12301, %v12867
    %v12879 = vmul.f32 %v12306, %v12867
    %v12880 = vmul.f32 %v12309, %v12867
    %v12881 = vmul.f32 %v12314, %v12867
    %v12882 = vmul.f32 %v12317, %v12867
    %v12883 = vmul.f32 %v12322, %v12867
    %v12884 = vmul.f32 %v12325, %v12867
    %v12885 = vmul.f32 %v12330, %v12867
    %v12886 = vmul.f32 %v12333, %v12867
    %v12887 = vmul.f32 %v12338, %v12867
    %v12888 = vmul.f32 %v12341, %v12867
    %v12889 = vmul.f32 %v12346, %v12867
    %v12890 = vmul.f32 %v12349, %v12867
    %v12891 = vmul.f32 %v12354, %v12867
    %v12892 = vmul.f32 %v12357, %v12867
    %v12893 = vmul.f32 %v12362, %v12867
    %v12894 = vmul.f32 %v12365, %v12867
    %v12895 = vmul.f32 %v12370, %v12867
    %v12896 = vmul.f32 %v12373, %v12867
    %v12897 = vmul.f32 %v12378, %v12867
    %v12898 = vmul.f32 %v12381, %v12867
    %v12899 = vmul.f32 %v12386, %v12867
    %v12900 = vmul.f32 %v12389, %v12867
    %v12901 = vmul.f32 %v12394, %v12867
    %v12902 = vmul.f32 %v12397, %v12867
    %v12903 = vmul.f32 %v12402, %v12867
    %v12904 = vmul.f32 %v12405, %v12867
    %v12905 = vmul.f32 %v12410, %v12867
    %v12906 = vmul.f32 %v12413, %v12867
    %v12907 = vmul.f32 %v12418, %v12867
    %v12908 = vmul.f32 %v12421, %v12867
    %v12909 = vmul.f32 %v12426, %v12867
    %v12910 = vmul.f32 %v12429, %v12867
    %v12911 = vmul.f32 %v12434, %v12867
    %v12912 = vmul.f32 %v12437, %v12867
    %v12913 = vmul.f32 %v12442, %v12867
    %v12914 = vmul.f32 %v12445, %v12867
    %v12915 = vmul.f32 %v12450, %v12867
    %v12916 = vmul.f32 %v12453, %v12867
    %v12917 = vmul.f32 %v12458, %v12867
    %v12918 = vmul.f32 %v12461, %v12867
    %v12919 = vmul.f32 %v12466, %v12867
    %v12920 = vmul.f32 %v12469, %v12867
    %v12921 = vmul.f32 %v12474, %v12867
    %v12922 = vmul.f32 %v12477, %v12867
    %v12923 = vmul.f32 %v12482, %v12867
    %v12924 = vmul.f32 %v12485, %v12867
    %v12925 = vmul.f32 %v12490, %v12867
    %v12926 = vmul.f32 %v12493, %v12867
    %v12927 = vmul.f32 %v12498, %v12867
    %v12928 = vmul.f32 %v12501, %v12867
    %v12929 = vmul.f32 %v12506, %v12867
    %v12930 = vmul.f32 %v12509, %v12867
    %v12931 = vmul.f32 %v12514, %v12867
    %v12932 = vmul.f32 %v12517, %v12867
    %v12934 = vlaneseq
    %v12935 = vshrl.u32 %v12934, 7
    %v12936 = vsub.s32 0, %v12935
    %v12937 = vrot.slane %v12862, %v12936
    %v12939 = vadd.f32 %v12869, %v12937
    %v12940 = vadd.f32 %v12870, %v12937
    %v12941 = vadd.f32 %v12871, %v12937
    %v12942 = vadd.f32 %v12872, %v12937
    %v12943 = vadd.f32 %v12873, %v12937
    %v12944 = vadd.f32 %v12874, %v12937
    %v12945 = vadd.f32 %v12875, %v12937
    %v12946 = vadd.f32 %v12876, %v12937
    %v12947 = vadd.f32 %v12877, %v12937
    %v12948 = vadd.f32 %v12878, %v12937
    %v12949 = vadd.f32 %v12879, %v12937
    %v12950 = vadd.f32 %v12880, %v12937
    %v12951 = vadd.f32 %v12881, %v12937
    %v12952 = vadd.f32 %v12882, %v12937
    %v12953 = vadd.f32 %v12883, %v12937
    %v12954 = vadd.f32 %v12884, %v12937
    %v12955 = vadd.f32 %v12885, %v12937
    %v12956 = vadd.f32 %v12886, %v12937
    %v12957 = vadd.f32 %v12887, %v12937
    %v12958 = vadd.f32 %v12888, %v12937
    %v12959 = vadd.f32 %v12889, %v12937
    %v12960 = vadd.f32 %v12890, %v12937
    %v12961 = vadd.f32 %v12891, %v12937
    %v12962 = vadd.f32 %v12892, %v12937
    %v12963 = vadd.f32 %v12893, %v12937
    %v12964 = vadd.f32 %v12894, %v12937
    %v12965 = vadd.f32 %v12895, %v12937
    %v12966 = vadd.f32 %v12896, %v12937
    %v12967 = vadd.f32 %v12897, %v12937
    %v12968 = vadd.f32 %v12898, %v12937
    %v12969 = vadd.f32 %v12899, %v12937
    %v12970 = vadd.f32 %v12900, %v12937
    %v12971 = vadd.f32 %v12901, %v12937
    %v12972 = vadd.f32 %v12902, %v12937
    %v12973 = vadd.f32 %v12903, %v12937
    %v12974 = vadd.f32 %v12904, %v12937
    %v12975 = vadd.f32 %v12905, %v12937
    %v12976 = vadd.f32 %v12906, %v12937
    %v12977 = vadd.f32 %v12907, %v12937
    %v12978 = vadd.f32 %v12908, %v12937
    %v12979 = vadd.f32 %v12909, %v12937
    %v12980 = vadd.f32 %v12910, %v12937
    %v12981 = vadd.f32 %v12911, %v12937
    %v12982 = vadd.f32 %v12912, %v12937
    %v12983 = vadd.f32 %v12913, %v12937
    %v12984 = vadd.f32 %v12914, %v12937
    %v12985 = vadd.f32 %v12915, %v12937
    %v12986 = vadd.f32 %v12916, %v12937
    %v12987 = vadd.f32 %v12917, %v12937
    %v12988 = vadd.f32 %v12918, %v12937
    %v12989 = vadd.f32 %v12919, %v12937
    %v12990 = vadd.f32 %v12920, %v12937
    %v12991 = vadd.f32 %v12921, %v12937
    %v12992 = vadd.f32 %v12922, %v12937
    %v12993 = vadd.f32 %v12923, %v12937
    %v12994 = vadd.f32 %v12924, %v12937
    %v12995 = vadd.f32 %v12925, %v12937
    %v12996 = vadd.f32 %v12926, %v12937
    %v12997 = vadd.f32 %v12927, %v12937
    %v12998 = vadd.f32 %v12928, %v12937
    %v12999 = vadd.f32 %v12929, %v12937
    %v13000 = vadd.f32 %v12930, %v12937
    %v13001 = vadd.f32 %v12931, %v12937
    %v13002 = vadd.f32 %v12932, %v12937
    %v13003 = vmax.f32 %v12939, 0.0
    %v13004 = vmax.f32 %v12940, 0.0
    %v13005 = vmax.f32 %v12941, 0.0
    %v13006 = vmax.f32 %v12942, 0.0
    %v13007 = vmax.f32 %v12943, 0.0
    %v13008 = vmax.f32 %v12944, 0.0
    %v13009 = vmax.f32 %v12945, 0.0
    %v13010 = vmax.f32 %v12946, 0.0
    %v13011 = vmax.f32 %v12947, 0.0
    %v13012 = vmax.f32 %v12948, 0.0
    %v13013 = vmax.f32 %v12949, 0.0
    %v13014 = vmax.f32 %v12950, 0.0
    %v13015 = vmax.f32 %v12951, 0.0
    %v13016 = vmax.f32 %v12952, 0.0
    %v13017 = vmax.f32 %v12953, 0.0
    %v13018 = vmax.f32 %v12954, 0.0
    %v13019 = vmax.f32 %v12955, 0.0
    %v13020 = vmax.f32 %v12956, 0.0
    %v13021 = vmax.f32 %v12957, 0.0
    %v13022 = vmax.f32 %v12958, 0.0
    %v13023 = vmax.f32 %v12959, 0.0
    %v13024 = vmax.f32 %v12960, 0.0
    %v13025 = vmax.f32 %v12961, 0.0
    %v13026 = vmax.f32 %v12962, 0.0
    %v13027 = vmax.f32 %v12963, 0.0
    %v13028 = vmax.f32 %v12964, 0.0
    %v13029 = vmax.f32 %v12965, 0.0
    %v13030 = vmax.f32 %v12966, 0.0
    %v13031 = vmax.f32 %v12967, 0.0
    %v13032 = vmax.f32 %v12968, 0.0
    %v13033 = vmax.f32 %v12969, 0.0
    %v13034 = vmax.f32 %v12970, 0.0
    %v13035 = vmax.f32 %v12971, 0.0
    %v13036 = vmax.f32 %v12972, 0.0
    %v13037 = vmax.f32 %v12973, 0.0
    %v13038 = vmax.f32 %v12974, 0.0
    %v13039 = vmax.f32 %v12975, 0.0
    %v13040 = vmax.f32 %v12976, 0.0
    %v13041 = vmax.f32 %v12977, 0.0
    %v13042 = vmax.f32 %v12978, 0.0
    %v13043 = vmax.f32 %v12979, 0.0
    %v13044 = vmax.f32 %v12980, 0.0
    %v13045 = vmax.f32 %v12981, 0.0
    %v13046 = vmax.f32 %v12982, 0.0
    %v13047 = vmax.f32 %v12983, 0.0
    %v13048 = vmax.f32 %v12984, 0.0
    %v13049 = vmax.f32 %v12985, 0.0
    %v13050 = vmax.f32 %v12986, 0.0
    %v13051 = vmax.f32 %v12987, 0.0
    %v13052 = vmax.f32 %v12988, 0.0
    %v13053 = vmax.f32 %v12989, 0.0
    %v13054 = vmax.f32 %v12990, 0.0
    %v13055 = vmax.f32 %v12991, 0.0
    %v13056 = vmax.f32 %v12992, 0.0
    %v13057 = vmax.f32 %v12993, 0.0
    %v13058 = vmax.f32 %v12994, 0.0
    %v13059 = vmax.f32 %v12995, 0.0
    %v13060 = vmax.f32 %v12996, 0.0
    %v13061 = vmax.f32 %v12997, 0.0
    %v13062 = vmax.f32 %v12998, 0.0
    %v13063 = vmax.f32 %v12999, 0.0
    %v13064 = vmax.f32 %v13000, 0.0
    %v13065 = vmax.f32 %v13001, 0.0
    %v13066 = vmax.f32 %v13002, 0.0
    %13131 = vrot.lane.b32.xlu0 %v3416, 64
    %v13132 = vpop.permute.xlu0 %13131
    %13133 = vrot.lane.b32.xlu0 %v3417, 64
    %v13134 = vpop.permute.xlu0 %13133
    %13135 = vrot.lane.b32.xlu0 %v3418, 64
    %v13136 = vpop.permute.xlu0 %13135
    %13137 = vrot.lane.b32.xlu0 %v3419, 64
    %v13138 = vpop.permute.xlu0 %13137
    %13139 = vrot.lane.b32.xlu0 %v3420, 64
    %v13140 = vpop.permute.xlu0 %13139
    %13141 = vrot.lane.b32.xlu0 %v3421, 64
    %v13142 = vpop.permute.xlu0 %13141
    %13143 = vrot.lane.b32.xlu0 %v3422, 64
    %v13144 = vpop.permute.xlu0 %13143
    %13145 = vrot.lane.b32.xlu0 %v3423, 64
    %v13146 = vpop.permute.xlu0 %13145
    %13147 = vrot.lane.b32.xlu0 %v3424, 64
    %v13148 = vpop.permute.xlu0 %13147
    %13149 = vrot.lane.b32.xlu0 %v3425, 64
    %v13150 = vpop.permute.xlu0 %13149
    %13151 = vrot.lane.b32.xlu0 %v3426, 64
    %v13152 = vpop.permute.xlu0 %13151
    %13153 = vrot.lane.b32.xlu0 %v3427, 64
    %v13154 = vpop.permute.xlu0 %13153
    %13155 = vrot.lane.b32.xlu0 %v3428, 64
    %v13156 = vpop.permute.xlu0 %13155
    %13157 = vrot.lane.b32.xlu0 %v3429, 64
    %v13158 = vpop.permute.xlu0 %13157
    %13159 = vrot.lane.b32.xlu0 %v3430, 64
    %v13160 = vpop.permute.xlu0 %13159
    %13161 = vrot.lane.b32.xlu0 %v3431, 64
    %v13162 = vpop.permute.xlu0 %13161
    %13163 = vrot.lane.b32.xlu0 %v3432, 64
    %v13164 = vpop.permute.xlu0 %13163
    %13165 = vrot.lane.b32.xlu0 %v3433, 64
    %v13166 = vpop.permute.xlu0 %13165
    %13167 = vrot.lane.b32.xlu0 %v3434, 64
    %v13168 = vpop.permute.xlu0 %13167
    %13169 = vrot.lane.b32.xlu0 %v3435, 64
    %v13170 = vpop.permute.xlu0 %13169
    %13171 = vrot.lane.b32.xlu0 %v3436, 64
    %v13172 = vpop.permute.xlu0 %13171
    %13173 = vrot.lane.b32.xlu0 %v3437, 64
    %v13174 = vpop.permute.xlu0 %13173
    %13175 = vrot.lane.b32.xlu0 %v3438, 64
    %v13176 = vpop.permute.xlu0 %13175
    %13177 = vrot.lane.b32.xlu0 %v3439, 64
    %v13178 = vpop.permute.xlu0 %13177
    %13179 = vrot.lane.b32.xlu0 %v3440, 64
    %v13180 = vpop.permute.xlu0 %13179
    %13181 = vrot.lane.b32.xlu0 %v3441, 64
    %v13182 = vpop.permute.xlu0 %13181
    %13183 = vrot.lane.b32.xlu0 %v3442, 64
    %v13184 = vpop.permute.xlu0 %13183
    %13185 = vrot.lane.b32.xlu0 %v3443, 64
    %v13186 = vpop.permute.xlu0 %13185
    %13187 = vrot.lane.b32.xlu0 %v3444, 64
    %v13188 = vpop.permute.xlu0 %13187
    %13189 = vrot.lane.b32.xlu0 %v3445, 64
    %v13190 = vpop.permute.xlu0 %13189
    %13191 = vrot.lane.b32.xlu0 %v3446, 64
    %v13192 = vpop.permute.xlu0 %13191
    %13193 = vrot.lane.b32.xlu0 %v3447, 64
    %v13194 = vpop.permute.xlu0 %13193
    %13195 = vrot.lane.b32.xlu0 %v3448, 64
    %v13196 = vpop.permute.xlu0 %13195
    %13197 = vrot.lane.b32.xlu0 %v3449, 64
    %v13198 = vpop.permute.xlu0 %13197
    %13199 = vrot.lane.b32.xlu0 %v3450, 64
    %v13200 = vpop.permute.xlu0 %13199
    %13201 = vrot.lane.b32.xlu0 %v3451, 64
    %v13202 = vpop.permute.xlu0 %13201
    %13203 = vrot.lane.b32.xlu0 %v3452, 64
    %v13204 = vpop.permute.xlu0 %13203
    %13205 = vrot.lane.b32.xlu0 %v3453, 64
    %v13206 = vpop.permute.xlu0 %13205
    %13207 = vrot.lane.b32.xlu0 %v3454, 64
    %v13208 = vpop.permute.xlu0 %13207
    %13209 = vrot.lane.b32.xlu0 %v3455, 64
    %v13210 = vpop.permute.xlu0 %13209
    %13211 = vrot.lane.b32.xlu0 %v3456, 64
    %v13212 = vpop.permute.xlu0 %13211
    %13213 = vrot.lane.b32.xlu0 %v3457, 64
    %v13214 = vpop.permute.xlu0 %13213
    %13215 = vrot.lane.b32.xlu0 %v3458, 64
    %v13216 = vpop.permute.xlu0 %13215
    %13217 = vrot.lane.b32.xlu0 %v3459, 64
    %v13218 = vpop.permute.xlu0 %13217
    %13219 = vrot.lane.b32.xlu0 %v3460, 64
    %v13220 = vpop.permute.xlu0 %13219
    %13221 = vrot.lane.b32.xlu0 %v3461, 64
    %v13222 = vpop.permute.xlu0 %13221
    %13223 = vrot.lane.b32.xlu0 %v3462, 64
    %v13224 = vpop.permute.xlu0 %13223
    %13225 = vrot.lane.b32.xlu0 %v3463, 64
    %v13226 = vpop.permute.xlu0 %13225
    %13227 = vrot.lane.b32.xlu0 %v3464, 64
    %v13228 = vpop.permute.xlu0 %13227
    %13229 = vrot.lane.b32.xlu0 %v3465, 64
    %v13230 = vpop.permute.xlu0 %13229
    %13231 = vrot.lane.b32.xlu0 %v3466, 64
    %v13232 = vpop.permute.xlu0 %13231
    %13233 = vrot.lane.b32.xlu0 %v3467, 64
    %v13234 = vpop.permute.xlu0 %13233
    %13235 = vrot.lane.b32.xlu0 %v3468, 64
    %v13236 = vpop.permute.xlu0 %13235
    %13237 = vrot.lane.b32.xlu0 %v3469, 64
    %v13238 = vpop.permute.xlu0 %13237
    %13239 = vrot.lane.b32.xlu0 %v3470, 64
    %v13240 = vpop.permute.xlu0 %13239
    %13241 = vrot.lane.b32.xlu0 %v3471, 64
    %v13242 = vpop.permute.xlu0 %13241
    %13243 = vrot.lane.b32.xlu0 %v3472, 64
    %v13244 = vpop.permute.xlu0 %13243
    %13245 = vrot.lane.b32.xlu0 %v3473, 64
    %v13246 = vpop.permute.xlu0 %13245
    %13247 = vrot.lane.b32.xlu0 %v3474, 64
    %v13248 = vpop.permute.xlu0 %13247
    %13249 = vrot.lane.b32.xlu0 %v3475, 64
    %v13250 = vpop.permute.xlu0 %13249
    %13251 = vrot.lane.b32.xlu0 %v3476, 64
    %v13252 = vpop.permute.xlu0 %13251
    %13253 = vrot.lane.b32.xlu0 %v3477, 64
    %v13254 = vpop.permute.xlu0 %13253
    %13255 = vrot.lane.b32.xlu0 %v3478, 64
    %v13256 = vpop.permute.xlu0 %13255
    %13257 = vrot.lane.b32.xlu0 %v3479, 64
    %v13258 = vpop.permute.xlu0 %13257
    %vm13323 = vcmask 195584
    %13324 = vst.msk [vmem:[#allocation3] sm:$0xff] %vm13323, %v13132
    %13325 = vst.msk [vmem:[#allocation3 + $0x8] sm:$0xff] %vm13323, %v13134
    %13326 = vst.msk [vmem:[#allocation3 + $0x10] sm:$0xff] %vm13323, %v13136
    %13327 = vst.msk [vmem:[#allocation3 + $0x18] sm:$0xff] %vm13323, %v13138
    %13328 = vst.msk [vmem:[#allocation3 + $0x20] sm:$0xff] %vm13323, %v13140
    %13329 = vst.msk [vmem:[#allocation3 + $0x28] sm:$0xff] %vm13323, %v13142
    %13330 = vst.msk [vmem:[#allocation3 + $0x30] sm:$0xff] %vm13323, %v13144
    %13331 = vst.msk [vmem:[#allocation3 + $0x38] sm:$0xff] %vm13323, %v13146
    %13332 = vst.msk [vmem:[#allocation3 + $0x40] sm:$0xff] %vm13323, %v13148
    %13333 = vst.msk [vmem:[#allocation3 + $0x48] sm:$0xff] %vm13323, %v13150
    %13334 = vst.msk [vmem:[#allocation3 + $0x50] sm:$0xff] %vm13323, %v13152
    %13335 = vst.msk [vmem:[#allocation3 + $0x58] sm:$0xff] %vm13323, %v13154
    %13336 = vst.msk [vmem:[#allocation3 + $0x60] sm:$0xff] %vm13323, %v13156
    %13337 = vst.msk [vmem:[#allocation3 + $0x68] sm:$0xff] %vm13323, %v13158
    %13338 = vst.msk [vmem:[#allocation3 + $0x70] sm:$0xff] %vm13323, %v13160
    %13339 = vst.msk [vmem:[#allocation3 + $0x78] sm:$0xff] %vm13323, %v13162
    %13340 = vst.msk [vmem:[#allocation3 + $0x80] sm:$0xff] %vm13323, %v13164
    %13341 = vst.msk [vmem:[#allocation3 + $0x88] sm:$0xff] %vm13323, %v13166
    %13342 = vst.msk [vmem:[#allocation3 + $0x90] sm:$0xff] %vm13323, %v13168
    %13343 = vst.msk [vmem:[#allocation3 + $0x98] sm:$0xff] %vm13323, %v13170
    %13344 = vst.msk [vmem:[#allocation3 + $0xa0] sm:$0xff] %vm13323, %v13172
    %13345 = vst.msk [vmem:[#allocation3 + $0xa8] sm:$0xff] %vm13323, %v13174
    %13346 = vst.msk [vmem:[#allocation3 + $0xb0] sm:$0xff] %vm13323, %v13176
    %13347 = vst.msk [vmem:[#allocation3 + $0xb8] sm:$0xff] %vm13323, %v13178
    %13348 = vst.msk [vmem:[#allocation3 + $0xc0] sm:$0xff] %vm13323, %v13180
    %13349 = vst.msk [vmem:[#allocation3 + $0xc8] sm:$0xff] %vm13323, %v13182
    %13350 = vst.msk [vmem:[#allocation3 + $0xd0] sm:$0xff] %vm13323, %v13184
    %13351 = vst.msk [vmem:[#allocation3 + $0xd8] sm:$0xff] %vm13323, %v13186
    %13352 = vst.msk [vmem:[#allocation3 + $0xe0] sm:$0xff] %vm13323, %v13188
    %13353 = vst.msk [vmem:[#allocation3 + $0xe8] sm:$0xff] %vm13323, %v13190
    %13354 = vst.msk [vmem:[#allocation3 + $0xf0] sm:$0xff] %vm13323, %v13192
    %13355 = vst.msk [vmem:[#allocation3 + $0xf8] sm:$0xff] %vm13323, %v13194
    %13356 = vst.msk [vmem:[#allocation3 + $0x100] sm:$0xff] %vm13323, %v13196
    %13357 = vst.msk [vmem:[#allocation3 + $0x108] sm:$0xff] %vm13323, %v13198
    %13358 = vst.msk [vmem:[#allocation3 + $0x110] sm:$0xff] %vm13323, %v13200
    %13359 = vst.msk [vmem:[#allocation3 + $0x118] sm:$0xff] %vm13323, %v13202
    %13360 = vst.msk [vmem:[#allocation3 + $0x120] sm:$0xff] %vm13323, %v13204
    %13361 = vst.msk [vmem:[#allocation3 + $0x128] sm:$0xff] %vm13323, %v13206
    %13362 = vst.msk [vmem:[#allocation3 + $0x130] sm:$0xff] %vm13323, %v13208
    %13363 = vst.msk [vmem:[#allocation3 + $0x138] sm:$0xff] %vm13323, %v13210
    %13364 = vst.msk [vmem:[#allocation3 + $0x140] sm:$0xff] %vm13323, %v13212
    %13365 = vst.msk [vmem:[#allocation3 + $0x148] sm:$0xff] %vm13323, %v13214
    %13366 = vst.msk [vmem:[#allocation3 + $0x150] sm:$0xff] %vm13323, %v13216
    %13367 = vst.msk [vmem:[#allocation3 + $0x158] sm:$0xff] %vm13323, %v13218
    %13368 = vst.msk [vmem:[#allocation3 + $0x160] sm:$0xff] %vm13323, %v13220
    %13369 = vst.msk [vmem:[#allocation3 + $0x168] sm:$0xff] %vm13323, %v13222
    %13370 = vst.msk [vmem:[#allocation3 + $0x170] sm:$0xff] %vm13323, %v13224
    %13371 = vst.msk [vmem:[#allocation3 + $0x178] sm:$0xff] %vm13323, %v13226
    %13372 = vst.msk [vmem:[#allocation3 + $0x180] sm:$0xff] %vm13323, %v13228
    %13373 = vst.msk [vmem:[#allocation3 + $0x188] sm:$0xff] %vm13323, %v13230
    %13374 = vst.msk [vmem:[#allocation3 + $0x190] sm:$0xff] %vm13323, %v13232
    %13375 = vst.msk [vmem:[#allocation3 + $0x198] sm:$0xff] %vm13323, %v13234
    %13376 = vst.msk [vmem:[#allocation3 + $0x1a0] sm:$0xff] %vm13323, %v13236
    %13377 = vst.msk [vmem:[#allocation3 + $0x1a8] sm:$0xff] %vm13323, %v13238
    %13378 = vst.msk [vmem:[#allocation3 + $0x1b0] sm:$0xff] %vm13323, %v13240
    %13379 = vst.msk [vmem:[#allocation3 + $0x1b8] sm:$0xff] %vm13323, %v13242
    %13380 = vst.msk [vmem:[#allocation3 + $0x1c0] sm:$0xff] %vm13323, %v13244
    %13381 = vst.msk [vmem:[#allocation3 + $0x1c8] sm:$0xff] %vm13323, %v13246
    %13382 = vst.msk [vmem:[#allocation3 + $0x1d0] sm:$0xff] %vm13323, %v13248
    %13383 = vst.msk [vmem:[#allocation3 + $0x1d8] sm:$0xff] %vm13323, %v13250
    %13384 = vst.msk [vmem:[#allocation3 + $0x1e0] sm:$0xff] %vm13323, %v13252
    %13385 = vst.msk [vmem:[#allocation3 + $0x1e8] sm:$0xff] %vm13323, %v13254
    %13386 = vst.msk [vmem:[#allocation3 + $0x1f0] sm:$0xff] %vm13323, %v13256
    %13387 = vst.msk [vmem:[#allocation3 + $0x1f8] sm:$0xff] %vm13323, %v13258
    %13452 = vrot.lane.b32.xlu0 %v13003, 24
    %v13453 = vpop.permute.xlu0 %13452
    %13454 = vrot.lane.b32.xlu0 %v13004, 24
    %v13455 = vpop.permute.xlu0 %13454
    %13456 = vrot.lane.b32.xlu0 %v13005, 24
    %v13457 = vpop.permute.xlu0 %13456
    %13458 = vrot.lane.b32.xlu0 %v13006, 24
    %v13459 = vpop.permute.xlu0 %13458
    %13460 = vrot.lane.b32.xlu0 %v13007, 24
    %v13461 = vpop.permute.xlu0 %13460
    %13462 = vrot.lane.b32.xlu0 %v13008, 24
    %v13463 = vpop.permute.xlu0 %13462
    %13464 = vrot.lane.b32.xlu0 %v13009, 24
    %v13465 = vpop.permute.xlu0 %13464
    %13466 = vrot.lane.b32.xlu0 %v13010, 24
    %v13467 = vpop.permute.xlu0 %13466
    %13468 = vrot.lane.b32.xlu0 %v13011, 24
    %v13469 = vpop.permute.xlu0 %13468
    %13470 = vrot.lane.b32.xlu0 %v13012, 24
    %v13471 = vpop.permute.xlu0 %13470
    %13472 = vrot.lane.b32.xlu0 %v13013, 24
    %v13473 = vpop.permute.xlu0 %13472
    %13474 = vrot.lane.b32.xlu0 %v13014, 24
    %v13475 = vpop.permute.xlu0 %13474
    %13476 = vrot.lane.b32.xlu0 %v13015, 24
    %v13477 = vpop.permute.xlu0 %13476
    %13478 = vrot.lane.b32.xlu0 %v13016, 24
    %v13479 = vpop.permute.xlu0 %13478
    %13480 = vrot.lane.b32.xlu0 %v13017, 24
    %v13481 = vpop.permute.xlu0 %13480
    %13482 = vrot.lane.b32.xlu0 %v13018, 24
    %v13483 = vpop.permute.xlu0 %13482
    %13484 = vrot.lane.b32.xlu0 %v13019, 24
    %v13485 = vpop.permute.xlu0 %13484
    %13486 = vrot.lane.b32.xlu0 %v13020, 24
    %v13487 = vpop.permute.xlu0 %13486
    %13488 = vrot.lane.b32.xlu0 %v13021, 24
    %v13489 = vpop.permute.xlu0 %13488
    %13490 = vrot.lane.b32.xlu0 %v13022, 24
    %v13491 = vpop.permute.xlu0 %13490
    %13492 = vrot.lane.b32.xlu0 %v13023, 24
    %v13493 = vpop.permute.xlu0 %13492
    %13494 = vrot.lane.b32.xlu0 %v13024, 24
    %v13495 = vpop.permute.xlu0 %13494
    %13496 = vrot.lane.b32.xlu0 %v13025, 24
    %v13497 = vpop.permute.xlu0 %13496
    %13498 = vrot.lane.b32.xlu0 %v13026, 24
    %v13499 = vpop.permute.xlu0 %13498
    %13500 = vrot.lane.b32.xlu0 %v13027, 24
    %v13501 = vpop.permute.xlu0 %13500
    %13502 = vrot.lane.b32.xlu0 %v13028, 24
    %v13503 = vpop.permute.xlu0 %13502
    %13504 = vrot.lane.b32.xlu0 %v13029, 24
    %v13505 = vpop.permute.xlu0 %13504
    %13506 = vrot.lane.b32.xlu0 %v13030, 24
    %v13507 = vpop.permute.xlu0 %13506
    %13508 = vrot.lane.b32.xlu0 %v13031, 24
    %v13509 = vpop.permute.xlu0 %13508
    %13510 = vrot.lane.b32.xlu0 %v13032, 24
    %v13511 = vpop.permute.xlu0 %13510
    %13512 = vrot.lane.b32.xlu0 %v13033, 24
    %v13513 = vpop.permute.xlu0 %13512
    %13514 = vrot.lane.b32.xlu0 %v13034, 24
    %v13515 = vpop.permute.xlu0 %13514
    %13516 = vrot.lane.b32.xlu0 %v13035, 24
    %v13517 = vpop.permute.xlu0 %13516
    %13518 = vrot.lane.b32.xlu0 %v13036, 24
    %v13519 = vpop.permute.xlu0 %13518
    %13520 = vrot.lane.b32.xlu0 %v13037, 24
    %v13521 = vpop.permute.xlu0 %13520
    %13522 = vrot.lane.b32.xlu0 %v13038, 24
    %v13523 = vpop.permute.xlu0 %13522
    %13524 = vrot.lane.b32.xlu0 %v13039, 24
    %v13525 = vpop.permute.xlu0 %13524
    %13526 = vrot.lane.b32.xlu0 %v13040, 24
    %v13527 = vpop.permute.xlu0 %13526
    %13528 = vrot.lane.b32.xlu0 %v13041, 24
    %v13529 = vpop.permute.xlu0 %13528
    %13530 = vrot.lane.b32.xlu0 %v13042, 24
    %v13531 = vpop.permute.xlu0 %13530
    %13532 = vrot.lane.b32.xlu0 %v13043, 24
    %v13533 = vpop.permute.xlu0 %13532
    %13534 = vrot.lane.b32.xlu0 %v13044, 24
    %v13535 = vpop.permute.xlu0 %13534
    %13536 = vrot.lane.b32.xlu0 %v13045, 24
    %v13537 = vpop.permute.xlu0 %13536
    %13538 = vrot.lane.b32.xlu0 %v13046, 24
    %v13539 = vpop.permute.xlu0 %13538
    %13540 = vrot.lane.b32.xlu0 %v13047, 24
    %v13541 = vpop.permute.xlu0 %13540
    %13542 = vrot.lane.b32.xlu0 %v13048, 24
    %v13543 = vpop.permute.xlu0 %13542
    %13544 = vrot.lane.b32.xlu0 %v13049, 24
    %v13545 = vpop.permute.xlu0 %13544
    %13546 = vrot.lane.b32.xlu0 %v13050, 24
    %v13547 = vpop.permute.xlu0 %13546
    %13548 = vrot.lane.b32.xlu0 %v13051, 24
    %v13549 = vpop.permute.xlu0 %13548
    %13550 = vrot.lane.b32.xlu0 %v13052, 24
    %v13551 = vpop.permute.xlu0 %13550
    %13552 = vrot.lane.b32.xlu0 %v13053, 24
    %v13553 = vpop.permute.xlu0 %13552
    %13554 = vrot.lane.b32.xlu0 %v13054, 24
    %v13555 = vpop.permute.xlu0 %13554
    %13556 = vrot.lane.b32.xlu0 %v13055, 24
    %v13557 = vpop.permute.xlu0 %13556
    %13558 = vrot.lane.b32.xlu0 %v13056, 24
    %v13559 = vpop.permute.xlu0 %13558
    %13560 = vrot.lane.b32.xlu0 %v13057, 24
    %v13561 = vpop.permute.xlu0 %13560
    %13562 = vrot.lane.b32.xlu0 %v13058, 24
    %v13563 = vpop.permute.xlu0 %13562
    %13564 = vrot.lane.b32.xlu0 %v13059, 24
    %v13565 = vpop.permute.xlu0 %13564
    %13566 = vrot.lane.b32.xlu0 %v13060, 24
    %v13567 = vpop.permute.xlu0 %13566
    %13568 = vrot.lane.b32.xlu0 %v13061, 24
    %v13569 = vpop.permute.xlu0 %13568
    %13570 = vrot.lane.b32.xlu0 %v13062, 24
    %v13571 = vpop.permute.xlu0 %13570
    %13572 = vrot.lane.b32.xlu0 %v13063, 24
    %v13573 = vpop.permute.xlu0 %13572
    %13574 = vrot.lane.b32.xlu0 %v13064, 24
    %v13575 = vpop.permute.xlu0 %13574
    %13576 = vrot.lane.b32.xlu0 %v13065, 24
    %v13577 = vpop.permute.xlu0 %13576
    %13578 = vrot.lane.b32.xlu0 %v13066, 24
    %v13579 = vpop.permute.xlu0 %13578
    %vm13644 = vcmask 523456
    %13645 = vst.msk [vmem:[#allocation3] sm:$0xff] %vm13644, %v13453
    %13646 = vst.msk [vmem:[#allocation3 + $0x8] sm:$0xff] %vm13644, %v13455
    %13647 = vst.msk [vmem:[#allocation3 + $0x10] sm:$0xff] %vm13644, %v13457
    %13648 = vst.msk [vmem:[#allocation3 + $0x18] sm:$0xff] %vm13644, %v13459
    %13649 = vst.msk [vmem:[#allocation3 + $0x20] sm:$0xff] %vm13644, %v13461
    %13650 = vst.msk [vmem:[#allocation3 + $0x28] sm:$0xff] %vm13644, %v13463
    %13651 = vst.msk [vmem:[#allocation3 + $0x30] sm:$0xff] %vm13644, %v13465
    %13652 = vst.msk [vmem:[#allocation3 + $0x38] sm:$0xff] %vm13644, %v13467
    %13653 = vst.msk [vmem:[#allocation3 + $0x40] sm:$0xff] %vm13644, %v13469
    %13654 = vst.msk [vmem:[#allocation3 + $0x48] sm:$0xff] %vm13644, %v13471
    %13655 = vst.msk [vmem:[#allocation3 + $0x50] sm:$0xff] %vm13644, %v13473
    %13656 = vst.msk [vmem:[#allocation3 + $0x58] sm:$0xff] %vm13644, %v13475
    %13657 = vst.msk [vmem:[#allocation3 + $0x60] sm:$0xff] %vm13644, %v13477
    %13658 = vst.msk [vmem:[#allocation3 + $0x68] sm:$0xff] %vm13644, %v13479
    %13659 = vst.msk [vmem:[#allocation3 + $0x70] sm:$0xff] %vm13644, %v13481
    %13660 = vst.msk [vmem:[#allocation3 + $0x78] sm:$0xff] %vm13644, %v13483
    %13661 = vst.msk [vmem:[#allocation3 + $0x80] sm:$0xff] %vm13644, %v13485
    %13662 = vst.msk [vmem:[#allocation3 + $0x88] sm:$0xff] %vm13644, %v13487
    %13663 = vst.msk [vmem:[#allocation3 + $0x90] sm:$0xff] %vm13644, %v13489
    %13664 = vst.msk [vmem:[#allocation3 + $0x98] sm:$0xff] %vm13644, %v13491
    %13665 = vst.msk [vmem:[#allocation3 + $0xa0] sm:$0xff] %vm13644, %v13493
    %13666 = vst.msk [vmem:[#allocation3 + $0xa8] sm:$0xff] %vm13644, %v13495
    %13667 = vst.msk [vmem:[#allocation3 + $0xb0] sm:$0xff] %vm13644, %v13497
    %13668 = vst.msk [vmem:[#allocation3 + $0xb8] sm:$0xff] %vm13644, %v13499
    %13669 = vst.msk [vmem:[#allocation3 + $0xc0] sm:$0xff] %vm13644, %v13501
    %13670 = vst.msk [vmem:[#allocation3 + $0xc8] sm:$0xff] %vm13644, %v13503
    %13671 = vst.msk [vmem:[#allocation3 + $0xd0] sm:$0xff] %vm13644, %v13505
    %13672 = vst.msk [vmem:[#allocation3 + $0xd8] sm:$0xff] %vm13644, %v13507
    %13673 = vst.msk [vmem:[#allocation3 + $0xe0] sm:$0xff] %vm13644, %v13509
    %13674 = vst.msk [vmem:[#allocation3 + $0xe8] sm:$0xff] %vm13644, %v13511
    %13675 = vst.msk [vmem:[#allocation3 + $0xf0] sm:$0xff] %vm13644, %v13513
    %13676 = vst.msk [vmem:[#allocation3 + $0xf8] sm:$0xff] %vm13644, %v13515
    %13677 = vst.msk [vmem:[#allocation3 + $0x100] sm:$0xff] %vm13644, %v13517
    %13678 = vst.msk [vmem:[#allocation3 + $0x108] sm:$0xff] %vm13644, %v13519
    %13679 = vst.msk [vmem:[#allocation3 + $0x110] sm:$0xff] %vm13644, %v13521
    %13680 = vst.msk [vmem:[#allocation3 + $0x118] sm:$0xff] %vm13644, %v13523
    %13681 = vst.msk [vmem:[#allocation3 + $0x120] sm:$0xff] %vm13644, %v13525
    %13682 = vst.msk [vmem:[#allocation3 + $0x128] sm:$0xff] %vm13644, %v13527
    %13683 = vst.msk [vmem:[#allocation3 + $0x130] sm:$0xff] %vm13644, %v13529
    %13684 = vst.msk [vmem:[#allocation3 + $0x138] sm:$0xff] %vm13644, %v13531
    %13685 = vst.msk [vmem:[#allocation3 + $0x140] sm:$0xff] %vm13644, %v13533
    %13686 = vst.msk [vmem:[#allocation3 + $0x148] sm:$0xff] %vm13644, %v13535
    %13687 = vst.msk [vmem:[#allocation3 + $0x150] sm:$0xff] %vm13644, %v13537
    %13688 = vst.msk [vmem:[#allocation3 + $0x158] sm:$0xff] %vm13644, %v13539
    %13689 = vst.msk [vmem:[#allocation3 + $0x160] sm:$0xff] %vm13644, %v13541
    %13690 = vst.msk [vmem:[#allocation3 + $0x168] sm:$0xff] %vm13644, %v13543
    %13691 = vst.msk [vmem:[#allocation3 + $0x170] sm:$0xff] %vm13644, %v13545
    %13692 = vst.msk [vmem:[#allocation3 + $0x178] sm:$0xff] %vm13644, %v13547
    %13693 = vst.msk [vmem:[#allocation3 + $0x180] sm:$0xff] %vm13644, %v13549
    %13694 = vst.msk [vmem:[#allocation3 + $0x188] sm:$0xff] %vm13644, %v13551
    %13695 = vst.msk [vmem:[#allocation3 + $0x190] sm:$0xff] %vm13644, %v13553
    %13696 = vst.msk [vmem:[#allocation3 + $0x198] sm:$0xff] %vm13644, %v13555
    %13697 = vst.msk [vmem:[#allocation3 + $0x1a0] sm:$0xff] %vm13644, %v13557
    %13698 = vst.msk [vmem:[#allocation3 + $0x1a8] sm:$0xff] %vm13644, %v13559
    %13699 = vst.msk [vmem:[#allocation3 + $0x1b0] sm:$0xff] %vm13644, %v13561
    %13700 = vst.msk [vmem:[#allocation3 + $0x1b8] sm:$0xff] %vm13644, %v13563
    %13701 = vst.msk [vmem:[#allocation3 + $0x1c0] sm:$0xff] %vm13644, %v13565
    %13702 = vst.msk [vmem:[#allocation3 + $0x1c8] sm:$0xff] %vm13644, %v13567
    %13703 = vst.msk [vmem:[#allocation3 + $0x1d0] sm:$0xff] %vm13644, %v13569
    %13704 = vst.msk [vmem:[#allocation3 + $0x1d8] sm:$0xff] %vm13644, %v13571
    %13705 = vst.msk [vmem:[#allocation3 + $0x1e0] sm:$0xff] %vm13644, %v13573
    %13706 = vst.msk [vmem:[#allocation3 + $0x1e8] sm:$0xff] %vm13644, %v13575
    %13707 = vst.msk [vmem:[#allocation3 + $0x1f0] sm:$0xff] %vm13644, %v13577
    %13708 = vst.msk [vmem:[#allocation3 + $0x1f8] sm:$0xff] %vm13644, %v13579
    // Predicated region
    $region58: #{mfa3_forward.1} parent=1 // pred_check
      _
    $region59: #{mfa3_forward.1} parent=1 // pred_check_branch
      %13710 = sbr.rel (0) target = $region61
    $region60: #{mfa3_forward.1} parent=1 // pred_region
      %s13712 = ssub.s32 8192, 8192
      %13713 = vsyncadd [#allocation4], %s13712
      %s13714 = sshll.u32 [#allocation3], 4
      %s13715 = int_to_ptr.vmem [resolvable:$true] %s13714
      %13720 = dma.vmem_to_hbm [thread:$0]  %s13715, 8192, %s14, [#allocation4], 128, 128, 8
    $region61: #{mfa3_forward.1} parent=1 // pred_fallthru
      _
    // Predicated region
    $region62: #{mfa3_forward.1} parent=1 // pred_check
      _
    $region63: #{mfa3_forward.1} parent=1 // pred_check_branch
      %13722 = sbr.rel (0) target = $region65
    $region64: #{mfa3_forward.1} parent=1 // pred_region
      %13723 = dma.done [#allocation4], 8192
    $region65: #{mfa3_forward.1} parent=1 // pred_fallthru
      _
    %13724 = vsyncpa [#allocation4], 1

</llo_original>
